<compile_context>
chip_gen: v7x
topology: tpu7x:2x2x1
jax: 0.10.0
libtpu: 0.0.40
codegen_flags: <defaults>
</compile_context>

<pallas_src>
import jax
import jax.numpy as jnp
from jax.experimental import pallas as pl
from jax.experimental.pallas import tpu as pltpu


_VMEM_LIMIT = 48 * 1024 * 1024   # safe on v7x (64 MiB/core), fine on v5e/v6e.


# ----------------------------------------------------------------------------
# Helpers
# ----------------------------------------------------------------------------
def _pick_th(ho, batch, row_bytes, budget=2 * 1024 * 1024):
    """Largest divisor of `ho` whose per-block rows stay under `budget`, while
    keeping at least 2 parallel grid blocks when possible (v7x megacore)."""
    divs = [d for d in range(1, ho + 1) if ho % d == 0]
    fits = [d for d in divs if d * row_bytes <= budget] or divs[:1]
    th = fits[-1]
    if batch * (ho // th) < 2 and len(fits) > 1:
        th = fits[-2]
    return th


def _prep_1x1_weight(w, stride):
    """OIHW (O,C,1,1) -> (stride*C, O) bf16.  For stride 2 the input block's
    last dim is [even-W pixel feats | odd-W pixel feats]; zero rows for the
    odd-W pixel implement the W-subsample inside the matmul."""
    o, c = w.shape[0], w.shape[1]
    wm = w.reshape(o, c).T                                     # (C, O)
    if stride > 1:
        wm = jnp.concatenate(
            [wm, jnp.zeros(((stride - 1) * c, o), wm.dtype)], axis=0)
    return wm.astype(jnp.bfloat16)


# ----------------------------------------------------------------------------
# Kernels
# ----------------------------------------------------------------------------
def _conv1x1_dual_kernel(x_ref, w1_ref, b1_ref, w2_ref, b2_ref, o1_ref, o2_ref):
    """Two 1x1 convs sharing one read of x: o1 = relu(x@W1+b1), o2 = x@W2+b2."""
    a = x_ref[...].astype(jnp.bfloat16).reshape(-1, x_ref.shape[-1])
    r1 = jnp.dot(a, w1_ref[...], preferred_element_type=jnp.float32) + b1_ref[...]
    o1_ref[...] = jnp.maximum(r1, 0.0).reshape(o1_ref.shape).astype(o1_ref.dtype)
    r2 = jnp.dot(a, w2_ref[...], preferred_element_type=jnp.float32) + b2_ref[...]
    o2_ref[...] = r2.reshape(o2_ref.shape).astype(o2_ref.dtype)


def _conv3x3_kernel(xp_ref, w_ref, b_ref, o_ref):
    """3x3 / stride 1 / pad 1 conv + ReLU.  xp_ref is the padded NHWC image
    (Hp,Wp,C) for one batch element; the 9 taps are accumulated in-kernel."""
    hp, wp, c = xp_ref.shape
    h, w = hp - 2, wp - 2
    o = o_ref.shape[-1]
    acc = jnp.zeros((h * w, o), jnp.float32)
    for t in range(9):                       # unrolled: 9 small MXU matmuls
        dy, dx = divmod(t, 3)
        xs = xp_ref[dy:dy + h, dx:dx + w, :]
        acc = acc + jnp.dot(xs.reshape(h * w, c), w_ref[t],
                            preferred_element_type=jnp.float32)
    r = jnp.maximum(acc + b_ref[...], 0.0)
    o_ref[...] = r.reshape(o_ref.shape).astype(o_ref.dtype)


def _conv1x1_skip_kernel(x_ref, w_ref, b_ref, s_ref, o_ref):
    """o = relu(x@W + b) + skip   (ReLU before the residual add, as in ref)."""
    a = x_ref[...].astype(jnp.bfloat16).reshape(-1, x_ref.shape[-1])
    r = jnp.dot(a, w_ref[...], preferred_element_type=jnp.float32) + b_ref[...]
    r = jnp.maximum(r, 0.0)
    r = r + s_ref[...].reshape(r.shape).astype(jnp.float32)
    o_ref[...] = r.reshape(o_ref.shape).astype(o_ref.dtype)


# ----------------------------------------------------------------------------
# Conv wrappers (thin glue; everything sits under one jax.jit)
# ----------------------------------------------------------------------------
def conv1x1_dual(x, w1, b1, w2, b2, *, stride):
    """Fused pair of 1x1 convs sharing input x (NHWC, stride folded in-kernel):
       y1 = relu(conv1x1(x, w1, stride) + b1)   [bf16]   (main path, c1)
       y2 =       conv1x1(x, w2, stride) + b2   [bf16]   (residual/skip path)"""
    B, H, W, C = x.shape
    n1, n2 = w1.shape[0], w2.shape[0]
    s = stride
    assert H % s == 0 and W % s == 0
    Ho, Wo = H // s, W // s

    # Free (contiguous) reshape: the H-subsample is the block index 0 along the
    # size-`s` dim, the W-subsample is handled by the zero-padded weight rows.
    xv = x.reshape(B, Ho, s, Wo, s * C)
    w1f = _prep_1x1_weight(w1, s)
    w2f = _prep_1x1_weight(w2, s)
    b1f = b1.astype(jnp.float32).reshape(1, n1)
    b2f = b2.astype(jnp.float32).reshape(1, n2)

    row_bytes = Wo * (s * C * x.dtype.itemsize + (n1 + n2) * 2)
    th = _pick_th(Ho, B, row_bytes)
    grid = (B, Ho // th)

    flops = 2 * B * Ho * Wo * (s * C) * (n1 + n2)
    bytes_acc = int(xv.size) * xv.dtype.itemsize + (w1f.size + w2f.size) * 2 \
        + (n1 + n2) * 4 + B * Ho * Wo * (n1 + n2) * 2

    y1, y2 = pl.pallas_call(
        _conv1x1_dual_kernel,
        out_shape=(jax.ShapeDtypeStruct((B, Ho, Wo, n1), jnp.bfloat16),
                   jax.ShapeDtypeStruct((B, Ho, Wo, n2), jnp.bfloat16)),
        grid=grid,
        in_specs=[
            pl.BlockSpec((None, th, None, Wo, s * C),
                         lambda bi, i: (bi, i, 0, 0, 0)),
            pl.BlockSpec((s * C, n1), lambda bi, i: (0, 0)),
            pl.BlockSpec((1, n1), lambda bi, i: (0, 0)),
            pl.BlockSpec((s * C, n2), lambda bi, i: (0, 0)),
            pl.BlockSpec((1, n2), lambda bi, i: (0, 0)),
        ],
        out_specs=(pl.BlockSpec((None, th, Wo, n1), lambda bi, i: (bi, i, 0, 0)),
                   pl.BlockSpec((None, th, Wo, n2), lambda bi, i: (bi, i, 0, 0))),
        compiler_params=pltpu.CompilerParams(
            dimension_semantics=("parallel", "parallel"),
            vmem_limit_bytes=_VMEM_LIMIT),
        cost_estimate=pl.CostEstimate(flops=flops, transcendentals=0,
                                      bytes_accessed=int(bytes_acc)),
    )(xv, w1f, b1f, w2f, b2f)
    return y1, y2


def conv3x3(x, w, b):
    """3x3 / stride 1 / pad 1 conv + ReLU.  x NHWC bf16, w OIHW (O,C,3,3)."""
    B, H, W, C = x.shape
    O = w.shape[0]
    xp = jnp.pad(x, ((0, 0), (1, 1), (1, 1), (0, 0)))          # single small pad pass
    wf = jnp.transpose(w, (2, 3, 1, 0)).reshape(9, C, O).astype(jnp.bfloat16)
    bf = b.astype(jnp.float32).reshape(1, O)

    flops = 2 * B * H * W * 9 * C * O
    bytes_acc = int(xp.size) * xp.dtype.itemsize + wf.size * 2 + B * H * W * O * 2

    return pl.pallas_call(
        _conv3x3_kernel,
        out_shape=jax.ShapeDtypeStruct((B, H, W, O), jnp.bfloat16),
        grid=(B,),
        in_specs=[
            pl.BlockSpec((None, H + 2, W + 2, C), lambda bi: (bi, 0, 0, 0)),
            pl.BlockSpec((9, C, O), lambda bi: (0, 0, 0)),
            pl.BlockSpec((1, O), lambda bi: (0, 0)),
        ],
        out_specs=pl.BlockSpec((None, H, W, O), lambda bi: (bi, 0, 0, 0)),
        compiler_params=pltpu.CompilerParams(
            dimension_semantics=("parallel",),
            vmem_limit_bytes=_VMEM_LIMIT),
        cost_estimate=pl.CostEstimate(flops=flops, transcendentals=0,
                                      bytes_accessed=int(bytes_acc)),
    )(xp, wf, bf)


def conv1x1_skip(x, w, b, skip):
    """out = relu(conv1x1(x, w) + b) + skip   -> f32 NHWC.  skip is bf16."""
    B, H, W, C = x.shape
    O = w.shape[0]
    wf = w.reshape(O, C).T.astype(jnp.bfloat16)                # (C, O)
    bf = b.astype(jnp.float32).reshape(1, O)

    row_bytes = W * (C * 2 + O * 2 + O * 4)
    th = _pick_th(H, B, row_bytes)
    grid = (B, H // th)

    flops = 2 * B * H * W * C * O
    bytes_acc = int(x.size) * 2 + int(skip.size) * 2 + wf.size * 2 \
        + B * H * W * O * 4

    return pl.pallas_call(
        _conv1x1_skip_kernel,
        out_shape=jax.ShapeDtypeStruct((B, H, W, O), jnp.float32),
        grid=grid,
        in_specs=[
            pl.BlockSpec((None, th, W, C), lambda bi, i: (bi, i, 0, 0)),
            pl.BlockSpec((C, O), lambda bi, i: (0, 0)),
            pl.BlockSpec((1, O), lambda bi, i: (0, 0)),
            pl.BlockSpec((None, th, W, O), lambda bi, i: (bi, i, 0, 0)),
        ],
        out_specs=pl.BlockSpec((None, th, W, O), lambda bi, i: (bi, i, 0, 0)),
        compiler_params=pltpu.CompilerParams(
            dimension_semantics=("parallel", "parallel"),
            vmem_limit_bytes=_VMEM_LIMIT),
        cost_estimate=pl.CostEstimate(flops=flops, transcendentals=0,
                                      bytes_accessed=int(bytes_acc)),
    )(x, wf, bf, skip)


# ----------------------------------------------------------------------------
# BottleNeck forward
# ----------------------------------------------------------------------------
def bottleneck_forward(p, x, *, down):
    """x: NHWC.  Matches the (intended) reference BottleNeck.forward."""
    s = 2 if down else 1
    # `x.size() is not out.size()` is always True in the PyTorch code, so the
    # non-down block always applies dim_equalizer -- reproduced here.
    pskip = p["downsample"] if down else p["dim_eq"]
    # Fused: c1 (with ReLU) and the skip 1x1 conv share a single read of x.
    y1, skip = conv1x1_dual(x, p["c1"]["w"], p["c1"]["b"],
                            pskip["w"], pskip["b"], stride=s)
    y2 = conv3x3(y1, p["c2"]["w"], p["c2"]["b"])
    # Last 1x1 conv: ReLU then residual add, fused into the kernel epilogue.
    return conv1x1_skip(y2, p["c3"]["w"], p["c3"]["b"], skip)


@jax.jit
def model_apply(p_a, p_b, x_nchw):
    """Two chained BottleNeck blocks (down=False then down=True), NCHW in/out."""
    x = jnp.transpose(x_nchw.astype(jnp.float32), (0, 2, 3, 1))   # -> NHWC
    x = bottleneck_forward(p_a, x, down=False)
    x = bottleneck_forward(p_b, x, down=True)
    return jnp.transpose(x, (0, 3, 1, 2))                         # -> NCHW


# ----------------------------------------------------------------------------
# Parameter init (deterministic, PyTorch-default-style uniform)
# ----------------------------------------------------------------------------
def init_conv(key, cout, cin, kh, kw):
    k1, k2 = jax.random.split(key)
    bound = 1.0 / float(cin * kh * kw) ** 0.5
    w = jax.random.uniform(k1, (cout, cin, kh, kw), jnp.float32, -bound, bound)
    b = jax.random.uniform(k2, (cout,), jnp.float32, -bound, bound)
    return {"w": w, "b": b}


def init_bottleneck(key, in_dim, mid_dim, out_dim, down):
    ks = jax.random.split(key, 4)
    p = {"c1": init_conv(ks[0], mid_dim, in_dim, 1, 1),
         "c2": init_conv(ks[1], mid_dim, mid_dim, 3, 3),
         "c3": init_conv(ks[2], out_dim, mid_dim, 1, 1)}
    if down:
        p["downsample"] = init_conv(ks[3], out_dim, in_dim, 1, 1)
    else:
        p["dim_eq"] = init_conv(ks[3], out_dim, in_dim, 1, 1)
    return p


# ----------------------------------------------------------------------------
# Pure-JAX float32 reference (verification only)
# ----------------------------------------------------------------------------
def _conv_ref(x, w, b, stride, padding):
    y = jax.lax.conv_general_dilated(
        x, jnp.transpose(w, (2, 3, 1, 0)),
        window_strides=(stride, stride),
        padding=((padding, padding), (padding, padding)),
        dimension_numbers=("NHWC", "HWIO", "NHWC"))
    return y + b


def bottleneck_ref(p, x, *, down):
    s = 2 if down else 1
    out = jax.nn.relu(_conv_ref(x, p["c1"]["w"], p["c1"]["b"], s, 0))
    out = jax.nn.relu(_conv_ref(out, p["c2"]["w"], p["c2"]["b"], 1, 1))
    out = jax.nn.relu(_conv_ref(out, p["c3"]["w"], p["c3"]["b"], 1, 0))
    if down:
        skip = _conv_ref(x, p["downsample"]["w"], p["downsample"]["b"], 2, 0)
    else:
        skip = _conv_ref(x, p["dim_eq"]["w"], p["dim_eq"]["b"], 1, 0)
    return out + skip


# ----------------------------------------------------------------------------
if __name__ == "__main__":
    key = jax.random.PRNGKey(0)
    k1, k2, kx = jax.random.split(key, 3)

    # Block A: non-down path (in=4, mid=4, out=16) on a 2x4x16x16 input.
    # Block B: down path     (in=16, mid=8, out=32), spatial 16 -> 8.
    p_a = init_bottleneck(k1, 4, 4, 16, down=False)
    p_b = init_bottleneck(k2, 16, 8, 32, down=True)
    x = jax.random.normal(kx, (2, 4, 16, 16), jnp.float32)

    out = model_apply(p_a, p_b, x)
    out = jax.block_until_ready(out)
    assert out.shape == (2, 32, 8, 8), out.shape
    assert bool(jnp.all(jnp.isfinite(out)))

    # Numerical sanity vs. a float32 XLA reference (kernels use bf16 operands).
    xr = jnp.transpose(x, (0, 2, 3, 1))
    r = bottleneck_ref(p_a, xr, down=False)
    r = bottleneck_ref(p_b, r, down=True)
    ref = jnp.transpose(r, (0, 3, 1, 2))
    rel = float(jnp.linalg.norm(out - ref) / (jnp.linalg.norm(ref) + 1e-6))
    assert rel < 5e-2, f"relative error too large: {rel}"

    print("KERNEL_OK")
</pallas_src>

<mosaic_0001>
module attributes {stable_mosaic.version = 11 : i64} {
  func.func @_conv1x1_dual_kernel(%arg0: i32, %arg1: i32, %arg2: memref<1x16x1x16x4xf32, #tpu.memory_space<vmem>>, %arg3: memref<4x4xbf16, #tpu.memory_space<vmem>>, %arg4: memref<1x4xf32, #tpu.memory_space<vmem>>, %arg5: memref<4x16xbf16, #tpu.memory_space<vmem>>, %arg6: memref<1x16xf32, #tpu.memory_space<vmem>>, %arg7: memref<1x16x16x4xbf16, #tpu.memory_space<vmem>>, %arg8: memref<1x16x16x16xbf16, #tpu.memory_space<vmem>>) attributes {dimension_semantics = [#tpu.dimension_semantics<parallel>, #tpu.dimension_semantics<parallel>], iteration_bounds = array<i64: 2, 1>, scalar_prefetch = 0 : i64, scratch_operands = 0 : i64, tpu.core_type = #tpu.core_type<tc>, window_params = [{transform_indices = @transform_0, window_bounds = array<i64: 1, 16, 1, 16, 4>}, {pipeline_mode = #tpu.pipeline_mode<synchronous>, transform_indices = @transform_1, window_bounds = array<i64: 4, 4>}, {pipeline_mode = #tpu.pipeline_mode<synchronous>, transform_indices = @transform_2, window_bounds = array<i64: 1, 4>}, {pipeline_mode = #tpu.pipeline_mode<synchronous>, transform_indices = @transform_3, window_bounds = array<i64: 4, 16>}, {pipeline_mode = #tpu.pipeline_mode<synchronous>, transform_indices = @transform_4, window_bounds = array<i64: 1, 16>}, {transform_indices = @transform_5, window_bounds = array<i64: 1, 16, 16, 4>}, {transform_indices = @transform_6, window_bounds = array<i64: 1, 16, 16, 16>}]} {
    %c0 = arith.constant 0 : index
    %c0_0 = arith.constant 0 : index
    %c0_1 = arith.constant 0 : index
    %c0_2 = arith.constant 0 : index
    %c0_3 = arith.constant 0 : index
    %0 = vector.load %arg2[%c0, %c0_0, %c0_1, %c0_2, %c0_3] : memref<1x16x1x16x4xf32, #tpu.memory_space<vmem>>, vector<1x16x1x16x4xf32>
    %1 = vector.shape_cast %0 : vector<1x16x1x16x4xf32> to vector<16x16x4xf32>
    %2 = arith.truncf %1 : vector<16x16x4xf32> to vector<16x16x4xbf16>
    %3 = vector.shape_cast %2 : vector<16x16x4xbf16> to vector<256x4xbf16>
    %c0_4 = arith.constant 0 : index
    %c0_5 = arith.constant 0 : index
    %4 = vector.load %arg3[%c0_4, %c0_5] : memref<4x4xbf16, #tpu.memory_space<vmem>>, vector<4x4xbf16>
    %cst = arith.constant dense<0.000000e+00> : vector<256x4xf32>
    %5 = tpu.matmul %3, %4, %cst {dimension_numbers = #tpu.dot_dimension_numbers<[1], [0], [0], [1], [0, 0, 1, 1], [], []>} : vector<256x4xbf16>, vector<4x4xbf16>, vector<256x4xf32> -> vector<256x4xf32>
    %c0_6 = arith.constant 0 : index
    %c0_7 = arith.constant 0 : index
    %6 = vector.load %arg4[%c0_6, %c0_7] : memref<1x4xf32, #tpu.memory_space<vmem>>, vector<1x4xf32>
    %7 = vector.broadcast %6 : vector<1x4xf32> to vector<256x4xf32>
    %8 = arith.addf %5, %7 : vector<256x4xf32>
    %cst_8 = arith.constant 0.000000e+00 : f32
    %9 = vector.broadcast %cst_8 : f32 to vector<256x4xf32>
    %10 = arith.maximumf %8, %9 : vector<256x4xf32>
    %11 = vector.shape_cast %10 : vector<256x4xf32> to vector<16x16x4xf32>
    %12 = arith.truncf %11 : vector<16x16x4xf32> to vector<16x16x4xbf16>
    %c0_9 = arith.constant 0 : index
    %c0_10 = arith.constant 0 : index
    %c0_11 = arith.constant 0 : index
    %c0_12 = arith.constant 0 : index
    %13 = vector.load %arg7[%c0_9, %c0_10, %c0_11, %c0_12] : memref<1x16x16x4xbf16, #tpu.memory_space<vmem>>, vector<1x16x16x4xbf16>
    %14 = vector.shape_cast %13 : vector<1x16x16x4xbf16> to vector<16x16x4xbf16>
    %15 = vector.shape_cast %12 : vector<16x16x4xbf16> to vector<1x16x16x4xbf16>
    tpu.vector_store %arg7[%c0_9, %c0_10, %c0_11, %c0_12], %15 {strides = array<i32>} : memref<1x16x16x4xbf16, #tpu.memory_space<vmem>>, vector<1x16x16x4xbf16>,
    %c0_13 = arith.constant 0 : index
    %c0_14 = arith.constant 0 : index
    %16 = vector.load %arg5[%c0_13, %c0_14] : memref<4x16xbf16, #tpu.memory_space<vmem>>, vector<4x16xbf16>
    %cst_15 = arith.constant dense<0.000000e+00> : vector<256x16xf32>
    %17 = tpu.matmul %3, %16, %cst_15 {dimension_numbers = #tpu.dot_dimension_numbers<[1], [0], [0], [1], [0, 0, 1, 1], [], []>} : vector<256x4xbf16>, vector<4x16xbf16>, vector<256x16xf32> -> vector<256x16xf32>
    %c0_16 = arith.constant 0 : index
    %c0_17 = arith.constant 0 : index
    %18 = vector.load %arg6[%c0_16, %c0_17] : memref<1x16xf32, #tpu.memory_space<vmem>>, vector<1x16xf32>
    %19 = vector.broadcast %18 : vector<1x16xf32> to vector<256x16xf32>
    %20 = arith.addf %17, %19 : vector<256x16xf32>
    %21 = vector.shape_cast %20 : vector<256x16xf32> to vector<16x16x16xf32>
    %22 = arith.truncf %21 : vector<16x16x16xf32> to vector<16x16x16xbf16>
    %c0_18 = arith.constant 0 : index
    %c0_19 = arith.constant 0 : index
    %c0_20 = arith.constant 0 : index
    %c0_21 = arith.constant 0 : index
    %23 = vector.load %arg8[%c0_18, %c0_19, %c0_20, %c0_21] : memref<1x16x16x16xbf16, #tpu.memory_space<vmem>>, vector<1x16x16x16xbf16>
    %24 = vector.shape_cast %23 : vector<1x16x16x16xbf16> to vector<16x16x16xbf16>
    %25 = vector.shape_cast %22 : vector<16x16x16xbf16> to vector<1x16x16x16xbf16>
    tpu.vector_store %arg8[%c0_18, %c0_19, %c0_20, %c0_21], %25 {strides = array<i32>} : memref<1x16x16x16xbf16, #tpu.memory_space<vmem>>, vector<1x16x16x16xbf16>,
    return
  }
  func.func @transform_0(%arg0: i32, %arg1: i32) -> (i32, i32, i32, i32, i32) {
    %c0_i32 = arith.constant 0 : i32
    %c0_i32_0 = arith.constant 0 : i32
    %c0_i32_1 = arith.constant 0 : i32
    %c0_i32_2 = arith.constant 0 : i32
    return %arg0, %arg1, %c0_i32, %c0_i32_0, %c0_i32_1 : i32, i32, i32, i32, i32
  }
  func.func @transform_1(%arg0: i32, %arg1: i32) -> (i32, i32) {
    %c0_i32 = arith.constant 0 : i32
    %c0_i32_0 = arith.constant 0 : i32
    %c0_i32_1 = arith.constant 0 : i32
    return %c0_i32, %c0_i32_0 : i32, i32
  }
  func.func @transform_2(%arg0: i32, %arg1: i32) -> (i32, i32) {
    %c0_i32 = arith.constant 0 : i32
    %c0_i32_0 = arith.constant 0 : i32
    %c0_i32_1 = arith.constant 0 : i32
    return %c0_i32, %c0_i32_0 : i32, i32
  }
  func.func @transform_3(%arg0: i32, %arg1: i32) -> (i32, i32) {
    %c0_i32 = arith.constant 0 : i32
    %c0_i32_0 = arith.constant 0 : i32
    %c0_i32_1 = arith.constant 0 : i32
    return %c0_i32, %c0_i32_0 : i32, i32
  }
  func.func @transform_4(%arg0: i32, %arg1: i32) -> (i32, i32) {
    %c0_i32 = arith.constant 0 : i32
    %c0_i32_0 = arith.constant 0 : i32
    %c0_i32_1 = arith.constant 0 : i32
    return %c0_i32, %c0_i32_0 : i32, i32
  }
  func.func @transform_5(%arg0: i32, %arg1: i32) -> (i32, i32, i32, i32) {
    %c0_i32 = arith.constant 0 : i32
    %c0_i32_0 = arith.constant 0 : i32
    %c0_i32_1 = arith.constant 0 : i32
    return %arg0, %arg1, %c0_i32, %c0_i32_0 : i32, i32, i32, i32
  }
  func.func @transform_6(%arg0: i32, %arg1: i32) -> (i32, i32, i32, i32) {
    %c0_i32 = arith.constant 0 : i32
    %c0_i32_0 = arith.constant 0 : i32
    %c0_i32_1 = arith.constant 0 : i32
    return %arg0, %arg1, %c0_i32, %c0_i32_0 : i32, i32, i32, i32
  }
}

module attributes {stable_mosaic.version = 11 : i64} {
  func.func @_conv3x3_kernel(%arg0: i32, %arg1: memref<1x18x18x4xbf16, #tpu.memory_space<vmem>>, %arg2: memref<9x4x4xbf16, #tpu.memory_space<vmem>>, %arg3: memref<1x4xf32, #tpu.memory_space<vmem>>, %arg4: memref<1x16x16x4xbf16, #tpu.memory_space<vmem>>) attributes {dimension_semantics = [#tpu.dimension_semantics<parallel>], iteration_bounds = array<i64: 2>, scalar_prefetch = 0 : i64, scratch_operands = 0 : i64, tpu.core_type = #tpu.core_type<tc>, window_params = [{transform_indices = @transform_0, window_bounds = array<i64: 1, 18, 18, 4>}, {pipeline_mode = #tpu.pipeline_mode<synchronous>, transform_indices = @transform_1, window_bounds = array<i64: 9, 4, 4>}, {pipeline_mode = #tpu.pipeline_mode<synchronous>, transform_indices = @transform_2, window_bounds = array<i64: 1, 4>}, {transform_indices = @transform_3, window_bounds = array<i64: 1, 16, 16, 4>}]} {
    %cst = arith.constant 0.000000e+00 : f32
    %0 = vector.broadcast %cst : f32 to vector<256x4xf32>
    %c0 = arith.constant 0 : index
    %c0_0 = arith.constant 0 : index
    %c0_1 = arith.constant 0 : index
    %c0_2 = arith.constant 0 : index
    %1 = vector.load %arg1[%c0, %c0_0, %c0_1, %c0_2] : memref<1x18x18x4xbf16, #tpu.memory_space<vmem>>, vector<1x16x16x4xbf16>
    %2 = vector.shape_cast %1 : vector<1x16x16x4xbf16> to vector<16x16x4xbf16>
    %3 = vector.shape_cast %2 : vector<16x16x4xbf16> to vector<256x4xbf16>
    %c0_3 = arith.constant 0 : index
    %c0_4 = arith.constant 0 : index
    %c0_5 = arith.constant 0 : index
    %4 = vector.load %arg2[%c0_3, %c0_4, %c0_5] : memref<9x4x4xbf16, #tpu.memory_space<vmem>>, vector<1x4x4xbf16>
    %5 = vector.shape_cast %4 : vector<1x4x4xbf16> to vector<4x4xbf16>
    %cst_6 = arith.constant dense<0.000000e+00> : vector<256x4xf32>
    %6 = tpu.matmul %3, %5, %cst_6 {dimension_numbers = #tpu.dot_dimension_numbers<[1], [0], [0], [1], [0, 0, 1, 1], [], []>} : vector<256x4xbf16>, vector<4x4xbf16>, vector<256x4xf32> -> vector<256x4xf32>
    %7 = arith.addf %0, %6 : vector<256x4xf32>
    %c0_7 = arith.constant 0 : index
    %c0_8 = arith.constant 0 : index
    %c1 = arith.constant 1 : index
    %c0_9 = arith.constant 0 : index
    %8 = vector.load %arg1[%c0_7, %c0_8, %c1, %c0_9] : memref<1x18x18x4xbf16, #tpu.memory_space<vmem>>, vector<1x16x16x4xbf16>
    %9 = vector.shape_cast %8 : vector<1x16x16x4xbf16> to vector<16x16x4xbf16>
    %10 = vector.shape_cast %9 : vector<16x16x4xbf16> to vector<256x4xbf16>
    %c1_10 = arith.constant 1 : index
    %c0_11 = arith.constant 0 : index
    %c0_12 = arith.constant 0 : index
    %11 = vector.load %arg2[%c1_10, %c0_11, %c0_12] : memref<9x4x4xbf16, #tpu.memory_space<vmem>>, vector<1x4x4xbf16>
    %12 = vector.shape_cast %11 : vector<1x4x4xbf16> to vector<4x4xbf16>
    %cst_13 = arith.constant dense<0.000000e+00> : vector<256x4xf32>
    %13 = tpu.matmul %10, %12, %cst_13 {dimension_numbers = #tpu.dot_dimension_numbers<[1], [0], [0], [1], [0, 0, 1, 1], [], []>} : vector<256x4xbf16>, vector<4x4xbf16>, vector<256x4xf32> -> vector<256x4xf32>
    %14 = arith.addf %7, %13 : vector<256x4xf32>
    %c0_14 = arith.constant 0 : index
    %c0_15 = arith.constant 0 : index
    %c2 = arith.constant 2 : index
    %c0_16 = arith.constant 0 : index
    %15 = vector.load %arg1[%c0_14, %c0_15, %c2, %c0_16] : memref<1x18x18x4xbf16, #tpu.memory_space<vmem>>, vector<1x16x16x4xbf16>
    %16 = vector.shape_cast %15 : vector<1x16x16x4xbf16> to vector<16x16x4xbf16>
    %17 = vector.shape_cast %16 : vector<16x16x4xbf16> to vector<256x4xbf16>
    %c2_17 = arith.constant 2 : index
    %c0_18 = arith.constant 0 : index
    %c0_19 = arith.constant 0 : index
    %18 = vector.load %arg2[%c2_17, %c0_18, %c0_19] : memref<9x4x4xbf16, #tpu.memory_space<vmem>>, vector<1x4x4xbf16>
    %19 = vector.shape_cast %18 : vector<1x4x4xbf16> to vector<4x4xbf16>
    %cst_20 = arith.constant dense<0.000000e+00> : vector<256x4xf32>
    %20 = tpu.matmul %17, %19, %cst_20 {dimension_numbers = #tpu.dot_dimension_numbers<[1], [0], [0], [1], [0, 0, 1, 1], [], []>} : vector<256x4xbf16>, vector<4x4xbf16>, vector<256x4xf32> -> vector<256x4xf32>
    %21 = arith.addf %14, %20 : vector<256x4xf32>
    %c0_21 = arith.constant 0 : index
    %c1_22 = arith.constant 1 : index
    %c0_23 = arith.constant 0 : index
    %c0_24 = arith.constant 0 : index
    %22 = vector.load %arg1[%c0_21, %c1_22, %c0_23, %c0_24] : memref<1x18x18x4xbf16, #tpu.memory_space<vmem>>, vector<1x16x16x4xbf16>
    %23 = vector.shape_cast %22 : vector<1x16x16x4xbf16> to vector<16x16x4xbf16>
    %24 = vector.shape_cast %23 : vector<16x16x4xbf16> to vector<256x4xbf16>
    %c3 = arith.constant 3 : index
    %c0_25 = arith.constant 0 : index
    %c0_26 = arith.constant 0 : index
    %25 = vector.load %arg2[%c3, %c0_25, %c0_26] : memref<9x4x4xbf16, #tpu.memory_space<vmem>>, vector<1x4x4xbf16>
    %26 = vector.shape_cast %25 : vector<1x4x4xbf16> to vector<4x4xbf16>
    %cst_27 = arith.constant dense<0.000000e+00> : vector<256x4xf32>
    %27 = tpu.matmul %24, %26, %cst_27 {dimension_numbers = #tpu.dot_dimension_numbers<[1], [0], [0], [1], [0, 0, 1, 1], [], []>} : vector<256x4xbf16>, vector<4x4xbf16>, vector<256x4xf32> -> vector<256x4xf32>
    %28 = arith.addf %21, %27 : vector<256x4xf32>
    %c0_28 = arith.constant 0 : index
    %c1_29 = arith.constant 1 : index
    %c1_30 = arith.constant 1 : index
    %c0_31 = arith.constant 0 : index
    %29 = vector.load %arg1[%c0_28, %c1_29, %c1_30, %c0_31] : memref<1x18x18x4xbf16, #tpu.memory_space<vmem>>, vector<1x16x16x4xbf16>
    %30 = vector.shape_cast %29 : vector<1x16x16x4xbf16> to vector<16x16x4xbf16>
    %31 = vector.shape_cast %30 : vector<16x16x4xbf16> to vector<256x4xbf16>
    %c4 = arith.constant 4 : index
    %c0_32 = arith.constant 0 : index
    %c0_33 = arith.constant 0 : index
    %32 = vector.load %arg2[%c4, %c0_32, %c0_33] : memref<9x4x4xbf16, #tpu.memory_space<vmem>>, vector<1x4x4xbf16>
    %33 = vector.shape_cast %32 : vector<1x4x4xbf16> to vector<4x4xbf16>
    %cst_34 = arith.constant dense<0.000000e+00> : vector<256x4xf32>
    %34 = tpu.matmul %31, %33, %cst_34 {dimension_numbers = #tpu.dot_dimension_numbers<[1], [0], [0], [1], [0, 0, 1, 1], [], []>} : vector<256x4xbf16>, vector<4x4xbf16>, vector<256x4xf32> -> vector<256x4xf32>
    %35 = arith.addf %28, %34 : vector<256x4xf32>
    %c0_35 = arith.constant 0 : index
    %c1_36 = arith.constant 1 : index
    %c2_37 = arith.constant 2 : index
    %c0_38 = arith.constant 0 : index
    %36 = vector.load %arg1[%c0_35, %c1_36, %c2_37, %c0_38] : memref<1x18x18x4xbf16, #tpu.memory_space<vmem>>, vector<1x16x16x4xbf16>
    %37 = vector.shape_cast %36 : vector<1x16x16x4xbf16> to vector<16x16x4xbf16>
    %38 = vector.shape_cast %37 : vector<16x16x4xbf16> to vector<256x4xbf16>
    %c5 = arith.constant 5 : index
    %c0_39 = arith.constant 0 : index
    %c0_40 = arith.constant 0 : index
    %39 = vector.load %arg2[%c5, %c0_39, %c0_40] : memref<9x4x4xbf16, #tpu.memory_space<vmem>>, vector<1x4x4xbf16>
    %40 = vector.shape_cast %39 : vector<1x4x4xbf16> to vector<4x4xbf16>
    %cst_41 = arith.constant dense<0.000000e+00> : vector<256x4xf32>
    %41 = tpu.matmul %38, %40, %cst_41 {dimension_numbers = #tpu.dot_dimension_numbers<[1], [0], [0], [1], [0, 0, 1, 1], [], []>} : vector<256x4xbf16>, vector<4x4xbf16>, vector<256x4xf32> -> vector<256x4xf32>
    %42 = arith.addf %35, %41 : vector<256x4xf32>
    %c0_42 = arith.constant 0 : index
    %c2_43 = arith.constant 2 : index
    %c0_44 = arith.constant 0 : index
    %c0_45 = arith.constant 0 : index
    %43 = vector.load %arg1[%c0_42, %c2_43, %c0_44, %c0_45] : memref<1x18x18x4xbf16, #tpu.memory_space<vmem>>, vector<1x16x16x4xbf16>
    %44 = vector.shape_cast %43 : vector<1x16x16x4xbf16> to vector<16x16x4xbf16>
    %45 = vector.shape_cast %44 : vector<16x16x4xbf16> to vector<256x4xbf16>
    %c6 = arith.constant 6 : index
    %c0_46 = arith.constant 0 : index
    %c0_47 = arith.constant 0 : index
    %46 = vector.load %arg2[%c6, %c0_46, %c0_47] : memref<9x4x4xbf16, #tpu.memory_space<vmem>>, vector<1x4x4xbf16>
    %47 = vector.shape_cast %46 : vector<1x4x4xbf16> to vector<4x4xbf16>
    %cst_48 = arith.constant dense<0.000000e+00> : vector<256x4xf32>
    %48 = tpu.matmul %45, %47, %cst_48 {dimension_numbers = #tpu.dot_dimension_numbers<[1], [0], [0], [1], [0, 0, 1, 1], [], []>} : vector<256x4xbf16>, vector<4x4xbf16>, vector<256x4xf32> -> vector<256x4xf32>
    %49 = arith.addf %42, %48 : vector<256x4xf32>
    %c0_49 = arith.constant 0 : index
    %c2_50 = arith.constant 2 : index
    %c1_51 = arith.constant 1 : index
    %c0_52 = arith.constant 0 : index
    %50 = vector.load %arg1[%c0_49, %c2_50, %c1_51, %c0_52] : memref<1x18x18x4xbf16, #tpu.memory_space<vmem>>, vector<1x16x16x4xbf16>
    %51 = vector.shape_cast %50 : vector<1x16x16x4xbf16> to vector<16x16x4xbf16>
    %52 = vector.shape_cast %51 : vector<16x16x4xbf16> to vector<256x4xbf16>
    %c7 = arith.constant 7 : index
    %c0_53 = arith.constant 0 : index
    %c0_54 = arith.constant 0 : index
    %53 = vector.load %arg2[%c7, %c0_53, %c0_54] : memref<9x4x4xbf16, #tpu.memory_space<vmem>>, vector<1x4x4xbf16>
    %54 = vector.shape_cast %53 : vector<1x4x4xbf16> to vector<4x4xbf16>
    %cst_55 = arith.constant dense<0.000000e+00> : vector<256x4xf32>
    %55 = tpu.matmul %52, %54, %cst_55 {dimension_numbers = #tpu.dot_dimension_numbers<[1], [0], [0], [1], [0, 0, 1, 1], [], []>} : vector<256x4xbf16>, vector<4x4xbf16>, vector<256x4xf32> -> vector<256x4xf32>
    %56 = arith.addf %49, %55 : vector<256x4xf32>
    %c0_56 = arith.constant 0 : index
    %c2_57 = arith.constant 2 : index
    %c2_58 = arith.constant 2 : index
    %c0_59 = arith.constant 0 : index
    %57 = vector.load %arg1[%c0_56, %c2_57, %c2_58, %c0_59] : memref<1x18x18x4xbf16, #tpu.memory_space<vmem>>, vector<1x16x16x4xbf16>
    %58 = vector.shape_cast %57 : vector<1x16x16x4xbf16> to vector<16x16x4xbf16>
    %59 = vector.shape_cast %58 : vector<16x16x4xbf16> to vector<256x4xbf16>
    %c8 = arith.constant 8 : index
    %c0_60 = arith.constant 0 : index
    %c0_61 = arith.constant 0 : index
    %60 = vector.load %arg2[%c8, %c0_60, %c0_61] : memref<9x4x4xbf16, #tpu.memory_space<vmem>>, vector<1x4x4xbf16>
    %61 = vector.shape_cast %60 : vector<1x4x4xbf16> to vector<4x4xbf16>
    %cst_62 = arith.constant dense<0.000000e+00> : vector<256x4xf32>
    %62 = tpu.matmul %59, %61, %cst_62 {dimension_numbers = #tpu.dot_dimension_numbers<[1], [0], [0], [1], [0, 0, 1, 1], [], []>} : vector<256x4xbf16>, vector<4x4xbf16>, vector<256x4xf32> -> vector<256x4xf32>
    %63 = arith.addf %56, %62 : vector<256x4xf32>
    %c0_63 = arith.constant 0 : index
    %c0_64 = arith.constant 0 : index
    %64 = vector.load %arg3[%c0_63, %c0_64] : memref<1x4xf32, #tpu.memory_space<vmem>>, vector<1x4xf32>
    %65 = vector.broadcast %64 : vector<1x4xf32> to vector<256x4xf32>
    %66 = arith.addf %63, %65 : vector<256x4xf32>
    %cst_65 = arith.constant 0.000000e+00 : f32
    %67 = vector.broadcast %cst_65 : f32 to vector<256x4xf32>
    %68 = arith.maximumf %66, %67 : vector<256x4xf32>
    %69 = vector.shape_cast %68 : vector<256x4xf32> to vector<16x16x4xf32>
    %70 = arith.truncf %69 : vector<16x16x4xf32> to vector<16x16x4xbf16>
    %c0_66 = arith.constant 0 : index
    %c0_67 = arith.constant 0 : index
    %c0_68 = arith.constant 0 : index
    %c0_69 = arith.constant 0 : index
    %71 = vector.load %arg4[%c0_66, %c0_67, %c0_68, %c0_69] : memref<1x16x16x4xbf16, #tpu.memory_space<vmem>>, vector<1x16x16x4xbf16>
    %72 = vector.shape_cast %71 : vector<1x16x16x4xbf16> to vector<16x16x4xbf16>
    %73 = vector.shape_cast %70 : vector<16x16x4xbf16> to vector<1x16x16x4xbf16>
    tpu.vector_store %arg4[%c0_66, %c0_67, %c0_68, %c0_69], %73 {strides = array<i32>} : memref<1x16x16x4xbf16, #tpu.memory_space<vmem>>, vector<1x16x16x4xbf16>,
    return
  }
  func.func @transform_0(%arg0: i32) -> (i32, i32, i32, i32) {
    %c0_i32 = arith.constant 0 : i32
    %c0_i32_0 = arith.constant 0 : i32
    %c0_i32_1 = arith.constant 0 : i32
    %c0_i32_2 = arith.constant 0 : i32
    return %arg0, %c0_i32, %c0_i32_0, %c0_i32_1 : i32, i32, i32, i32
  }
  func.func @transform_1(%arg0: i32) -> (i32, i32, i32) {
    %c0_i32 = arith.constant 0 : i32
    %c0_i32_0 = arith.constant 0 : i32
    %c0_i32_1 = arith.constant 0 : i32
    %c0_i32_2 = arith.constant 0 : i32
    return %c0_i32, %c0_i32_0, %c0_i32_1 : i32, i32, i32
  }
  func.func @transform_2(%arg0: i32) -> (i32, i32) {
    %c0_i32 = arith.constant 0 : i32
    %c0_i32_0 = arith.constant 0 : i32
    %c0_i32_1 = arith.constant 0 : i32
    return %c0_i32, %c0_i32_0 : i32, i32
  }
  func.func @transform_3(%arg0: i32) -> (i32, i32, i32, i32) {
    %c0_i32 = arith.constant 0 : i32
    %c0_i32_0 = arith.constant 0 : i32
    %c0_i32_1 = arith.constant 0 : i32
    %c0_i32_2 = arith.constant 0 : i32
    return %arg0, %c0_i32, %c0_i32_0, %c0_i32_1 : i32, i32, i32, i32
  }
}

module attributes {stable_mosaic.version = 11 : i64} {
  func.func @_conv1x1_skip_kernel(%arg0: i32, %arg1: i32, %arg2: memref<1x16x16x4xbf16, #tpu.memory_space<vmem>>, %arg3: memref<4x16xbf16, #tpu.memory_space<vmem>>, %arg4: memref<1x16xf32, #tpu.memory_space<vmem>>, %arg5: memref<1x16x16x16xbf16, #tpu.memory_space<vmem>>, %arg6: memref<1x16x16x16xf32, #tpu.memory_space<vmem>>) attributes {dimension_semantics = [#tpu.dimension_semantics<parallel>, #tpu.dimension_semantics<parallel>], iteration_bounds = array<i64: 2, 1>, scalar_prefetch = 0 : i64, scratch_operands = 0 : i64, tpu.core_type = #tpu.core_type<tc>, window_params = [{transform_indices = @transform_0, window_bounds = array<i64: 1, 16, 16, 4>}, {pipeline_mode = #tpu.pipeline_mode<synchronous>, transform_indices = @transform_1, window_bounds = array<i64: 4, 16>}, {pipeline_mode = #tpu.pipeline_mode<synchronous>, transform_indices = @transform_2, window_bounds = array<i64: 1, 16>}, {transform_indices = @transform_3, window_bounds = array<i64: 1, 16, 16, 16>}, {transform_indices = @transform_4, window_bounds = array<i64: 1, 16, 16, 16>}]} {
    %c0 = arith.constant 0 : index
    %c0_0 = arith.constant 0 : index
    %c0_1 = arith.constant 0 : index
    %c0_2 = arith.constant 0 : index
    %0 = vector.load %arg2[%c0, %c0_0, %c0_1, %c0_2] : memref<1x16x16x4xbf16, #tpu.memory_space<vmem>>, vector<1x16x16x4xbf16>
    %1 = vector.shape_cast %0 : vector<1x16x16x4xbf16> to vector<16x16x4xbf16>
    %2 = vector.shape_cast %1 : vector<16x16x4xbf16> to vector<256x4xbf16>
    %c0_3 = arith.constant 0 : index
    %c0_4 = arith.constant 0 : index
    %3 = vector.load %arg3[%c0_3, %c0_4] : memref<4x16xbf16, #tpu.memory_space<vmem>>, vector<4x16xbf16>
    %cst = arith.constant dense<0.000000e+00> : vector<256x16xf32>
    %4 = tpu.matmul %2, %3, %cst {dimension_numbers = #tpu.dot_dimension_numbers<[1], [0], [0], [1], [0, 0, 1, 1], [], []>} : vector<256x4xbf16>, vector<4x16xbf16>, vector<256x16xf32> -> vector<256x16xf32>
    %c0_5 = arith.constant 0 : index
    %c0_6 = arith.constant 0 : index
    %5 = vector.load %arg4[%c0_5, %c0_6] : memref<1x16xf32, #tpu.memory_space<vmem>>, vector<1x16xf32>
    %6 = vector.broadcast %5 : vector<1x16xf32> to vector<256x16xf32>
    %7 = arith.addf %4, %6 : vector<256x16xf32>
    %cst_7 = arith.constant 0.000000e+00 : f32
    %8 = vector.broadcast %cst_7 : f32 to vector<256x16xf32>
    %9 = arith.maximumf %7, %8 : vector<256x16xf32>
    %c0_8 = arith.constant 0 : index
    %c0_9 = arith.constant 0 : index
    %c0_10 = arith.constant 0 : index
    %c0_11 = arith.constant 0 : index
    %10 = vector.load %arg5[%c0_8, %c0_9, %c0_10, %c0_11] : memref<1x16x16x16xbf16, #tpu.memory_space<vmem>>, vector<1x16x16x16xbf16>
    %11 = vector.shape_cast %10 : vector<1x16x16x16xbf16> to vector<16x16x16xbf16>
    %12 = vector.shape_cast %11 : vector<16x16x16xbf16> to vector<256x16xbf16>
    %13 = arith.extf %12 : vector<256x16xbf16> to vector<256x16xf32>
    %14 = arith.addf %9, %13 : vector<256x16xf32>
    %15 = vector.shape_cast %14 : vector<256x16xf32> to vector<16x16x16xf32>
    %c0_12 = arith.constant 0 : index
    %c0_13 = arith.constant 0 : index
    %c0_14 = arith.constant 0 : index
    %c0_15 = arith.constant 0 : index
    %16 = vector.load %arg6[%c0_12, %c0_13, %c0_14, %c0_15] : memref<1x16x16x16xf32, #tpu.memory_space<vmem>>, vector<1x16x16x16xf32>
    %17 = vector.shape_cast %16 : vector<1x16x16x16xf32> to vector<16x16x16xf32>
    %18 = vector.shape_cast %15 : vector<16x16x16xf32> to vector<1x16x16x16xf32>
    tpu.vector_store %arg6[%c0_12, %c0_13, %c0_14, %c0_15], %18 {strides = array<i32>} : memref<1x16x16x16xf32, #tpu.memory_space<vmem>>, vector<1x16x16x16xf32>,
    return
  }
  func.func @transform_0(%arg0: i32, %arg1: i32) -> (i32, i32, i32, i32) {
    %c0_i32 = arith.constant 0 : i32
    %c0_i32_0 = arith.constant 0 : i32
    %c0_i32_1 = arith.constant 0 : i32
    return %arg0, %arg1, %c0_i32, %c0_i32_0 : i32, i32, i32, i32
  }
  func.func @transform_1(%arg0: i32, %arg1: i32) -> (i32, i32) {
    %c0_i32 = arith.constant 0 : i32
    %c0_i32_0 = arith.constant 0 : i32
    %c0_i32_1 = arith.constant 0 : i32
    return %c0_i32, %c0_i32_0 : i32, i32
  }
  func.func @transform_2(%arg0: i32, %arg1: i32) -> (i32, i32) {
    %c0_i32 = arith.constant 0 : i32
    %c0_i32_0 = arith.constant 0 : i32
    %c0_i32_1 = arith.constant 0 : i32
    return %c0_i32, %c0_i32_0 : i32, i32
  }
  func.func @transform_3(%arg0: i32, %arg1: i32) -> (i32, i32, i32, i32) {
    %c0_i32 = arith.constant 0 : i32
    %c0_i32_0 = arith.constant 0 : i32
    %c0_i32_1 = arith.constant 0 : i32
    return %arg0, %arg1, %c0_i32, %c0_i32_0 : i32, i32, i32, i32
  }
  func.func @transform_4(%arg0: i32, %arg1: i32) -> (i32, i32, i32, i32) {
    %c0_i32 = arith.constant 0 : i32
    %c0_i32_0 = arith.constant 0 : i32
    %c0_i32_1 = arith.constant 0 : i32
    return %arg0, %arg1, %c0_i32, %c0_i32_0 : i32, i32, i32, i32
  }
}

module attributes {stable_mosaic.version = 11 : i64} {
  func.func @_conv1x1_dual_kernel(%arg0: i32, %arg1: i32, %arg2: memref<1x8x1x8x32xf32, #tpu.memory_space<vmem>>, %arg3: memref<32x8xbf16, #tpu.memory_space<vmem>>, %arg4: memref<1x8xf32, #tpu.memory_space<vmem>>, %arg5: memref<32x32xbf16, #tpu.memory_space<vmem>>, %arg6: memref<1x32xf32, #tpu.memory_space<vmem>>, %arg7: memref<1x8x8x8xbf16, #tpu.memory_space<vmem>>, %arg8: memref<1x8x8x32xbf16, #tpu.memory_space<vmem>>) attributes {dimension_semantics = [#tpu.dimension_semantics<parallel>, #tpu.dimension_semantics<parallel>], iteration_bounds = array<i64: 2, 1>, scalar_prefetch = 0 : i64, scratch_operands = 0 : i64, tpu.core_type = #tpu.core_type<tc>, window_params = [{transform_indices = @transform_0, window_bounds = array<i64: 1, 8, 1, 8, 32>}, {pipeline_mode = #tpu.pipeline_mode<synchronous>, transform_indices = @transform_1, window_bounds = array<i64: 32, 8>}, {pipeline_mode = #tpu.pipeline_mode<synchronous>, transform_indices = @transform_2, window_bounds = array<i64: 1, 8>}, {pipeline_mode = #tpu.pipeline_mode<synchronous>, transform_indices = @transform_3, window_bounds = array<i64: 32, 32>}, {pipeline_mode = #tpu.pipeline_mode<synchronous>, transform_indices = @transform_4, window_bounds = array<i64: 1, 32>}, {transform_indices = @transform_5, window_bounds = array<i64: 1, 8, 8, 8>}, {transform_indices = @transform_6, window_bounds = array<i64: 1, 8, 8, 32>}]} {
    %c0 = arith.constant 0 : index
    %c0_0 = arith.constant 0 : index
    %c0_1 = arith.constant 0 : index
    %c0_2 = arith.constant 0 : index
    %c0_3 = arith.constant 0 : index
    %0 = vector.load %arg2[%c0, %c0_0, %c0_1, %c0_2, %c0_3] : memref<1x8x1x8x32xf32, #tpu.memory_space<vmem>>, vector<1x8x1x8x32xf32>
    %1 = vector.shape_cast %0 : vector<1x8x1x8x32xf32> to vector<8x8x32xf32>
    %2 = arith.truncf %1 : vector<8x8x32xf32> to vector<8x8x32xbf16>
    %3 = vector.shape_cast %2 : vector<8x8x32xbf16> to vector<64x32xbf16>
    %c0_4 = arith.constant 0 : index
    %c0_5 = arith.constant 0 : index
    %4 = vector.load %arg3[%c0_4, %c0_5] : memref<32x8xbf16, #tpu.memory_space<vmem>>, vector<32x8xbf16>
    %cst = arith.constant dense<0.000000e+00> : vector<64x8xf32>
    %5 = tpu.matmul %3, %4, %cst {dimension_numbers = #tpu.dot_dimension_numbers<[1], [0], [0], [1], [0, 0, 1, 1], [], []>} : vector<64x32xbf16>, vector<32x8xbf16>, vector<64x8xf32> -> vector<64x8xf32>
    %c0_6 = arith.constant 0 : index
    %c0_7 = arith.constant 0 : index
    %6 = vector.load %arg4[%c0_6, %c0_7] : memref<1x8xf32, #tpu.memory_space<vmem>>, vector<1x8xf32>
    %7 = vector.broadcast %6 : vector<1x8xf32> to vector<64x8xf32>
    %8 = arith.addf %5, %7 : vector<64x8xf32>
    %cst_8 = arith.constant 0.000000e+00 : f32
    %9 = vector.broadcast %cst_8 : f32 to vector<64x8xf32>
    %10 = arith.maximumf %8, %9 : vector<64x8xf32>
    %11 = vector.shape_cast %10 : vector<64x8xf32> to vector<8x8x8xf32>
    %12 = arith.truncf %11 : vector<8x8x8xf32> to vector<8x8x8xbf16>
    %c0_9 = arith.constant 0 : index
    %c0_10 = arith.constant 0 : index
    %c0_11 = arith.constant 0 : index
    %c0_12 = arith.constant 0 : index
    %13 = vector.load %arg7[%c0_9, %c0_10, %c0_11, %c0_12] : memref<1x8x8x8xbf16, #tpu.memory_space<vmem>>, vector<1x8x8x8xbf16>
    %14 = vector.shape_cast %13 : vector<1x8x8x8xbf16> to vector<8x8x8xbf16>
    %15 = vector.shape_cast %12 : vector<8x8x8xbf16> to vector<1x8x8x8xbf16>
    tpu.vector_store %arg7[%c0_9, %c0_10, %c0_11, %c0_12], %15 {strides = array<i32>} : memref<1x8x8x8xbf16, #tpu.memory_space<vmem>>, vector<1x8x8x8xbf16>,
    %c0_13 = arith.constant 0 : index
    %c0_14 = arith.constant 0 : index
    %16 = vector.load %arg5[%c0_13, %c0_14] : memref<32x32xbf16, #tpu.memory_space<vmem>>, vector<32x32xbf16>
    %cst_15 = arith.constant dense<0.000000e+00> : vector<64x32xf32>
    %17 = tpu.matmul %3, %16, %cst_15 {dimension_numbers = #tpu.dot_dimension_numbers<[1], [0], [0], [1], [0, 0, 1, 1], [], []>} : vector<64x32xbf16>, vector<32x32xbf16>, vector<64x32xf32> -> vector<64x32xf32>
    %c0_16 = arith.constant 0 : index
    %c0_17 = arith.constant 0 : index
    %18 = vector.load %arg6[%c0_16, %c0_17] : memref<1x32xf32, #tpu.memory_space<vmem>>, vector<1x32xf32>
    %19 = vector.broadcast %18 : vector<1x32xf32> to vector<64x32xf32>
    %20 = arith.addf %17, %19 : vector<64x32xf32>
    %21 = vector.shape_cast %20 : vector<64x32xf32> to vector<8x8x32xf32>
    %22 = arith.truncf %21 : vector<8x8x32xf32> to vector<8x8x32xbf16>
    %c0_18 = arith.constant 0 : index
    %c0_19 = arith.constant 0 : index
    %c0_20 = arith.constant 0 : index
    %c0_21 = arith.constant 0 : index
    %23 = vector.load %arg8[%c0_18, %c0_19, %c0_20, %c0_21] : memref<1x8x8x32xbf16, #tpu.memory_space<vmem>>, vector<1x8x8x32xbf16>
    %24 = vector.shape_cast %23 : vector<1x8x8x32xbf16> to vector<8x8x32xbf16>
    %25 = vector.shape_cast %22 : vector<8x8x32xbf16> to vector<1x8x8x32xbf16>
    tpu.vector_store %arg8[%c0_18, %c0_19, %c0_20, %c0_21], %25 {strides = array<i32>} : memref<1x8x8x32xbf16, #tpu.memory_space<vmem>>, vector<1x8x8x32xbf16>,
    return
  }
  func.func @transform_0(%arg0: i32, %arg1: i32) -> (i32, i32, i32, i32, i32) {
    %c0_i32 = arith.constant 0 : i32
    %c0_i32_0 = arith.constant 0 : i32
    %c0_i32_1 = arith.constant 0 : i32
    %c0_i32_2 = arith.constant 0 : i32
    return %arg0, %arg1, %c0_i32, %c0_i32_0, %c0_i32_1 : i32, i32, i32, i32, i32
  }
  func.func @transform_1(%arg0: i32, %arg1: i32) -> (i32, i32) {
    %c0_i32 = arith.constant 0 : i32
    %c0_i32_0 = arith.constant 0 : i32
    %c0_i32_1 = arith.constant 0 : i32
    return %c0_i32, %c0_i32_0 : i32, i32
  }
  func.func @transform_2(%arg0: i32, %arg1: i32) -> (i32, i32) {
    %c0_i32 = arith.constant 0 : i32
    %c0_i32_0 = arith.constant 0 : i32
    %c0_i32_1 = arith.constant 0 : i32
    return %c0_i32, %c0_i32_0 : i32, i32
  }
  func.func @transform_3(%arg0: i32, %arg1: i32) -> (i32, i32) {
    %c0_i32 = arith.constant 0 : i32
    %c0_i32_0 = arith.constant 0 : i32
    %c0_i32_1 = arith.constant 0 : i32
    return %c0_i32, %c0_i32_0 : i32, i32
  }
  func.func @transform_4(%arg0: i32, %arg1: i32) -> (i32, i32) {
    %c0_i32 = arith.constant 0 : i32
    %c0_i32_0 = arith.constant 0 : i32
    %c0_i32_1 = arith.constant 0 : i32
    return %c0_i32, %c0_i32_0 : i32, i32
  }
  func.func @transform_5(%arg0: i32, %arg1: i32) -> (i32, i32, i32, i32) {
    %c0_i32 = arith.constant 0 : i32
    %c0_i32_0 = arith.constant 0 : i32
    %c0_i32_1 = arith.constant 0 : i32
    return %arg0, %arg1, %c0_i32, %c0_i32_0 : i32, i32, i32, i32
  }
  func.func @transform_6(%arg0: i32, %arg1: i32) -> (i32, i32, i32, i32) {
    %c0_i32 = arith.constant 0 : i32
    %c0_i32_0 = arith.constant 0 : i32
    %c0_i32_1 = arith.constant 0 : i32
    return %arg0, %arg1, %c0_i32, %c0_i32_0 : i32, i32, i32, i32
  }
}

module attributes {stable_mosaic.version = 11 : i64} {
  func.func @_conv3x3_kernel(%arg0: i32, %arg1: memref<1x10x10x8xbf16, #tpu.memory_space<vmem>>, %arg2: memref<9x8x8xbf16, #tpu.memory_space<vmem>>, %arg3: memref<1x8xf32, #tpu.memory_space<vmem>>, %arg4: memref<1x8x8x8xbf16, #tpu.memory_space<vmem>>) attributes {dimension_semantics = [#tpu.dimension_semantics<parallel>], iteration_bounds = array<i64: 2>, scalar_prefetch = 0 : i64, scratch_operands = 0 : i64, tpu.core_type = #tpu.core_type<tc>, window_params = [{transform_indices = @transform_0, window_bounds = array<i64: 1, 10, 10, 8>}, {pipeline_mode = #tpu.pipeline_mode<synchronous>, transform_indices = @transform_1, window_bounds = array<i64: 9, 8, 8>}, {pipeline_mode = #tpu.pipeline_mode<synchronous>, transform_indices = @transform_2, window_bounds = array<i64: 1, 8>}, {transform_indices = @transform_3, window_bounds = array<i64: 1, 8, 8, 8>}]} {
    %cst = arith.constant 0.000000e+00 : f32
    %0 = vector.broadcast %cst : f32 to vector<64x8xf32>
    %c0 = arith.constant 0 : index
    %c0_0 = arith.constant 0 : index
    %c0_1 = arith.constant 0 : index
    %c0_2 = arith.constant 0 : index
    %1 = vector.load %arg1[%c0, %c0_0, %c0_1, %c0_2] : memref<1x10x10x8xbf16, #tpu.memory_space<vmem>>, vector<1x8x8x8xbf16>
    %2 = vector.shape_cast %1 : vector<1x8x8x8xbf16> to vector<8x8x8xbf16>
    %3 = vector.shape_cast %2 : vector<8x8x8xbf16> to vector<64x8xbf16>
    %c0_3 = arith.constant 0 : index
    %c0_4 = arith.constant 0 : index
    %c0_5 = arith.constant 0 : index
    %4 = vector.load %arg2[%c0_3, %c0_4, %c0_5] : memref<9x8x8xbf16, #tpu.memory_space<vmem>>, vector<1x8x8xbf16>
    %5 = vector.shape_cast %4 : vector<1x8x8xbf16> to vector<8x8xbf16>
    %cst_6 = arith.constant dense<0.000000e+00> : vector<64x8xf32>
    %6 = tpu.matmul %3, %5, %cst_6 {dimension_numbers = #tpu.dot_dimension_numbers<[1], [0], [0], [1], [0, 0, 1, 1], [], []>} : vector<64x8xbf16>, vector<8x8xbf16>, vector<64x8xf32> -> vector<64x8xf32>
    %7 = arith.addf %0, %6 : vector<64x8xf32>
    %c0_7 = arith.constant 0 : index
    %c0_8 = arith.constant 0 : index
    %c1 = arith.constant 1 : index
    %c0_9 = arith.constant 0 : index
    %8 = vector.load %arg1[%c0_7, %c0_8, %c1, %c0_9] : memref<1x10x10x8xbf16, #tpu.memory_space<vmem>>, vector<1x8x8x8xbf16>
    %9 = vector.shape_cast %8 : vector<1x8x8x8xbf16> to vector<8x8x8xbf16>
    %10 = vector.shape_cast %9 : vector<8x8x8xbf16> to vector<64x8xbf16>
    %c1_10 = arith.constant 1 : index
    %c0_11 = arith.constant 0 : index
    %c0_12 = arith.constant 0 : index
    %11 = vector.load %arg2[%c1_10, %c0_11, %c0_12] : memref<9x8x8xbf16, #tpu.memory_space<vmem>>, vector<1x8x8xbf16>
    %12 = vector.shape_cast %11 : vector<1x8x8xbf16> to vector<8x8xbf16>
    %cst_13 = arith.constant dense<0.000000e+00> : vector<64x8xf32>
    %13 = tpu.matmul %10, %12, %cst_13 {dimension_numbers = #tpu.dot_dimension_numbers<[1], [0], [0], [1], [0, 0, 1, 1], [], []>} : vector<64x8xbf16>, vector<8x8xbf16>, vector<64x8xf32> -> vector<64x8xf32>
    %14 = arith.addf %7, %13 : vector<64x8xf32>
    %c0_14 = arith.constant 0 : index
    %c0_15 = arith.constant 0 : index
    %c2 = arith.constant 2 : index
    %c0_16 = arith.constant 0 : index
    %15 = vector.load %arg1[%c0_14, %c0_15, %c2, %c0_16] : memref<1x10x10x8xbf16, #tpu.memory_space<vmem>>, vector<1x8x8x8xbf16>
    %16 = vector.shape_cast %15 : vector<1x8x8x8xbf16> to vector<8x8x8xbf16>
    %17 = vector.shape_cast %16 : vector<8x8x8xbf16> to vector<64x8xbf16>
    %c2_17 = arith.constant 2 : index
    %c0_18 = arith.constant 0 : index
    %c0_19 = arith.constant 0 : index
    %18 = vector.load %arg2[%c2_17, %c0_18, %c0_19] : memref<9x8x8xbf16, #tpu.memory_space<vmem>>, vector<1x8x8xbf16>
    %19 = vector.shape_cast %18 : vector<1x8x8xbf16> to vector<8x8xbf16>
    %cst_20 = arith.constant dense<0.000000e+00> : vector<64x8xf32>
    %20 = tpu.matmul %17, %19, %cst_20 {dimension_numbers = #tpu.dot_dimension_numbers<[1], [0], [0], [1], [0, 0, 1, 1], [], []>} : vector<64x8xbf16>, vector<8x8xbf16>, vector<64x8xf32> -> vector<64x8xf32>
    %21 = arith.addf %14, %20 : vector<64x8xf32>
    %c0_21 = arith.constant 0 : index
    %c1_22 = arith.constant 1 : index
    %c0_23 = arith.constant 0 : index
    %c0_24 = arith.constant 0 : index
    %22 = vector.load %arg1[%c0_21, %c1_22, %c0_23, %c0_24] : memref<1x10x10x8xbf16, #tpu.memory_space<vmem>>, vector<1x8x8x8xbf16>
    %23 = vector.shape_cast %22 : vector<1x8x8x8xbf16> to vector<8x8x8xbf16>
    %24 = vector.shape_cast %23 : vector<8x8x8xbf16> to vector<64x8xbf16>
    %c3 = arith.constant 3 : index
    %c0_25 = arith.constant 0 : index
    %c0_26 = arith.constant 0 : index
    %25 = vector.load %arg2[%c3, %c0_25, %c0_26] : memref<9x8x8xbf16, #tpu.memory_space<vmem>>, vector<1x8x8xbf16>
    %26 = vector.shape_cast %25 : vector<1x8x8xbf16> to vector<8x8xbf16>
    %cst_27 = arith.constant dense<0.000000e+00> : vector<64x8xf32>
    %27 = tpu.matmul %24, %26, %cst_27 {dimension_numbers = #tpu.dot_dimension_numbers<[1], [0], [0], [1], [0, 0, 1, 1], [], []>} : vector<64x8xbf16>, vector<8x8xbf16>, vector<64x8xf32> -> vector<64x8xf32>
    %28 = arith.addf %21, %27 : vector<64x8xf32>
    %c0_28 = arith.constant 0 : index
    %c1_29 = arith.constant 1 : index
    %c1_30 = arith.constant 1 : index
    %c0_31 = arith.constant 0 : index
    %29 = vector.load %arg1[%c0_28, %c1_29, %c1_30, %c0_31] : memref<1x10x10x8xbf16, #tpu.memory_space<vmem>>, vector<1x8x8x8xbf16>
    %30 = vector.shape_cast %29 : vector<1x8x8x8xbf16> to vector<8x8x8xbf16>
    %31 = vector.shape_cast %30 : vector<8x8x8xbf16> to vector<64x8xbf16>
    %c4 = arith.constant 4 : index
    %c0_32 = arith.constant 0 : index
    %c0_33 = arith.constant 0 : index
    %32 = vector.load %arg2[%c4, %c0_32, %c0_33] : memref<9x8x8xbf16, #tpu.memory_space<vmem>>, vector<1x8x8xbf16>
    %33 = vector.shape_cast %32 : vector<1x8x8xbf16> to vector<8x8xbf16>
    %cst_34 = arith.constant dense<0.000000e+00> : vector<64x8xf32>
    %34 = tpu.matmul %31, %33, %cst_34 {dimension_numbers = #tpu.dot_dimension_numbers<[1], [0], [0], [1], [0, 0, 1, 1], [], []>} : vector<64x8xbf16>, vector<8x8xbf16>, vector<64x8xf32> -> vector<64x8xf32>
    %35 = arith.addf %28, %34 : vector<64x8xf32>
    %c0_35 = arith.constant 0 : index
    %c1_36 = arith.constant 1 : index
    %c2_37 = arith.constant 2 : index
    %c0_38 = arith.constant 0 : index
    %36 = vector.load %arg1[%c0_35, %c1_36, %c2_37, %c0_38] : memref<1x10x10x8xbf16, #tpu.memory_space<vmem>>, vector<1x8x8x8xbf16>
    %37 = vector.shape_cast %36 : vector<1x8x8x8xbf16> to vector<8x8x8xbf16>
    %38 = vector.shape_cast %37 : vector<8x8x8xbf16> to vector<64x8xbf16>
    %c5 = arith.constant 5 : index
    %c0_39 = arith.constant 0 : index
    %c0_40 = arith.constant 0 : index
    %39 = vector.load %arg2[%c5, %c0_39, %c0_40] : memref<9x8x8xbf16, #tpu.memory_space<vmem>>, vector<1x8x8xbf16>
    %40 = vector.shape_cast %39 : vector<1x8x8xbf16> to vector<8x8xbf16>
    %cst_41 = arith.constant dense<0.000000e+00> : vector<64x8xf32>
    %41 = tpu.matmul %38, %40, %cst_41 {dimension_numbers = #tpu.dot_dimension_numbers<[1], [0], [0], [1], [0, 0, 1, 1], [], []>} : vector<64x8xbf16>, vector<8x8xbf16>, vector<64x8xf32> -> vector<64x8xf32>
    %42 = arith.addf %35, %41 : vector<64x8xf32>
    %c0_42 = arith.constant 0 : index
    %c2_43 = arith.constant 2 : index
    %c0_44 = arith.constant 0 : index
    %c0_45 = arith.constant 0 : index
    %43 = vector.load %arg1[%c0_42, %c2_43, %c0_44, %c0_45] : memref<1x10x10x8xbf16, #tpu.memory_space<vmem>>, vector<1x8x8x8xbf16>
    %44 = vector.shape_cast %43 : vector<1x8x8x8xbf16> to vector<8x8x8xbf16>
    %45 = vector.shape_cast %44 : vector<8x8x8xbf16> to vector<64x8xbf16>
    %c6 = arith.constant 6 : index
    %c0_46 = arith.constant 0 : index
    %c0_47 = arith.constant 0 : index
    %46 = vector.load %arg2[%c6, %c0_46, %c0_47] : memref<9x8x8xbf16, #tpu.memory_space<vmem>>, vector<1x8x8xbf16>
    %47 = vector.shape_cast %46 : vector<1x8x8xbf16> to vector<8x8xbf16>
    %cst_48 = arith.constant dense<0.000000e+00> : vector<64x8xf32>
    %48 = tpu.matmul %45, %47, %cst_48 {dimension_numbers = #tpu.dot_dimension_numbers<[1], [0], [0], [1], [0, 0, 1, 1], [], []>} : vector<64x8xbf16>, vector<8x8xbf16>, vector<64x8xf32> -> vector<64x8xf32>
    %49 = arith.addf %42, %48 : vector<64x8xf32>
    %c0_49 = arith.constant 0 : index
    %c2_50 = arith.constant 2 : index
    %c1_51 = arith.constant 1 : index
    %c0_52 = arith.constant 0 : index
    %50 = vector.load %arg1[%c0_49, %c2_50, %c1_51, %c0_52] : memref<1x10x10x8xbf16, #tpu.memory_space<vmem>>, vector<1x8x8x8xbf16>
    %51 = vector.shape_cast %50 : vector<1x8x8x8xbf16> to vector<8x8x8xbf16>
    %52 = vector.shape_cast %51 : vector<8x8x8xbf16> to vector<64x8xbf16>
    %c7 = arith.constant 7 : index
    %c0_53 = arith.constant 0 : index
    %c0_54 = arith.constant 0 : index
    %53 = vector.load %arg2[%c7, %c0_53, %c0_54] : memref<9x8x8xbf16, #tpu.memory_space<vmem>>, vector<1x8x8xbf16>
    %54 = vector.shape_cast %53 : vector<1x8x8xbf16> to vector<8x8xbf16>
    %cst_55 = arith.constant dense<0.000000e+00> : vector<64x8xf32>
    %55 = tpu.matmul %52, %54, %cst_55 {dimension_numbers = #tpu.dot_dimension_numbers<[1], [0], [0], [1], [0, 0, 1, 1], [], []>} : vector<64x8xbf16>, vector<8x8xbf16>, vector<64x8xf32> -> vector<64x8xf32>
    %56 = arith.addf %49, %55 : vector<64x8xf32>
    %c0_56 = arith.constant 0 : index
    %c2_57 = arith.constant 2 : index
    %c2_58 = arith.constant 2 : index
    %c0_59 = arith.constant 0 : index
    %57 = vector.load %arg1[%c0_56, %c2_57, %c2_58, %c0_59] : memref<1x10x10x8xbf16, #tpu.memory_space<vmem>>, vector<1x8x8x8xbf16>
    %58 = vector.shape_cast %57 : vector<1x8x8x8xbf16> to vector<8x8x8xbf16>
    %59 = vector.shape_cast %58 : vector<8x8x8xbf16> to vector<64x8xbf16>
    %c8 = arith.constant 8 : index
    %c0_60 = arith.constant 0 : index
    %c0_61 = arith.constant 0 : index
    %60 = vector.load %arg2[%c8, %c0_60, %c0_61] : memref<9x8x8xbf16, #tpu.memory_space<vmem>>, vector<1x8x8xbf16>
    %61 = vector.shape_cast %60 : vector<1x8x8xbf16> to vector<8x8xbf16>
    %cst_62 = arith.constant dense<0.000000e+00> : vector<64x8xf32>
    %62 = tpu.matmul %59, %61, %cst_62 {dimension_numbers = #tpu.dot_dimension_numbers<[1], [0], [0], [1], [0, 0, 1, 1], [], []>} : vector<64x8xbf16>, vector<8x8xbf16>, vector<64x8xf32> -> vector<64x8xf32>
    %63 = arith.addf %56, %62 : vector<64x8xf32>
    %c0_63 = arith.constant 0 : index
    %c0_64 = arith.constant 0 : index
    %64 = vector.load %arg3[%c0_63, %c0_64] : memref<1x8xf32, #tpu.memory_space<vmem>>, vector<1x8xf32>
    %65 = vector.broadcast %64 : vector<1x8xf32> to vector<64x8xf32>
    %66 = arith.addf %63, %65 : vector<64x8xf32>
    %cst_65 = arith.constant 0.000000e+00 : f32
    %67 = vector.broadcast %cst_65 : f32 to vector<64x8xf32>
    %68 = arith.maximumf %66, %67 : vector<64x8xf32>
    %69 = vector.shape_cast %68 : vector<64x8xf32> to vector<8x8x8xf32>
    %70 = arith.truncf %69 : vector<8x8x8xf32> to vector<8x8x8xbf16>
    %c0_66 = arith.constant 0 : index
    %c0_67 = arith.constant 0 : index
    %c0_68 = arith.constant 0 : index
    %c0_69 = arith.constant 0 : index
    %71 = vector.load %arg4[%c0_66, %c0_67, %c0_68, %c0_69] : memref<1x8x8x8xbf16, #tpu.memory_space<vmem>>, vector<1x8x8x8xbf16>
    %72 = vector.shape_cast %71 : vector<1x8x8x8xbf16> to vector<8x8x8xbf16>
    %73 = vector.shape_cast %70 : vector<8x8x8xbf16> to vector<1x8x8x8xbf16>
    tpu.vector_store %arg4[%c0_66, %c0_67, %c0_68, %c0_69], %73 {strides = array<i32>} : memref<1x8x8x8xbf16, #tpu.memory_space<vmem>>, vector<1x8x8x8xbf16>,
    return
  }
  func.func @transform_0(%arg0: i32) -> (i32, i32, i32, i32) {
    %c0_i32 = arith.constant 0 : i32
    %c0_i32_0 = arith.constant 0 : i32
    %c0_i32_1 = arith.constant 0 : i32
    %c0_i32_2 = arith.constant 0 : i32
    return %arg0, %c0_i32, %c0_i32_0, %c0_i32_1 : i32, i32, i32, i32
  }
  func.func @transform_1(%arg0: i32) -> (i32, i32, i32) {
    %c0_i32 = arith.constant 0 : i32
    %c0_i32_0 = arith.constant 0 : i32
    %c0_i32_1 = arith.constant 0 : i32
    %c0_i32_2 = arith.constant 0 : i32
    return %c0_i32, %c0_i32_0, %c0_i32_1 : i32, i32, i32
  }
  func.func @transform_2(%arg0: i32) -> (i32, i32) {
    %c0_i32 = arith.constant 0 : i32
    %c0_i32_0 = arith.constant 0 : i32
    %c0_i32_1 = arith.constant 0 : i32
    return %c0_i32, %c0_i32_0 : i32, i32
  }
  func.func @transform_3(%arg0: i32) -> (i32, i32, i32, i32) {
    %c0_i32 = arith.constant 0 : i32
    %c0_i32_0 = arith.constant 0 : i32
    %c0_i32_1 = arith.constant 0 : i32
    %c0_i32_2 = arith.constant 0 : i32
    return %arg0, %c0_i32, %c0_i32_0, %c0_i32_1 : i32, i32, i32, i32
  }
}

module attributes {stable_mosaic.version = 11 : i64} {
  func.func @_conv1x1_skip_kernel(%arg0: i32, %arg1: i32, %arg2: memref<1x8x8x8xbf16, #tpu.memory_space<vmem>>, %arg3: memref<8x32xbf16, #tpu.memory_space<vmem>>, %arg4: memref<1x32xf32, #tpu.memory_space<vmem>>, %arg5: memref<1x8x8x32xbf16, #tpu.memory_space<vmem>>, %arg6: memref<1x8x8x32xf32, #tpu.memory_space<vmem>>) attributes {dimension_semantics = [#tpu.dimension_semantics<parallel>, #tpu.dimension_semantics<parallel>], iteration_bounds = array<i64: 2, 1>, scalar_prefetch = 0 : i64, scratch_operands = 0 : i64, tpu.core_type = #tpu.core_type<tc>, window_params = [{transform_indices = @transform_0, window_bounds = array<i64: 1, 8, 8, 8>}, {pipeline_mode = #tpu.pipeline_mode<synchronous>, transform_indices = @transform_1, window_bounds = array<i64: 8, 32>}, {pipeline_mode = #tpu.pipeline_mode<synchronous>, transform_indices = @transform_2, window_bounds = array<i64: 1, 32>}, {transform_indices = @transform_3, window_bounds = array<i64: 1, 8, 8, 32>}, {transform_indices = @transform_4, window_bounds = array<i64: 1, 8, 8, 32>}]} {
    %c0 = arith.constant 0 : index
    %c0_0 = arith.constant 0 : index
    %c0_1 = arith.constant 0 : index
    %c0_2 = arith.constant 0 : index
    %0 = vector.load %arg2[%c0, %c0_0, %c0_1, %c0_2] : memref<1x8x8x8xbf16, #tpu.memory_space<vmem>>, vector<1x8x8x8xbf16>
    %1 = vector.shape_cast %0 : vector<1x8x8x8xbf16> to vector<8x8x8xbf16>
    %2 = vector.shape_cast %1 : vector<8x8x8xbf16> to vector<64x8xbf16>
    %c0_3 = arith.constant 0 : index
    %c0_4 = arith.constant 0 : index
    %3 = vector.load %arg3[%c0_3, %c0_4] : memref<8x32xbf16, #tpu.memory_space<vmem>>, vector<8x32xbf16>
    %cst = arith.constant dense<0.000000e+00> : vector<64x32xf32>
    %4 = tpu.matmul %2, %3, %cst {dimension_numbers = #tpu.dot_dimension_numbers<[1], [0], [0], [1], [0, 0, 1, 1], [], []>} : vector<64x8xbf16>, vector<8x32xbf16>, vector<64x32xf32> -> vector<64x32xf32>
    %c0_5 = arith.constant 0 : index
    %c0_6 = arith.constant 0 : index
    %5 = vector.load %arg4[%c0_5, %c0_6] : memref<1x32xf32, #tpu.memory_space<vmem>>, vector<1x32xf32>
    %6 = vector.broadcast %5 : vector<1x32xf32> to vector<64x32xf32>
    %7 = arith.addf %4, %6 : vector<64x32xf32>
    %cst_7 = arith.constant 0.000000e+00 : f32
    %8 = vector.broadcast %cst_7 : f32 to vector<64x32xf32>
    %9 = arith.maximumf %7, %8 : vector<64x32xf32>
    %c0_8 = arith.constant 0 : index
    %c0_9 = arith.constant 0 : index
    %c0_10 = arith.constant 0 : index
    %c0_11 = arith.constant 0 : index
    %10 = vector.load %arg5[%c0_8, %c0_9, %c0_10, %c0_11] : memref<1x8x8x32xbf16, #tpu.memory_space<vmem>>, vector<1x8x8x32xbf16>
    %11 = vector.shape_cast %10 : vector<1x8x8x32xbf16> to vector<8x8x32xbf16>
    %12 = vector.shape_cast %11 : vector<8x8x32xbf16> to vector<64x32xbf16>
    %13 = arith.extf %12 : vector<64x32xbf16> to vector<64x32xf32>
    %14 = arith.addf %9, %13 : vector<64x32xf32>
    %15 = vector.shape_cast %14 : vector<64x32xf32> to vector<8x8x32xf32>
    %c0_12 = arith.constant 0 : index
    %c0_13 = arith.constant 0 : index
    %c0_14 = arith.constant 0 : index
    %c0_15 = arith.constant 0 : index
    %16 = vector.load %arg6[%c0_12, %c0_13, %c0_14, %c0_15] : memref<1x8x8x32xf32, #tpu.memory_space<vmem>>, vector<1x8x8x32xf32>
    %17 = vector.shape_cast %16 : vector<1x8x8x32xf32> to vector<8x8x32xf32>
    %18 = vector.shape_cast %15 : vector<8x8x32xf32> to vector<1x8x8x32xf32>
    tpu.vector_store %arg6[%c0_12, %c0_13, %c0_14, %c0_15], %18 {strides = array<i32>} : memref<1x8x8x32xf32, #tpu.memory_space<vmem>>, vector<1x8x8x32xf32>,
    return
  }
  func.func @transform_0(%arg0: i32, %arg1: i32) -> (i32, i32, i32, i32) {
    %c0_i32 = arith.constant 0 : i32
    %c0_i32_0 = arith.constant 0 : i32
    %c0_i32_1 = arith.constant 0 : i32
    return %arg0, %arg1, %c0_i32, %c0_i32_0 : i32, i32, i32, i32
  }
  func.func @transform_1(%arg0: i32, %arg1: i32) -> (i32, i32) {
    %c0_i32 = arith.constant 0 : i32
    %c0_i32_0 = arith.constant 0 : i32
    %c0_i32_1 = arith.constant 0 : i32
    return %c0_i32, %c0_i32_0 : i32, i32
  }
  func.func @transform_2(%arg0: i32, %arg1: i32) -> (i32, i32) {
    %c0_i32 = arith.constant 0 : i32
    %c0_i32_0 = arith.constant 0 : i32
    %c0_i32_1 = arith.constant 0 : i32
    return %c0_i32, %c0_i32_0 : i32, i32
  }
  func.func @transform_3(%arg0: i32, %arg1: i32) -> (i32, i32, i32, i32) {
    %c0_i32 = arith.constant 0 : i32
    %c0_i32_0 = arith.constant 0 : i32
    %c0_i32_1 = arith.constant 0 : i32
    return %arg0, %arg1, %c0_i32, %c0_i32_0 : i32, i32, i32, i32
  }
  func.func @transform_4(%arg0: i32, %arg1: i32) -> (i32, i32, i32, i32) {
    %c0_i32 = arith.constant 0 : i32
    %c0_i32_0 = arith.constant 0 : i32
    %c0_i32_1 = arith.constant 0 : i32
    return %arg0, %arg1, %c0_i32, %c0_i32_0 : i32, i32, i32, i32
  }
}

</mosaic_0001>

<llo_original>
// kernel: model_apply.8
$region0: #{model_apply.8}
  #allocation0 [shape = 'u32[]', space=smem, size = 0x4, offset = 0x4, fixed_abs, tag = 'smem constant byte address 0x4 - core index']
  #allocation1 [shape = 'u32[144,128]{1,0:T(1,128)}', space=vmem, size = 0x12000, scoped, tag = 'internal scratch']
  %s0 = inlined_call_operand.vmem [shape: bf16[2,16,16,4], index: 0, kind: input, shape index: {}]
  %s1 = inlined_call_operand.vmem [shape: bf16[4,16], index: 1, kind: input, shape index: {}]
  %s2 = inlined_call_operand.vmem [shape: f32[1,16], index: 2, kind: input, shape index: {}]
  %s3 = inlined_call_operand.vmem [shape: bf16[2,16,16,16], index: 3, kind: input, shape index: {}]
  %s4 = inlined_call_operand.vmem [shape: f32[2,16,16,16], index: 4, kind: output, shape index: {}]
  %s5 = sld [smem:[#allocation0]]
  $region49: #{model_apply.8} parent=0
    _
  %s7 = ssub.s32 1, %s5
  %s8 = scalar_select 0, %s7, %s5
  loop: start=0, step=1, limit=4
  $region2: #{model_apply.8} parent=0 // loop_pre_header
    _
  $region3: #{model_apply.8} parent=0 // loop_header
    %s10 = sphi 0, %s14
    %p11 = scmp.ge.s32.totalorder %s10, 4
    %s17 = sphi 0, %s29
    %s18 = sphi 0, %s25
    %s19 = sphi 0, %s17
    %s20 = sphi 0, %s18
    %s21 = sphi 0, %s19
    %s22 = sphi 0, %s20
    %s34 = sphi 0, %s36
    %s37 = sphi 0, %s34
    %s38 = sphi 0, %s37
    %s54 = sphi 0, %s38
    %s58 = sphi 0, %s58
    %s60 = sphi 0, %s58
    %s61 = sphi 0, %s60
    %s75 = sphi 0, %s61
    %s79 = sphi 0, %s79
    %s81 = sphi 0, %s79
    %s82 = sphi 0, %s81
    %s96 = sphi 0, %s82
    %s104 = sphi 0, %s106
    %s107 = sphi 0, %s104
    %s108 = sphi 0, %s107
    %s124 = sphi 0, %s108
    %s132 = sphi 0, %s134
    %s135 = sphi 0, %s132
    %s136 = sphi 0, %s135
    %s152 = sphi 0, %s136
  $region4: #{model_apply.8} parent=0 // loop_header_branch
    %13 = sbr.rel (%p11) target = $region8
  $region5: #{model_apply.8} parent=0 // loop_body
    %s15 = ssub.s32 %s10, 1
    %s16 = ssub.s32 %s10, 2
    %s23 = sadd.s32 1, %s18
    %p24 = scmp.ge.s32.totalorder %s23, 1
    %s25 = scalar_select %p24, 0, %s23
    %s26 = sadd.s32 1, %s17
    %s27 = scalar_select %p24, %s26, %s17
    %p28 = scmp.ge.s32.totalorder %s27, 2
    %s29 = scalar_select %p28, 0, %s27
    %s30 = ssub.s32 %s17, %s29
    %s31 = ssub.s32 %s18, %s25
    %s32 = sor.u32 %s30, %s31
    %p33 = scmp.eq.s32.totalorder %s32, 0
    %s35 = sadd.s32 %s34, 1
    %s36 = scalar_select %p33, %s34, %s35
    %p39 = pneg %p33
    %p40 = scmp.eq.s32.totalorder %s10, 1
    %p41 = por %p39, %p40
    %p42 = scmp.ne.s32.totalorder %s34, %s37
    %p43 = scmp.eq.s32.totalorder %s10, 0
    %p44 = por %p42, %p43
    %p45 = scmp.ne.s32.totalorder %s34, %s37
    %p46 = scmp.eq.s32.totalorder %s15, 1
    %p47 = por %p45, %p46
    %p48 = scmp.ne.s32.totalorder %s37, %s38
    %p49 = scmp.eq.s32.totalorder %s15, 0
    %p50 = por %p48, %p49
    %p51 = scmp.ne.s32.totalorder %s37, %s38
    %p52 = scmp.eq.s32.totalorder %s16, 1
    %p53 = por %p51, %p52
    %p55 = scmp.ne.s32.totalorder %s38, %s54
    %p56 = scmp.eq.s32.totalorder %s16, 0
    %p57 = por %p55, %p56
    %s59 = sadd.s32 %s58, 1
    %p62 = scmp.eq.s32.totalorder %s10, 1
    %p63 = scmp.ne.s32.totalorder %s58, %s60
    %p64 = scmp.eq.s32.totalorder %s10, 0
    %p65 = por %p63, %p64
    %p66 = scmp.ne.s32.totalorder %s58, %s60
    %p67 = scmp.eq.s32.totalorder %s15, 1
    %p68 = por %p66, %p67
    %p69 = scmp.ne.s32.totalorder %s60, %s61
    %p70 = scmp.eq.s32.totalorder %s15, 0
    %p71 = por %p69, %p70
    %p72 = scmp.ne.s32.totalorder %s60, %s61
    %p73 = scmp.eq.s32.totalorder %s16, 1
    %p74 = por %p72, %p73
    %p76 = scmp.ne.s32.totalorder %s61, %s75
    %p77 = scmp.eq.s32.totalorder %s16, 0
    %p78 = por %p76, %p77
    %s80 = sadd.s32 %s79, 1
    %p83 = scmp.eq.s32.totalorder %s10, 1
    %p84 = scmp.ne.s32.totalorder %s79, %s81
    %p85 = scmp.eq.s32.totalorder %s10, 0
    %p86 = por %p84, %p85
    %p87 = scmp.ne.s32.totalorder %s79, %s81
    %p88 = scmp.eq.s32.totalorder %s15, 1
    %p89 = por %p87, %p88
    %p90 = scmp.ne.s32.totalorder %s81, %s82
    %p91 = scmp.eq.s32.totalorder %s15, 0
    %p92 = por %p90, %p91
    %p93 = scmp.ne.s32.totalorder %s81, %s82
    %p94 = scmp.eq.s32.totalorder %s16, 1
    %p95 = por %p93, %p94
    %p97 = scmp.ne.s32.totalorder %s82, %s96
    %p98 = scmp.eq.s32.totalorder %s16, 0
    %p99 = por %p97, %p98
    %s100 = ssub.s32 %s17, %s29
    %s101 = ssub.s32 %s18, %s25
    %s102 = sor.u32 %s100, %s101
    %p103 = scmp.eq.s32.totalorder %s102, 0
    %s105 = sadd.s32 %s104, 1
    %s106 = scalar_select %p103, %s104, %s105
    %p109 = pneg %p103
    %p110 = scmp.eq.s32.totalorder %s10, 1
    %p111 = por %p109, %p110
    %p112 = scmp.ne.s32.totalorder %s104, %s107
    %p113 = scmp.eq.s32.totalorder %s10, 0
    %p114 = por %p112, %p113
    %p115 = scmp.ne.s32.totalorder %s104, %s107
    %p116 = scmp.eq.s32.totalorder %s15, 1
    %p117 = por %p115, %p116
    %p118 = scmp.ne.s32.totalorder %s107, %s108
    %p119 = scmp.eq.s32.totalorder %s15, 0
    %p120 = por %p118, %p119
    %p121 = scmp.ne.s32.totalorder %s107, %s108
    %p122 = scmp.eq.s32.totalorder %s16, 1
    %p123 = por %p121, %p122
    %p125 = scmp.ne.s32.totalorder %s108, %s124
    %p126 = scmp.eq.s32.totalorder %s16, 0
    %p127 = por %p125, %p126
    %s128 = ssub.s32 %s17, %s29
    %s129 = ssub.s32 %s18, %s25
    %s130 = sor.u32 %s128, %s129
    %p131 = scmp.eq.s32.totalorder %s130, 0
    %s133 = sadd.s32 %s132, 1
    %s134 = scalar_select %p131, %s132, %s133
    %p137 = pneg %p131
    %p138 = scmp.eq.s32.totalorder %s10, 1
    %p139 = por %p137, %p138
    %p140 = scmp.ne.s32.totalorder %s132, %s135
    %p141 = scmp.eq.s32.totalorder %s10, 0
    %p142 = por %p140, %p141
    %p143 = scmp.ne.s32.totalorder %s132, %s135
    %p144 = scmp.eq.s32.totalorder %s15, 1
    %p145 = por %p143, %p144
    %p146 = scmp.ne.s32.totalorder %s135, %s136
    %p147 = scmp.eq.s32.totalorder %s15, 0
    %p148 = por %p146, %p147
    %p149 = scmp.ne.s32.totalorder %s135, %s136
    %p150 = scmp.eq.s32.totalorder %s16, 1
    %p151 = por %p149, %p150
    %p153 = scmp.ne.s32.totalorder %s136, %s152
    %p154 = scmp.eq.s32.totalorder %s16, 0
    %p155 = por %p153, %p154
    %p156 = scmp.le.s32.totalorder 1, %s10
    %p157 = scmp.lt.s32.totalorder %s10, 3
    %p158 = pnand %p156, %p157
    %p159 = pneg %p158
    // Predicated region
    $region9: #{model_apply.8} parent=5 // pred_check
      _
    $region10: #{model_apply.8} parent=5 // pred_check_branch
      %161 = sbr.rel (%p158) target = $region12
    $region11: #{model_apply.8} parent=5 // pred_region
      %s162 = ssub.s32 %s10, 1
      // Predicated region
      $region13: #{model_apply.8} parent=11 // pred_check
        %p163 = pneg %p71
      $region14: #{model_apply.8} parent=11 // pred_check_branch
        %165 = sbr.rel (%p163) target = $region16
      $region15: #{model_apply.8} parent=11 // pred_region
        _
      $region16: #{model_apply.8} parent=11 // pred_fallthru
        _
      // Predicated region
      $region17: #{model_apply.8} parent=11 // pred_check
        %p166 = pneg %p92
      $region18: #{model_apply.8} parent=11 // pred_check_branch
        %168 = sbr.rel (%p166) target = $region20
      $region19: #{model_apply.8} parent=11 // pred_region
        _
      $region20: #{model_apply.8} parent=11 // pred_fallthru
        _
    $region12: #{model_apply.8} parent=5 // pred_fallthru
      _
    %p169 = scmp.lt.s32.totalorder %s10, 2
    // Predicated region
    $region21: #{model_apply.8} parent=5 // pred_check
      %p170 = pneg %p169
    $region22: #{model_apply.8} parent=5 // pred_check_branch
      %172 = sbr.rel (%p170) target = $region24
    $region23: #{model_apply.8} parent=5 // pred_region
      // Predicated region
      $region25: #{model_apply.8} parent=23 // pred_check
        %p173 = pneg %p44
      $region26: #{model_apply.8} parent=23 // pred_check_branch
        %175 = sbr.rel (%p173) target = $region28
      $region27: #{model_apply.8} parent=23 // pred_region
        %s176 = smul.u32 16, %s18
        %p177 = scmp.lt.s32.totalorder %s17, 1
        %s178 = scalar_select %p177, %s17, 1
        %p179 = scmp.lt.s32.totalorder %s176, 15
        %s180 = scalar_select %p179, %s176, 15
        %s181 = smul.addr %s180, 2
        %s182 = smul.addr %s178, 32
        %s183 = sadd.s32 %s181, %s182
        %s184 = smul.addr %s183, 4
        %s185 = scalar_lea.vmem %s0, %s184
        %s186 = smul.u32 16, %s18
      $region28: #{model_apply.8} parent=23 // pred_fallthru
        _
      // Predicated region
      $region29: #{model_apply.8} parent=23 // pred_check
        %p187 = pneg %p114
      $region30: #{model_apply.8} parent=23 // pred_check_branch
        %189 = sbr.rel (%p187) target = $region32
      $region31: #{model_apply.8} parent=23 // pred_region
        %s190 = smul.u32 16, %s18
        %p191 = scmp.lt.s32.totalorder %s17, 1
        %s192 = scalar_select %p191, %s17, 1
        %p193 = scmp.lt.s32.totalorder %s190, 15
        %s194 = scalar_select %p193, %s190, 15
        %s195 = smul.addr %s194, 2
        %s196 = smul.addr %s192, 32
        %s197 = sadd.s32 %s195, %s196
        %s198 = smul.addr %s197, 4
        %s199 = scalar_lea.vmem %s3, %s198
        %s200 = smul.u32 16, %s18
      $region32: #{model_apply.8} parent=23 // pred_fallthru
        _
    $region24: #{model_apply.8} parent=5 // pred_fallthru
      _
    %p201 = scmp.le.s32.totalorder 1, %s10
    %p202 = scmp.lt.s32.totalorder %s10, 3
    %p203 = pnand %p201, %p202
    %p204 = pneg %p203
    // Predicated region
    $region33: #{model_apply.8} parent=5 // pred_check
      _
    $region34: #{model_apply.8} parent=5 // pred_check_branch
      %206 = sbr.rel (%p203) target = $region36
    $region35: #{model_apply.8} parent=5 // pred_region
      %s207 = ssub.s32 %s10, 1
      %s208 = smul.u32 16, %s20
      %p209 = scmp.lt.s32.totalorder %s19, 1
      %s210 = scalar_select %p209, %s19, 1
      %p211 = scmp.lt.s32.totalorder %s208, 15
      %s212 = scalar_select %p211, %s208, 15
      %s213 = smul.addr %s212, 2
      %s214 = smul.addr %s210, 32
      %s215 = sadd.s32 %s213, %s214
      %s216 = smul.addr %s215, 4
      %s217 = scalar_lea.vmem %s0, %s216
      %p218 = pneg %p50
      %p219 = pneg %p47
      %p220 = pneg %p71
      %p221 = pneg %p68
      %p222 = pneg %p92
      %p223 = pneg %p89
      %s224 = smul.u32 16, %s20
      %p225 = scmp.lt.s32.totalorder %s19, 1
      %s226 = scalar_select %p225, %s19, 1
      %p227 = scmp.lt.s32.totalorder %s224, 15
      %s228 = scalar_select %p227, %s224, 15
      %s229 = smul.addr %s228, 2
      %s230 = smul.addr %s226, 32
      %s231 = sadd.s32 %s229, %s230
      %s232 = smul.addr %s231, 4
      %s233 = scalar_lea.vmem %s3, %s232
      %p234 = pneg %p120
      %p235 = pneg %p117
      %p236 = pneg %p148
      %p237 = pneg %p145
      %s238 = smul.u32 16, %s20
      %p239 = scmp.lt.s32.totalorder %s19, 1
      %s240 = scalar_select %p239, %s19, 1
      %p241 = scmp.lt.s32.totalorder %s238, 15
      %s242 = scalar_select %p241, %s238, 15
      %s243 = smul.addr %s242, 2
      %s244 = smul.addr %s240, 32
      %s245 = sadd.s32 %s243, %s244
      %s246 = smul.addr %s245, 8
      %s247 = scalar_lea.vmem %s4, %s246
      %s248 = smul.u32 16, %s20
      %p249 = scmp.lt.s32.totalorder %s19, 1
      %s250 = scalar_select %p249, %s19, 1
      %p251 = scmp.lt.s32.totalorder %s248, 15
      %s252 = scalar_select %p251, %s248, 15
      %s253 = smul.addr %s252, 2
      %s254 = smul.addr %s250, 32
      %s255 = sadd.s32 %s253, %s254
      %s256 = smul.addr %s255, 4
      %s257 = scalar_lea.vmem %s0, %s256
      %s258 = smul.u32 16, %s20
      %s259 = smul.u32 16, %s20
      %p260 = scmp.lt.s32.totalorder %s19, 1
      %s261 = scalar_select %p260, %s19, 1
      %p262 = scmp.lt.s32.totalorder %s259, 15
      %s263 = scalar_select %p262, %s259, 15
      %s264 = smul.addr %s263, 2
      %s265 = smul.addr %s261, 32
      %s266 = sadd.s32 %s264, %s265
      %s267 = smul.addr %s266, 4
      %s268 = scalar_lea.vmem %s3, %s267
      %s269 = smul.u32 16, %s20
      %s270 = smul.u32 16, %s20
      %p271 = scmp.lt.s32.totalorder %s19, 1
      %s272 = scalar_select %p271, %s19, 1
      %p273 = scmp.lt.s32.totalorder %s270, 15
      %s274 = scalar_select %p273, %s270, 15
      %s275 = smul.addr %s274, 2
      %s276 = smul.addr %s272, 32
      %s277 = sadd.s32 %s275, %s276
      %s278 = smul.addr %s277, 8
      %s279 = scalar_lea.vmem %s4, %s278
      %s280 = smul.u32 16, %s20
      %v282 = vld [vmem:[%s257] sm:$0xf]
      %v283 = vld [vmem:[%s257 + $0x4] sm:$0xf]
      %v284 = vld [vmem:[%s257 + $0x8] sm:$0xf]
      %v285 = vld [vmem:[%s257 + $0xc] sm:$0xf]
      %v286 = vld [vmem:[%s257 + $0x10] sm:$0xf]
      %v287 = vld [vmem:[%s257 + $0x14] sm:$0xf]
      %v288 = vld [vmem:[%s257 + $0x18] sm:$0xf]
      %v289 = vld [vmem:[%s257 + $0x1c] sm:$0xf]
      %v290 = vld [vmem:[%s257 + $0x20] sm:$0xf]
      %v291 = vld [vmem:[%s257 + $0x24] sm:$0xf]
      %v292 = vld [vmem:[%s257 + $0x28] sm:$0xf]
      %v293 = vld [vmem:[%s257 + $0x2c] sm:$0xf]
      %v294 = vld [vmem:[%s257 + $0x30] sm:$0xf]
      %v295 = vld [vmem:[%s257 + $0x34] sm:$0xf]
      %v296 = vld [vmem:[%s257 + $0x38] sm:$0xf]
      %v297 = vld [vmem:[%s257 + $0x3c] sm:$0xf]
      %v298 = vld [vmem:[%s257 + $0x40] sm:$0xf]
      %v299 = vld [vmem:[%s257 + $0x44] sm:$0xf]
      %v300 = vld [vmem:[%s257 + $0x48] sm:$0xf]
      %v301 = vld [vmem:[%s257 + $0x4c] sm:$0xf]
      %v302 = vld [vmem:[%s257 + $0x50] sm:$0xf]
      %v303 = vld [vmem:[%s257 + $0x54] sm:$0xf]
      %v304 = vld [vmem:[%s257 + $0x58] sm:$0xf]
      %v305 = vld [vmem:[%s257 + $0x5c] sm:$0xf]
      %v306 = vld [vmem:[%s257 + $0x60] sm:$0xf]
      %v307 = vld [vmem:[%s257 + $0x64] sm:$0xf]
      %v308 = vld [vmem:[%s257 + $0x68] sm:$0xf]
      %v309 = vld [vmem:[%s257 + $0x6c] sm:$0xf]
      %v310 = vld [vmem:[%s257 + $0x70] sm:$0xf]
      %v311 = vld [vmem:[%s257 + $0x74] sm:$0xf]
      %v312 = vld [vmem:[%s257 + $0x78] sm:$0xf]
      %v313 = vld [vmem:[%s257 + $0x7c] sm:$0xf]
      %v314 = vld [vmem:[%s1] sm:$0x3]
      %v315 = vld [vmem:[%s2] sm:$0x1]
      %v317 = vlaneseq
      %v318 = vshrl.u32 %v317, 7
      %v319 = vsub.s32 0, %v318
      %v320 = vrot.slane %v315, %v319
      %v354 = vunpack.c.l.b16 %v282
      %v355 = vunpack.c.l.b16 %v283
      %v356 = vunpack.c.l.b16 %v284
      %v357 = vunpack.c.l.b16 %v285
      %v358 = vunpack.c.l.b16 %v286
      %v359 = vunpack.c.l.b16 %v287
      %v360 = vunpack.c.l.b16 %v288
      %v361 = vunpack.c.l.b16 %v289
      %v362 = vunpack.c.l.b16 %v290
      %v363 = vunpack.c.l.b16 %v291
      %v364 = vunpack.c.l.b16 %v292
      %v365 = vunpack.c.l.b16 %v293
      %v366 = vunpack.c.l.b16 %v294
      %v367 = vunpack.c.l.b16 %v295
      %v368 = vunpack.c.l.b16 %v296
      %v369 = vunpack.c.l.b16 %v297
      %v370 = vunpack.c.l.b16 %v298
      %v371 = vunpack.c.l.b16 %v299
      %v372 = vunpack.c.l.b16 %v300
      %v373 = vunpack.c.l.b16 %v301
      %v374 = vunpack.c.l.b16 %v302
      %v375 = vunpack.c.l.b16 %v303
      %v376 = vunpack.c.l.b16 %v304
      %v377 = vunpack.c.l.b16 %v305
      %v378 = vunpack.c.l.b16 %v306
      %v379 = vunpack.c.l.b16 %v307
      %v380 = vunpack.c.l.b16 %v308
      %v381 = vunpack.c.l.b16 %v309
      %v382 = vunpack.c.l.b16 %v310
      %v383 = vunpack.c.l.b16 %v311
      %v384 = vunpack.c.l.b16 %v312
      %v385 = vunpack.c.l.b16 %v313
      %v386 = vpack.c.b16 %v355, %v354
      %v387 = vpack.c.b16 %v357, %v356
      %v388 = vpack.c.b16 %v359, %v358
      %v389 = vpack.c.b16 %v361, %v360
      %v390 = vpack.c.b16 %v363, %v362
      %v391 = vpack.c.b16 %v365, %v364
      %v392 = vpack.c.b16 %v367, %v366
      %v393 = vpack.c.b16 %v369, %v368
      %v394 = vpack.c.b16 %v371, %v370
      %v395 = vpack.c.b16 %v373, %v372
      %v396 = vpack.c.b16 %v375, %v374
      %v397 = vpack.c.b16 %v377, %v376
      %v398 = vpack.c.b16 %v379, %v378
      %v399 = vpack.c.b16 %v381, %v380
      %v400 = vpack.c.b16 %v383, %v382
      %v401 = vpack.c.b16 %v385, %v384
      %vm402 = vcmask 31744
      %v404 = vsel %vm402, %v386, 0
      %v407 = vsel %vm402, %v387, 0
      %v410 = vsel %vm402, %v388, 0
      %v413 = vsel %vm402, %v389, 0
      %v416 = vsel %vm402, %v390, 0
      %v419 = vsel %vm402, %v391, 0
      %v422 = vsel %vm402, %v392, 0
      %v425 = vsel %vm402, %v393, 0
      %v428 = vsel %vm402, %v394, 0
      %v431 = vsel %vm402, %v395, 0
      %v434 = vsel %vm402, %v396, 0
      %v437 = vsel %vm402, %v397, 0
      %v440 = vsel %vm402, %v398, 0
      %v443 = vsel %vm402, %v399, 0
      %v446 = vsel %vm402, %v400, 0
      %v449 = vsel %vm402, %v401, 0
      %vm451 = vcmask 1041408
      %v453 = vsel %vm451, %v314, 0
      %455 = vmatprep.subr.bf16.mxu0 0
      %456 = vmatpush1.bf16.msra.mxu0 %v453
      %457 = vmatprep.subr.bf16.mxu0 0
      %458 = vmatpush1.bf16.msra.mxu0 0
      %459 = vmatprep.subr.bf16.mxu0 0
      %460 = vmatpush1.bf16.msra.mxu0 0
      %461 = vmatprep.subr.bf16.mxu0 0
      %462 = vmatpush1.bf16.msra.mxu0 0
      %463 = vmatprep.subr.bf16.mxu0 0
      %464 = vmatpush1.bf16.msra.mxu0 0
      %465 = vmatprep.subr.bf16.mxu0 0
      %466 = vmatpush1.bf16.msra.mxu0 0
      %467 = vmatprep.subr.bf16.mxu0 0
      %468 = vmatpush1.bf16.msra.mxu0 0
      %469 = vmatprep.subr.bf16.mxu0 0
      %470 = vmatpush1.bf16.msra.mxu0 0
      %471 = vmatprep.subr.bf16.mxu0 0
      %472 = vmatpush1.bf16.msra.mxu0 0
      %473 = vmatprep.subr.bf16.mxu0 0
      %474 = vmatpush1.bf16.msra.mxu0 0
      %475 = vmatprep.subr.bf16.mxu0 0
      %476 = vmatpush1.bf16.msra.mxu0 0
      %477 = vmatprep.subr.bf16.mxu0 0
      %478 = vmatpush1.bf16.msra.mxu0 0
      %479 = vmatprep.subr.bf16.mxu0 0
      %480 = vmatpush1.bf16.msra.mxu0 0
      %481 = vmatprep.subr.bf16.mxu0 0
      %482 = vmatpush1.bf16.msra.mxu0 0
      %483 = vmatprep.subr.bf16.mxu0 0
      %484 = vmatpush1.bf16.msra.mxu0 0
      %485 = vmatprep.subr.bf16.mxu0 0
      %486 = vmatpush1.bf16.msra.mxu0 0
      %487 = vmatprep.mubr.bf16.mxu0 0
      %488 = vmatmul.mubr.bf16.gmra.mrb[0].mxu0 %v404
      %v489 = vpop.f32.mrb[0].mxu0
      %v490 = vadd.f32 %v320, %v489
      %v491 = vpop.f32.mrb[0].mxu0
      %v492 = vpop.f32.mrb[0].mxu0
      %v493 = vadd.f32 %v320, %v492
      %v494 = vpop.f32.mrb[0].mxu0
      %495 = vmatprep.mubr.bf16.mxu0 0
      %496 = vmatmul.mubr.bf16.gmra.mrb[0].mxu0 %v407
      %v497 = vpop.f32.mrb[0].mxu0
      %v498 = vadd.f32 %v320, %v497
      %v499 = vpop.f32.mrb[0].mxu0
      %v500 = vpop.f32.mrb[0].mxu0
      %v501 = vadd.f32 %v320, %v500
      %v502 = vpop.f32.mrb[0].mxu0
      %503 = vmatprep.mubr.bf16.mxu0 0
      %504 = vmatmul.mubr.bf16.gmra.mrb[0].mxu0 %v410
      %v505 = vpop.f32.mrb[0].mxu0
      %v506 = vadd.f32 %v320, %v505
      %v507 = vpop.f32.mrb[0].mxu0
      %v508 = vpop.f32.mrb[0].mxu0
      %v509 = vadd.f32 %v320, %v508
      %v510 = vpop.f32.mrb[0].mxu0
      %511 = vmatprep.mubr.bf16.mxu0 0
      %512 = vmatmul.mubr.bf16.gmra.mrb[0].mxu0 %v413
      %v513 = vpop.f32.mrb[0].mxu0
      %v514 = vadd.f32 %v320, %v513
      %v515 = vpop.f32.mrb[0].mxu0
      %v516 = vpop.f32.mrb[0].mxu0
      %v517 = vadd.f32 %v320, %v516
      %v518 = vpop.f32.mrb[0].mxu0
      %519 = vmatprep.mubr.bf16.mxu0 0
      %520 = vmatmul.mubr.bf16.gmra.mrb[0].mxu0 %v416
      %v521 = vpop.f32.mrb[0].mxu0
      %v522 = vadd.f32 %v320, %v521
      %v523 = vpop.f32.mrb[0].mxu0
      %v524 = vpop.f32.mrb[0].mxu0
      %v525 = vadd.f32 %v320, %v524
      %v526 = vpop.f32.mrb[0].mxu0
      %527 = vmatprep.mubr.bf16.mxu0 0
      %528 = vmatmul.mubr.bf16.gmra.mrb[0].mxu0 %v419
      %v529 = vpop.f32.mrb[0].mxu0
      %v530 = vadd.f32 %v320, %v529
      %v531 = vpop.f32.mrb[0].mxu0
      %v532 = vpop.f32.mrb[0].mxu0
      %v533 = vadd.f32 %v320, %v532
      %v534 = vpop.f32.mrb[0].mxu0
      %535 = vmatprep.mubr.bf16.mxu0 0
      %536 = vmatmul.mubr.bf16.gmra.mrb[0].mxu0 %v422
      %v537 = vpop.f32.mrb[0].mxu0
      %v538 = vadd.f32 %v320, %v537
      %v539 = vpop.f32.mrb[0].mxu0
      %v540 = vpop.f32.mrb[0].mxu0
      %v541 = vadd.f32 %v320, %v540
      %v542 = vpop.f32.mrb[0].mxu0
      %543 = vmatprep.mubr.bf16.mxu0 0
      %544 = vmatmul.mubr.bf16.gmra.mrb[0].mxu0 %v425
      %v545 = vpop.f32.mrb[0].mxu0
      %v546 = vadd.f32 %v320, %v545
      %v547 = vpop.f32.mrb[0].mxu0
      %v548 = vpop.f32.mrb[0].mxu0
      %v549 = vadd.f32 %v320, %v548
      %v550 = vpop.f32.mrb[0].mxu0
      %551 = vmatprep.mubr.bf16.mxu0 0
      %552 = vmatmul.mubr.bf16.gmra.mrb[0].mxu0 %v428
      %v553 = vpop.f32.mrb[0].mxu0
      %v554 = vadd.f32 %v320, %v553
      %v555 = vpop.f32.mrb[0].mxu0
      %v556 = vpop.f32.mrb[0].mxu0
      %v557 = vadd.f32 %v320, %v556
      %v558 = vpop.f32.mrb[0].mxu0
      %559 = vmatprep.mubr.bf16.mxu0 0
      %560 = vmatmul.mubr.bf16.gmra.mrb[0].mxu0 %v431
      %v561 = vpop.f32.mrb[0].mxu0
      %v562 = vadd.f32 %v320, %v561
      %v563 = vpop.f32.mrb[0].mxu0
      %v564 = vpop.f32.mrb[0].mxu0
      %v565 = vadd.f32 %v320, %v564
      %v566 = vpop.f32.mrb[0].mxu0
      %567 = vmatprep.mubr.bf16.mxu0 0
      %568 = vmatmul.mubr.bf16.gmra.mrb[0].mxu0 %v434
      %v569 = vpop.f32.mrb[0].mxu0
      %v570 = vadd.f32 %v320, %v569
      %v571 = vpop.f32.mrb[0].mxu0
      %v572 = vpop.f32.mrb[0].mxu0
      %v573 = vadd.f32 %v320, %v572
      %v574 = vpop.f32.mrb[0].mxu0
      %575 = vmatprep.mubr.bf16.mxu0 0
      %576 = vmatmul.mubr.bf16.gmra.mrb[0].mxu0 %v437
      %v577 = vpop.f32.mrb[0].mxu0
      %v578 = vadd.f32 %v320, %v577
      %v579 = vpop.f32.mrb[0].mxu0
      %v580 = vpop.f32.mrb[0].mxu0
      %v581 = vadd.f32 %v320, %v580
      %v582 = vpop.f32.mrb[0].mxu0
      %583 = vmatprep.mubr.bf16.mxu0 0
      %584 = vmatmul.mubr.bf16.gmra.mrb[0].mxu0 %v440
      %v585 = vpop.f32.mrb[0].mxu0
      %v586 = vadd.f32 %v320, %v585
      %v587 = vpop.f32.mrb[0].mxu0
      %v588 = vpop.f32.mrb[0].mxu0
      %v589 = vadd.f32 %v320, %v588
      %v590 = vpop.f32.mrb[0].mxu0
      %591 = vmatprep.mubr.bf16.mxu0 0
      %592 = vmatmul.mubr.bf16.gmra.mrb[0].mxu0 %v443
      %v593 = vpop.f32.mrb[0].mxu0
      %v594 = vadd.f32 %v320, %v593
      %v595 = vpop.f32.mrb[0].mxu0
      %v596 = vpop.f32.mrb[0].mxu0
      %v597 = vadd.f32 %v320, %v596
      %v598 = vpop.f32.mrb[0].mxu0
      %599 = vmatprep.mubr.bf16.mxu0 0
      %600 = vmatmul.mubr.bf16.gmra.mrb[0].mxu0 %v446
      %v601 = vpop.f32.mrb[0].mxu0
      %v602 = vadd.f32 %v320, %v601
      %v603 = vpop.f32.mrb[0].mxu0
      %v604 = vpop.f32.mrb[0].mxu0
      %v605 = vadd.f32 %v320, %v604
      %v606 = vpop.f32.mrb[0].mxu0
      %607 = vmatprep.mubr.bf16.mxu0 0
      %608 = vmatmul.mubr.bf16.gmra.mrb[0].mxu0 %v449
      %v609 = vpop.f32.mrb[0].mxu0
      %v610 = vadd.f32 %v320, %v609
      %v611 = vpop.f32.mrb[0].mxu0
      %v612 = vpop.f32.mrb[0].mxu0
      %v613 = vadd.f32 %v320, %v612
      %v614 = vpop.f32.mrb[0].mxu0
      %615 = vdwg.mxu0
      %v616 = vmax.f32 %v490, 0.0
      %v617 = vmax.f32 %v493, 0.0
      %v618 = vmax.f32 %v498, 0.0
      %v619 = vmax.f32 %v501, 0.0
      %v620 = vmax.f32 %v506, 0.0
      %v621 = vmax.f32 %v509, 0.0
      %v622 = vmax.f32 %v514, 0.0
      %v623 = vmax.f32 %v517, 0.0
      %v624 = vmax.f32 %v522, 0.0
      %v625 = vmax.f32 %v525, 0.0
      %v626 = vmax.f32 %v530, 0.0
      %v627 = vmax.f32 %v533, 0.0
      %v628 = vmax.f32 %v538, 0.0
      %v629 = vmax.f32 %v541, 0.0
      %v630 = vmax.f32 %v546, 0.0
      %v631 = vmax.f32 %v549, 0.0
      %v632 = vmax.f32 %v554, 0.0
      %v633 = vmax.f32 %v557, 0.0
      %v634 = vmax.f32 %v562, 0.0
      %v635 = vmax.f32 %v565, 0.0
      %v636 = vmax.f32 %v570, 0.0
      %v637 = vmax.f32 %v573, 0.0
      %v638 = vmax.f32 %v578, 0.0
      %v639 = vmax.f32 %v581, 0.0
      %v640 = vmax.f32 %v586, 0.0
      %v641 = vmax.f32 %v589, 0.0
      %v642 = vmax.f32 %v594, 0.0
      %v643 = vmax.f32 %v597, 0.0
      %v644 = vmax.f32 %v602, 0.0
      %v645 = vmax.f32 %v605, 0.0
      %v646 = vmax.f32 %v610, 0.0
      %v647 = vmax.f32 %v613, 0.0
      %v648 = vld [vmem:[%s268] sm:$0xf]
      %v649 = vld [vmem:[%s268 + $0x4] sm:$0xf]
      %v650 = vld [vmem:[%s268 + $0x8] sm:$0xf]
      %v651 = vld [vmem:[%s268 + $0xc] sm:$0xf]
      %v652 = vld [vmem:[%s268 + $0x10] sm:$0xf]
      %v653 = vld [vmem:[%s268 + $0x14] sm:$0xf]
      %v654 = vld [vmem:[%s268 + $0x18] sm:$0xf]
      %v655 = vld [vmem:[%s268 + $0x1c] sm:$0xf]
      %v656 = vld [vmem:[%s268 + $0x20] sm:$0xf]
      %v657 = vld [vmem:[%s268 + $0x24] sm:$0xf]
      %v658 = vld [vmem:[%s268 + $0x28] sm:$0xf]
      %v659 = vld [vmem:[%s268 + $0x2c] sm:$0xf]
      %v660 = vld [vmem:[%s268 + $0x30] sm:$0xf]
      %v661 = vld [vmem:[%s268 + $0x34] sm:$0xf]
      %v662 = vld [vmem:[%s268 + $0x38] sm:$0xf]
      %v663 = vld [vmem:[%s268 + $0x3c] sm:$0xf]
      %v664 = vld [vmem:[%s268 + $0x40] sm:$0xf]
      %v665 = vld [vmem:[%s268 + $0x44] sm:$0xf]
      %v666 = vld [vmem:[%s268 + $0x48] sm:$0xf]
      %v667 = vld [vmem:[%s268 + $0x4c] sm:$0xf]
      %v668 = vld [vmem:[%s268 + $0x50] sm:$0xf]
      %v669 = vld [vmem:[%s268 + $0x54] sm:$0xf]
      %v670 = vld [vmem:[%s268 + $0x58] sm:$0xf]
      %v671 = vld [vmem:[%s268 + $0x5c] sm:$0xf]
      %v672 = vld [vmem:[%s268 + $0x60] sm:$0xf]
      %v673 = vld [vmem:[%s268 + $0x64] sm:$0xf]
      %v674 = vld [vmem:[%s268 + $0x68] sm:$0xf]
      %v675 = vld [vmem:[%s268 + $0x6c] sm:$0xf]
      %v676 = vld [vmem:[%s268 + $0x70] sm:$0xf]
      %v677 = vld [vmem:[%s268 + $0x74] sm:$0xf]
      %v678 = vld [vmem:[%s268 + $0x78] sm:$0xf]
      %v679 = vld [vmem:[%s268 + $0x7c] sm:$0xf]
      %v680 = vunpack.c.l.bf16 %v648
      %v681 = vunpack.c.l.bf16 %v649
      %v682 = vunpack.c.l.bf16 %v650
      %v683 = vunpack.c.l.bf16 %v651
      %v684 = vunpack.c.l.bf16 %v652
      %v685 = vunpack.c.l.bf16 %v653
      %v686 = vunpack.c.l.bf16 %v654
      %v687 = vunpack.c.l.bf16 %v655
      %v688 = vunpack.c.l.bf16 %v656
      %v689 = vunpack.c.l.bf16 %v657
      %v690 = vunpack.c.l.bf16 %v658
      %v691 = vunpack.c.l.bf16 %v659
      %v692 = vunpack.c.l.bf16 %v660
      %v693 = vunpack.c.l.bf16 %v661
      %v694 = vunpack.c.l.bf16 %v662
      %v695 = vunpack.c.l.bf16 %v663
      %v696 = vunpack.c.l.bf16 %v664
      %v697 = vunpack.c.l.bf16 %v665
      %v698 = vunpack.c.l.bf16 %v666
      %v699 = vunpack.c.l.bf16 %v667
      %v700 = vunpack.c.l.bf16 %v668
      %v701 = vunpack.c.l.bf16 %v669
      %v702 = vunpack.c.l.bf16 %v670
      %v703 = vunpack.c.l.bf16 %v671
      %v704 = vunpack.c.l.bf16 %v672
      %v705 = vunpack.c.l.bf16 %v673
      %v706 = vunpack.c.l.bf16 %v674
      %v707 = vunpack.c.l.bf16 %v675
      %v708 = vunpack.c.l.bf16 %v676
      %v709 = vunpack.c.l.bf16 %v677
      %v710 = vunpack.c.l.bf16 %v678
      %v711 = vunpack.c.l.bf16 %v679
      %v712 = vadd.f32 %v616, %v680
      %v713 = vadd.f32 %v617, %v681
      %v714 = vadd.f32 %v618, %v682
      %v715 = vadd.f32 %v619, %v683
      %v716 = vadd.f32 %v620, %v684
      %v717 = vadd.f32 %v621, %v685
      %v718 = vadd.f32 %v622, %v686
      %v719 = vadd.f32 %v623, %v687
      %v720 = vadd.f32 %v624, %v688
      %v721 = vadd.f32 %v625, %v689
      %v722 = vadd.f32 %v626, %v690
      %v723 = vadd.f32 %v627, %v691
      %v724 = vadd.f32 %v628, %v692
      %v725 = vadd.f32 %v629, %v693
      %v726 = vadd.f32 %v630, %v694
      %v727 = vadd.f32 %v631, %v695
      %v728 = vadd.f32 %v632, %v696
      %v729 = vadd.f32 %v633, %v697
      %v730 = vadd.f32 %v634, %v698
      %v731 = vadd.f32 %v635, %v699
      %v732 = vadd.f32 %v636, %v700
      %v733 = vadd.f32 %v637, %v701
      %v734 = vadd.f32 %v638, %v702
      %v735 = vadd.f32 %v639, %v703
      %v736 = vadd.f32 %v640, %v704
      %v737 = vadd.f32 %v641, %v705
      %v738 = vadd.f32 %v642, %v706
      %v739 = vadd.f32 %v643, %v707
      %v740 = vadd.f32 %v644, %v708
      %v741 = vadd.f32 %v645, %v709
      %v742 = vadd.f32 %v646, %v710
      %v743 = vadd.f32 %v647, %v711
      %vm744 = vcmask 130048
      %745 = vst.msk [vmem:[%s279] sm:$0xff] %vm744, %v712
      %746 = vst.msk [vmem:[%s279 + $0x8] sm:$0xff] %vm744, %v713
      %747 = vst.msk [vmem:[%s279 + $0x10] sm:$0xff] %vm744, %v714
      %748 = vst.msk [vmem:[%s279 + $0x18] sm:$0xff] %vm744, %v715
      %749 = vst.msk [vmem:[%s279 + $0x20] sm:$0xff] %vm744, %v716
      %750 = vst.msk [vmem:[%s279 + $0x28] sm:$0xff] %vm744, %v717
      %751 = vst.msk [vmem:[%s279 + $0x30] sm:$0xff] %vm744, %v718
      %752 = vst.msk [vmem:[%s279 + $0x38] sm:$0xff] %vm744, %v719
      %753 = vst.msk [vmem:[%s279 + $0x40] sm:$0xff] %vm744, %v720
      %754 = vst.msk [vmem:[%s279 + $0x48] sm:$0xff] %vm744, %v721
      %755 = vst.msk [vmem:[%s279 + $0x50] sm:$0xff] %vm744, %v722
      %756 = vst.msk [vmem:[%s279 + $0x58] sm:$0xff] %vm744, %v723
      %757 = vst.msk [vmem:[%s279 + $0x60] sm:$0xff] %vm744, %v724
      %758 = vst.msk [vmem:[%s279 + $0x68] sm:$0xff] %vm744, %v725
      %759 = vst.msk [vmem:[%s279 + $0x70] sm:$0xff] %vm744, %v726
      %760 = vst.msk [vmem:[%s279 + $0x78] sm:$0xff] %vm744, %v727
      %761 = vst.msk [vmem:[%s279 + $0x80] sm:$0xff] %vm744, %v728
      %762 = vst.msk [vmem:[%s279 + $0x88] sm:$0xff] %vm744, %v729
      %763 = vst.msk [vmem:[%s279 + $0x90] sm:$0xff] %vm744, %v730
      %764 = vst.msk [vmem:[%s279 + $0x98] sm:$0xff] %vm744, %v731
      %765 = vst.msk [vmem:[%s279 + $0xa0] sm:$0xff] %vm744, %v732
      %766 = vst.msk [vmem:[%s279 + $0xa8] sm:$0xff] %vm744, %v733
      %767 = vst.msk [vmem:[%s279 + $0xb0] sm:$0xff] %vm744, %v734
      %768 = vst.msk [vmem:[%s279 + $0xb8] sm:$0xff] %vm744, %v735
      %769 = vst.msk [vmem:[%s279 + $0xc0] sm:$0xff] %vm744, %v736
      %770 = vst.msk [vmem:[%s279 + $0xc8] sm:$0xff] %vm744, %v737
      %771 = vst.msk [vmem:[%s279 + $0xd0] sm:$0xff] %vm744, %v738
      %772 = vst.msk [vmem:[%s279 + $0xd8] sm:$0xff] %vm744, %v739
      %773 = vst.msk [vmem:[%s279 + $0xe0] sm:$0xff] %vm744, %v740
      %774 = vst.msk [vmem:[%s279 + $0xe8] sm:$0xff] %vm744, %v741
      %775 = vst.msk [vmem:[%s279 + $0xf0] sm:$0xff] %vm744, %v742
      %776 = vst.msk [vmem:[%s279 + $0xf8] sm:$0xff] %vm744, %v743
      %s777 = smul.u32 16, %s20
      %p778 = scmp.lt.s32.totalorder %s19, 1
      %s779 = scalar_select %p778, %s19, 1
      %p780 = scmp.lt.s32.totalorder %s777, 15
      %s781 = scalar_select %p780, %s777, 15
      %s782 = smul.addr %s781, 2
      %s783 = smul.addr %s779, 32
      %s784 = sadd.s32 %s782, %s783
      %s785 = smul.addr %s784, 8
      %s786 = scalar_lea.vmem %s4, %s785
      // Predicated region
      $region37: #{model_apply.8} parent=35 // pred_check
        %p787 = pneg %p145
      $region38: #{model_apply.8} parent=35 // pred_check_branch
        %789 = sbr.rel (%p787) target = $region40
      $region39: #{model_apply.8} parent=35 // pred_region
        %s790 = smul.u32 16, %s20
      $region40: #{model_apply.8} parent=35 // pred_fallthru
        _
    $region36: #{model_apply.8} parent=5 // pred_fallthru
      _
    %p791 = scmp.le.s32.totalorder 2, %s10
    // Predicated region
    $region41: #{model_apply.8} parent=5 // pred_check
      %p792 = pneg %p791
    $region42: #{model_apply.8} parent=5 // pred_check_branch
      %794 = sbr.rel (%p792) target = $region44
    $region43: #{model_apply.8} parent=5 // pred_region
      %s795 = ssub.s32 %s10, 2
      // Predicated region
      $region45: #{model_apply.8} parent=43 // pred_check
        %p796 = pneg %p151
      $region46: #{model_apply.8} parent=43 // pred_check_branch
        %798 = sbr.rel (%p796) target = $region48
      $region47: #{model_apply.8} parent=43 // pred_region
        %s799 = smul.u32 16, %s22
        %p800 = scmp.lt.s32.totalorder %s21, 1
        %s801 = scalar_select %p800, %s21, 1
        %p802 = scmp.lt.s32.totalorder %s799, 15
        %s803 = scalar_select %p802, %s799, 15
        %s804 = smul.addr %s803, 2
        %s805 = smul.addr %s801, 32
        %s806 = sadd.s32 %s804, %s805
        %s807 = smul.addr %s806, 8
        %s808 = scalar_lea.vmem %s4, %s807
      $region48: #{model_apply.8} parent=43 // pred_fallthru
        _
    $region44: #{model_apply.8} parent=5 // pred_fallthru
      _
  $region6: #{model_apply.8} parent=0 // loop_footer
    %s14 = sadd.s32 1, %s10
  $region7: #{model_apply.8} parent=0 // loop_footer_branch
    %9 = sbr.rel target = $region3
  $region8: #{model_apply.8} parent=0 // loop_exit
    _

// kernel: model_apply.6
$region0: #{model_apply.6}
  #allocation0 [shape = 'u32[]', space=smem, size = 0x4, offset = 0x4, fixed_abs, tag = 'smem constant byte address 0x4 - core index']
  #allocation1 [shape = 'u32[144,128]{1,0:T(1,128)}', space=vmem, size = 0x12000, scoped, tag = 'internal scratch']
  %s0 = inlined_call_operand.vmem [shape: f32[2,16,1,16,4], index: 0, kind: input, shape index: {}]
  %s1 = inlined_call_operand.vmem [shape: bf16[4,4], index: 1, kind: input, shape index: {}]
  %s2 = inlined_call_operand.vmem [shape: f32[1,4], index: 2, kind: input, shape index: {}]
  %s3 = inlined_call_operand.vmem [shape: bf16[4,16], index: 3, kind: input, shape index: {}]
  %s4 = inlined_call_operand.vmem [shape: f32[1,16], index: 4, kind: input, shape index: {}]
  %s5 = inlined_call_operand.vmem [shape: bf16[2,16,16,4], index: 5, kind: output, shape index: {0}]
  %s6 = inlined_call_operand.vmem [shape: bf16[2,16,16,16], index: 6, kind: output, shape index: {1}]
  %7 = xla_tuple %s5, %s6
  %s8 = sld [smem:[#allocation0]]
  $region61: #{model_apply.6} parent=0
    _
  %s10 = ssub.s32 1, %s8
  %s11 = scalar_select 0, %s10, %s8
  loop: start=0, step=1, limit=4
  $region2: #{model_apply.6} parent=0 // loop_pre_header
    _
  $region3: #{model_apply.6} parent=0 // loop_header
    %s13 = sphi 0, %s17
    %p14 = scmp.ge.s32.totalorder %s13, 4
    %s20 = sphi 0, %s32
    %s21 = sphi 0, %s28
    %s22 = sphi 0, %s20
    %s23 = sphi 0, %s21
    %s24 = sphi 0, %s22
    %s25 = sphi 0, %s23
    %s37 = sphi 0, %s39
    %s40 = sphi 0, %s37
    %s41 = sphi 0, %s40
    %s57 = sphi 0, %s41
    %s61 = sphi 0, %s61
    %s63 = sphi 0, %s61
    %s64 = sphi 0, %s63
    %s78 = sphi 0, %s64
    %s82 = sphi 0, %s82
    %s84 = sphi 0, %s82
    %s85 = sphi 0, %s84
    %s99 = sphi 0, %s85
    %s103 = sphi 0, %s103
    %s105 = sphi 0, %s103
    %s106 = sphi 0, %s105
    %s120 = sphi 0, %s106
    %s124 = sphi 0, %s124
    %s126 = sphi 0, %s124
    %s127 = sphi 0, %s126
    %s141 = sphi 0, %s127
    %s149 = sphi 0, %s151
    %s152 = sphi 0, %s149
    %s153 = sphi 0, %s152
    %s169 = sphi 0, %s153
    %s177 = sphi 0, %s179
    %s180 = sphi 0, %s177
    %s181 = sphi 0, %s180
    %s197 = sphi 0, %s181
  $region4: #{model_apply.6} parent=0 // loop_header_branch
    %16 = sbr.rel (%p14) target = $region8
  $region5: #{model_apply.6} parent=0 // loop_body
    %s18 = ssub.s32 %s13, 1
    %s19 = ssub.s32 %s13, 2
    %s26 = sadd.s32 1, %s21
    %p27 = scmp.ge.s32.totalorder %s26, 1
    %s28 = scalar_select %p27, 0, %s26
    %s29 = sadd.s32 1, %s20
    %s30 = scalar_select %p27, %s29, %s20
    %p31 = scmp.ge.s32.totalorder %s30, 2
    %s32 = scalar_select %p31, 0, %s30
    %s33 = ssub.s32 %s20, %s32
    %s34 = ssub.s32 %s21, %s28
    %s35 = sor.u32 %s33, %s34
    %p36 = scmp.eq.s32.totalorder %s35, 0
    %s38 = sadd.s32 %s37, 1
    %s39 = scalar_select %p36, %s37, %s38
    %p42 = pneg %p36
    %p43 = scmp.eq.s32.totalorder %s13, 1
    %p44 = por %p42, %p43
    %p45 = scmp.ne.s32.totalorder %s37, %s40
    %p46 = scmp.eq.s32.totalorder %s13, 0
    %p47 = por %p45, %p46
    %p48 = scmp.ne.s32.totalorder %s37, %s40
    %p49 = scmp.eq.s32.totalorder %s18, 1
    %p50 = por %p48, %p49
    %p51 = scmp.ne.s32.totalorder %s40, %s41
    %p52 = scmp.eq.s32.totalorder %s18, 0
    %p53 = por %p51, %p52
    %p54 = scmp.ne.s32.totalorder %s40, %s41
    %p55 = scmp.eq.s32.totalorder %s19, 1
    %p56 = por %p54, %p55
    %p58 = scmp.ne.s32.totalorder %s41, %s57
    %p59 = scmp.eq.s32.totalorder %s19, 0
    %p60 = por %p58, %p59
    %s62 = sadd.s32 %s61, 1
    %p65 = scmp.eq.s32.totalorder %s13, 1
    %p66 = scmp.ne.s32.totalorder %s61, %s63
    %p67 = scmp.eq.s32.totalorder %s13, 0
    %p68 = por %p66, %p67
    %p69 = scmp.ne.s32.totalorder %s61, %s63
    %p70 = scmp.eq.s32.totalorder %s18, 1
    %p71 = por %p69, %p70
    %p72 = scmp.ne.s32.totalorder %s63, %s64
    %p73 = scmp.eq.s32.totalorder %s18, 0
    %p74 = por %p72, %p73
    %p75 = scmp.ne.s32.totalorder %s63, %s64
    %p76 = scmp.eq.s32.totalorder %s19, 1
    %p77 = por %p75, %p76
    %p79 = scmp.ne.s32.totalorder %s64, %s78
    %p80 = scmp.eq.s32.totalorder %s19, 0
    %p81 = por %p79, %p80
    %s83 = sadd.s32 %s82, 1
    %p86 = scmp.eq.s32.totalorder %s13, 1
    %p87 = scmp.ne.s32.totalorder %s82, %s84
    %p88 = scmp.eq.s32.totalorder %s13, 0
    %p89 = por %p87, %p88
    %p90 = scmp.ne.s32.totalorder %s82, %s84
    %p91 = scmp.eq.s32.totalorder %s18, 1
    %p92 = por %p90, %p91
    %p93 = scmp.ne.s32.totalorder %s84, %s85
    %p94 = scmp.eq.s32.totalorder %s18, 0
    %p95 = por %p93, %p94
    %p96 = scmp.ne.s32.totalorder %s84, %s85
    %p97 = scmp.eq.s32.totalorder %s19, 1
    %p98 = por %p96, %p97
    %p100 = scmp.ne.s32.totalorder %s85, %s99
    %p101 = scmp.eq.s32.totalorder %s19, 0
    %p102 = por %p100, %p101
    %s104 = sadd.s32 %s103, 1
    %p107 = scmp.eq.s32.totalorder %s13, 1
    %p108 = scmp.ne.s32.totalorder %s103, %s105
    %p109 = scmp.eq.s32.totalorder %s13, 0
    %p110 = por %p108, %p109
    %p111 = scmp.ne.s32.totalorder %s103, %s105
    %p112 = scmp.eq.s32.totalorder %s18, 1
    %p113 = por %p111, %p112
    %p114 = scmp.ne.s32.totalorder %s105, %s106
    %p115 = scmp.eq.s32.totalorder %s18, 0
    %p116 = por %p114, %p115
    %p117 = scmp.ne.s32.totalorder %s105, %s106
    %p118 = scmp.eq.s32.totalorder %s19, 1
    %p119 = por %p117, %p118
    %p121 = scmp.ne.s32.totalorder %s106, %s120
    %p122 = scmp.eq.s32.totalorder %s19, 0
    %p123 = por %p121, %p122
    %s125 = sadd.s32 %s124, 1
    %p128 = scmp.eq.s32.totalorder %s13, 1
    %p129 = scmp.ne.s32.totalorder %s124, %s126
    %p130 = scmp.eq.s32.totalorder %s13, 0
    %p131 = por %p129, %p130
    %p132 = scmp.ne.s32.totalorder %s124, %s126
    %p133 = scmp.eq.s32.totalorder %s18, 1
    %p134 = por %p132, %p133
    %p135 = scmp.ne.s32.totalorder %s126, %s127
    %p136 = scmp.eq.s32.totalorder %s18, 0
    %p137 = por %p135, %p136
    %p138 = scmp.ne.s32.totalorder %s126, %s127
    %p139 = scmp.eq.s32.totalorder %s19, 1
    %p140 = por %p138, %p139
    %p142 = scmp.ne.s32.totalorder %s127, %s141
    %p143 = scmp.eq.s32.totalorder %s19, 0
    %p144 = por %p142, %p143
    %s145 = ssub.s32 %s20, %s32
    %s146 = ssub.s32 %s21, %s28
    %s147 = sor.u32 %s145, %s146
    %p148 = scmp.eq.s32.totalorder %s147, 0
    %s150 = sadd.s32 %s149, 1
    %s151 = scalar_select %p148, %s149, %s150
    %p154 = pneg %p148
    %p155 = scmp.eq.s32.totalorder %s13, 1
    %p156 = por %p154, %p155
    %p157 = scmp.ne.s32.totalorder %s149, %s152
    %p158 = scmp.eq.s32.totalorder %s13, 0
    %p159 = por %p157, %p158
    %p160 = scmp.ne.s32.totalorder %s149, %s152
    %p161 = scmp.eq.s32.totalorder %s18, 1
    %p162 = por %p160, %p161
    %p163 = scmp.ne.s32.totalorder %s152, %s153
    %p164 = scmp.eq.s32.totalorder %s18, 0
    %p165 = por %p163, %p164
    %p166 = scmp.ne.s32.totalorder %s152, %s153
    %p167 = scmp.eq.s32.totalorder %s19, 1
    %p168 = por %p166, %p167
    %p170 = scmp.ne.s32.totalorder %s153, %s169
    %p171 = scmp.eq.s32.totalorder %s19, 0
    %p172 = por %p170, %p171
    %s173 = ssub.s32 %s20, %s32
    %s174 = ssub.s32 %s21, %s28
    %s175 = sor.u32 %s173, %s174
    %p176 = scmp.eq.s32.totalorder %s175, 0
    %s178 = sadd.s32 %s177, 1
    %s179 = scalar_select %p176, %s177, %s178
    %p182 = pneg %p176
    %p183 = scmp.eq.s32.totalorder %s13, 1
    %p184 = por %p182, %p183
    %p185 = scmp.ne.s32.totalorder %s177, %s180
    %p186 = scmp.eq.s32.totalorder %s13, 0
    %p187 = por %p185, %p186
    %p188 = scmp.ne.s32.totalorder %s177, %s180
    %p189 = scmp.eq.s32.totalorder %s18, 1
    %p190 = por %p188, %p189
    %p191 = scmp.ne.s32.totalorder %s180, %s181
    %p192 = scmp.eq.s32.totalorder %s18, 0
    %p193 = por %p191, %p192
    %p194 = scmp.ne.s32.totalorder %s180, %s181
    %p195 = scmp.eq.s32.totalorder %s19, 1
    %p196 = por %p194, %p195
    %p198 = scmp.ne.s32.totalorder %s181, %s197
    %p199 = scmp.eq.s32.totalorder %s19, 0
    %p200 = por %p198, %p199
    %p201 = scmp.le.s32.totalorder 1, %s13
    %p202 = scmp.lt.s32.totalorder %s13, 3
    %p203 = pnand %p201, %p202
    %p204 = pneg %p203
    // Predicated region
    $region9: #{model_apply.6} parent=5 // pred_check
      _
    $region10: #{model_apply.6} parent=5 // pred_check_branch
      %206 = sbr.rel (%p203) target = $region12
    $region11: #{model_apply.6} parent=5 // pred_region
      %s207 = ssub.s32 %s13, 1
      // Predicated region
      $region13: #{model_apply.6} parent=11 // pred_check
        %p208 = pneg %p74
      $region14: #{model_apply.6} parent=11 // pred_check_branch
        %210 = sbr.rel (%p208) target = $region16
      $region15: #{model_apply.6} parent=11 // pred_region
        _
      $region16: #{model_apply.6} parent=11 // pred_fallthru
        _
      // Predicated region
      $region17: #{model_apply.6} parent=11 // pred_check
        %p211 = pneg %p95
      $region18: #{model_apply.6} parent=11 // pred_check_branch
        %213 = sbr.rel (%p211) target = $region20
      $region19: #{model_apply.6} parent=11 // pred_region
        _
      $region20: #{model_apply.6} parent=11 // pred_fallthru
        _
      // Predicated region
      $region21: #{model_apply.6} parent=11 // pred_check
        %p214 = pneg %p116
      $region22: #{model_apply.6} parent=11 // pred_check_branch
        %216 = sbr.rel (%p214) target = $region24
      $region23: #{model_apply.6} parent=11 // pred_region
        _
      $region24: #{model_apply.6} parent=11 // pred_fallthru
        _
      // Predicated region
      $region25: #{model_apply.6} parent=11 // pred_check
        %p217 = pneg %p137
      $region26: #{model_apply.6} parent=11 // pred_check_branch
        %219 = sbr.rel (%p217) target = $region28
      $region27: #{model_apply.6} parent=11 // pred_region
        _
      $region28: #{model_apply.6} parent=11 // pred_fallthru
        _
    $region12: #{model_apply.6} parent=5 // pred_fallthru
      _
    %p220 = scmp.lt.s32.totalorder %s13, 2
    // Predicated region
    $region29: #{model_apply.6} parent=5 // pred_check
      %p221 = pneg %p220
    $region30: #{model_apply.6} parent=5 // pred_check_branch
      %223 = sbr.rel (%p221) target = $region32
    $region31: #{model_apply.6} parent=5 // pred_region
      // Predicated region
      $region33: #{model_apply.6} parent=31 // pred_check
        %p224 = pneg %p47
      $region34: #{model_apply.6} parent=31 // pred_check_branch
        %226 = sbr.rel (%p224) target = $region36
      $region35: #{model_apply.6} parent=31 // pred_region
        %s227 = smul.u32 16, %s21
        %p228 = scmp.lt.s32.totalorder %s20, 1
        %s229 = scalar_select %p228, %s20, 1
        %p230 = scmp.lt.s32.totalorder %s227, 15
        %s231 = scalar_select %p230, %s227, 15
        %s232 = smul.addr %s231, 2
        %s233 = smul.addr %s229, 32
        %s234 = sadd.s32 %s232, %s233
        %s235 = smul.addr %s234, 8
        %s236 = scalar_lea.vmem %s0, %s235
        %s237 = smul.u32 16, %s21
      $region36: #{model_apply.6} parent=31 // pred_fallthru
        _
    $region32: #{model_apply.6} parent=5 // pred_fallthru
      _
    %p238 = scmp.le.s32.totalorder 1, %s13
    %p239 = scmp.lt.s32.totalorder %s13, 3
    %p240 = pnand %p238, %p239
    %p241 = pneg %p240
    // Predicated region
    $region37: #{model_apply.6} parent=5 // pred_check
      _
    $region38: #{model_apply.6} parent=5 // pred_check_branch
      %243 = sbr.rel (%p240) target = $region40
    $region39: #{model_apply.6} parent=5 // pred_region
      %s244 = ssub.s32 %s13, 1
      %s245 = smul.u32 16, %s23
      %p246 = scmp.lt.s32.totalorder %s22, 1
      %s247 = scalar_select %p246, %s22, 1
      %p248 = scmp.lt.s32.totalorder %s245, 15
      %s249 = scalar_select %p248, %s245, 15
      %s250 = smul.addr %s249, 2
      %s251 = smul.addr %s247, 32
      %s252 = sadd.s32 %s250, %s251
      %s253 = smul.addr %s252, 8
      %s254 = scalar_lea.vmem %s0, %s253
      %p255 = pneg %p53
      %p256 = pneg %p50
      %p257 = pneg %p74
      %p258 = pneg %p71
      %p259 = pneg %p95
      %p260 = pneg %p92
      %p261 = pneg %p116
      %p262 = pneg %p113
      %p263 = pneg %p137
      %p264 = pneg %p134
      %p265 = pneg %p165
      %p266 = pneg %p162
      %s267 = smul.u32 16, %s23
      %p268 = scmp.lt.s32.totalorder %s22, 1
      %s269 = scalar_select %p268, %s22, 1
      %p270 = scmp.lt.s32.totalorder %s267, 15
      %s271 = scalar_select %p270, %s267, 15
      %s272 = smul.addr %s271, 2
      %s273 = smul.addr %s269, 32
      %s274 = sadd.s32 %s272, %s273
      %s275 = smul.addr %s274, 4
      %s276 = scalar_lea.vmem %s5, %s275
      %p277 = pneg %p193
      %p278 = pneg %p190
      %s279 = smul.u32 16, %s23
      %p280 = scmp.lt.s32.totalorder %s22, 1
      %s281 = scalar_select %p280, %s22, 1
      %p282 = scmp.lt.s32.totalorder %s279, 15
      %s283 = scalar_select %p282, %s279, 15
      %s284 = smul.addr %s283, 2
      %s285 = smul.addr %s281, 32
      %s286 = sadd.s32 %s284, %s285
      %s287 = smul.addr %s286, 4
      %s288 = scalar_lea.vmem %s6, %s287
      %s289 = smul.u32 16, %s23
      %p290 = scmp.lt.s32.totalorder %s22, 1
      %s291 = scalar_select %p290, %s22, 1
      %p292 = scmp.lt.s32.totalorder %s289, 15
      %s293 = scalar_select %p292, %s289, 15
      %s294 = smul.addr %s293, 2
      %s295 = smul.addr %s291, 32
      %s296 = sadd.s32 %s294, %s295
      %s297 = smul.addr %s296, 8
      %s298 = scalar_lea.vmem %s0, %s297
      %s299 = smul.u32 16, %s23
      %s300 = smul.u32 16, %s23
      %p301 = scmp.lt.s32.totalorder %s22, 1
      %s302 = scalar_select %p301, %s22, 1
      %p303 = scmp.lt.s32.totalorder %s300, 15
      %s304 = scalar_select %p303, %s300, 15
      %s305 = smul.addr %s304, 2
      %s306 = smul.addr %s302, 32
      %s307 = sadd.s32 %s305, %s306
      %s308 = smul.addr %s307, 4
      %s309 = scalar_lea.vmem %s5, %s308
      %s310 = smul.u32 16, %s23
      %s311 = smul.u32 16, %s23
      %p312 = scmp.lt.s32.totalorder %s22, 1
      %s313 = scalar_select %p312, %s22, 1
      %p314 = scmp.lt.s32.totalorder %s311, 15
      %s315 = scalar_select %p314, %s311, 15
      %s316 = smul.addr %s315, 2
      %s317 = smul.addr %s313, 32
      %s318 = sadd.s32 %s316, %s317
      %s319 = smul.addr %s318, 4
      %s320 = scalar_lea.vmem %s6, %s319
      %s321 = smul.u32 16, %s23
      %v323 = vld [vmem:[%s298] sm:$0xff]
      %v324 = vld [vmem:[%s298 + $0x8] sm:$0xff]
      %v325 = vld [vmem:[%s298 + $0x10] sm:$0xff]
      %v326 = vld [vmem:[%s298 + $0x18] sm:$0xff]
      %v327 = vld [vmem:[%s298 + $0x20] sm:$0xff]
      %v328 = vld [vmem:[%s298 + $0x28] sm:$0xff]
      %v329 = vld [vmem:[%s298 + $0x30] sm:$0xff]
      %v330 = vld [vmem:[%s298 + $0x38] sm:$0xff]
      %v331 = vld [vmem:[%s298 + $0x40] sm:$0xff]
      %v332 = vld [vmem:[%s298 + $0x48] sm:$0xff]
      %v333 = vld [vmem:[%s298 + $0x50] sm:$0xff]
      %v334 = vld [vmem:[%s298 + $0x58] sm:$0xff]
      %v335 = vld [vmem:[%s298 + $0x60] sm:$0xff]
      %v336 = vld [vmem:[%s298 + $0x68] sm:$0xff]
      %v337 = vld [vmem:[%s298 + $0x70] sm:$0xff]
      %v338 = vld [vmem:[%s298 + $0x78] sm:$0xff]
      %v339 = vld [vmem:[%s298 + $0x80] sm:$0xff]
      %v340 = vld [vmem:[%s298 + $0x88] sm:$0xff]
      %v341 = vld [vmem:[%s298 + $0x90] sm:$0xff]
      %v342 = vld [vmem:[%s298 + $0x98] sm:$0xff]
      %v343 = vld [vmem:[%s298 + $0xa0] sm:$0xff]
      %v344 = vld [vmem:[%s298 + $0xa8] sm:$0xff]
      %v345 = vld [vmem:[%s298 + $0xb0] sm:$0xff]
      %v346 = vld [vmem:[%s298 + $0xb8] sm:$0xff]
      %v347 = vld [vmem:[%s298 + $0xc0] sm:$0xff]
      %v348 = vld [vmem:[%s298 + $0xc8] sm:$0xff]
      %v349 = vld [vmem:[%s298 + $0xd0] sm:$0xff]
      %v350 = vld [vmem:[%s298 + $0xd8] sm:$0xff]
      %v351 = vld [vmem:[%s298 + $0xe0] sm:$0xff]
      %v352 = vld [vmem:[%s298 + $0xe8] sm:$0xff]
      %v353 = vld [vmem:[%s298 + $0xf0] sm:$0xff]
      %v354 = vld [vmem:[%s298 + $0xf8] sm:$0xff]
      %v355 = vpack.c.bf16 %v324, %v323
      %v356 = vpack.c.bf16 %v326, %v325
      %v357 = vpack.c.bf16 %v328, %v327
      %v358 = vpack.c.bf16 %v330, %v329
      %v359 = vpack.c.bf16 %v332, %v331
      %v360 = vpack.c.bf16 %v334, %v333
      %v361 = vpack.c.bf16 %v336, %v335
      %v362 = vpack.c.bf16 %v338, %v337
      %v363 = vpack.c.bf16 %v340, %v339
      %v364 = vpack.c.bf16 %v342, %v341
      %v365 = vpack.c.bf16 %v344, %v343
      %v366 = vpack.c.bf16 %v346, %v345
      %v367 = vpack.c.bf16 %v348, %v347
      %v368 = vpack.c.bf16 %v350, %v349
      %v369 = vpack.c.bf16 %v352, %v351
      %v370 = vpack.c.bf16 %v354, %v353
      %v371 = vld [vmem:[%s1] sm:$0x3]
      %v372 = vld [vmem:[%s2] sm:$0x1]
      %v374 = vlaneseq
      %v375 = vshrl.u32 %v374, 7
      %v376 = vsub.s32 0, %v375
      %v377 = vrot.slane %v372, %v376
      %vm379 = vcmask 31744
      %v381 = vsel %vm379, %v355, 0
      %v384 = vsel %vm379, %v356, 0
      %v387 = vsel %vm379, %v357, 0
      %v390 = vsel %vm379, %v358, 0
      %v393 = vsel %vm379, %v359, 0
      %v396 = vsel %vm379, %v360, 0
      %v399 = vsel %vm379, %v361, 0
      %v402 = vsel %vm379, %v362, 0
      %v405 = vsel %vm379, %v363, 0
      %v408 = vsel %vm379, %v364, 0
      %v411 = vsel %vm379, %v365, 0
      %v414 = vsel %vm379, %v366, 0
      %v417 = vsel %vm379, %v367, 0
      %v420 = vsel %vm379, %v368, 0
      %v423 = vsel %vm379, %v369, 0
      %v426 = vsel %vm379, %v370, 0
      %vm428 = vcmask 1041408
      %v430 = vsel %vm428, %v371, 0
      %432 = vmatprep.subr.bf16.mxu0 0
      %433 = vmatpush1.bf16.msra.mxu0 %v430
      %434 = vmatprep.subr.bf16.mxu0 0
      %435 = vmatpush1.bf16.msra.mxu0 0
      %436 = vmatprep.subr.bf16.mxu0 0
      %437 = vmatpush1.bf16.msra.mxu0 0
      %438 = vmatprep.subr.bf16.mxu0 0
      %439 = vmatpush1.bf16.msra.mxu0 0
      %440 = vmatprep.subr.bf16.mxu0 0
      %441 = vmatpush1.bf16.msra.mxu0 0
      %442 = vmatprep.subr.bf16.mxu0 0
      %443 = vmatpush1.bf16.msra.mxu0 0
      %444 = vmatprep.subr.bf16.mxu0 0
      %445 = vmatpush1.bf16.msra.mxu0 0
      %446 = vmatprep.subr.bf16.mxu0 0
      %447 = vmatpush1.bf16.msra.mxu0 0
      %448 = vmatprep.subr.bf16.mxu0 0
      %449 = vmatpush1.bf16.msra.mxu0 0
      %450 = vmatprep.subr.bf16.mxu0 0
      %451 = vmatpush1.bf16.msra.mxu0 0
      %452 = vmatprep.subr.bf16.mxu0 0
      %453 = vmatpush1.bf16.msra.mxu0 0
      %454 = vmatprep.subr.bf16.mxu0 0
      %455 = vmatpush1.bf16.msra.mxu0 0
      %456 = vmatprep.subr.bf16.mxu0 0
      %457 = vmatpush1.bf16.msra.mxu0 0
      %458 = vmatprep.subr.bf16.mxu0 0
      %459 = vmatpush1.bf16.msra.mxu0 0
      %460 = vmatprep.subr.bf16.mxu0 0
      %461 = vmatpush1.bf16.msra.mxu0 0
      %462 = vmatprep.subr.bf16.mxu0 0
      %463 = vmatpush1.bf16.msra.mxu0 0
      %464 = vmatprep.mubr.bf16.mxu0 0
      %465 = vmatmul.mubr.bf16.gmra.mrb[0].mxu0 %v381
      %v466 = vpop.f32.mrb[0].mxu0
      %v467 = vadd.f32 %v377, %v466
      %v468 = vpop.f32.mrb[0].mxu0
      %v469 = vpop.f32.mrb[0].mxu0
      %v470 = vadd.f32 %v377, %v469
      %v471 = vpop.f32.mrb[0].mxu0
      %472 = vmatprep.mubr.bf16.mxu0 0
      %473 = vmatmul.mubr.bf16.gmra.mrb[0].mxu0 %v384
      %v474 = vpop.f32.mrb[0].mxu0
      %v475 = vadd.f32 %v377, %v474
      %v476 = vpop.f32.mrb[0].mxu0
      %v477 = vpop.f32.mrb[0].mxu0
      %v478 = vadd.f32 %v377, %v477
      %v479 = vpop.f32.mrb[0].mxu0
      %480 = vmatprep.mubr.bf16.mxu0 0
      %481 = vmatmul.mubr.bf16.gmra.mrb[0].mxu0 %v387
      %v482 = vpop.f32.mrb[0].mxu0
      %v483 = vadd.f32 %v377, %v482
      %v484 = vpop.f32.mrb[0].mxu0
      %v485 = vpop.f32.mrb[0].mxu0
      %v486 = vadd.f32 %v377, %v485
      %v487 = vpop.f32.mrb[0].mxu0
      %488 = vmatprep.mubr.bf16.mxu0 0
      %489 = vmatmul.mubr.bf16.gmra.mrb[0].mxu0 %v390
      %v490 = vpop.f32.mrb[0].mxu0
      %v491 = vadd.f32 %v377, %v490
      %v492 = vpop.f32.mrb[0].mxu0
      %v493 = vpop.f32.mrb[0].mxu0
      %v494 = vadd.f32 %v377, %v493
      %v495 = vpop.f32.mrb[0].mxu0
      %496 = vmatprep.mubr.bf16.mxu0 0
      %497 = vmatmul.mubr.bf16.gmra.mrb[0].mxu0 %v393
      %v498 = vpop.f32.mrb[0].mxu0
      %v499 = vadd.f32 %v377, %v498
      %v500 = vpop.f32.mrb[0].mxu0
      %v501 = vpop.f32.mrb[0].mxu0
      %v502 = vadd.f32 %v377, %v501
      %v503 = vpop.f32.mrb[0].mxu0
      %504 = vmatprep.mubr.bf16.mxu0 0
      %505 = vmatmul.mubr.bf16.gmra.mrb[0].mxu0 %v396
      %v506 = vpop.f32.mrb[0].mxu0
      %v507 = vadd.f32 %v377, %v506
      %v508 = vpop.f32.mrb[0].mxu0
      %v509 = vpop.f32.mrb[0].mxu0
      %v510 = vadd.f32 %v377, %v509
      %v511 = vpop.f32.mrb[0].mxu0
      %512 = vmatprep.mubr.bf16.mxu0 0
      %513 = vmatmul.mubr.bf16.gmra.mrb[0].mxu0 %v399
      %v514 = vpop.f32.mrb[0].mxu0
      %v515 = vadd.f32 %v377, %v514
      %v516 = vpop.f32.mrb[0].mxu0
      %v517 = vpop.f32.mrb[0].mxu0
      %v518 = vadd.f32 %v377, %v517
      %v519 = vpop.f32.mrb[0].mxu0
      %520 = vmatprep.mubr.bf16.mxu0 0
      %521 = vmatmul.mubr.bf16.gmra.mrb[0].mxu0 %v402
      %v522 = vpop.f32.mrb[0].mxu0
      %v523 = vadd.f32 %v377, %v522
      %v524 = vpop.f32.mrb[0].mxu0
      %v525 = vpop.f32.mrb[0].mxu0
      %v526 = vadd.f32 %v377, %v525
      %v527 = vpop.f32.mrb[0].mxu0
      %528 = vmatprep.mubr.bf16.mxu0 0
      %529 = vmatmul.mubr.bf16.gmra.mrb[0].mxu0 %v405
      %v530 = vpop.f32.mrb[0].mxu0
      %v531 = vadd.f32 %v377, %v530
      %v532 = vpop.f32.mrb[0].mxu0
      %v533 = vpop.f32.mrb[0].mxu0
      %v534 = vadd.f32 %v377, %v533
      %v535 = vpop.f32.mrb[0].mxu0
      %536 = vmatprep.mubr.bf16.mxu0 0
      %537 = vmatmul.mubr.bf16.gmra.mrb[0].mxu0 %v408
      %v538 = vpop.f32.mrb[0].mxu0
      %v539 = vadd.f32 %v377, %v538
      %v540 = vpop.f32.mrb[0].mxu0
      %v541 = vpop.f32.mrb[0].mxu0
      %v542 = vadd.f32 %v377, %v541
      %v543 = vpop.f32.mrb[0].mxu0
      %544 = vmatprep.mubr.bf16.mxu0 0
      %545 = vmatmul.mubr.bf16.gmra.mrb[0].mxu0 %v411
      %v546 = vpop.f32.mrb[0].mxu0
      %v547 = vadd.f32 %v377, %v546
      %v548 = vpop.f32.mrb[0].mxu0
      %v549 = vpop.f32.mrb[0].mxu0
      %v550 = vadd.f32 %v377, %v549
      %v551 = vpop.f32.mrb[0].mxu0
      %552 = vmatprep.mubr.bf16.mxu0 0
      %553 = vmatmul.mubr.bf16.gmra.mrb[0].mxu0 %v414
      %v554 = vpop.f32.mrb[0].mxu0
      %v555 = vadd.f32 %v377, %v554
      %v556 = vpop.f32.mrb[0].mxu0
      %v557 = vpop.f32.mrb[0].mxu0
      %v558 = vadd.f32 %v377, %v557
      %v559 = vpop.f32.mrb[0].mxu0
      %560 = vmatprep.mubr.bf16.mxu0 0
      %561 = vmatmul.mubr.bf16.gmra.mrb[0].mxu0 %v417
      %v562 = vpop.f32.mrb[0].mxu0
      %v563 = vadd.f32 %v377, %v562
      %v564 = vpop.f32.mrb[0].mxu0
      %v565 = vpop.f32.mrb[0].mxu0
      %v566 = vadd.f32 %v377, %v565
      %v567 = vpop.f32.mrb[0].mxu0
      %568 = vmatprep.mubr.bf16.mxu0 0
      %569 = vmatmul.mubr.bf16.gmra.mrb[0].mxu0 %v420
      %v570 = vpop.f32.mrb[0].mxu0
      %v571 = vadd.f32 %v377, %v570
      %v572 = vpop.f32.mrb[0].mxu0
      %v573 = vpop.f32.mrb[0].mxu0
      %v574 = vadd.f32 %v377, %v573
      %v575 = vpop.f32.mrb[0].mxu0
      %576 = vmatprep.mubr.bf16.mxu0 0
      %577 = vmatmul.mubr.bf16.gmra.mrb[0].mxu0 %v423
      %v578 = vpop.f32.mrb[0].mxu0
      %v579 = vadd.f32 %v377, %v578
      %v580 = vpop.f32.mrb[0].mxu0
      %v581 = vpop.f32.mrb[0].mxu0
      %v582 = vadd.f32 %v377, %v581
      %v583 = vpop.f32.mrb[0].mxu0
      %584 = vmatprep.mubr.bf16.mxu0 0
      %585 = vmatmul.mubr.bf16.gmra.mrb[0].mxu0 %v426
      %v586 = vpop.f32.mrb[0].mxu0
      %v587 = vadd.f32 %v377, %v586
      %v588 = vpop.f32.mrb[0].mxu0
      %v589 = vpop.f32.mrb[0].mxu0
      %v590 = vadd.f32 %v377, %v589
      %v591 = vpop.f32.mrb[0].mxu0
      %592 = vdwg.mxu0
      %v593 = vmax.f32 %v467, 0.0
      %v594 = vmax.f32 %v470, 0.0
      %v595 = vmax.f32 %v475, 0.0
      %v596 = vmax.f32 %v478, 0.0
      %v597 = vmax.f32 %v483, 0.0
      %v598 = vmax.f32 %v486, 0.0
      %v599 = vmax.f32 %v491, 0.0
      %v600 = vmax.f32 %v494, 0.0
      %v601 = vmax.f32 %v499, 0.0
      %v602 = vmax.f32 %v502, 0.0
      %v603 = vmax.f32 %v507, 0.0
      %v604 = vmax.f32 %v510, 0.0
      %v605 = vmax.f32 %v515, 0.0
      %v606 = vmax.f32 %v518, 0.0
      %v607 = vmax.f32 %v523, 0.0
      %v608 = vmax.f32 %v526, 0.0
      %v609 = vmax.f32 %v531, 0.0
      %v610 = vmax.f32 %v534, 0.0
      %v611 = vmax.f32 %v539, 0.0
      %v612 = vmax.f32 %v542, 0.0
      %v613 = vmax.f32 %v547, 0.0
      %v614 = vmax.f32 %v550, 0.0
      %v615 = vmax.f32 %v555, 0.0
      %v616 = vmax.f32 %v558, 0.0
      %v617 = vmax.f32 %v563, 0.0
      %v618 = vmax.f32 %v566, 0.0
      %v619 = vmax.f32 %v571, 0.0
      %v620 = vmax.f32 %v574, 0.0
      %v621 = vmax.f32 %v579, 0.0
      %v622 = vmax.f32 %v582, 0.0
      %v623 = vmax.f32 %v587, 0.0
      %v624 = vmax.f32 %v590, 0.0
      %v625 = vpack.c.bf16 %v594, %v593
      %v626 = vpack.c.bf16 %v596, %v595
      %v627 = vpack.c.bf16 %v598, %v597
      %v628 = vpack.c.bf16 %v600, %v599
      %v629 = vpack.c.bf16 %v602, %v601
      %v630 = vpack.c.bf16 %v604, %v603
      %v631 = vpack.c.bf16 %v606, %v605
      %v632 = vpack.c.bf16 %v608, %v607
      %v633 = vpack.c.bf16 %v610, %v609
      %v634 = vpack.c.bf16 %v612, %v611
      %v635 = vpack.c.bf16 %v614, %v613
      %v636 = vpack.c.bf16 %v616, %v615
      %v637 = vpack.c.bf16 %v618, %v617
      %v638 = vpack.c.bf16 %v620, %v619
      %v639 = vpack.c.bf16 %v622, %v621
      %v640 = vpack.c.bf16 %v624, %v623
      %v657 = vunpack.c.l.b16 %v625
      %v658 = vunpack.c.h.b16 %v625
      %v659 = vunpack.c.l.b16 %v626
      %v660 = vunpack.c.h.b16 %v626
      %v661 = vunpack.c.l.b16 %v627
      %v662 = vunpack.c.h.b16 %v627
      %v663 = vunpack.c.l.b16 %v628
      %v664 = vunpack.c.h.b16 %v628
      %v665 = vunpack.c.l.b16 %v629
      %v666 = vunpack.c.h.b16 %v629
      %v667 = vunpack.c.l.b16 %v630
      %v668 = vunpack.c.h.b16 %v630
      %v669 = vunpack.c.l.b16 %v631
      %v670 = vunpack.c.h.b16 %v631
      %v671 = vunpack.c.l.b16 %v632
      %v672 = vunpack.c.h.b16 %v632
      %v673 = vunpack.c.l.b16 %v633
      %v674 = vunpack.c.h.b16 %v633
      %v675 = vunpack.c.l.b16 %v634
      %v676 = vunpack.c.h.b16 %v634
      %v677 = vunpack.c.l.b16 %v635
      %v678 = vunpack.c.h.b16 %v635
      %v679 = vunpack.c.l.b16 %v636
      %v680 = vunpack.c.h.b16 %v636
      %v681 = vunpack.c.l.b16 %v637
      %v682 = vunpack.c.h.b16 %v637
      %v683 = vunpack.c.l.b16 %v638
      %v684 = vunpack.c.h.b16 %v638
      %v685 = vunpack.c.l.b16 %v639
      %v686 = vunpack.c.h.b16 %v639
      %v687 = vunpack.c.l.b16 %v640
      %v688 = vunpack.c.h.b16 %v640
      %v689 = vpack.c.b16 %v657, %v657
      %v690 = vpack.c.b16 %v658, %v658
      %v691 = vpack.c.b16 %v659, %v659
      %v692 = vpack.c.b16 %v660, %v660
      %v693 = vpack.c.b16 %v661, %v661
      %v694 = vpack.c.b16 %v662, %v662
      %v695 = vpack.c.b16 %v663, %v663
      %v696 = vpack.c.b16 %v664, %v664
      %v697 = vpack.c.b16 %v665, %v665
      %v698 = vpack.c.b16 %v666, %v666
      %v699 = vpack.c.b16 %v667, %v667
      %v700 = vpack.c.b16 %v668, %v668
      %v701 = vpack.c.b16 %v669, %v669
      %v702 = vpack.c.b16 %v670, %v670
      %v703 = vpack.c.b16 %v671, %v671
      %v704 = vpack.c.b16 %v672, %v672
      %v705 = vpack.c.b16 %v673, %v673
      %v706 = vpack.c.b16 %v674, %v674
      %v707 = vpack.c.b16 %v675, %v675
      %v708 = vpack.c.b16 %v676, %v676
      %v709 = vpack.c.b16 %v677, %v677
      %v710 = vpack.c.b16 %v678, %v678
      %v711 = vpack.c.b16 %v679, %v679
      %v712 = vpack.c.b16 %v680, %v680
      %v713 = vpack.c.b16 %v681, %v681
      %v714 = vpack.c.b16 %v682, %v682
      %v715 = vpack.c.b16 %v683, %v683
      %v716 = vpack.c.b16 %v684, %v684
      %v717 = vpack.c.b16 %v685, %v685
      %v718 = vpack.c.b16 %v686, %v686
      %v719 = vpack.c.b16 %v687, %v687
      %v720 = vpack.c.b16 %v688, %v688
      %vm753 = vcmask 27648
      %754 = vst.msk [vmem:[%s309] sm:$0xf] %vm753, %v689
      %755 = vst.msk [vmem:[%s309 + $0x4] sm:$0xf] %vm753, %v690
      %756 = vst.msk [vmem:[%s309 + $0x8] sm:$0xf] %vm753, %v691
      %757 = vst.msk [vmem:[%s309 + $0xc] sm:$0xf] %vm753, %v692
      %758 = vst.msk [vmem:[%s309 + $0x10] sm:$0xf] %vm753, %v693
      %759 = vst.msk [vmem:[%s309 + $0x14] sm:$0xf] %vm753, %v694
      %760 = vst.msk [vmem:[%s309 + $0x18] sm:$0xf] %vm753, %v695
      %761 = vst.msk [vmem:[%s309 + $0x1c] sm:$0xf] %vm753, %v696
      %762 = vst.msk [vmem:[%s309 + $0x20] sm:$0xf] %vm753, %v697
      %763 = vst.msk [vmem:[%s309 + $0x24] sm:$0xf] %vm753, %v698
      %764 = vst.msk [vmem:[%s309 + $0x28] sm:$0xf] %vm753, %v699
      %765 = vst.msk [vmem:[%s309 + $0x2c] sm:$0xf] %vm753, %v700
      %766 = vst.msk [vmem:[%s309 + $0x30] sm:$0xf] %vm753, %v701
      %767 = vst.msk [vmem:[%s309 + $0x34] sm:$0xf] %vm753, %v702
      %768 = vst.msk [vmem:[%s309 + $0x38] sm:$0xf] %vm753, %v703
      %769 = vst.msk [vmem:[%s309 + $0x3c] sm:$0xf] %vm753, %v704
      %770 = vst.msk [vmem:[%s309 + $0x40] sm:$0xf] %vm753, %v705
      %771 = vst.msk [vmem:[%s309 + $0x44] sm:$0xf] %vm753, %v706
      %772 = vst.msk [vmem:[%s309 + $0x48] sm:$0xf] %vm753, %v707
      %773 = vst.msk [vmem:[%s309 + $0x4c] sm:$0xf] %vm753, %v708
      %774 = vst.msk [vmem:[%s309 + $0x50] sm:$0xf] %vm753, %v709
      %775 = vst.msk [vmem:[%s309 + $0x54] sm:$0xf] %vm753, %v710
      %776 = vst.msk [vmem:[%s309 + $0x58] sm:$0xf] %vm753, %v711
      %777 = vst.msk [vmem:[%s309 + $0x5c] sm:$0xf] %vm753, %v712
      %778 = vst.msk [vmem:[%s309 + $0x60] sm:$0xf] %vm753, %v713
      %779 = vst.msk [vmem:[%s309 + $0x64] sm:$0xf] %vm753, %v714
      %780 = vst.msk [vmem:[%s309 + $0x68] sm:$0xf] %vm753, %v715
      %781 = vst.msk [vmem:[%s309 + $0x6c] sm:$0xf] %vm753, %v716
      %782 = vst.msk [vmem:[%s309 + $0x70] sm:$0xf] %vm753, %v717
      %783 = vst.msk [vmem:[%s309 + $0x74] sm:$0xf] %vm753, %v718
      %784 = vst.msk [vmem:[%s309 + $0x78] sm:$0xf] %vm753, %v719
      %785 = vst.msk [vmem:[%s309 + $0x7c] sm:$0xf] %vm753, %v720
      %v786 = vld [vmem:[%s3] sm:$0x3]
      %v787 = vld [vmem:[%s4] sm:$0x1]
      %v789 = vlaneseq
      %v790 = vshrl.u32 %v789, 7
      %v791 = vsub.s32 0, %v790
      %v792 = vrot.slane %v787, %v791
      %v795 = vsel %vm428, %v786, 0
      %797 = vmatprep.subr.bf16.mxu0 0
      %798 = vmatpush1.bf16.msra.mxu0 %v795
      %799 = vmatprep.subr.bf16.mxu0 0
      %800 = vmatpush1.bf16.msra.mxu0 0
      %801 = vmatprep.subr.bf16.mxu0 0
      %802 = vmatpush1.bf16.msra.mxu0 0
      %803 = vmatprep.subr.bf16.mxu0 0
      %804 = vmatpush1.bf16.msra.mxu0 0
      %805 = vmatprep.subr.bf16.mxu0 0
      %806 = vmatpush1.bf16.msra.mxu0 0
      %807 = vmatprep.subr.bf16.mxu0 0
      %808 = vmatpush1.bf16.msra.mxu0 0
      %809 = vmatprep.subr.bf16.mxu0 0
      %810 = vmatpush1.bf16.msra.mxu0 0
      %811 = vmatprep.subr.bf16.mxu0 0
      %812 = vmatpush1.bf16.msra.mxu0 0
      %813 = vmatprep.subr.bf16.mxu0 0
      %814 = vmatpush1.bf16.msra.mxu0 0
      %815 = vmatprep.subr.bf16.mxu0 0
      %816 = vmatpush1.bf16.msra.mxu0 0
      %817 = vmatprep.subr.bf16.mxu0 0
      %818 = vmatpush1.bf16.msra.mxu0 0
      %819 = vmatprep.subr.bf16.mxu0 0
      %820 = vmatpush1.bf16.msra.mxu0 0
      %821 = vmatprep.subr.bf16.mxu0 0
      %822 = vmatpush1.bf16.msra.mxu0 0
      %823 = vmatprep.subr.bf16.mxu0 0
      %824 = vmatpush1.bf16.msra.mxu0 0
      %825 = vmatprep.subr.bf16.mxu0 0
      %826 = vmatpush1.bf16.msra.mxu0 0
      %827 = vmatprep.subr.bf16.mxu0 0
      %828 = vmatpush1.bf16.msra.mxu0 0
      %829 = vmatprep.mubr.bf16.mxu0 0
      %830 = vmatmul.mubr.bf16.gmra.mrb[0].mxu0 %v381
      %v831 = vpop.f32.mrb[0].mxu0
      %v832 = vadd.f32 %v792, %v831
      %v833 = vpop.f32.mrb[0].mxu0
      %v834 = vpop.f32.mrb[0].mxu0
      %v835 = vadd.f32 %v792, %v834
      %v836 = vpop.f32.mrb[0].mxu0
      %837 = vmatprep.mubr.bf16.mxu0 0
      %838 = vmatmul.mubr.bf16.gmra.mrb[0].mxu0 %v384
      %v839 = vpop.f32.mrb[0].mxu0
      %v840 = vadd.f32 %v792, %v839
      %v841 = vpop.f32.mrb[0].mxu0
      %v842 = vpop.f32.mrb[0].mxu0
      %v843 = vadd.f32 %v792, %v842
      %v844 = vpop.f32.mrb[0].mxu0
      %845 = vmatprep.mubr.bf16.mxu0 0
      %846 = vmatmul.mubr.bf16.gmra.mrb[0].mxu0 %v387
      %v847 = vpop.f32.mrb[0].mxu0
      %v848 = vadd.f32 %v792, %v847
      %v849 = vpop.f32.mrb[0].mxu0
      %v850 = vpop.f32.mrb[0].mxu0
      %v851 = vadd.f32 %v792, %v850
      %v852 = vpop.f32.mrb[0].mxu0
      %853 = vmatprep.mubr.bf16.mxu0 0
      %854 = vmatmul.mubr.bf16.gmra.mrb[0].mxu0 %v390
      %v855 = vpop.f32.mrb[0].mxu0
      %v856 = vadd.f32 %v792, %v855
      %v857 = vpop.f32.mrb[0].mxu0
      %v858 = vpop.f32.mrb[0].mxu0
      %v859 = vadd.f32 %v792, %v858
      %v860 = vpop.f32.mrb[0].mxu0
      %861 = vmatprep.mubr.bf16.mxu0 0
      %862 = vmatmul.mubr.bf16.gmra.mrb[0].mxu0 %v393
      %v863 = vpop.f32.mrb[0].mxu0
      %v864 = vadd.f32 %v792, %v863
      %v865 = vpop.f32.mrb[0].mxu0
      %v866 = vpop.f32.mrb[0].mxu0
      %v867 = vadd.f32 %v792, %v866
      %v868 = vpop.f32.mrb[0].mxu0
      %869 = vmatprep.mubr.bf16.mxu0 0
      %870 = vmatmul.mubr.bf16.gmra.mrb[0].mxu0 %v396
      %v871 = vpop.f32.mrb[0].mxu0
      %v872 = vadd.f32 %v792, %v871
      %v873 = vpop.f32.mrb[0].mxu0
      %v874 = vpop.f32.mrb[0].mxu0
      %v875 = vadd.f32 %v792, %v874
      %v876 = vpop.f32.mrb[0].mxu0
      %877 = vmatprep.mubr.bf16.mxu0 0
      %878 = vmatmul.mubr.bf16.gmra.mrb[0].mxu0 %v399
      %v879 = vpop.f32.mrb[0].mxu0
      %v880 = vadd.f32 %v792, %v879
      %v881 = vpop.f32.mrb[0].mxu0
      %v882 = vpop.f32.mrb[0].mxu0
      %v883 = vadd.f32 %v792, %v882
      %v884 = vpop.f32.mrb[0].mxu0
      %885 = vmatprep.mubr.bf16.mxu0 0
      %886 = vmatmul.mubr.bf16.gmra.mrb[0].mxu0 %v402
      %v887 = vpop.f32.mrb[0].mxu0
      %v888 = vadd.f32 %v792, %v887
      %v889 = vpop.f32.mrb[0].mxu0
      %v890 = vpop.f32.mrb[0].mxu0
      %v891 = vadd.f32 %v792, %v890
      %v892 = vpop.f32.mrb[0].mxu0
      %893 = vmatprep.mubr.bf16.mxu0 0
      %894 = vmatmul.mubr.bf16.gmra.mrb[0].mxu0 %v405
      %v895 = vpop.f32.mrb[0].mxu0
      %v896 = vadd.f32 %v792, %v895
      %v897 = vpop.f32.mrb[0].mxu0
      %v898 = vpop.f32.mrb[0].mxu0
      %v899 = vadd.f32 %v792, %v898
      %v900 = vpop.f32.mrb[0].mxu0
      %901 = vmatprep.mubr.bf16.mxu0 0
      %902 = vmatmul.mubr.bf16.gmra.mrb[0].mxu0 %v408
      %v903 = vpop.f32.mrb[0].mxu0
      %v904 = vadd.f32 %v792, %v903
      %v905 = vpop.f32.mrb[0].mxu0
      %v906 = vpop.f32.mrb[0].mxu0
      %v907 = vadd.f32 %v792, %v906
      %v908 = vpop.f32.mrb[0].mxu0
      %909 = vmatprep.mubr.bf16.mxu0 0
      %910 = vmatmul.mubr.bf16.gmra.mrb[0].mxu0 %v411
      %v911 = vpop.f32.mrb[0].mxu0
      %v912 = vadd.f32 %v792, %v911
      %v913 = vpop.f32.mrb[0].mxu0
      %v914 = vpop.f32.mrb[0].mxu0
      %v915 = vadd.f32 %v792, %v914
      %v916 = vpop.f32.mrb[0].mxu0
      %917 = vmatprep.mubr.bf16.mxu0 0
      %918 = vmatmul.mubr.bf16.gmra.mrb[0].mxu0 %v414
      %v919 = vpop.f32.mrb[0].mxu0
      %v920 = vadd.f32 %v792, %v919
      %v921 = vpop.f32.mrb[0].mxu0
      %v922 = vpop.f32.mrb[0].mxu0
      %v923 = vadd.f32 %v792, %v922
      %v924 = vpop.f32.mrb[0].mxu0
      %925 = vmatprep.mubr.bf16.mxu0 0
      %926 = vmatmul.mubr.bf16.gmra.mrb[0].mxu0 %v417
      %v927 = vpop.f32.mrb[0].mxu0
      %v928 = vadd.f32 %v792, %v927
      %v929 = vpop.f32.mrb[0].mxu0
      %v930 = vpop.f32.mrb[0].mxu0
      %v931 = vadd.f32 %v792, %v930
      %v932 = vpop.f32.mrb[0].mxu0
      %933 = vmatprep.mubr.bf16.mxu0 0
      %934 = vmatmul.mubr.bf16.gmra.mrb[0].mxu0 %v420
      %v935 = vpop.f32.mrb[0].mxu0
      %v936 = vadd.f32 %v792, %v935
      %v937 = vpop.f32.mrb[0].mxu0
      %v938 = vpop.f32.mrb[0].mxu0
      %v939 = vadd.f32 %v792, %v938
      %v940 = vpop.f32.mrb[0].mxu0
      %941 = vmatprep.mubr.bf16.mxu0 0
      %942 = vmatmul.mubr.bf16.gmra.mrb[0].mxu0 %v423
      %v943 = vpop.f32.mrb[0].mxu0
      %v944 = vadd.f32 %v792, %v943
      %v945 = vpop.f32.mrb[0].mxu0
      %v946 = vpop.f32.mrb[0].mxu0
      %v947 = vadd.f32 %v792, %v946
      %v948 = vpop.f32.mrb[0].mxu0
      %949 = vmatprep.mubr.bf16.mxu0 0
      %950 = vmatmul.mubr.bf16.gmra.mrb[0].mxu0 %v426
      %v951 = vpop.f32.mrb[0].mxu0
      %v952 = vadd.f32 %v792, %v951
      %v953 = vpop.f32.mrb[0].mxu0
      %v954 = vpop.f32.mrb[0].mxu0
      %v955 = vadd.f32 %v792, %v954
      %v956 = vpop.f32.mrb[0].mxu0
      %957 = vdwg.mxu0
      %v958 = vpack.c.bf16 %v835, %v832
      %v959 = vpack.c.bf16 %v843, %v840
      %v960 = vpack.c.bf16 %v851, %v848
      %v961 = vpack.c.bf16 %v859, %v856
      %v962 = vpack.c.bf16 %v867, %v864
      %v963 = vpack.c.bf16 %v875, %v872
      %v964 = vpack.c.bf16 %v883, %v880
      %v965 = vpack.c.bf16 %v891, %v888
      %v966 = vpack.c.bf16 %v899, %v896
      %v967 = vpack.c.bf16 %v907, %v904
      %v968 = vpack.c.bf16 %v915, %v912
      %v969 = vpack.c.bf16 %v923, %v920
      %v970 = vpack.c.bf16 %v931, %v928
      %v971 = vpack.c.bf16 %v939, %v936
      %v972 = vpack.c.bf16 %v947, %v944
      %v973 = vpack.c.bf16 %v955, %v952
      %v990 = vunpack.c.l.b16 %v958
      %v991 = vunpack.c.h.b16 %v958
      %v992 = vunpack.c.l.b16 %v959
      %v993 = vunpack.c.h.b16 %v959
      %v994 = vunpack.c.l.b16 %v960
      %v995 = vunpack.c.h.b16 %v960
      %v996 = vunpack.c.l.b16 %v961
      %v997 = vunpack.c.h.b16 %v961
      %v998 = vunpack.c.l.b16 %v962
      %v999 = vunpack.c.h.b16 %v962
      %v1000 = vunpack.c.l.b16 %v963
      %v1001 = vunpack.c.h.b16 %v963
      %v1002 = vunpack.c.l.b16 %v964
      %v1003 = vunpack.c.h.b16 %v964
      %v1004 = vunpack.c.l.b16 %v965
      %v1005 = vunpack.c.h.b16 %v965
      %v1006 = vunpack.c.l.b16 %v966
      %v1007 = vunpack.c.h.b16 %v966
      %v1008 = vunpack.c.l.b16 %v967
      %v1009 = vunpack.c.h.b16 %v967
      %v1010 = vunpack.c.l.b16 %v968
      %v1011 = vunpack.c.h.b16 %v968
      %v1012 = vunpack.c.l.b16 %v969
      %v1013 = vunpack.c.h.b16 %v969
      %v1014 = vunpack.c.l.b16 %v970
      %v1015 = vunpack.c.h.b16 %v970
      %v1016 = vunpack.c.l.b16 %v971
      %v1017 = vunpack.c.h.b16 %v971
      %v1018 = vunpack.c.l.b16 %v972
      %v1019 = vunpack.c.h.b16 %v972
      %v1020 = vunpack.c.l.b16 %v973
      %v1021 = vunpack.c.h.b16 %v973
      %v1022 = vpack.c.b16 %v990, %v990
      %v1023 = vpack.c.b16 %v991, %v991
      %v1024 = vpack.c.b16 %v992, %v992
      %v1025 = vpack.c.b16 %v993, %v993
      %v1026 = vpack.c.b16 %v994, %v994
      %v1027 = vpack.c.b16 %v995, %v995
      %v1028 = vpack.c.b16 %v996, %v996
      %v1029 = vpack.c.b16 %v997, %v997
      %v1030 = vpack.c.b16 %v998, %v998
      %v1031 = vpack.c.b16 %v999, %v999
      %v1032 = vpack.c.b16 %v1000, %v1000
      %v1033 = vpack.c.b16 %v1001, %v1001
      %v1034 = vpack.c.b16 %v1002, %v1002
      %v1035 = vpack.c.b16 %v1003, %v1003
      %v1036 = vpack.c.b16 %v1004, %v1004
      %v1037 = vpack.c.b16 %v1005, %v1005
      %v1038 = vpack.c.b16 %v1006, %v1006
      %v1039 = vpack.c.b16 %v1007, %v1007
      %v1040 = vpack.c.b16 %v1008, %v1008
      %v1041 = vpack.c.b16 %v1009, %v1009
      %v1042 = vpack.c.b16 %v1010, %v1010
      %v1043 = vpack.c.b16 %v1011, %v1011
      %v1044 = vpack.c.b16 %v1012, %v1012
      %v1045 = vpack.c.b16 %v1013, %v1013
      %v1046 = vpack.c.b16 %v1014, %v1014
      %v1047 = vpack.c.b16 %v1015, %v1015
      %v1048 = vpack.c.b16 %v1016, %v1016
      %v1049 = vpack.c.b16 %v1017, %v1017
      %v1050 = vpack.c.b16 %v1018, %v1018
      %v1051 = vpack.c.b16 %v1019, %v1019
      %v1052 = vpack.c.b16 %v1020, %v1020
      %v1053 = vpack.c.b16 %v1021, %v1021
      %vm1086 = vcmask 125952
      %1087 = vst.msk [vmem:[%s320] sm:$0xf] %vm1086, %v1022
      %1088 = vst.msk [vmem:[%s320 + $0x4] sm:$0xf] %vm1086, %v1023
      %1089 = vst.msk [vmem:[%s320 + $0x8] sm:$0xf] %vm1086, %v1024
      %1090 = vst.msk [vmem:[%s320 + $0xc] sm:$0xf] %vm1086, %v1025
      %1091 = vst.msk [vmem:[%s320 + $0x10] sm:$0xf] %vm1086, %v1026
      %1092 = vst.msk [vmem:[%s320 + $0x14] sm:$0xf] %vm1086, %v1027
      %1093 = vst.msk [vmem:[%s320 + $0x18] sm:$0xf] %vm1086, %v1028
      %1094 = vst.msk [vmem:[%s320 + $0x1c] sm:$0xf] %vm1086, %v1029
      %1095 = vst.msk [vmem:[%s320 + $0x20] sm:$0xf] %vm1086, %v1030
      %1096 = vst.msk [vmem:[%s320 + $0x24] sm:$0xf] %vm1086, %v1031
      %1097 = vst.msk [vmem:[%s320 + $0x28] sm:$0xf] %vm1086, %v1032
      %1098 = vst.msk [vmem:[%s320 + $0x2c] sm:$0xf] %vm1086, %v1033
      %1099 = vst.msk [vmem:[%s320 + $0x30] sm:$0xf] %vm1086, %v1034
      %1100 = vst.msk [vmem:[%s320 + $0x34] sm:$0xf] %vm1086, %v1035
      %1101 = vst.msk [vmem:[%s320 + $0x38] sm:$0xf] %vm1086, %v1036
      %1102 = vst.msk [vmem:[%s320 + $0x3c] sm:$0xf] %vm1086, %v1037
      %1103 = vst.msk [vmem:[%s320 + $0x40] sm:$0xf] %vm1086, %v1038
      %1104 = vst.msk [vmem:[%s320 + $0x44] sm:$0xf] %vm1086, %v1039
      %1105 = vst.msk [vmem:[%s320 + $0x48] sm:$0xf] %vm1086, %v1040
      %1106 = vst.msk [vmem:[%s320 + $0x4c] sm:$0xf] %vm1086, %v1041
      %1107 = vst.msk [vmem:[%s320 + $0x50] sm:$0xf] %vm1086, %v1042
      %1108 = vst.msk [vmem:[%s320 + $0x54] sm:$0xf] %vm1086, %v1043
      %1109 = vst.msk [vmem:[%s320 + $0x58] sm:$0xf] %vm1086, %v1044
      %1110 = vst.msk [vmem:[%s320 + $0x5c] sm:$0xf] %vm1086, %v1045
      %1111 = vst.msk [vmem:[%s320 + $0x60] sm:$0xf] %vm1086, %v1046
      %1112 = vst.msk [vmem:[%s320 + $0x64] sm:$0xf] %vm1086, %v1047
      %1113 = vst.msk [vmem:[%s320 + $0x68] sm:$0xf] %vm1086, %v1048
      %1114 = vst.msk [vmem:[%s320 + $0x6c] sm:$0xf] %vm1086, %v1049
      %1115 = vst.msk [vmem:[%s320 + $0x70] sm:$0xf] %vm1086, %v1050
      %1116 = vst.msk [vmem:[%s320 + $0x74] sm:$0xf] %vm1086, %v1051
      %1117 = vst.msk [vmem:[%s320 + $0x78] sm:$0xf] %vm1086, %v1052
      %1118 = vst.msk [vmem:[%s320 + $0x7c] sm:$0xf] %vm1086, %v1053
      %s1119 = smul.u32 16, %s23
      %p1120 = scmp.lt.s32.totalorder %s22, 1
      %s1121 = scalar_select %p1120, %s22, 1
      %p1122 = scmp.lt.s32.totalorder %s1119, 15
      %s1123 = scalar_select %p1122, %s1119, 15
      %s1124 = smul.addr %s1123, 2
      %s1125 = smul.addr %s1121, 32
      %s1126 = sadd.s32 %s1124, %s1125
      %s1127 = smul.addr %s1126, 4
      %s1128 = scalar_lea.vmem %s5, %s1127
      %s1129 = smul.u32 16, %s23
      %p1130 = scmp.lt.s32.totalorder %s22, 1
      %s1131 = scalar_select %p1130, %s22, 1
      %p1132 = scmp.lt.s32.totalorder %s1129, 15
      %s1133 = scalar_select %p1132, %s1129, 15
      %s1134 = smul.addr %s1133, 2
      %s1135 = smul.addr %s1131, 32
      %s1136 = sadd.s32 %s1134, %s1135
      %s1137 = smul.addr %s1136, 4
      %s1138 = scalar_lea.vmem %s6, %s1137
      // Predicated region
      $region41: #{model_apply.6} parent=39 // pred_check
        %p1139 = pneg %p162
      $region42: #{model_apply.6} parent=39 // pred_check_branch
        %1141 = sbr.rel (%p1139) target = $region44
      $region43: #{model_apply.6} parent=39 // pred_region
        %s1142 = smul.u32 16, %s23
      $region44: #{model_apply.6} parent=39 // pred_fallthru
        _
      // Predicated region
      $region45: #{model_apply.6} parent=39 // pred_check
        %p1143 = pneg %p190
      $region46: #{model_apply.6} parent=39 // pred_check_branch
        %1145 = sbr.rel (%p1143) target = $region48
      $region47: #{model_apply.6} parent=39 // pred_region
        %s1146 = smul.u32 16, %s23
      $region48: #{model_apply.6} parent=39 // pred_fallthru
        _
    $region40: #{model_apply.6} parent=5 // pred_fallthru
      _
    %p1147 = scmp.le.s32.totalorder 2, %s13
    // Predicated region
    $region49: #{model_apply.6} parent=5 // pred_check
      %p1148 = pneg %p1147
    $region50: #{model_apply.6} parent=5 // pred_check_branch
      %1150 = sbr.rel (%p1148) target = $region52
    $region51: #{model_apply.6} parent=5 // pred_region
      %s1151 = ssub.s32 %s13, 2
      // Predicated region
      $region53: #{model_apply.6} parent=51 // pred_check
        %p1152 = pneg %p168
      $region54: #{model_apply.6} parent=51 // pred_check_branch
        %1154 = sbr.rel (%p1152) target = $region56
      $region55: #{model_apply.6} parent=51 // pred_region
        %s1155 = smul.u32 16, %s25
        %p1156 = scmp.lt.s32.totalorder %s24, 1
        %s1157 = scalar_select %p1156, %s24, 1
        %p1158 = scmp.lt.s32.totalorder %s1155, 15
        %s1159 = scalar_select %p1158, %s1155, 15
        %s1160 = smul.addr %s1159, 2
        %s1161 = smul.addr %s1157, 32
        %s1162 = sadd.s32 %s1160, %s1161
        %s1163 = smul.addr %s1162, 4
        %s1164 = scalar_lea.vmem %s5, %s1163
      $region56: #{model_apply.6} parent=51 // pred_fallthru
        _
      // Predicated region
      $region57: #{model_apply.6} parent=51 // pred_check
        %p1165 = pneg %p196
      $region58: #{model_apply.6} parent=51 // pred_check_branch
        %1167 = sbr.rel (%p1165) target = $region60
      $region59: #{model_apply.6} parent=51 // pred_region
        %s1168 = smul.u32 16, %s25
        %p1169 = scmp.lt.s32.totalorder %s24, 1
        %s1170 = scalar_select %p1169, %s24, 1
        %p1171 = scmp.lt.s32.totalorder %s1168, 15
        %s1172 = scalar_select %p1171, %s1168, 15
        %s1173 = smul.addr %s1172, 2
        %s1174 = smul.addr %s1170, 32
        %s1175 = sadd.s32 %s1173, %s1174
        %s1176 = smul.addr %s1175, 4
        %s1177 = scalar_lea.vmem %s6, %s1176
      $region60: #{model_apply.6} parent=51 // pred_fallthru
        _
    $region52: #{model_apply.6} parent=5 // pred_fallthru
      _
  $region6: #{model_apply.6} parent=0 // loop_footer
    %s17 = sadd.s32 1, %s13
  $region7: #{model_apply.6} parent=0 // loop_footer_branch
    %12 = sbr.rel target = $region3
  $region8: #{model_apply.6} parent=0 // loop_exit
    _

// kernel: model_apply.9
$region0: #{model_apply.9}
  #allocation0 [shape = 'u32[]', space=smem, size = 0x4, offset = 0x4, fixed_abs, tag = 'smem constant byte address 0x4 - core index']
  #allocation1 [shape = 'u32[144,128]{1,0:T(1,128)}', space=vmem, size = 0x12000, scoped, tag = 'internal scratch']
  %s0 = inlined_call_operand.vmem [shape: f32[2,8,2,8,32], index: 0, kind: input, shape index: {}]
  %s1 = inlined_call_operand.vmem [shape: bf16[32,8], index: 1, kind: input, shape index: {}]
  %s2 = inlined_call_operand.vmem [shape: f32[1,8], index: 2, kind: input, shape index: {}]
  %s3 = inlined_call_operand.vmem [shape: bf16[32,32], index: 3, kind: input, shape index: {}]
  %s4 = inlined_call_operand.vmem [shape: f32[1,32], index: 4, kind: input, shape index: {}]
  %s5 = inlined_call_operand.vmem [shape: bf16[2,8,8,8], index: 5, kind: output, shape index: {0}]
  %s6 = inlined_call_operand.vmem [shape: bf16[2,8,8,32], index: 6, kind: output, shape index: {1}]
  %7 = xla_tuple %s5, %s6
  %s8 = sld [smem:[#allocation0]]
  $region99: #{model_apply.9} parent=0
    _
  %s10 = ssub.s32 1, %s8
  %s11 = scalar_select 0, %s10, %s8
  $region1: #{model_apply.9} parent=0
    #allocation2 [shape = 'u8[65536]{0}', space=vmem, size = 0x10000, scoped, tag = 'input window, operand 0']
    loop: start=0, step=1, limit=4
    $region2: #{model_apply.9} parent=1 // loop_pre_header
      _
    $region3: #{model_apply.9} parent=1 // loop_header
      %s13 = sphi 0, %s17
      %p14 = scmp.ge.s32.totalorder %s13, 4
      %s20 = sphi 0, %s32
      %s21 = sphi 0, %s28
      %s22 = sphi 0, %s20
      %s23 = sphi 0, %s21
      %s24 = sphi 0, %s22
      %s25 = sphi 0, %s23
      %s37 = sphi 0, %s39
      %s40 = sphi 0, %s37
      %s41 = sphi 0, %s40
      %s57 = sphi 0, %s41
      %s61 = sphi 0, %s61
      %s63 = sphi 0, %s61
      %s64 = sphi 0, %s63
      %s78 = sphi 0, %s64
      %s82 = sphi 0, %s82
      %s84 = sphi 0, %s82
      %s85 = sphi 0, %s84
      %s99 = sphi 0, %s85
      %s103 = sphi 0, %s103
      %s105 = sphi 0, %s103
      %s106 = sphi 0, %s105
      %s120 = sphi 0, %s106
      %s124 = sphi 0, %s124
      %s126 = sphi 0, %s124
      %s127 = sphi 0, %s126
      %s141 = sphi 0, %s127
      %s149 = sphi 0, %s151
      %s152 = sphi 0, %s149
      %s153 = sphi 0, %s152
      %s169 = sphi 0, %s153
      %s177 = sphi 0, %s179
      %s180 = sphi 0, %s177
      %s181 = sphi 0, %s180
      %s197 = sphi 0, %s181
    $region4: #{model_apply.9} parent=1 // loop_header_branch
      %16 = sbr.rel (%p14) target = $region8
    $region5: #{model_apply.9} parent=1 // loop_body
      %s18 = ssub.s32 %s13, 1
      %s19 = ssub.s32 %s13, 2
      %s26 = sadd.s32 1, %s21
      %p27 = scmp.ge.s32.totalorder %s26, 1
      %s28 = scalar_select %p27, 0, %s26
      %s29 = sadd.s32 1, %s20
      %s30 = scalar_select %p27, %s29, %s20
      %p31 = scmp.ge.s32.totalorder %s30, 2
      %s32 = scalar_select %p31, 0, %s30
      %s33 = ssub.s32 %s20, %s32
      %s34 = ssub.s32 %s21, %s28
      %s35 = sor.u32 %s33, %s34
      %p36 = scmp.eq.s32.totalorder %s35, 0
      %s38 = sadd.s32 %s37, 1
      %s39 = scalar_select %p36, %s37, %s38
      %p42 = pneg %p36
      %p43 = scmp.eq.s32.totalorder %s13, 1
      %p44 = por %p42, %p43
      %p45 = scmp.ne.s32.totalorder %s37, %s40
      %p46 = scmp.eq.s32.totalorder %s13, 0
      %p47 = por %p45, %p46
      %p48 = scmp.ne.s32.totalorder %s37, %s40
      %p49 = scmp.eq.s32.totalorder %s18, 1
      %p50 = por %p48, %p49
      %p51 = scmp.ne.s32.totalorder %s40, %s41
      %p52 = scmp.eq.s32.totalorder %s18, 0
      %p53 = por %p51, %p52
      %p54 = scmp.ne.s32.totalorder %s40, %s41
      %p55 = scmp.eq.s32.totalorder %s19, 1
      %p56 = por %p54, %p55
      %p58 = scmp.ne.s32.totalorder %s41, %s57
      %p59 = scmp.eq.s32.totalorder %s19, 0
      %p60 = por %p58, %p59
      %s62 = sadd.s32 %s61, 1
      %p65 = scmp.eq.s32.totalorder %s13, 1
      %p66 = scmp.ne.s32.totalorder %s61, %s63
      %p67 = scmp.eq.s32.totalorder %s13, 0
      %p68 = por %p66, %p67
      %p69 = scmp.ne.s32.totalorder %s61, %s63
      %p70 = scmp.eq.s32.totalorder %s18, 1
      %p71 = por %p69, %p70
      %p72 = scmp.ne.s32.totalorder %s63, %s64
      %p73 = scmp.eq.s32.totalorder %s18, 0
      %p74 = por %p72, %p73
      %p75 = scmp.ne.s32.totalorder %s63, %s64
      %p76 = scmp.eq.s32.totalorder %s19, 1
      %p77 = por %p75, %p76
      %p79 = scmp.ne.s32.totalorder %s64, %s78
      %p80 = scmp.eq.s32.totalorder %s19, 0
      %p81 = por %p79, %p80
      %s83 = sadd.s32 %s82, 1
      %p86 = scmp.eq.s32.totalorder %s13, 1
      %p87 = scmp.ne.s32.totalorder %s82, %s84
      %p88 = scmp.eq.s32.totalorder %s13, 0
      %p89 = por %p87, %p88
      %p90 = scmp.ne.s32.totalorder %s82, %s84
      %p91 = scmp.eq.s32.totalorder %s18, 1
      %p92 = por %p90, %p91
      %p93 = scmp.ne.s32.totalorder %s84, %s85
      %p94 = scmp.eq.s32.totalorder %s18, 0
      %p95 = por %p93, %p94
      %p96 = scmp.ne.s32.totalorder %s84, %s85
      %p97 = scmp.eq.s32.totalorder %s19, 1
      %p98 = por %p96, %p97
      %p100 = scmp.ne.s32.totalorder %s85, %s99
      %p101 = scmp.eq.s32.totalorder %s19, 0
      %p102 = por %p100, %p101
      %s104 = sadd.s32 %s103, 1
      %p107 = scmp.eq.s32.totalorder %s13, 1
      %p108 = scmp.ne.s32.totalorder %s103, %s105
      %p109 = scmp.eq.s32.totalorder %s13, 0
      %p110 = por %p108, %p109
      %p111 = scmp.ne.s32.totalorder %s103, %s105
      %p112 = scmp.eq.s32.totalorder %s18, 1
      %p113 = por %p111, %p112
      %p114 = scmp.ne.s32.totalorder %s105, %s106
      %p115 = scmp.eq.s32.totalorder %s18, 0
      %p116 = por %p114, %p115
      %p117 = scmp.ne.s32.totalorder %s105, %s106
      %p118 = scmp.eq.s32.totalorder %s19, 1
      %p119 = por %p117, %p118
      %p121 = scmp.ne.s32.totalorder %s106, %s120
      %p122 = scmp.eq.s32.totalorder %s19, 0
      %p123 = por %p121, %p122
      %s125 = sadd.s32 %s124, 1
      %p128 = scmp.eq.s32.totalorder %s13, 1
      %p129 = scmp.ne.s32.totalorder %s124, %s126
      %p130 = scmp.eq.s32.totalorder %s13, 0
      %p131 = por %p129, %p130
      %p132 = scmp.ne.s32.totalorder %s124, %s126
      %p133 = scmp.eq.s32.totalorder %s18, 1
      %p134 = por %p132, %p133
      %p135 = scmp.ne.s32.totalorder %s126, %s127
      %p136 = scmp.eq.s32.totalorder %s18, 0
      %p137 = por %p135, %p136
      %p138 = scmp.ne.s32.totalorder %s126, %s127
      %p139 = scmp.eq.s32.totalorder %s19, 1
      %p140 = por %p138, %p139
      %p142 = scmp.ne.s32.totalorder %s127, %s141
      %p143 = scmp.eq.s32.totalorder %s19, 0
      %p144 = por %p142, %p143
      %s145 = ssub.s32 %s20, %s32
      %s146 = ssub.s32 %s21, %s28
      %s147 = sor.u32 %s145, %s146
      %p148 = scmp.eq.s32.totalorder %s147, 0
      %s150 = sadd.s32 %s149, 1
      %s151 = scalar_select %p148, %s149, %s150
      %p154 = pneg %p148
      %p155 = scmp.eq.s32.totalorder %s13, 1
      %p156 = por %p154, %p155
      %p157 = scmp.ne.s32.totalorder %s149, %s152
      %p158 = scmp.eq.s32.totalorder %s13, 0
      %p159 = por %p157, %p158
      %p160 = scmp.ne.s32.totalorder %s149, %s152
      %p161 = scmp.eq.s32.totalorder %s18, 1
      %p162 = por %p160, %p161
      %p163 = scmp.ne.s32.totalorder %s152, %s153
      %p164 = scmp.eq.s32.totalorder %s18, 0
      %p165 = por %p163, %p164
      %p166 = scmp.ne.s32.totalorder %s152, %s153
      %p167 = scmp.eq.s32.totalorder %s19, 1
      %p168 = por %p166, %p167
      %p170 = scmp.ne.s32.totalorder %s153, %s169
      %p171 = scmp.eq.s32.totalorder %s19, 0
      %p172 = por %p170, %p171
      %s173 = ssub.s32 %s20, %s32
      %s174 = ssub.s32 %s21, %s28
      %s175 = sor.u32 %s173, %s174
      %p176 = scmp.eq.s32.totalorder %s175, 0
      %s178 = sadd.s32 %s177, 1
      %s179 = scalar_select %p176, %s177, %s178
      %p182 = pneg %p176
      %p183 = scmp.eq.s32.totalorder %s13, 1
      %p184 = por %p182, %p183
      %p185 = scmp.ne.s32.totalorder %s177, %s180
      %p186 = scmp.eq.s32.totalorder %s13, 0
      %p187 = por %p185, %p186
      %p188 = scmp.ne.s32.totalorder %s177, %s180
      %p189 = scmp.eq.s32.totalorder %s18, 1
      %p190 = por %p188, %p189
      %p191 = scmp.ne.s32.totalorder %s180, %s181
      %p192 = scmp.eq.s32.totalorder %s18, 0
      %p193 = por %p191, %p192
      %p194 = scmp.ne.s32.totalorder %s180, %s181
      %p195 = scmp.eq.s32.totalorder %s19, 1
      %p196 = por %p194, %p195
      %p198 = scmp.ne.s32.totalorder %s181, %s197
      %p199 = scmp.eq.s32.totalorder %s19, 0
      %p200 = por %p198, %p199
      %p201 = scmp.le.s32.totalorder 1, %s13
      %p202 = scmp.lt.s32.totalorder %s13, 3
      %p203 = pnand %p201, %p202
      %p204 = pneg %p203
      // Predicated region
      $region9: #{model_apply.9} parent=5 // pred_check
        _
      $region10: #{model_apply.9} parent=5 // pred_check_branch
        %206 = sbr.rel (%p203) target = $region12
      $region11: #{model_apply.9} parent=5 // pred_region
        %s207 = ssub.s32 %s13, 1
        // Predicated region
        $region13: #{model_apply.9} parent=11 // pred_check
          %p208 = pneg %p74
        $region14: #{model_apply.9} parent=11 // pred_check_branch
          %210 = sbr.rel (%p208) target = $region16
        $region15: #{model_apply.9} parent=11 // pred_region
          _
        $region16: #{model_apply.9} parent=11 // pred_fallthru
          _
        // Predicated region
        $region17: #{model_apply.9} parent=11 // pred_check
          %p211 = pneg %p95
        $region18: #{model_apply.9} parent=11 // pred_check_branch
          %213 = sbr.rel (%p211) target = $region20
        $region19: #{model_apply.9} parent=11 // pred_region
          _
        $region20: #{model_apply.9} parent=11 // pred_fallthru
          _
        // Predicated region
        $region21: #{model_apply.9} parent=11 // pred_check
          %p214 = pneg %p116
        $region22: #{model_apply.9} parent=11 // pred_check_branch
          %216 = sbr.rel (%p214) target = $region24
        $region23: #{model_apply.9} parent=11 // pred_region
          _
        $region24: #{model_apply.9} parent=11 // pred_fallthru
          _
        // Predicated region
        $region25: #{model_apply.9} parent=11 // pred_check
          %p217 = pneg %p137
        $region26: #{model_apply.9} parent=11 // pred_check_branch
          %219 = sbr.rel (%p217) target = $region28
        $region27: #{model_apply.9} parent=11 // pred_region
          _
        $region28: #{model_apply.9} parent=11 // pred_fallthru
          _
      $region12: #{model_apply.9} parent=5 // pred_fallthru
        _
      %p220 = scmp.lt.s32.totalorder %s13, 2
      // Predicated region
      $region29: #{model_apply.9} parent=5 // pred_check
        %p221 = pneg %p220
      $region30: #{model_apply.9} parent=5 // pred_check_branch
        %223 = sbr.rel (%p221) target = $region32
      $region31: #{model_apply.9} parent=5 // pred_region
        // Predicated region
        $region33: #{model_apply.9} parent=31 // pred_check
          %p224 = pneg %p47
        $region34: #{model_apply.9} parent=31 // pred_check_branch
          %226 = sbr.rel (%p224) target = $region36
        $region35: #{model_apply.9} parent=31 // pred_region
          %s227 = sand.u32 %s37, 1
          %s228 = sand.u32 %s37, 1
          %s229 = smul.addr %s228, 64
          %s230 = scalar_lea.vmem [#allocation2], %s229
          %s231 = smul.u32 8, %s21
          %s232 = smul.addr %s231, 2
          %s233 = smul.addr %s20, 16
          %s234 = sadd.s32 %s232, %s233
          %s235 = smul.addr %s234, 8
          %s236 = scalar_lea.vmem %s0, %s235
          // Predicated region
          $region37: #{model_apply.9} parent=35 // pred_check
            _
          $region38: #{model_apply.9} parent=35 // pred_check_branch
            %238 = sbr.rel (0) target = $region40
          $region39: #{model_apply.9} parent=35 // pred_region
            // Predicated region
            $region41: #{model_apply.9} parent=39 // pred_check
              _
            $region42: #{model_apply.9} parent=39 // pred_check_branch
              %240 = sbr.rel (0) target = $region44
            $region43: #{model_apply.9} parent=39 // pred_region
              // Predicated region
              $region56: #{model_apply.9} parent=43 // pred_check
                _
              $region57: #{model_apply.9} parent=43 // pred_check_branch
                %269 = sbr.rel (0) target = $region59
              $region58: #{model_apply.9} parent=43 // pred_region
                loop: start=0, step=1, limit=1
                $region60: #{model_apply.9} parent=58 // loop_pre_header
                  _
                $region61: #{model_apply.9} parent=58 // loop_header
                  %s271 = sphi 0, %s275
                  %p272 = scmp.ge.s32.totalorder %s271, 1
                  %s276 = sphi %s236, %s236
                  %s277 = sphi %s230, %s230
                $region62: #{model_apply.9} parent=58 // loop_header_branch
                  %274 = sbr.rel (%p272) target = $region66
                $region63: #{model_apply.9} parent=58 // loop_body
                  %v278 = vld [vmem:[%s276] sm:$0xff]
                  %279 = vst [vmem:[%s277] sm:$0xff] %v278
                  %v280 = vld [vmem:[%s276 + $0x10] sm:$0xff]
                  %281 = vst [vmem:[%s277 + $0x8] sm:$0xff] %v280
                  %v282 = vld [vmem:[%s276 + $0x20] sm:$0xff]
                  %283 = vst [vmem:[%s277 + $0x10] sm:$0xff] %v282
                  %v284 = vld [vmem:[%s276 + $0x30] sm:$0xff]
                  %285 = vst [vmem:[%s277 + $0x18] sm:$0xff] %v284
                  %v286 = vld [vmem:[%s276 + $0x40] sm:$0xff]
                  %287 = vst [vmem:[%s277 + $0x20] sm:$0xff] %v286
                  %v288 = vld [vmem:[%s276 + $0x50] sm:$0xff]
                  %289 = vst [vmem:[%s277 + $0x28] sm:$0xff] %v288
                  %v290 = vld [vmem:[%s276 + $0x60] sm:$0xff]
                  %291 = vst [vmem:[%s277 + $0x30] sm:$0xff] %v290
                  %v292 = vld [vmem:[%s276 + $0x70] sm:$0xff]
                  %293 = vst [vmem:[%s277 + $0x38] sm:$0xff] %v292
                $region64: #{model_apply.9} parent=58 // loop_footer
                  %s275 = sadd.s32 1, %s271
                $region65: #{model_apply.9} parent=58 // loop_footer_branch
                  %270 = sbr.rel target = $region61
                $region66: #{model_apply.9} parent=58 // loop_exit
                  _
              $region59: #{model_apply.9} parent=43 // pred_fallthru
                _
              // Predicated region
              $region67: #{model_apply.9} parent=43 // pred_check
                _
              $region68: #{model_apply.9} parent=43 // pred_check_branch
                %295 = sbr.rel target = $region70
              $region69: #{model_apply.9} parent=43 // pred_region
                _
              $region70: #{model_apply.9} parent=43 // pred_fallthru
                _
            $region44: #{model_apply.9} parent=39 // pred_fallthru
              _
            // Predicated region
            $region45: #{model_apply.9} parent=39 // pred_check
              _
            $region46: #{model_apply.9} parent=39 // pred_check_branch
              %242 = sbr.rel target = $region48
            $region47: #{model_apply.9} parent=39 // pred_region
              loop: start=0, step=1, limit=1
              $region49: #{model_apply.9} parent=47 // loop_pre_header
                _
              $region50: #{model_apply.9} parent=47 // loop_header
                %s245 = sphi 0, %s249
                %p246 = scmp.ge.s32.totalorder %s245, 1
                %s250 = sphi %s236, %s236
                %s251 = sphi %s230, %s230
              $region51: #{model_apply.9} parent=47 // loop_header_branch
                %248 = sbr.rel (%p246) target = $region55
              $region52: #{model_apply.9} parent=47 // loop_body
                %v252 = vld [vmem:[%s250] sm:$0xff]
                %253 = vst [vmem:[%s251] sm:$0xff] %v252
                %v254 = vld [vmem:[%s250 + $0x10] sm:$0xff]
                %255 = vst [vmem:[%s251 + $0x8] sm:$0xff] %v254
                %v256 = vld [vmem:[%s250 + $0x20] sm:$0xff]
                %257 = vst [vmem:[%s251 + $0x10] sm:$0xff] %v256
                %v258 = vld [vmem:[%s250 + $0x30] sm:$0xff]
                %259 = vst [vmem:[%s251 + $0x18] sm:$0xff] %v258
                %v260 = vld [vmem:[%s250 + $0x40] sm:$0xff]
                %261 = vst [vmem:[%s251 + $0x20] sm:$0xff] %v260
                %v262 = vld [vmem:[%s250 + $0x50] sm:$0xff]
                %263 = vst [vmem:[%s251 + $0x28] sm:$0xff] %v262
                %v264 = vld [vmem:[%s250 + $0x60] sm:$0xff]
                %265 = vst [vmem:[%s251 + $0x30] sm:$0xff] %v264
                %v266 = vld [vmem:[%s250 + $0x70] sm:$0xff]
                %267 = vst [vmem:[%s251 + $0x38] sm:$0xff] %v266
              $region53: #{model_apply.9} parent=47 // loop_footer
                %s249 = sadd.s32 1, %s245
              $region54: #{model_apply.9} parent=47 // loop_footer_branch
                %244 = sbr.rel target = $region50
              $region55: #{model_apply.9} parent=47 // loop_exit
                _
            $region48: #{model_apply.9} parent=39 // pred_fallthru
              _
          $region40: #{model_apply.9} parent=35 // pred_fallthru
            _
          %296 = vnop
        $region36: #{model_apply.9} parent=31 // pred_fallthru
          _
      $region32: #{model_apply.9} parent=5 // pred_fallthru
        _
      %p297 = scmp.le.s32.totalorder 1, %s13
      %p298 = scmp.lt.s32.totalorder %s13, 3
      %p299 = pnand %p297, %p298
      %p300 = pneg %p299
      // Predicated region
      $region71: #{model_apply.9} parent=5 // pred_check
        _
      $region72: #{model_apply.9} parent=5 // pred_check_branch
        %302 = sbr.rel (%p299) target = $region74
      $region73: #{model_apply.9} parent=5 // pred_region
        %s303 = ssub.s32 %s13, 1
        %s304 = sand.u32 %s40, 1
        %s305 = sand.u32 %s40, 1
        %s306 = smul.addr %s305, 64
        %s307 = scalar_lea.vmem [#allocation2], %s306
        // Predicated region
        $region75: #{model_apply.9} parent=73 // pred_check
          %p308 = pneg %p53
        $region76: #{model_apply.9} parent=73 // pred_check_branch
          %310 = sbr.rel (%p308) target = $region78
        $region77: #{model_apply.9} parent=73 // pred_region
          _
        $region78: #{model_apply.9} parent=73 // pred_fallthru
          _
        %s311 = sand.u32 %s40, 1
        %s312 = sand.u32 %s40, 1
        %s313 = smul.addr %s312, 64
        %s314 = scalar_lea.vmem [#allocation2], %s313
        %p315 = pneg %p53
        %p316 = pneg %p50
        %p317 = pneg %p74
        %p318 = pneg %p71
        %p319 = pneg %p95
        %p320 = pneg %p92
        %p321 = pneg %p116
        %p322 = pneg %p113
        %p323 = pneg %p137
        %p324 = pneg %p134
        %p325 = pneg %p165
        %p326 = pneg %p162
        %s327 = smul.u32 8, %s23
        %p328 = scmp.lt.s32.totalorder %s22, 1
        %s329 = scalar_select %p328, %s22, 1
        %p330 = scmp.lt.s32.totalorder %s327, 7
        %s331 = scalar_select %p330, %s327, 7
        %s332 = smul.addr %s329, 8
        %s333 = sadd.s32 %s331, %s332
        %s334 = smul.addr %s333, 4
        %s335 = scalar_lea.vmem %s5, %s334
        %p336 = pneg %p193
        %p337 = pneg %p190
        %s338 = smul.u32 8, %s23
        %p339 = scmp.lt.s32.totalorder %s22, 1
        %s340 = scalar_select %p339, %s22, 1
        %p341 = scmp.lt.s32.totalorder %s338, 7
        %s342 = scalar_select %p341, %s338, 7
        %s343 = smul.addr %s340, 8
        %s344 = sadd.s32 %s342, %s343
        %s345 = smul.addr %s344, 4
        %s346 = scalar_lea.vmem %s6, %s345
        %s347 = smul.u32 8, %s23
        %s348 = smul.u32 8, %s23
        %p349 = scmp.lt.s32.totalorder %s22, 1
        %s350 = scalar_select %p349, %s22, 1
        %p351 = scmp.lt.s32.totalorder %s348, 7
        %s352 = scalar_select %p351, %s348, 7
        %s353 = smul.addr %s350, 8
        %s354 = sadd.s32 %s352, %s353
        %s355 = smul.addr %s354, 4
        %s356 = scalar_lea.vmem %s5, %s355
        %s357 = smul.u32 8, %s23
        %s358 = smul.u32 8, %s23
        %p359 = scmp.lt.s32.totalorder %s22, 1
        %s360 = scalar_select %p359, %s22, 1
        %p361 = scmp.lt.s32.totalorder %s358, 7
        %s362 = scalar_select %p361, %s358, 7
        %s363 = smul.addr %s360, 8
        %s364 = sadd.s32 %s362, %s363
        %s365 = smul.addr %s364, 4
        %s366 = scalar_lea.vmem %s6, %s365
        %s367 = smul.u32 8, %s23
        %v369 = vld [vmem:[%s307] sm:$0xff]
        %v370 = vld [vmem:[%s307 + $0x8] sm:$0xff]
        %v371 = vld [vmem:[%s307 + $0x10] sm:$0xff]
        %v372 = vld [vmem:[%s307 + $0x18] sm:$0xff]
        %v373 = vld [vmem:[%s307 + $0x20] sm:$0xff]
        %v374 = vld [vmem:[%s307 + $0x28] sm:$0xff]
        %v375 = vld [vmem:[%s307 + $0x30] sm:$0xff]
        %v376 = vld [vmem:[%s307 + $0x38] sm:$0xff]
        %v377 = vpack.c.bf16 %v369, %v369
        %v378 = vpack.c.bf16 %v370, %v370
        %v379 = vpack.c.bf16 %v371, %v371
        %v380 = vpack.c.bf16 %v372, %v372
        %v381 = vpack.c.bf16 %v373, %v373
        %v382 = vpack.c.bf16 %v374, %v374
        %v383 = vpack.c.bf16 %v375, %v375
        %v384 = vpack.c.bf16 %v376, %v376
        %v385 = vld [vmem:[%s1] sm:$0xf]
        %v386 = vld [vmem:[%s1 + $0x4] sm:$0xf]
        %v387 = vld [vmem:[%s1 + $0x8] sm:$0xf]
        %v388 = vld [vmem:[%s1 + $0xc] sm:$0xf]
        %v389 = vld [vmem:[%s2] sm:$0x1]
        %v391 = vlaneseq
        %v392 = vshrl.u32 %v391, 7
        %v393 = vsub.s32 0, %v392
        %v394 = vrot.slane %v389, %v393
        %v404 = vunpack.c.l.b16 %v377
        %v405 = vunpack.c.l.b16 %v378
        %v406 = vunpack.c.l.b16 %v379
        %v407 = vunpack.c.l.b16 %v380
        %v408 = vunpack.c.l.b16 %v381
        %v409 = vunpack.c.l.b16 %v382
        %v410 = vunpack.c.l.b16 %v383
        %v411 = vunpack.c.l.b16 %v384
        %v412 = vpack.c.b16 %v405, %v404
        %v413 = vpack.c.b16 %v407, %v406
        %v414 = vpack.c.b16 %v409, %v408
        %v415 = vpack.c.b16 %v411, %v410
        %v420 = vunpack.c.l.b16 %v385
        %v421 = vunpack.c.l.b16 %v386
        %v422 = vunpack.c.l.b16 %v387
        %v423 = vunpack.c.l.b16 %v388
        %v424 = vpack.c.b16 %v421, %v420
        %v425 = vpack.c.b16 %v423, %v422
        %vm428 = vcmask 261120
        %v430 = vsel %vm428, %v412, 0
        %v433 = vsel %vm428, %v413, 0
        %v436 = vsel %vm428, %v414, 0
        %v439 = vsel %vm428, %v415, 0
        %441 = vmatprep.subr.bf16.mxu0 0
        %442 = vmatpush1.bf16.msra.mxu0 %v424
        %443 = vmatprep.subr.bf16.mxu0 0
        %444 = vmatpush1.bf16.msra.mxu0 %v425
        %445 = vmatprep.subr.bf16.mxu0 0
        %446 = vmatpush1.bf16.msra.mxu0 0
        %447 = vmatprep.subr.bf16.mxu0 0
        %448 = vmatpush1.bf16.msra.mxu0 0
        %449 = vmatprep.subr.bf16.mxu0 0
        %450 = vmatpush1.bf16.msra.mxu0 0
        %451 = vmatprep.subr.bf16.mxu0 0
        %452 = vmatpush1.bf16.msra.mxu0 0
        %453 = vmatprep.subr.bf16.mxu0 0
        %454 = vmatpush1.bf16.msra.mxu0 0
        %455 = vmatprep.subr.bf16.mxu0 0
        %456 = vmatpush1.bf16.msra.mxu0 0
        %457 = vmatprep.subr.bf16.mxu0 0
        %458 = vmatpush1.bf16.msra.mxu0 0
        %459 = vmatprep.subr.bf16.mxu0 0
        %460 = vmatpush1.bf16.msra.mxu0 0
        %461 = vmatprep.subr.bf16.mxu0 0
        %462 = vmatpush1.bf16.msra.mxu0 0
        %463 = vmatprep.subr.bf16.mxu0 0
        %464 = vmatpush1.bf16.msra.mxu0 0
        %465 = vmatprep.subr.bf16.mxu0 0
        %466 = vmatpush1.bf16.msra.mxu0 0
        %467 = vmatprep.subr.bf16.mxu0 0
        %468 = vmatpush1.bf16.msra.mxu0 0
        %469 = vmatprep.subr.bf16.mxu0 0
        %470 = vmatpush1.bf16.msra.mxu0 0
        %471 = vmatprep.subr.bf16.mxu0 0
        %472 = vmatpush1.bf16.msra.mxu0 0
        %473 = vmatprep.mubr.bf16.mxu0 0
        %474 = vmatmul.mubr.bf16.gmra.mrb[0].mxu0 %v430
        %v475 = vpop.f32.mrb[0].mxu0
        %v476 = vadd.f32 %v394, %v475
        %v477 = vpop.f32.mrb[0].mxu0
        %v478 = vpop.f32.mrb[0].mxu0
        %v479 = vadd.f32 %v394, %v478
        %v480 = vpop.f32.mrb[0].mxu0
        %481 = vmatprep.mubr.bf16.mxu0 0
        %482 = vmatmul.mubr.bf16.gmra.mrb[0].mxu0 %v433
        %v483 = vpop.f32.mrb[0].mxu0
        %v484 = vadd.f32 %v394, %v483
        %v485 = vpop.f32.mrb[0].mxu0
        %v486 = vpop.f32.mrb[0].mxu0
        %v487 = vadd.f32 %v394, %v486
        %v488 = vpop.f32.mrb[0].mxu0
        %489 = vmatprep.mubr.bf16.mxu0 0
        %490 = vmatmul.mubr.bf16.gmra.mrb[0].mxu0 %v436
        %v491 = vpop.f32.mrb[0].mxu0
        %v492 = vadd.f32 %v394, %v491
        %v493 = vpop.f32.mrb[0].mxu0
        %v494 = vpop.f32.mrb[0].mxu0
        %v495 = vadd.f32 %v394, %v494
        %v496 = vpop.f32.mrb[0].mxu0
        %497 = vmatprep.mubr.bf16.mxu0 0
        %498 = vmatmul.mubr.bf16.gmra.mrb[0].mxu0 %v439
        %v499 = vpop.f32.mrb[0].mxu0
        %v500 = vadd.f32 %v394, %v499
        %v501 = vpop.f32.mrb[0].mxu0
        %v502 = vpop.f32.mrb[0].mxu0
        %v503 = vadd.f32 %v394, %v502
        %v504 = vpop.f32.mrb[0].mxu0
        %505 = vdwg.mxu0
        %v506 = vmax.f32 %v476, 0.0
        %v507 = vmax.f32 %v479, 0.0
        %v508 = vmax.f32 %v484, 0.0
        %v509 = vmax.f32 %v487, 0.0
        %v510 = vmax.f32 %v492, 0.0
        %v511 = vmax.f32 %v495, 0.0
        %v512 = vmax.f32 %v500, 0.0
        %v513 = vmax.f32 %v503, 0.0
        %v514 = vpack.c.bf16 %v506, %v506
        %v515 = vpack.c.bf16 %v507, %v507
        %v516 = vpack.c.bf16 %v508, %v508
        %v517 = vpack.c.bf16 %v509, %v509
        %v518 = vpack.c.bf16 %v510, %v510
        %v519 = vpack.c.bf16 %v511, %v511
        %v520 = vpack.c.bf16 %v512, %v512
        %v521 = vpack.c.bf16 %v513, %v513
        %vm522 = vcmask 60416
        %523 = vst.msk [vmem:[%s356] sm:$0xf] %vm522, %v514
        %524 = vst.msk [vmem:[%s356 + $0x4] sm:$0xf] %vm522, %v515
        %525 = vst.msk [vmem:[%s356 + $0x8] sm:$0xf] %vm522, %v516
        %526 = vst.msk [vmem:[%s356 + $0xc] sm:$0xf] %vm522, %v517
        %527 = vst.msk [vmem:[%s356 + $0x10] sm:$0xf] %vm522, %v518
        %528 = vst.msk [vmem:[%s356 + $0x14] sm:$0xf] %vm522, %v519
        %529 = vst.msk [vmem:[%s356 + $0x18] sm:$0xf] %vm522, %v520
        %530 = vst.msk [vmem:[%s356 + $0x1c] sm:$0xf] %vm522, %v521
        %v531 = vld [vmem:[%s3] sm:$0xf]
        %v532 = vld [vmem:[%s3 + $0x4] sm:$0xf]
        %v533 = vld [vmem:[%s3 + $0x8] sm:$0xf]
        %v534 = vld [vmem:[%s3 + $0xc] sm:$0xf]
        %v535 = vld [vmem:[%s4] sm:$0x1]
        %v537 = vlaneseq
        %v538 = vshrl.u32 %v537, 7
        %v539 = vsub.s32 0, %v538
        %v540 = vrot.slane %v535, %v539
        %v546 = vunpack.c.l.b16 %v531
        %v547 = vunpack.c.l.b16 %v532
        %v548 = vunpack.c.l.b16 %v533
        %v549 = vunpack.c.l.b16 %v534
        %v550 = vpack.c.b16 %v547, %v546
        %v551 = vpack.c.b16 %v549, %v548
        %554 = vmatprep.subr.bf16.mxu0 0
        %555 = vmatpush1.bf16.msra.mxu0 %v550
        %556 = vmatprep.subr.bf16.mxu0 0
        %557 = vmatpush1.bf16.msra.mxu0 %v551
        %558 = vmatprep.subr.bf16.mxu0 0
        %559 = vmatpush1.bf16.msra.mxu0 0
        %560 = vmatprep.subr.bf16.mxu0 0
        %561 = vmatpush1.bf16.msra.mxu0 0
        %562 = vmatprep.subr.bf16.mxu0 0
        %563 = vmatpush1.bf16.msra.mxu0 0
        %564 = vmatprep.subr.bf16.mxu0 0
        %565 = vmatpush1.bf16.msra.mxu0 0
        %566 = vmatprep.subr.bf16.mxu0 0
        %567 = vmatpush1.bf16.msra.mxu0 0
        %568 = vmatprep.subr.bf16.mxu0 0
        %569 = vmatpush1.bf16.msra.mxu0 0
        %570 = vmatprep.subr.bf16.mxu0 0
        %571 = vmatpush1.bf16.msra.mxu0 0
        %572 = vmatprep.subr.bf16.mxu0 0
        %573 = vmatpush1.bf16.msra.mxu0 0
        %574 = vmatprep.subr.bf16.mxu0 0
        %575 = vmatpush1.bf16.msra.mxu0 0
        %576 = vmatprep.subr.bf16.mxu0 0
        %577 = vmatpush1.bf16.msra.mxu0 0
        %578 = vmatprep.subr.bf16.mxu0 0
        %579 = vmatpush1.bf16.msra.mxu0 0
        %580 = vmatprep.subr.bf16.mxu0 0
        %581 = vmatpush1.bf16.msra.mxu0 0
        %582 = vmatprep.subr.bf16.mxu0 0
        %583 = vmatpush1.bf16.msra.mxu0 0
        %584 = vmatprep.subr.bf16.mxu0 0
        %585 = vmatpush1.bf16.msra.mxu0 0
        %586 = vmatprep.mubr.bf16.mxu0 0
        %587 = vmatmul.mubr.bf16.gmra.mrb[0].mxu0 %v430
        %v588 = vpop.f32.mrb[0].mxu0
        %v589 = vadd.f32 %v540, %v588
        %v590 = vpop.f32.mrb[0].mxu0
        %v591 = vpop.f32.mrb[0].mxu0
        %v592 = vadd.f32 %v540, %v591
        %v593 = vpop.f32.mrb[0].mxu0
        %594 = vmatprep.mubr.bf16.mxu0 0
        %595 = vmatmul.mubr.bf16.gmra.mrb[0].mxu0 %v433
        %v596 = vpop.f32.mrb[0].mxu0
        %v597 = vadd.f32 %v540, %v596
        %v598 = vpop.f32.mrb[0].mxu0
        %v599 = vpop.f32.mrb[0].mxu0
        %v600 = vadd.f32 %v540, %v599
        %v601 = vpop.f32.mrb[0].mxu0
        %602 = vmatprep.mubr.bf16.mxu0 0
        %603 = vmatmul.mubr.bf16.gmra.mrb[0].mxu0 %v436
        %v604 = vpop.f32.mrb[0].mxu0
        %v605 = vadd.f32 %v540, %v604
        %v606 = vpop.f32.mrb[0].mxu0
        %v607 = vpop.f32.mrb[0].mxu0
        %v608 = vadd.f32 %v540, %v607
        %v609 = vpop.f32.mrb[0].mxu0
        %610 = vmatprep.mubr.bf16.mxu0 0
        %611 = vmatmul.mubr.bf16.gmra.mrb[0].mxu0 %v439
        %v612 = vpop.f32.mrb[0].mxu0
        %v613 = vadd.f32 %v540, %v612
        %v614 = vpop.f32.mrb[0].mxu0
        %v615 = vpop.f32.mrb[0].mxu0
        %v616 = vadd.f32 %v540, %v615
        %v617 = vpop.f32.mrb[0].mxu0
        %618 = vdwg.mxu0
        %v619 = vpack.c.bf16 %v589, %v589
        %v620 = vpack.c.bf16 %v592, %v592
        %v621 = vpack.c.bf16 %v597, %v597
        %v622 = vpack.c.bf16 %v600, %v600
        %v623 = vpack.c.bf16 %v605, %v605
        %v624 = vpack.c.bf16 %v608, %v608
        %v625 = vpack.c.bf16 %v613, %v613
        %v626 = vpack.c.bf16 %v616, %v616
        %vm627 = vcmask 257024
        %628 = vst.msk [vmem:[%s366] sm:$0xf] %vm627, %v619
        %629 = vst.msk [vmem:[%s366 + $0x4] sm:$0xf] %vm627, %v620
        %630 = vst.msk [vmem:[%s366 + $0x8] sm:$0xf] %vm627, %v621
        %631 = vst.msk [vmem:[%s366 + $0xc] sm:$0xf] %vm627, %v622
        %632 = vst.msk [vmem:[%s366 + $0x10] sm:$0xf] %vm627, %v623
        %633 = vst.msk [vmem:[%s366 + $0x14] sm:$0xf] %vm627, %v624
        %634 = vst.msk [vmem:[%s366 + $0x18] sm:$0xf] %vm627, %v625
        %635 = vst.msk [vmem:[%s366 + $0x1c] sm:$0xf] %vm627, %v626
        %s636 = smul.u32 8, %s23
        %p637 = scmp.lt.s32.totalorder %s22, 1
        %s638 = scalar_select %p637, %s22, 1
        %p639 = scmp.lt.s32.totalorder %s636, 7
        %s640 = scalar_select %p639, %s636, 7
        %s641 = smul.addr %s638, 8
        %s642 = sadd.s32 %s640, %s641
        %s643 = smul.addr %s642, 4
        %s644 = scalar_lea.vmem %s5, %s643
        %s645 = smul.u32 8, %s23
        %p646 = scmp.lt.s32.totalorder %s22, 1
        %s647 = scalar_select %p646, %s22, 1
        %p648 = scmp.lt.s32.totalorder %s645, 7
        %s649 = scalar_select %p648, %s645, 7
        %s650 = smul.addr %s647, 8
        %s651 = sadd.s32 %s649, %s650
        %s652 = smul.addr %s651, 4
        %s653 = scalar_lea.vmem %s6, %s652
        // Predicated region
        $region79: #{model_apply.9} parent=73 // pred_check
          %p654 = pneg %p162
        $region80: #{model_apply.9} parent=73 // pred_check_branch
          %656 = sbr.rel (%p654) target = $region82
        $region81: #{model_apply.9} parent=73 // pred_region
          %s657 = smul.u32 8, %s23
        $region82: #{model_apply.9} parent=73 // pred_fallthru
          _
        // Predicated region
        $region83: #{model_apply.9} parent=73 // pred_check
          %p658 = pneg %p190
        $region84: #{model_apply.9} parent=73 // pred_check_branch
          %660 = sbr.rel (%p658) target = $region86
        $region85: #{model_apply.9} parent=73 // pred_region
          %s661 = smul.u32 8, %s23
        $region86: #{model_apply.9} parent=73 // pred_fallthru
          _
      $region74: #{model_apply.9} parent=5 // pred_fallthru
        _
      %p662 = scmp.le.s32.totalorder 2, %s13
      // Predicated region
      $region87: #{model_apply.9} parent=5 // pred_check
        %p663 = pneg %p662
      $region88: #{model_apply.9} parent=5 // pred_check_branch
        %665 = sbr.rel (%p663) target = $region90
      $region89: #{model_apply.9} parent=5 // pred_region
        %s666 = ssub.s32 %s13, 2
        // Predicated region
        $region91: #{model_apply.9} parent=89 // pred_check
          %p667 = pneg %p168
        $region92: #{model_apply.9} parent=89 // pred_check_branch
          %669 = sbr.rel (%p667) target = $region94
        $region93: #{model_apply.9} parent=89 // pred_region
          %s670 = smul.u32 8, %s25
          %p671 = scmp.lt.s32.totalorder %s24, 1
          %s672 = scalar_select %p671, %s24, 1
          %p673 = scmp.lt.s32.totalorder %s670, 7
          %s674 = scalar_select %p673, %s670, 7
          %s675 = smul.addr %s672, 8
          %s676 = sadd.s32 %s674, %s675
          %s677 = smul.addr %s676, 4
          %s678 = scalar_lea.vmem %s5, %s677
        $region94: #{model_apply.9} parent=89 // pred_fallthru
          _
        // Predicated region
        $region95: #{model_apply.9} parent=89 // pred_check
          %p679 = pneg %p196
        $region96: #{model_apply.9} parent=89 // pred_check_branch
          %681 = sbr.rel (%p679) target = $region98
        $region97: #{model_apply.9} parent=89 // pred_region
          %s682 = smul.u32 8, %s25
          %p683 = scmp.lt.s32.totalorder %s24, 1
          %s684 = scalar_select %p683, %s24, 1
          %p685 = scmp.lt.s32.totalorder %s682, 7
          %s686 = scalar_select %p685, %s682, 7
          %s687 = smul.addr %s684, 8
          %s688 = sadd.s32 %s686, %s687
          %s689 = smul.addr %s688, 4
          %s690 = scalar_lea.vmem %s6, %s689
        $region98: #{model_apply.9} parent=89 // pred_fallthru
          _
      $region90: #{model_apply.9} parent=5 // pred_fallthru
        _
    $region6: #{model_apply.9} parent=1 // loop_footer
      %s17 = sadd.s32 1, %s13
    $region7: #{model_apply.9} parent=1 // loop_footer_branch
      %12 = sbr.rel target = $region3
    $region8: #{model_apply.9} parent=1 // loop_exit
      _

// kernel: model_apply.11
$region0: #{model_apply.11}
  #allocation0 [shape = 'u32[]', space=smem, size = 0x4, offset = 0x4, fixed_abs, tag = 'smem constant byte address 0x4 - core index']
  #allocation1 [shape = 'u32[144,128]{1,0:T(1,128)}', space=vmem, size = 0x12000, scoped, tag = 'internal scratch']
  %s0 = inlined_call_operand.vmem [shape: bf16[2,8,8,8], index: 0, kind: input, shape index: {}]
  %s1 = inlined_call_operand.vmem [shape: bf16[8,32], index: 1, kind: input, shape index: {}]
  %s2 = inlined_call_operand.vmem [shape: f32[1,32], index: 2, kind: input, shape index: {}]
  %s3 = inlined_call_operand.vmem [shape: bf16[2,8,8,32], index: 3, kind: input, shape index: {}]
  %s4 = inlined_call_operand.hbm [shape: f32[2,8,8,32], index: 4, kind: output, shape index: {}]
  %s5 = sld [smem:[#allocation0]]
  $region49: #{model_apply.11} parent=0
    _
  %s7 = ssub.s32 1, %s5
  %s8 = scalar_select 0, %s7, %s5
  $region1: #{model_apply.11} parent=0
    #allocation2 [shape = 'u8[65536]{0}', space=vmem, size = 0x10000, scoped, tag = 'output window, operand 0']
    #allocation3 [shape = 's32[2]{0}', space=sflag, size = 0x8, scoped, tag = 'scoped memory for model_apply.11']
    %9 = vsyncpa [#allocation3], 0
    %s10 = scalar_lea.sflag [#allocation3], 1
    %11 = vsyncpa %s10, 0
    loop: start=0, step=1, limit=4
    $region2: #{model_apply.11} parent=1 // loop_pre_header
      _
    $region3: #{model_apply.11} parent=1 // loop_header
      %s13 = sphi 0, %s17
      %p14 = scmp.ge.s32.totalorder %s13, 4
      %s20 = sphi 0, %s32
      %s21 = sphi 0, %s28
      %s22 = sphi 0, %s20
      %s23 = sphi 0, %s21
      %s24 = sphi 0, %s22
      %s25 = sphi 0, %s23
      %s37 = sphi 0, %s39
      %s40 = sphi 0, %s37
      %s41 = sphi 0, %s40
      %s57 = sphi 0, %s41
      %s61 = sphi 0, %s61
      %s63 = sphi 0, %s61
      %s64 = sphi 0, %s63
      %s78 = sphi 0, %s64
      %s82 = sphi 0, %s82
      %s84 = sphi 0, %s82
      %s85 = sphi 0, %s84
      %s99 = sphi 0, %s85
      %s107 = sphi 0, %s109
      %s110 = sphi 0, %s107
      %s111 = sphi 0, %s110
      %s127 = sphi 0, %s111
      %s135 = sphi 0, %s137
      %s138 = sphi 0, %s135
      %s139 = sphi 0, %s138
      %s155 = sphi 0, %s139
    $region4: #{model_apply.11} parent=1 // loop_header_branch
      %16 = sbr.rel (%p14) target = $region8
    $region5: #{model_apply.11} parent=1 // loop_body
      %s18 = ssub.s32 %s13, 1
      %s19 = ssub.s32 %s13, 2
      %s26 = sadd.s32 1, %s21
      %p27 = scmp.ge.s32.totalorder %s26, 1
      %s28 = scalar_select %p27, 0, %s26
      %s29 = sadd.s32 1, %s20
      %s30 = scalar_select %p27, %s29, %s20
      %p31 = scmp.ge.s32.totalorder %s30, 2
      %s32 = scalar_select %p31, 0, %s30
      %s33 = ssub.s32 %s20, %s32
      %s34 = ssub.s32 %s21, %s28
      %s35 = sor.u32 %s33, %s34
      %p36 = scmp.eq.s32.totalorder %s35, 0
      %s38 = sadd.s32 %s37, 1
      %s39 = scalar_select %p36, %s37, %s38
      %p42 = pneg %p36
      %p43 = scmp.eq.s32.totalorder %s13, 1
      %p44 = por %p42, %p43
      %p45 = scmp.ne.s32.totalorder %s37, %s40
      %p46 = scmp.eq.s32.totalorder %s13, 0
      %p47 = por %p45, %p46
      %p48 = scmp.ne.s32.totalorder %s37, %s40
      %p49 = scmp.eq.s32.totalorder %s18, 1
      %p50 = por %p48, %p49
      %p51 = scmp.ne.s32.totalorder %s40, %s41
      %p52 = scmp.eq.s32.totalorder %s18, 0
      %p53 = por %p51, %p52
      %p54 = scmp.ne.s32.totalorder %s40, %s41
      %p55 = scmp.eq.s32.totalorder %s19, 1
      %p56 = por %p54, %p55
      %p58 = scmp.ne.s32.totalorder %s41, %s57
      %p59 = scmp.eq.s32.totalorder %s19, 0
      %p60 = por %p58, %p59
      %s62 = sadd.s32 %s61, 1
      %p65 = scmp.eq.s32.totalorder %s13, 1
      %p66 = scmp.ne.s32.totalorder %s61, %s63
      %p67 = scmp.eq.s32.totalorder %s13, 0
      %p68 = por %p66, %p67
      %p69 = scmp.ne.s32.totalorder %s61, %s63
      %p70 = scmp.eq.s32.totalorder %s18, 1
      %p71 = por %p69, %p70
      %p72 = scmp.ne.s32.totalorder %s63, %s64
      %p73 = scmp.eq.s32.totalorder %s18, 0
      %p74 = por %p72, %p73
      %p75 = scmp.ne.s32.totalorder %s63, %s64
      %p76 = scmp.eq.s32.totalorder %s19, 1
      %p77 = por %p75, %p76
      %p79 = scmp.ne.s32.totalorder %s64, %s78
      %p80 = scmp.eq.s32.totalorder %s19, 0
      %p81 = por %p79, %p80
      %s83 = sadd.s32 %s82, 1
      %p86 = scmp.eq.s32.totalorder %s13, 1
      %p87 = scmp.ne.s32.totalorder %s82, %s84
      %p88 = scmp.eq.s32.totalorder %s13, 0
      %p89 = por %p87, %p88
      %p90 = scmp.ne.s32.totalorder %s82, %s84
      %p91 = scmp.eq.s32.totalorder %s18, 1
      %p92 = por %p90, %p91
      %p93 = scmp.ne.s32.totalorder %s84, %s85
      %p94 = scmp.eq.s32.totalorder %s18, 0
      %p95 = por %p93, %p94
      %p96 = scmp.ne.s32.totalorder %s84, %s85
      %p97 = scmp.eq.s32.totalorder %s19, 1
      %p98 = por %p96, %p97
      %p100 = scmp.ne.s32.totalorder %s85, %s99
      %p101 = scmp.eq.s32.totalorder %s19, 0
      %p102 = por %p100, %p101
      %s103 = ssub.s32 %s20, %s32
      %s104 = ssub.s32 %s21, %s28
      %s105 = sor.u32 %s103, %s104
      %p106 = scmp.eq.s32.totalorder %s105, 0
      %s108 = sadd.s32 %s107, 1
      %s109 = scalar_select %p106, %s107, %s108
      %p112 = pneg %p106
      %p113 = scmp.eq.s32.totalorder %s13, 1
      %p114 = por %p112, %p113
      %p115 = scmp.ne.s32.totalorder %s107, %s110
      %p116 = scmp.eq.s32.totalorder %s13, 0
      %p117 = por %p115, %p116
      %p118 = scmp.ne.s32.totalorder %s107, %s110
      %p119 = scmp.eq.s32.totalorder %s18, 1
      %p120 = por %p118, %p119
      %p121 = scmp.ne.s32.totalorder %s110, %s111
      %p122 = scmp.eq.s32.totalorder %s18, 0
      %p123 = por %p121, %p122
      %p124 = scmp.ne.s32.totalorder %s110, %s111
      %p125 = scmp.eq.s32.totalorder %s19, 1
      %p126 = por %p124, %p125
      %p128 = scmp.ne.s32.totalorder %s111, %s127
      %p129 = scmp.eq.s32.totalorder %s19, 0
      %p130 = por %p128, %p129
      %s131 = ssub.s32 %s20, %s32
      %s132 = ssub.s32 %s21, %s28
      %s133 = sor.u32 %s131, %s132
      %p134 = scmp.eq.s32.totalorder %s133, 0
      %s136 = sadd.s32 %s135, 1
      %s137 = scalar_select %p134, %s135, %s136
      %p140 = pneg %p134
      %p141 = scmp.eq.s32.totalorder %s13, 1
      %p142 = por %p140, %p141
      %p143 = scmp.ne.s32.totalorder %s135, %s138
      %p144 = scmp.eq.s32.totalorder %s13, 0
      %p145 = por %p143, %p144
      %p146 = scmp.ne.s32.totalorder %s135, %s138
      %p147 = scmp.eq.s32.totalorder %s18, 1
      %p148 = por %p146, %p147
      %p149 = scmp.ne.s32.totalorder %s138, %s139
      %p150 = scmp.eq.s32.totalorder %s18, 0
      %p151 = por %p149, %p150
      %p152 = scmp.ne.s32.totalorder %s138, %s139
      %p153 = scmp.eq.s32.totalorder %s19, 1
      %p154 = por %p152, %p153
      %p156 = scmp.ne.s32.totalorder %s139, %s155
      %p157 = scmp.eq.s32.totalorder %s19, 0
      %p158 = por %p156, %p157
      %p159 = scmp.le.s32.totalorder 1, %s13
      %p160 = scmp.lt.s32.totalorder %s13, 3
      %p161 = pnand %p159, %p160
      %p162 = pneg %p161
      // Predicated region
      $region9: #{model_apply.11} parent=5 // pred_check
        _
      $region10: #{model_apply.11} parent=5 // pred_check_branch
        %164 = sbr.rel (%p161) target = $region12
      $region11: #{model_apply.11} parent=5 // pred_region
        %s165 = ssub.s32 %s13, 1
        // Predicated region
        $region13: #{model_apply.11} parent=11 // pred_check
          %p166 = pneg %p74
        $region14: #{model_apply.11} parent=11 // pred_check_branch
          %168 = sbr.rel (%p166) target = $region16
        $region15: #{model_apply.11} parent=11 // pred_region
          _
        $region16: #{model_apply.11} parent=11 // pred_fallthru
          _
        // Predicated region
        $region17: #{model_apply.11} parent=11 // pred_check
          %p169 = pneg %p95
        $region18: #{model_apply.11} parent=11 // pred_check_branch
          %171 = sbr.rel (%p169) target = $region20
        $region19: #{model_apply.11} parent=11 // pred_region
          _
        $region20: #{model_apply.11} parent=11 // pred_fallthru
          _
      $region12: #{model_apply.11} parent=5 // pred_fallthru
        _
      %p172 = scmp.lt.s32.totalorder %s13, 2
      // Predicated region
      $region21: #{model_apply.11} parent=5 // pred_check
        %p173 = pneg %p172
      $region22: #{model_apply.11} parent=5 // pred_check_branch
        %175 = sbr.rel (%p173) target = $region24
      $region23: #{model_apply.11} parent=5 // pred_region
        // Predicated region
        $region25: #{model_apply.11} parent=23 // pred_check
          %p176 = pneg %p47
        $region26: #{model_apply.11} parent=23 // pred_check_branch
          %178 = sbr.rel (%p176) target = $region28
        $region27: #{model_apply.11} parent=23 // pred_region
          %s179 = smul.u32 8, %s21
          %p180 = scmp.lt.s32.totalorder %s20, 1
          %s181 = scalar_select %p180, %s20, 1
          %p182 = scmp.lt.s32.totalorder %s179, 7
          %s183 = scalar_select %p182, %s179, 7
          %s184 = smul.addr %s181, 8
          %s185 = sadd.s32 %s183, %s184
          %s186 = smul.addr %s185, 4
          %s187 = scalar_lea.vmem %s0, %s186
          %s188 = smul.u32 8, %s21
        $region28: #{model_apply.11} parent=23 // pred_fallthru
          _
        // Predicated region
        $region29: #{model_apply.11} parent=23 // pred_check
          %p189 = pneg %p117
        $region30: #{model_apply.11} parent=23 // pred_check_branch
          %191 = sbr.rel (%p189) target = $region32
        $region31: #{model_apply.11} parent=23 // pred_region
          %s192 = smul.u32 8, %s21
          %p193 = scmp.lt.s32.totalorder %s20, 1
          %s194 = scalar_select %p193, %s20, 1
          %p195 = scmp.lt.s32.totalorder %s192, 7
          %s196 = scalar_select %p195, %s192, 7
          %s197 = smul.addr %s194, 8
          %s198 = sadd.s32 %s196, %s197
          %s199 = smul.addr %s198, 4
          %s200 = scalar_lea.vmem %s3, %s199
          %s201 = smul.u32 8, %s21
        $region32: #{model_apply.11} parent=23 // pred_fallthru
          _
      $region24: #{model_apply.11} parent=5 // pred_fallthru
        _
      %p202 = scmp.le.s32.totalorder 1, %s13
      %p203 = scmp.lt.s32.totalorder %s13, 3
      %p204 = pnand %p202, %p203
      %p205 = pneg %p204
      // Predicated region
      $region33: #{model_apply.11} parent=5 // pred_check
        _
      $region34: #{model_apply.11} parent=5 // pred_check_branch
        %207 = sbr.rel (%p204) target = $region36
      $region35: #{model_apply.11} parent=5 // pred_region
        %s208 = ssub.s32 %s13, 1
        %s209 = smul.u32 8, %s23
        %p210 = scmp.lt.s32.totalorder %s22, 1
        %s211 = scalar_select %p210, %s22, 1
        %p212 = scmp.lt.s32.totalorder %s209, 7
        %s213 = scalar_select %p212, %s209, 7
        %s214 = smul.addr %s211, 8
        %s215 = sadd.s32 %s213, %s214
        %s216 = smul.addr %s215, 4
        %s217 = scalar_lea.vmem %s0, %s216
        %p218 = pneg %p53
        %p219 = pneg %p50
        %p220 = pneg %p74
        %p221 = pneg %p71
        %p222 = pneg %p95
        %p223 = pneg %p92
        %s224 = smul.u32 8, %s23
        %p225 = scmp.lt.s32.totalorder %s22, 1
        %s226 = scalar_select %p225, %s22, 1
        %p227 = scmp.lt.s32.totalorder %s224, 7
        %s228 = scalar_select %p227, %s224, 7
        %s229 = smul.addr %s226, 8
        %s230 = sadd.s32 %s228, %s229
        %s231 = smul.addr %s230, 4
        %s232 = scalar_lea.vmem %s3, %s231
        %p233 = pneg %p123
        %p234 = pneg %p120
        %p235 = pneg %p151
        %p236 = pneg %p148
        %s237 = sand.u32 %s138, 1
        %s238 = scalar_lea.sflag [#allocation3], %s237
        %s239 = sand.u32 %s138, 1
        %s240 = smul.addr %s239, 64
        %s241 = scalar_lea.vmem [#allocation2], %s240
        %s242 = smul.u32 8, %s23
        %p243 = scmp.lt.s32.totalorder %s22, 1
        %s244 = scalar_select %p243, %s22, 1
        %p245 = scmp.lt.s32.totalorder %s242, 7
        %s246 = scalar_select %p245, %s242, 7
        %s247 = smul.addr %s244, 8
        %s248 = sadd.s32 %s246, %s247
        %s249 = smul.addr %s248, 4
        %s250 = scalar_lea.vmem %s0, %s249
        %s251 = smul.u32 8, %s23
        %s252 = smul.u32 8, %s23
        %p253 = scmp.lt.s32.totalorder %s22, 1
        %s254 = scalar_select %p253, %s22, 1
        %p255 = scmp.lt.s32.totalorder %s252, 7
        %s256 = scalar_select %p255, %s252, 7
        %s257 = smul.addr %s254, 8
        %s258 = sadd.s32 %s256, %s257
        %s259 = smul.addr %s258, 4
        %s260 = scalar_lea.vmem %s3, %s259
        %s261 = smul.u32 8, %s23
        %s262 = smul.u32 8, %s23
        %v264 = vld [vmem:[%s250] sm:$0xf]
        %v265 = vld [vmem:[%s250 + $0x4] sm:$0xf]
        %v266 = vld [vmem:[%s250 + $0x8] sm:$0xf]
        %v267 = vld [vmem:[%s250 + $0xc] sm:$0xf]
        %v268 = vld [vmem:[%s250 + $0x10] sm:$0xf]
        %v269 = vld [vmem:[%s250 + $0x14] sm:$0xf]
        %v270 = vld [vmem:[%s250 + $0x18] sm:$0xf]
        %v271 = vld [vmem:[%s250 + $0x1c] sm:$0xf]
        %v272 = vld [vmem:[%s1] sm:$0xf]
        %v273 = vld [vmem:[%s2] sm:$0x1]
        %v275 = vlaneseq
        %v276 = vshrl.u32 %v275, 7
        %v277 = vsub.s32 0, %v276
        %v278 = vrot.slane %v273, %v277
        %v288 = vunpack.c.l.b16 %v264
        %v289 = vunpack.c.l.b16 %v265
        %v290 = vunpack.c.l.b16 %v266
        %v291 = vunpack.c.l.b16 %v267
        %v292 = vunpack.c.l.b16 %v268
        %v293 = vunpack.c.l.b16 %v269
        %v294 = vunpack.c.l.b16 %v270
        %v295 = vunpack.c.l.b16 %v271
        %v296 = vpack.c.b16 %v289, %v288
        %v297 = vpack.c.b16 %v291, %v290
        %v298 = vpack.c.b16 %v293, %v292
        %v299 = vpack.c.b16 %v295, %v294
        %vm300 = vcmask 64512
        %v302 = vsel %vm300, %v296, 0
        %v305 = vsel %vm300, %v297, 0
        %v308 = vsel %vm300, %v298, 0
        %v311 = vsel %vm300, %v299, 0
        %vm313 = vcmask 1043456
        %v315 = vsel %vm313, %v272, 0
        %317 = vmatprep.subr.bf16.mxu0 0
        %318 = vmatpush1.bf16.msra.mxu0 %v315
        %319 = vmatprep.subr.bf16.mxu0 0
        %320 = vmatpush1.bf16.msra.mxu0 0
        %321 = vmatprep.subr.bf16.mxu0 0
        %322 = vmatpush1.bf16.msra.mxu0 0
        %323 = vmatprep.subr.bf16.mxu0 0
        %324 = vmatpush1.bf16.msra.mxu0 0
        %325 = vmatprep.subr.bf16.mxu0 0
        %326 = vmatpush1.bf16.msra.mxu0 0
        %327 = vmatprep.subr.bf16.mxu0 0
        %328 = vmatpush1.bf16.msra.mxu0 0
        %329 = vmatprep.subr.bf16.mxu0 0
        %330 = vmatpush1.bf16.msra.mxu0 0
        %331 = vmatprep.subr.bf16.mxu0 0
        %332 = vmatpush1.bf16.msra.mxu0 0
        %333 = vmatprep.subr.bf16.mxu0 0
        %334 = vmatpush1.bf16.msra.mxu0 0
        %335 = vmatprep.subr.bf16.mxu0 0
        %336 = vmatpush1.bf16.msra.mxu0 0
        %337 = vmatprep.subr.bf16.mxu0 0
        %338 = vmatpush1.bf16.msra.mxu0 0
        %339 = vmatprep.subr.bf16.mxu0 0
        %340 = vmatpush1.bf16.msra.mxu0 0
        %341 = vmatprep.subr.bf16.mxu0 0
        %342 = vmatpush1.bf16.msra.mxu0 0
        %343 = vmatprep.subr.bf16.mxu0 0
        %344 = vmatpush1.bf16.msra.mxu0 0
        %345 = vmatprep.subr.bf16.mxu0 0
        %346 = vmatpush1.bf16.msra.mxu0 0
        %347 = vmatprep.subr.bf16.mxu0 0
        %348 = vmatpush1.bf16.msra.mxu0 0
        %349 = vmatprep.mubr.bf16.mxu0 0
        %350 = vmatmul.mubr.bf16.gmra.mrb[0].mxu0 %v302
        %v351 = vpop.f32.mrb[0].mxu0
        %v352 = vadd.f32 %v278, %v351
        %v353 = vpop.f32.mrb[0].mxu0
        %v354 = vpop.f32.mrb[0].mxu0
        %v355 = vadd.f32 %v278, %v354
        %v356 = vpop.f32.mrb[0].mxu0
        %357 = vmatprep.mubr.bf16.mxu0 0
        %358 = vmatmul.mubr.bf16.gmra.mrb[0].mxu0 %v305
        %v359 = vpop.f32.mrb[0].mxu0
        %v360 = vadd.f32 %v278, %v359
        %v361 = vpop.f32.mrb[0].mxu0
        %v362 = vpop.f32.mrb[0].mxu0
        %v363 = vadd.f32 %v278, %v362
        %v364 = vpop.f32.mrb[0].mxu0
        %365 = vmatprep.mubr.bf16.mxu0 0
        %366 = vmatmul.mubr.bf16.gmra.mrb[0].mxu0 %v308
        %v367 = vpop.f32.mrb[0].mxu0
        %v368 = vadd.f32 %v278, %v367
        %v369 = vpop.f32.mrb[0].mxu0
        %v370 = vpop.f32.mrb[0].mxu0
        %v371 = vadd.f32 %v278, %v370
        %v372 = vpop.f32.mrb[0].mxu0
        %373 = vmatprep.mubr.bf16.mxu0 0
        %374 = vmatmul.mubr.bf16.gmra.mrb[0].mxu0 %v311
        %v375 = vpop.f32.mrb[0].mxu0
        %v376 = vadd.f32 %v278, %v375
        %v377 = vpop.f32.mrb[0].mxu0
        %v378 = vpop.f32.mrb[0].mxu0
        %v379 = vadd.f32 %v278, %v378
        %v380 = vpop.f32.mrb[0].mxu0
        %381 = vdwg.mxu0
        %v382 = vmax.f32 %v352, 0.0
        %v383 = vmax.f32 %v355, 0.0
        %v384 = vmax.f32 %v360, 0.0
        %v385 = vmax.f32 %v363, 0.0
        %v386 = vmax.f32 %v368, 0.0
        %v387 = vmax.f32 %v371, 0.0
        %v388 = vmax.f32 %v376, 0.0
        %v389 = vmax.f32 %v379, 0.0
        %v390 = vld [vmem:[%s260] sm:$0xf]
        %v391 = vld [vmem:[%s260 + $0x4] sm:$0xf]
        %v392 = vld [vmem:[%s260 + $0x8] sm:$0xf]
        %v393 = vld [vmem:[%s260 + $0xc] sm:$0xf]
        %v394 = vld [vmem:[%s260 + $0x10] sm:$0xf]
        %v395 = vld [vmem:[%s260 + $0x14] sm:$0xf]
        %v396 = vld [vmem:[%s260 + $0x18] sm:$0xf]
        %v397 = vld [vmem:[%s260 + $0x1c] sm:$0xf]
        %v398 = vunpack.c.l.bf16 %v390
        %v399 = vunpack.c.l.bf16 %v391
        %v400 = vunpack.c.l.bf16 %v392
        %v401 = vunpack.c.l.bf16 %v393
        %v402 = vunpack.c.l.bf16 %v394
        %v403 = vunpack.c.l.bf16 %v395
        %v404 = vunpack.c.l.bf16 %v396
        %v405 = vunpack.c.l.bf16 %v397
        %v406 = vadd.f32 %v382, %v398
        %v407 = vadd.f32 %v383, %v399
        %v408 = vadd.f32 %v384, %v400
        %v409 = vadd.f32 %v385, %v401
        %v410 = vadd.f32 %v386, %v402
        %v411 = vadd.f32 %v387, %v403
        %v412 = vadd.f32 %v388, %v404
        %v413 = vadd.f32 %v389, %v405
        %vm414 = vcmask 261120
        %415 = vst.msk [vmem:[%s241] sm:$0xff] %vm414, %v406
        %416 = vst.msk [vmem:[%s241 + $0x8] sm:$0xff] %vm414, %v407
        %417 = vst.msk [vmem:[%s241 + $0x10] sm:$0xff] %vm414, %v408
        %418 = vst.msk [vmem:[%s241 + $0x18] sm:$0xff] %vm414, %v409
        %419 = vst.msk [vmem:[%s241 + $0x20] sm:$0xff] %vm414, %v410
        %420 = vst.msk [vmem:[%s241 + $0x28] sm:$0xff] %vm414, %v411
        %421 = vst.msk [vmem:[%s241 + $0x30] sm:$0xff] %vm414, %v412
        %422 = vst.msk [vmem:[%s241 + $0x38] sm:$0xff] %vm414, %v413
        %s423 = sand.u32 %s138, 1
        %s424 = scalar_lea.sflag [#allocation3], %s423
        %s425 = sand.u32 %s138, 1
        %s426 = smul.addr %s425, 64
        %s427 = scalar_lea.vmem [#allocation2], %s426
        // Predicated region
        $region37: #{model_apply.11} parent=35 // pred_check
          %p428 = pneg %p148
        $region38: #{model_apply.11} parent=35 // pred_check_branch
          %430 = sbr.rel (%p428) target = $region40
        $region39: #{model_apply.11} parent=35 // pred_region
          %s431 = smul.u32 8, %s23
          %s433 = ssub.s32 1024, 1024
          %434 = vsyncadd %s424, %s433
          %s435 = smul.addr %s22, 8
          %s436 = sadd.s32 %s431, %s435
          %s437 = smul.addr %s436, 128
          %s438 = scalar_lea.hbm %s4, %s437
          %s439 = sshll.u32 %s427, 4
          %s440 = int_to_ptr.vmem [resolvable:$true] %s439
          %445 = dma.vmem_to_hbm [thread:$0]  %s440, 1024, %s438, %s424, 128, 128, 8
        $region40: #{model_apply.11} parent=35 // pred_fallthru
          _
      $region36: #{model_apply.11} parent=5 // pred_fallthru
        _
      %p446 = scmp.le.s32.totalorder 2, %s13
      // Predicated region
      $region41: #{model_apply.11} parent=5 // pred_check
        %p447 = pneg %p446
      $region42: #{model_apply.11} parent=5 // pred_check_branch
        %449 = sbr.rel (%p447) target = $region44
      $region43: #{model_apply.11} parent=5 // pred_region
        %s450 = ssub.s32 %s13, 2
        // Predicated region
        $region45: #{model_apply.11} parent=43 // pred_check
          %p451 = pneg %p154
        $region46: #{model_apply.11} parent=43 // pred_check_branch
          %453 = sbr.rel (%p451) target = $region48
        $region47: #{model_apply.11} parent=43 // pred_region
          %s454 = sand.u32 %s139, 1
          %s455 = scalar_lea.sflag [#allocation3], %s454
          %s456 = sand.u32 %s139, 1
          %s457 = smul.addr %s456, 64
          %s458 = scalar_lea.vmem [#allocation2], %s457
          %459 = dma.done %s455, 1024
        $region48: #{model_apply.11} parent=43 // pred_fallthru
          _
      $region44: #{model_apply.11} parent=5 // pred_fallthru
        _
    $region6: #{model_apply.11} parent=1 // loop_footer
      %s17 = sadd.s32 1, %s13
    $region7: #{model_apply.11} parent=1 // loop_footer_branch
      %12 = sbr.rel target = $region3
    $region8: #{model_apply.11} parent=1 // loop_exit
      _
    %460 = vsyncpa [#allocation3], 1
    %s461 = scalar_lea.sflag [#allocation3], 1
    %462 = vsyncpa %s461, 1

// kernel: model_apply.10
$region0: #{model_apply.10}
  #allocation0 [shape = 'u32[]', space=smem, size = 0x4, offset = 0x4, fixed_abs, tag = 'smem constant byte address 0x4 - core index']
  #allocation1 [shape = 'u32[144,128]{1,0:T(1,128)}', space=vmem, size = 0x12000, scoped, tag = 'internal scratch']
  %s0 = inlined_call_operand.vmem [shape: bf16[2,10,10,8], index: 0, kind: input, shape index: {}]
  %s1 = inlined_call_operand.vmem [shape: bf16[9,8,8], index: 1, kind: input, shape index: {}]
  %s2 = inlined_call_operand.vmem [shape: f32[1,8], index: 2, kind: input, shape index: {}]
  %s3 = inlined_call_operand.vmem [shape: bf16[2,8,8,8], index: 3, kind: output, shape index: {}]
  %s4 = sld [smem:[#allocation0]]
  $region45: #{model_apply.10} parent=0
    _
  %s6 = ssub.s32 1, %s4
  %s7 = scalar_select 0, %s6, %s4
  loop: start=0, step=1, limit=4
  $region2: #{model_apply.10} parent=0 // loop_pre_header
    _
  $region3: #{model_apply.10} parent=0 // loop_header
    %s9 = sphi 0, %s13
    %p10 = scmp.ge.s32.totalorder %s9, 4
    %s19 = sphi 0, %s21
    %s22 = sphi 0, %s19
    %s23 = sphi 0, %s22
    %s39 = sphi 0, %s23
    %s43 = sphi 0, %s43
    %s45 = sphi 0, %s43
    %s46 = sphi 0, %s45
    %s60 = sphi 0, %s46
    %s64 = sphi 0, %s64
    %s66 = sphi 0, %s64
    %s67 = sphi 0, %s66
    %s81 = sphi 0, %s67
    %s87 = sphi 0, %s89
    %s90 = sphi 0, %s87
    %s91 = sphi 0, %s90
    %s107 = sphi 0, %s91
  $region4: #{model_apply.10} parent=0 // loop_header_branch
    %12 = sbr.rel (%p10) target = $region8
  $region5: #{model_apply.10} parent=0 // loop_body
    %s14 = ssub.s32 %s9, 1
    %s15 = ssub.s32 %s9, 2
    %s16 = sadd.s32 %s9, 1
    %s17 = ssub.s32 %s9, %s16
    %p18 = scmp.eq.s32.totalorder %s17, 0
    %s20 = sadd.s32 %s19, 1
    %s21 = scalar_select %p18, %s19, %s20
    %p24 = pneg %p18
    %p25 = scmp.eq.s32.totalorder %s9, 1
    %p26 = por %p24, %p25
    %p27 = scmp.ne.s32.totalorder %s19, %s22
    %p28 = scmp.eq.s32.totalorder %s9, 0
    %p29 = por %p27, %p28
    %p30 = scmp.ne.s32.totalorder %s19, %s22
    %p31 = scmp.eq.s32.totalorder %s14, 1
    %p32 = por %p30, %p31
    %p33 = scmp.ne.s32.totalorder %s22, %s23
    %p34 = scmp.eq.s32.totalorder %s14, 0
    %p35 = por %p33, %p34
    %p36 = scmp.ne.s32.totalorder %s22, %s23
    %p37 = scmp.eq.s32.totalorder %s15, 1
    %p38 = por %p36, %p37
    %p40 = scmp.ne.s32.totalorder %s23, %s39
    %p41 = scmp.eq.s32.totalorder %s15, 0
    %p42 = por %p40, %p41
    %s44 = sadd.s32 %s43, 1
    %p47 = scmp.eq.s32.totalorder %s9, 1
    %p48 = scmp.ne.s32.totalorder %s43, %s45
    %p49 = scmp.eq.s32.totalorder %s9, 0
    %p50 = por %p48, %p49
    %p51 = scmp.ne.s32.totalorder %s43, %s45
    %p52 = scmp.eq.s32.totalorder %s14, 1
    %p53 = por %p51, %p52
    %p54 = scmp.ne.s32.totalorder %s45, %s46
    %p55 = scmp.eq.s32.totalorder %s14, 0
    %p56 = por %p54, %p55
    %p57 = scmp.ne.s32.totalorder %s45, %s46
    %p58 = scmp.eq.s32.totalorder %s15, 1
    %p59 = por %p57, %p58
    %p61 = scmp.ne.s32.totalorder %s46, %s60
    %p62 = scmp.eq.s32.totalorder %s15, 0
    %p63 = por %p61, %p62
    %s65 = sadd.s32 %s64, 1
    %p68 = scmp.eq.s32.totalorder %s9, 1
    %p69 = scmp.ne.s32.totalorder %s64, %s66
    %p70 = scmp.eq.s32.totalorder %s9, 0
    %p71 = por %p69, %p70
    %p72 = scmp.ne.s32.totalorder %s64, %s66
    %p73 = scmp.eq.s32.totalorder %s14, 1
    %p74 = por %p72, %p73
    %p75 = scmp.ne.s32.totalorder %s66, %s67
    %p76 = scmp.eq.s32.totalorder %s14, 0
    %p77 = por %p75, %p76
    %p78 = scmp.ne.s32.totalorder %s66, %s67
    %p79 = scmp.eq.s32.totalorder %s15, 1
    %p80 = por %p78, %p79
    %p82 = scmp.ne.s32.totalorder %s67, %s81
    %p83 = scmp.eq.s32.totalorder %s15, 0
    %p84 = por %p82, %p83
    %s85 = ssub.s32 %s9, %s16
    %p86 = scmp.eq.s32.totalorder %s85, 0
    %s88 = sadd.s32 %s87, 1
    %s89 = scalar_select %p86, %s87, %s88
    %p92 = pneg %p86
    %p93 = scmp.eq.s32.totalorder %s9, 1
    %p94 = por %p92, %p93
    %p95 = scmp.ne.s32.totalorder %s87, %s90
    %p96 = scmp.eq.s32.totalorder %s9, 0
    %p97 = por %p95, %p96
    %p98 = scmp.ne.s32.totalorder %s87, %s90
    %p99 = scmp.eq.s32.totalorder %s14, 1
    %p100 = por %p98, %p99
    %p101 = scmp.ne.s32.totalorder %s90, %s91
    %p102 = scmp.eq.s32.totalorder %s14, 0
    %p103 = por %p101, %p102
    %p104 = scmp.ne.s32.totalorder %s90, %s91
    %p105 = scmp.eq.s32.totalorder %s15, 1
    %p106 = por %p104, %p105
    %p108 = scmp.ne.s32.totalorder %s91, %s107
    %p109 = scmp.eq.s32.totalorder %s15, 0
    %p110 = por %p108, %p109
    %p111 = scmp.le.s32.totalorder 1, %s9
    %p112 = scmp.lt.s32.totalorder %s9, 3
    %p113 = pnand %p111, %p112
    %p114 = pneg %p113
    // Predicated region
    $region9: #{model_apply.10} parent=5 // pred_check
      _
    $region10: #{model_apply.10} parent=5 // pred_check_branch
      %116 = sbr.rel (%p113) target = $region12
    $region11: #{model_apply.10} parent=5 // pred_region
      %s117 = ssub.s32 %s9, 1
      // Predicated region
      $region13: #{model_apply.10} parent=11 // pred_check
        %p118 = pneg %p56
      $region14: #{model_apply.10} parent=11 // pred_check_branch
        %120 = sbr.rel (%p118) target = $region16
      $region15: #{model_apply.10} parent=11 // pred_region
        _
      $region16: #{model_apply.10} parent=11 // pred_fallthru
        _
      // Predicated region
      $region17: #{model_apply.10} parent=11 // pred_check
        %p121 = pneg %p77
      $region18: #{model_apply.10} parent=11 // pred_check_branch
        %123 = sbr.rel (%p121) target = $region20
      $region19: #{model_apply.10} parent=11 // pred_region
        _
      $region20: #{model_apply.10} parent=11 // pred_fallthru
        _
    $region12: #{model_apply.10} parent=5 // pred_fallthru
      _
    %p124 = scmp.lt.s32.totalorder %s9, 2
    // Predicated region
    $region21: #{model_apply.10} parent=5 // pred_check
      %p125 = pneg %p124
    $region22: #{model_apply.10} parent=5 // pred_check_branch
      %127 = sbr.rel (%p125) target = $region24
    $region23: #{model_apply.10} parent=5 // pred_region
      // Predicated region
      $region25: #{model_apply.10} parent=23 // pred_check
        %p128 = pneg %p29
      $region26: #{model_apply.10} parent=23 // pred_check_branch
        %130 = sbr.rel (%p128) target = $region28
      $region27: #{model_apply.10} parent=23 // pred_region
        %p131 = scmp.lt.s32.totalorder %s9, 1
        %s132 = scalar_select %p131, %s9, 1
        %s133 = smul.addr %s132, 20
        %s134 = smul.addr %s133, 4
        %s135 = scalar_lea.vmem %s0, %s134
      $region28: #{model_apply.10} parent=23 // pred_fallthru
        _
    $region24: #{model_apply.10} parent=5 // pred_fallthru
      _
    %p136 = scmp.le.s32.totalorder 1, %s9
    %p137 = scmp.lt.s32.totalorder %s9, 3
    %p138 = pnand %p136, %p137
    %p139 = pneg %p138
    // Predicated region
    $region29: #{model_apply.10} parent=5 // pred_check
      _
    $region30: #{model_apply.10} parent=5 // pred_check_branch
      %141 = sbr.rel (%p138) target = $region32
    $region31: #{model_apply.10} parent=5 // pred_region
      %s142 = ssub.s32 %s9, 1
      %p143 = scmp.lt.s32.totalorder %s14, 1
      %s144 = scalar_select %p143, %s14, 1
      %s145 = smul.addr %s144, 20
      %s146 = smul.addr %s145, 4
      %s147 = scalar_lea.vmem %s0, %s146
      %p148 = pneg %p35
      %p149 = pneg %p32
      %p150 = pneg %p56
      %p151 = pneg %p53
      %p152 = pneg %p77
      %p153 = pneg %p74
      %p154 = pneg %p103
      %p155 = pneg %p100
      %p156 = scmp.lt.s32.totalorder %s14, 1
      %s157 = scalar_select %p156, %s14, 1
      %s158 = smul.addr %s157, 8
      %s159 = smul.addr %s158, 4
      %s160 = scalar_lea.vmem %s3, %s159
      %p161 = scmp.lt.s32.totalorder %s14, 1
      %s162 = scalar_select %p161, %s14, 1
      %s163 = smul.addr %s162, 20
      %s164 = smul.addr %s163, 4
      %s165 = scalar_lea.vmem %s0, %s164
      %p166 = scmp.lt.s32.totalorder %s14, 1
      %s167 = scalar_select %p166, %s14, 1
      %s168 = smul.addr %s167, 8
      %s169 = smul.addr %s168, 4
      %s170 = scalar_lea.vmem %s3, %s169
      %v172 = vld [vmem:[%s165] sm:$0xf]
      %v173 = vld [vmem:[%s165 + $0x8] sm:$0xf]
      %v174 = vld [vmem:[%s165 + $0x10] sm:$0xf]
      %v175 = vld [vmem:[%s165 + $0x18] sm:$0xf]
      %v176 = vld [vmem:[%s165 + $0x20] sm:$0xf]
      %v177 = vld [vmem:[%s165 + $0x28] sm:$0xf]
      %v178 = vld [vmem:[%s165 + $0x30] sm:$0xf]
      %v179 = vld [vmem:[%s165 + $0x38] sm:$0xf]
      %v180 = vld [vmem:[%s1] sm:$0xf]
      %v181 = vld [vmem:[%s165 + $0x4] sm:$0x1]
      %v182 = vld [vmem:[%s165 + $0xc] sm:$0x1]
      %v183 = vld [vmem:[%s165 + $0x14] sm:$0x1]
      %v184 = vld [vmem:[%s165 + $0x1c] sm:$0x1]
      %v185 = vld [vmem:[%s165 + $0x24] sm:$0x1]
      %v186 = vld [vmem:[%s165 + $0x2c] sm:$0x1]
      %v187 = vld [vmem:[%s165 + $0x34] sm:$0x1]
      %v188 = vld [vmem:[%s165 + $0x3c] sm:$0x1]
      %vm189 = vsmask.f32 3328
      %vm190 = vsmask.f32 7440
      %vm191 = vmor %vm189, %vm190
      %v193 = vshrl.u32 %v172, 16
      %v195 = vrot.slane %v193, 4
      %v196 = vshll.u32 %v172, 16
      %v198 = vrot.slane %v196, 5
      %v199 = vor.u32 %v195, %v198
      %v200 = vrot.slane %v199, 4
      %v202 = vshll.u32 %v181, 16
      %v204 = vrot.slane %v202, 5
      %v205 = vsel %vm191, %v200, %v204
      %v207 = vshrl.u32 %v173, 16
      %v209 = vrot.slane %v207, 4
      %v210 = vshll.u32 %v173, 16
      %v212 = vrot.slane %v210, 5
      %v213 = vor.u32 %v209, %v212
      %v214 = vrot.slane %v213, 4
      %v216 = vshll.u32 %v182, 16
      %v218 = vrot.slane %v216, 5
      %v219 = vsel %vm191, %v214, %v218
      %v221 = vshrl.u32 %v174, 16
      %v223 = vrot.slane %v221, 4
      %v224 = vshll.u32 %v174, 16
      %v226 = vrot.slane %v224, 5
      %v227 = vor.u32 %v223, %v226
      %v228 = vrot.slane %v227, 4
      %v230 = vshll.u32 %v183, 16
      %v232 = vrot.slane %v230, 5
      %v233 = vsel %vm191, %v228, %v232
      %v235 = vshrl.u32 %v175, 16
      %v237 = vrot.slane %v235, 4
      %v238 = vshll.u32 %v175, 16
      %v240 = vrot.slane %v238, 5
      %v241 = vor.u32 %v237, %v240
      %v242 = vrot.slane %v241, 4
      %v244 = vshll.u32 %v184, 16
      %v246 = vrot.slane %v244, 5
      %v247 = vsel %vm191, %v242, %v246
      %v249 = vshrl.u32 %v176, 16
      %v251 = vrot.slane %v249, 4
      %v252 = vshll.u32 %v176, 16
      %v254 = vrot.slane %v252, 5
      %v255 = vor.u32 %v251, %v254
      %v256 = vrot.slane %v255, 4
      %v258 = vshll.u32 %v185, 16
      %v260 = vrot.slane %v258, 5
      %v261 = vsel %vm191, %v256, %v260
      %v263 = vshrl.u32 %v177, 16
      %v265 = vrot.slane %v263, 4
      %v266 = vshll.u32 %v177, 16
      %v268 = vrot.slane %v266, 5
      %v269 = vor.u32 %v265, %v268
      %v270 = vrot.slane %v269, 4
      %v272 = vshll.u32 %v186, 16
      %v274 = vrot.slane %v272, 5
      %v275 = vsel %vm191, %v270, %v274
      %v277 = vshrl.u32 %v178, 16
      %v279 = vrot.slane %v277, 4
      %v280 = vshll.u32 %v178, 16
      %v282 = vrot.slane %v280, 5
      %v283 = vor.u32 %v279, %v282
      %v284 = vrot.slane %v283, 4
      %v286 = vshll.u32 %v187, 16
      %v288 = vrot.slane %v286, 5
      %v289 = vsel %vm191, %v284, %v288
      %v291 = vshrl.u32 %v179, 16
      %v293 = vrot.slane %v291, 4
      %v294 = vshll.u32 %v179, 16
      %v296 = vrot.slane %v294, 5
      %v297 = vor.u32 %v293, %v296
      %v298 = vrot.slane %v297, 4
      %v300 = vshll.u32 %v188, 16
      %v302 = vrot.slane %v300, 5
      %v303 = vsel %vm191, %v298, %v302
      %s304 = scalar_lea.vmem %s1, 4
      %v305 = vld [vmem:[%s304] sm:$0xf]
      %v306 = vunpack.c.l.b16 %v205
      %v307 = vunpack.c.l.b16 %v219
      %v308 = vunpack.c.l.b16 %v233
      %v309 = vunpack.c.l.b16 %v247
      %v310 = vunpack.c.l.b16 %v261
      %v311 = vunpack.c.l.b16 %v275
      %v312 = vunpack.c.l.b16 %v289
      %v313 = vunpack.c.l.b16 %v303
      %v314 = vpack.c.b16 %v307, %v306
      %v315 = vpack.c.b16 %v309, %v308
      %v316 = vpack.c.b16 %v311, %v310
      %v317 = vpack.c.b16 %v313, %v312
      %vm318 = vcmask 64512
      %v320 = vsel %vm318, %v314, 0
      %v323 = vsel %vm318, %v315, 0
      %v326 = vsel %vm318, %v316, 0
      %v329 = vsel %vm318, %v317, 0
      %vm331 = vcmask 1043456
      %v333 = vsel %vm331, %v305, 0
      %335 = vmatprep.subr.bf16.mxu0 0
      %336 = vmatpush1.bf16.msra.mxu0 %v333
      %337 = vmatprep.subr.bf16.mxu0 0
      %338 = vmatpush1.bf16.msra.mxu0 0
      %339 = vmatprep.subr.bf16.mxu0 0
      %340 = vmatpush1.bf16.msra.mxu0 0
      %341 = vmatprep.subr.bf16.mxu0 0
      %342 = vmatpush1.bf16.msra.mxu0 0
      %343 = vmatprep.subr.bf16.mxu0 0
      %344 = vmatpush1.bf16.msra.mxu0 0
      %345 = vmatprep.subr.bf16.mxu0 0
      %346 = vmatpush1.bf16.msra.mxu0 0
      %347 = vmatprep.subr.bf16.mxu0 0
      %348 = vmatpush1.bf16.msra.mxu0 0
      %349 = vmatprep.subr.bf16.mxu0 0
      %350 = vmatpush1.bf16.msra.mxu0 0
      %351 = vmatprep.subr.bf16.mxu0 0
      %352 = vmatpush1.bf16.msra.mxu0 0
      %353 = vmatprep.subr.bf16.mxu0 0
      %354 = vmatpush1.bf16.msra.mxu0 0
      %355 = vmatprep.subr.bf16.mxu0 0
      %356 = vmatpush1.bf16.msra.mxu0 0
      %357 = vmatprep.subr.bf16.mxu0 0
      %358 = vmatpush1.bf16.msra.mxu0 0
      %359 = vmatprep.subr.bf16.mxu0 0
      %360 = vmatpush1.bf16.msra.mxu0 0
      %361 = vmatprep.subr.bf16.mxu0 0
      %362 = vmatpush1.bf16.msra.mxu0 0
      %363 = vmatprep.subr.bf16.mxu0 0
      %364 = vmatpush1.bf16.msra.mxu0 0
      %365 = vmatprep.subr.bf16.mxu0 0
      %366 = vmatpush1.bf16.msra.mxu0 0
      %367 = vmatprep.mubr.bf16.mxu0 0
      %368 = vmatmul.mubr.bf16.gmra.mrb[0].mxu0 %v320
      %v369 = vpop.f32.mrb[0].mxu0
      %v370 = vadd.f32 0.0, %v369
      %v371 = vpop.f32.mrb[0].mxu0
      %v372 = vpop.f32.mrb[0].mxu0
      %v373 = vadd.f32 0.0, %v372
      %v374 = vpop.f32.mrb[0].mxu0
      %375 = vmatprep.mubr.bf16.mxu0 0
      %376 = vmatmul.mubr.bf16.gmra.mrb[0].mxu0 %v323
      %v377 = vpop.f32.mrb[0].mxu0
      %v378 = vadd.f32 0.0, %v377
      %v379 = vpop.f32.mrb[0].mxu0
      %v380 = vpop.f32.mrb[0].mxu0
      %v381 = vadd.f32 0.0, %v380
      %v382 = vpop.f32.mrb[0].mxu0
      %383 = vmatprep.mubr.bf16.mxu0 0
      %384 = vmatmul.mubr.bf16.gmra.mrb[0].mxu0 %v326
      %v385 = vpop.f32.mrb[0].mxu0
      %v386 = vadd.f32 0.0, %v385
      %v387 = vpop.f32.mrb[0].mxu0
      %v388 = vpop.f32.mrb[0].mxu0
      %v389 = vadd.f32 0.0, %v388
      %v390 = vpop.f32.mrb[0].mxu0
      %391 = vmatprep.mubr.bf16.mxu0 0
      %392 = vmatmul.mubr.bf16.gmra.mrb[0].mxu0 %v329
      %v393 = vpop.f32.mrb[0].mxu0
      %v394 = vadd.f32 0.0, %v393
      %v395 = vpop.f32.mrb[0].mxu0
      %v396 = vpop.f32.mrb[0].mxu0
      %v397 = vadd.f32 0.0, %v396
      %v398 = vpop.f32.mrb[0].mxu0
      %399 = vdwg.mxu0
      %v408 = vunpack.c.l.b16 %v172
      %v409 = vunpack.c.l.b16 %v173
      %v410 = vunpack.c.l.b16 %v174
      %v411 = vunpack.c.l.b16 %v175
      %v412 = vunpack.c.l.b16 %v176
      %v413 = vunpack.c.l.b16 %v177
      %v414 = vunpack.c.l.b16 %v178
      %v415 = vunpack.c.l.b16 %v179
      %v416 = vpack.c.b16 %v409, %v408
      %v417 = vpack.c.b16 %v411, %v410
      %v418 = vpack.c.b16 %v413, %v412
      %v419 = vpack.c.b16 %v415, %v414
      %v421 = vsel %vm318, %v416, 0
      %v424 = vsel %vm318, %v417, 0
      %v427 = vsel %vm318, %v418, 0
      %v430 = vsel %vm318, %v419, 0
      %v433 = vsel %vm331, %v180, 0
      %435 = vmatprep.subr.bf16.mxu0 0
      %436 = vmatpush1.bf16.msra.mxu0 %v433
      %437 = vmatprep.subr.bf16.mxu0 0
      %438 = vmatpush1.bf16.msra.mxu0 0
      %439 = vmatprep.subr.bf16.mxu0 0
      %440 = vmatpush1.bf16.msra.mxu0 0
      %441 = vmatprep.subr.bf16.mxu0 0
      %442 = vmatpush1.bf16.msra.mxu0 0
      %443 = vmatprep.subr.bf16.mxu0 0
      %444 = vmatpush1.bf16.msra.mxu0 0
      %445 = vmatprep.subr.bf16.mxu0 0
      %446 = vmatpush1.bf16.msra.mxu0 0
      %447 = vmatprep.subr.bf16.mxu0 0
      %448 = vmatpush1.bf16.msra.mxu0 0
      %449 = vmatprep.subr.bf16.mxu0 0
      %450 = vmatpush1.bf16.msra.mxu0 0
      %451 = vmatprep.subr.bf16.mxu0 0
      %452 = vmatpush1.bf16.msra.mxu0 0
      %453 = vmatprep.subr.bf16.mxu0 0
      %454 = vmatpush1.bf16.msra.mxu0 0
      %455 = vmatprep.subr.bf16.mxu0 0
      %456 = vmatpush1.bf16.msra.mxu0 0
      %457 = vmatprep.subr.bf16.mxu0 0
      %458 = vmatpush1.bf16.msra.mxu0 0
      %459 = vmatprep.subr.bf16.mxu0 0
      %460 = vmatpush1.bf16.msra.mxu0 0
      %461 = vmatprep.subr.bf16.mxu0 0
      %462 = vmatpush1.bf16.msra.mxu0 0
      %463 = vmatprep.subr.bf16.mxu0 0
      %464 = vmatpush1.bf16.msra.mxu0 0
      %465 = vmatprep.subr.bf16.mxu0 0
      %466 = vmatpush1.bf16.msra.mxu0 0
      %467 = vmatprep.mubr.bf16.mxu0 0
      %468 = vmatmul.mubr.bf16.gmra.mrb[0].mxu0 %v421
      %v469 = vpop.f32.mrb[0].mxu0
      %v470 = vadd.f32 %v370, %v469
      %v471 = vpop.f32.mrb[0].mxu0
      %v472 = vpop.f32.mrb[0].mxu0
      %v473 = vadd.f32 %v373, %v472
      %v474 = vpop.f32.mrb[0].mxu0
      %475 = vmatprep.mubr.bf16.mxu0 0
      %476 = vmatmul.mubr.bf16.gmra.mrb[0].mxu0 %v424
      %v477 = vpop.f32.mrb[0].mxu0
      %v478 = vadd.f32 %v378, %v477
      %v479 = vpop.f32.mrb[0].mxu0
      %v480 = vpop.f32.mrb[0].mxu0
      %v481 = vadd.f32 %v381, %v480
      %v482 = vpop.f32.mrb[0].mxu0
      %483 = vmatprep.mubr.bf16.mxu0 0
      %484 = vmatmul.mubr.bf16.gmra.mrb[0].mxu0 %v427
      %v485 = vpop.f32.mrb[0].mxu0
      %v486 = vadd.f32 %v386, %v485
      %v487 = vpop.f32.mrb[0].mxu0
      %v488 = vpop.f32.mrb[0].mxu0
      %v489 = vadd.f32 %v389, %v488
      %v490 = vpop.f32.mrb[0].mxu0
      %491 = vmatprep.mubr.bf16.mxu0 0
      %492 = vmatmul.mubr.bf16.gmra.mrb[0].mxu0 %v430
      %v493 = vpop.f32.mrb[0].mxu0
      %v494 = vadd.f32 %v394, %v493
      %v495 = vpop.f32.mrb[0].mxu0
      %v496 = vpop.f32.mrb[0].mxu0
      %v497 = vadd.f32 %v397, %v496
      %v498 = vpop.f32.mrb[0].mxu0
      %499 = vdwg.mxu0
      %v500 = vld [vmem:[%s165] sm:$0xe]
      %v501 = vld [vmem:[%s165 + $0x8] sm:$0xe]
      %v502 = vld [vmem:[%s165 + $0x10] sm:$0xe]
      %v503 = vld [vmem:[%s165 + $0x18] sm:$0xe]
      %v504 = vld [vmem:[%s165 + $0x20] sm:$0xe]
      %v505 = vld [vmem:[%s165 + $0x28] sm:$0xe]
      %v506 = vld [vmem:[%s165 + $0x30] sm:$0xe]
      %v507 = vld [vmem:[%s165 + $0x38] sm:$0xe]
      %vm524 = vcmask 1042432
      %vm525 = vcmask 1046532
      %vm526 = vmor %vm524, %vm525
      %v527 = vrot.slane %v500, 5
      %v528 = vrot.slane %v527, 4
      %v529 = vrot.slane %v181, 5
      %v530 = vsel %vm526, %v528, %v529
      %v531 = vrot.slane %v501, 5
      %v532 = vrot.slane %v531, 4
      %v533 = vrot.slane %v182, 5
      %v534 = vsel %vm526, %v532, %v533
      %v535 = vrot.slane %v502, 5
      %v536 = vrot.slane %v535, 4
      %v537 = vrot.slane %v183, 5
      %v538 = vsel %vm526, %v536, %v537
      %v539 = vrot.slane %v503, 5
      %v540 = vrot.slane %v539, 4
      %v541 = vrot.slane %v184, 5
      %v542 = vsel %vm526, %v540, %v541
      %v543 = vrot.slane %v504, 5
      %v544 = vrot.slane %v543, 4
      %v545 = vrot.slane %v185, 5
      %v546 = vsel %vm526, %v544, %v545
      %v547 = vrot.slane %v505, 5
      %v548 = vrot.slane %v547, 4
      %v549 = vrot.slane %v186, 5
      %v550 = vsel %vm526, %v548, %v549
      %v551 = vrot.slane %v506, 5
      %v552 = vrot.slane %v551, 4
      %v553 = vrot.slane %v187, 5
      %v554 = vsel %vm526, %v552, %v553
      %v555 = vrot.slane %v507, 5
      %v556 = vrot.slane %v555, 4
      %v557 = vrot.slane %v188, 5
      %v558 = vsel %vm526, %v556, %v557
      %s559 = scalar_lea.vmem %s1, 8
      %v560 = vld [vmem:[%s559] sm:$0xf]
      %v561 = vunpack.c.l.b16 %v530
      %v562 = vunpack.c.l.b16 %v534
      %v563 = vunpack.c.l.b16 %v538
      %v564 = vunpack.c.l.b16 %v542
      %v565 = vunpack.c.l.b16 %v546
      %v566 = vunpack.c.l.b16 %v550
      %v567 = vunpack.c.l.b16 %v554
      %v568 = vunpack.c.l.b16 %v558
      %v569 = vpack.c.b16 %v562, %v561
      %v570 = vpack.c.b16 %v564, %v563
      %v571 = vpack.c.b16 %v566, %v565
      %v572 = vpack.c.b16 %v568, %v567
      %v574 = vsel %vm318, %v569, 0
      %v577 = vsel %vm318, %v570, 0
      %v580 = vsel %vm318, %v571, 0
      %v583 = vsel %vm318, %v572, 0
      %v586 = vsel %vm331, %v560, 0
      %588 = vmatprep.subr.bf16.mxu0 0
      %589 = vmatpush1.bf16.msra.mxu0 %v586
      %590 = vmatprep.subr.bf16.mxu0 0
      %591 = vmatpush1.bf16.msra.mxu0 0
      %592 = vmatprep.subr.bf16.mxu0 0
      %593 = vmatpush1.bf16.msra.mxu0 0
      %594 = vmatprep.subr.bf16.mxu0 0
      %595 = vmatpush1.bf16.msra.mxu0 0
      %596 = vmatprep.subr.bf16.mxu0 0
      %597 = vmatpush1.bf16.msra.mxu0 0
      %598 = vmatprep.subr.bf16.mxu0 0
      %599 = vmatpush1.bf16.msra.mxu0 0
      %600 = vmatprep.subr.bf16.mxu0 0
      %601 = vmatpush1.bf16.msra.mxu0 0
      %602 = vmatprep.subr.bf16.mxu0 0
      %603 = vmatpush1.bf16.msra.mxu0 0
      %604 = vmatprep.subr.bf16.mxu0 0
      %605 = vmatpush1.bf16.msra.mxu0 0
      %606 = vmatprep.subr.bf16.mxu0 0
      %607 = vmatpush1.bf16.msra.mxu0 0
      %608 = vmatprep.subr.bf16.mxu0 0
      %609 = vmatpush1.bf16.msra.mxu0 0
      %610 = vmatprep.subr.bf16.mxu0 0
      %611 = vmatpush1.bf16.msra.mxu0 0
      %612 = vmatprep.subr.bf16.mxu0 0
      %613 = vmatpush1.bf16.msra.mxu0 0
      %614 = vmatprep.subr.bf16.mxu0 0
      %615 = vmatpush1.bf16.msra.mxu0 0
      %616 = vmatprep.subr.bf16.mxu0 0
      %617 = vmatpush1.bf16.msra.mxu0 0
      %618 = vmatprep.subr.bf16.mxu0 0
      %619 = vmatpush1.bf16.msra.mxu0 0
      %620 = vmatprep.mubr.bf16.mxu0 0
      %621 = vmatmul.mubr.bf16.gmra.mrb[0].mxu0 %v574
      %v622 = vpop.f32.mrb[0].mxu0
      %v623 = vadd.f32 0.0, %v622
      %v624 = vpop.f32.mrb[0].mxu0
      %v625 = vpop.f32.mrb[0].mxu0
      %v626 = vadd.f32 0.0, %v625
      %v627 = vpop.f32.mrb[0].mxu0
      %628 = vmatprep.mubr.bf16.mxu0 0
      %629 = vmatmul.mubr.bf16.gmra.mrb[0].mxu0 %v577
      %v630 = vpop.f32.mrb[0].mxu0
      %v631 = vadd.f32 0.0, %v630
      %v632 = vpop.f32.mrb[0].mxu0
      %v633 = vpop.f32.mrb[0].mxu0
      %v634 = vadd.f32 0.0, %v633
      %v635 = vpop.f32.mrb[0].mxu0
      %636 = vmatprep.mubr.bf16.mxu0 0
      %637 = vmatmul.mubr.bf16.gmra.mrb[0].mxu0 %v580
      %v638 = vpop.f32.mrb[0].mxu0
      %v639 = vadd.f32 0.0, %v638
      %v640 = vpop.f32.mrb[0].mxu0
      %v641 = vpop.f32.mrb[0].mxu0
      %v642 = vadd.f32 0.0, %v641
      %v643 = vpop.f32.mrb[0].mxu0
      %644 = vmatprep.mubr.bf16.mxu0 0
      %645 = vmatmul.mubr.bf16.gmra.mrb[0].mxu0 %v583
      %v646 = vpop.f32.mrb[0].mxu0
      %v647 = vadd.f32 0.0, %v646
      %v648 = vpop.f32.mrb[0].mxu0
      %v649 = vpop.f32.mrb[0].mxu0
      %v650 = vadd.f32 0.0, %v649
      %v651 = vpop.f32.mrb[0].mxu0
      %652 = vdwg.mxu0
      %v653 = vadd.f32 %v470, %v623
      %v654 = vadd.f32 %v473, %v626
      %v655 = vadd.f32 %v478, %v631
      %v656 = vadd.f32 %v481, %v634
      %v657 = vadd.f32 %v486, %v639
      %v658 = vadd.f32 %v489, %v642
      %v659 = vadd.f32 %v494, %v647
      %v660 = vadd.f32 %v497, %v650
      %s661 = scalar_lea.vmem %s165, 8
      %v662 = vld [vmem:[%s661] sm:$0xf]
      %v663 = vld [vmem:[%s661 + $0x8] sm:$0xf]
      %v664 = vld [vmem:[%s661 + $0x10] sm:$0xf]
      %v665 = vld [vmem:[%s661 + $0x18] sm:$0xf]
      %v666 = vld [vmem:[%s661 + $0x20] sm:$0xf]
      %v667 = vld [vmem:[%s661 + $0x28] sm:$0xf]
      %v668 = vld [vmem:[%s661 + $0x30] sm:$0xf]
      %v669 = vld [vmem:[%s661 + $0x38] sm:$0xf]
      %s670 = scalar_lea.vmem %s1, 12
      %v671 = vld [vmem:[%s670] sm:$0xf]
      %v680 = vunpack.c.l.b16 %v662
      %v681 = vunpack.c.l.b16 %v663
      %v682 = vunpack.c.l.b16 %v664
      %v683 = vunpack.c.l.b16 %v665
      %v684 = vunpack.c.l.b16 %v666
      %v685 = vunpack.c.l.b16 %v667
      %v686 = vunpack.c.l.b16 %v668
      %v687 = vunpack.c.l.b16 %v669
      %v688 = vpack.c.b16 %v681, %v680
      %v689 = vpack.c.b16 %v683, %v682
      %v690 = vpack.c.b16 %v685, %v684
      %v691 = vpack.c.b16 %v687, %v686
      %v693 = vsel %vm318, %v688, 0
      %v696 = vsel %vm318, %v689, 0
      %v699 = vsel %vm318, %v690, 0
      %v702 = vsel %vm318, %v691, 0
      %v705 = vsel %vm331, %v671, 0
      %707 = vmatprep.subr.bf16.mxu0 0
      %708 = vmatpush1.bf16.msra.mxu0 %v705
      %709 = vmatprep.subr.bf16.mxu0 0
      %710 = vmatpush1.bf16.msra.mxu0 0
      %711 = vmatprep.subr.bf16.mxu0 0
      %712 = vmatpush1.bf16.msra.mxu0 0
      %713 = vmatprep.subr.bf16.mxu0 0
      %714 = vmatpush1.bf16.msra.mxu0 0
      %715 = vmatprep.subr.bf16.mxu0 0
      %716 = vmatpush1.bf16.msra.mxu0 0
      %717 = vmatprep.subr.bf16.mxu0 0
      %718 = vmatpush1.bf16.msra.mxu0 0
      %719 = vmatprep.subr.bf16.mxu0 0
      %720 = vmatpush1.bf16.msra.mxu0 0
      %721 = vmatprep.subr.bf16.mxu0 0
      %722 = vmatpush1.bf16.msra.mxu0 0
      %723 = vmatprep.subr.bf16.mxu0 0
      %724 = vmatpush1.bf16.msra.mxu0 0
      %725 = vmatprep.subr.bf16.mxu0 0
      %726 = vmatpush1.bf16.msra.mxu0 0
      %727 = vmatprep.subr.bf16.mxu0 0
      %728 = vmatpush1.bf16.msra.mxu0 0
      %729 = vmatprep.subr.bf16.mxu0 0
      %730 = vmatpush1.bf16.msra.mxu0 0
      %731 = vmatprep.subr.bf16.mxu0 0
      %732 = vmatpush1.bf16.msra.mxu0 0
      %733 = vmatprep.subr.bf16.mxu0 0
      %734 = vmatpush1.bf16.msra.mxu0 0
      %735 = vmatprep.subr.bf16.mxu0 0
      %736 = vmatpush1.bf16.msra.mxu0 0
      %737 = vmatprep.subr.bf16.mxu0 0
      %738 = vmatpush1.bf16.msra.mxu0 0
      %739 = vmatprep.mubr.bf16.mxu0 0
      %740 = vmatmul.mubr.bf16.gmra.mrb[0].mxu0 %v693
      %v741 = vpop.f32.mrb[0].mxu0
      %v742 = vadd.f32 0.0, %v741
      %v743 = vpop.f32.mrb[0].mxu0
      %v744 = vpop.f32.mrb[0].mxu0
      %v745 = vadd.f32 0.0, %v744
      %v746 = vpop.f32.mrb[0].mxu0
      %747 = vmatprep.mubr.bf16.mxu0 0
      %748 = vmatmul.mubr.bf16.gmra.mrb[0].mxu0 %v696
      %v749 = vpop.f32.mrb[0].mxu0
      %v750 = vadd.f32 0.0, %v749
      %v751 = vpop.f32.mrb[0].mxu0
      %v752 = vpop.f32.mrb[0].mxu0
      %v753 = vadd.f32 0.0, %v752
      %v754 = vpop.f32.mrb[0].mxu0
      %755 = vmatprep.mubr.bf16.mxu0 0
      %756 = vmatmul.mubr.bf16.gmra.mrb[0].mxu0 %v699
      %v757 = vpop.f32.mrb[0].mxu0
      %v758 = vadd.f32 0.0, %v757
      %v759 = vpop.f32.mrb[0].mxu0
      %v760 = vpop.f32.mrb[0].mxu0
      %v761 = vadd.f32 0.0, %v760
      %v762 = vpop.f32.mrb[0].mxu0
      %763 = vmatprep.mubr.bf16.mxu0 0
      %764 = vmatmul.mubr.bf16.gmra.mrb[0].mxu0 %v702
      %v765 = vpop.f32.mrb[0].mxu0
      %v766 = vadd.f32 0.0, %v765
      %v767 = vpop.f32.mrb[0].mxu0
      %v768 = vpop.f32.mrb[0].mxu0
      %v769 = vadd.f32 0.0, %v768
      %v770 = vpop.f32.mrb[0].mxu0
      %771 = vdwg.mxu0
      %v772 = vadd.f32 %v653, %v742
      %v773 = vadd.f32 %v654, %v745
      %v774 = vadd.f32 %v655, %v750
      %v775 = vadd.f32 %v656, %v753
      %v776 = vadd.f32 %v657, %v758
      %v777 = vadd.f32 %v658, %v761
      %v778 = vadd.f32 %v659, %v766
      %v779 = vadd.f32 %v660, %v769
      %v780 = vld [vmem:[%s661] sm:$0xf]
      %v781 = vld [vmem:[%s661 + $0x4] sm:$0x1]
      %v782 = vld [vmem:[%s661 + $0x8] sm:$0xf]
      %v783 = vld [vmem:[%s661 + $0xc] sm:$0x1]
      %v784 = vld [vmem:[%s661 + $0x10] sm:$0xf]
      %v785 = vld [vmem:[%s661 + $0x14] sm:$0x1]
      %v786 = vld [vmem:[%s661 + $0x18] sm:$0xf]
      %v787 = vld [vmem:[%s661 + $0x1c] sm:$0x1]
      %v788 = vld [vmem:[%s661 + $0x20] sm:$0xf]
      %v789 = vld [vmem:[%s661 + $0x24] sm:$0x1]
      %v790 = vld [vmem:[%s661 + $0x28] sm:$0xf]
      %v791 = vld [vmem:[%s661 + $0x2c] sm:$0x1]
      %v792 = vld [vmem:[%s661 + $0x30] sm:$0xf]
      %v793 = vld [vmem:[%s661 + $0x34] sm:$0x1]
      %v794 = vld [vmem:[%s661 + $0x38] sm:$0xf]
      %v795 = vld [vmem:[%s661 + $0x3c] sm:$0x1]
      %v797 = vshrl.u32 %v780, 16
      %v799 = vrot.slane %v797, 4
      %v800 = vshll.u32 %v780, 16
      %v802 = vrot.slane %v800, 5
      %v803 = vor.u32 %v799, %v802
      %v804 = vrot.slane %v803, 4
      %v806 = vshll.u32 %v781, 16
      %v808 = vrot.slane %v806, 5
      %v809 = vsel %vm191, %v804, %v808
      %v811 = vshrl.u32 %v782, 16
      %v813 = vrot.slane %v811, 4
      %v814 = vshll.u32 %v782, 16
      %v816 = vrot.slane %v814, 5
      %v817 = vor.u32 %v813, %v816
      %v818 = vrot.slane %v817, 4
      %v820 = vshll.u32 %v783, 16
      %v822 = vrot.slane %v820, 5
      %v823 = vsel %vm191, %v818, %v822
      %v825 = vshrl.u32 %v784, 16
      %v827 = vrot.slane %v825, 4
      %v828 = vshll.u32 %v784, 16
      %v830 = vrot.slane %v828, 5
      %v831 = vor.u32 %v827, %v830
      %v832 = vrot.slane %v831, 4
      %v834 = vshll.u32 %v785, 16
      %v836 = vrot.slane %v834, 5
      %v837 = vsel %vm191, %v832, %v836
      %v839 = vshrl.u32 %v786, 16
      %v841 = vrot.slane %v839, 4
      %v842 = vshll.u32 %v786, 16
      %v844 = vrot.slane %v842, 5
      %v845 = vor.u32 %v841, %v844
      %v846 = vrot.slane %v845, 4
      %v848 = vshll.u32 %v787, 16
      %v850 = vrot.slane %v848, 5
      %v851 = vsel %vm191, %v846, %v850
      %v853 = vshrl.u32 %v788, 16
      %v855 = vrot.slane %v853, 4
      %v856 = vshll.u32 %v788, 16
      %v858 = vrot.slane %v856, 5
      %v859 = vor.u32 %v855, %v858
      %v860 = vrot.slane %v859, 4
      %v862 = vshll.u32 %v789, 16
      %v864 = vrot.slane %v862, 5
      %v865 = vsel %vm191, %v860, %v864
      %v867 = vshrl.u32 %v790, 16
      %v869 = vrot.slane %v867, 4
      %v870 = vshll.u32 %v790, 16
      %v872 = vrot.slane %v870, 5
      %v873 = vor.u32 %v869, %v872
      %v874 = vrot.slane %v873, 4
      %v876 = vshll.u32 %v791, 16
      %v878 = vrot.slane %v876, 5
      %v879 = vsel %vm191, %v874, %v878
      %v881 = vshrl.u32 %v792, 16
      %v883 = vrot.slane %v881, 4
      %v884 = vshll.u32 %v792, 16
      %v886 = vrot.slane %v884, 5
      %v887 = vor.u32 %v883, %v886
      %v888 = vrot.slane %v887, 4
      %v890 = vshll.u32 %v793, 16
      %v892 = vrot.slane %v890, 5
      %v893 = vsel %vm191, %v888, %v892
      %v895 = vshrl.u32 %v794, 16
      %v897 = vrot.slane %v895, 4
      %v898 = vshll.u32 %v794, 16
      %v900 = vrot.slane %v898, 5
      %v901 = vor.u32 %v897, %v900
      %v902 = vrot.slane %v901, 4
      %v904 = vshll.u32 %v795, 16
      %v906 = vrot.slane %v904, 5
      %v907 = vsel %vm191, %v902, %v906
      %s908 = scalar_lea.vmem %s1, 16
      %v909 = vld [vmem:[%s908] sm:$0xf]
      %v910 = vunpack.c.l.b16 %v809
      %v911 = vunpack.c.l.b16 %v823
      %v912 = vunpack.c.l.b16 %v837
      %v913 = vunpack.c.l.b16 %v851
      %v914 = vunpack.c.l.b16 %v865
      %v915 = vunpack.c.l.b16 %v879
      %v916 = vunpack.c.l.b16 %v893
      %v917 = vunpack.c.l.b16 %v907
      %v918 = vpack.c.b16 %v911, %v910
      %v919 = vpack.c.b16 %v913, %v912
      %v920 = vpack.c.b16 %v915, %v914
      %v921 = vpack.c.b16 %v917, %v916
      %v923 = vsel %vm318, %v918, 0
      %v926 = vsel %vm318, %v919, 0
      %v929 = vsel %vm318, %v920, 0
      %v932 = vsel %vm318, %v921, 0
      %v935 = vsel %vm331, %v909, 0
      %937 = vmatprep.subr.bf16.mxu0 0
      %938 = vmatpush1.bf16.msra.mxu0 %v935
      %939 = vmatprep.subr.bf16.mxu0 0
      %940 = vmatpush1.bf16.msra.mxu0 0
      %941 = vmatprep.subr.bf16.mxu0 0
      %942 = vmatpush1.bf16.msra.mxu0 0
      %943 = vmatprep.subr.bf16.mxu0 0
      %944 = vmatpush1.bf16.msra.mxu0 0
      %945 = vmatprep.subr.bf16.mxu0 0
      %946 = vmatpush1.bf16.msra.mxu0 0
      %947 = vmatprep.subr.bf16.mxu0 0
      %948 = vmatpush1.bf16.msra.mxu0 0
      %949 = vmatprep.subr.bf16.mxu0 0
      %950 = vmatpush1.bf16.msra.mxu0 0
      %951 = vmatprep.subr.bf16.mxu0 0
      %952 = vmatpush1.bf16.msra.mxu0 0
      %953 = vmatprep.subr.bf16.mxu0 0
      %954 = vmatpush1.bf16.msra.mxu0 0
      %955 = vmatprep.subr.bf16.mxu0 0
      %956 = vmatpush1.bf16.msra.mxu0 0
      %957 = vmatprep.subr.bf16.mxu0 0
      %958 = vmatpush1.bf16.msra.mxu0 0
      %959 = vmatprep.subr.bf16.mxu0 0
      %960 = vmatpush1.bf16.msra.mxu0 0
      %961 = vmatprep.subr.bf16.mxu0 0
      %962 = vmatpush1.bf16.msra.mxu0 0
      %963 = vmatprep.subr.bf16.mxu0 0
      %964 = vmatpush1.bf16.msra.mxu0 0
      %965 = vmatprep.subr.bf16.mxu0 0
      %966 = vmatpush1.bf16.msra.mxu0 0
      %967 = vmatprep.subr.bf16.mxu0 0
      %968 = vmatpush1.bf16.msra.mxu0 0
      %969 = vmatprep.mubr.bf16.mxu0 0
      %970 = vmatmul.mubr.bf16.gmra.mrb[0].mxu0 %v923
      %v971 = vpop.f32.mrb[0].mxu0
      %v972 = vadd.f32 0.0, %v971
      %v973 = vpop.f32.mrb[0].mxu0
      %v974 = vpop.f32.mrb[0].mxu0
      %v975 = vadd.f32 0.0, %v974
      %v976 = vpop.f32.mrb[0].mxu0
      %977 = vmatprep.mubr.bf16.mxu0 0
      %978 = vmatmul.mubr.bf16.gmra.mrb[0].mxu0 %v926
      %v979 = vpop.f32.mrb[0].mxu0
      %v980 = vadd.f32 0.0, %v979
      %v981 = vpop.f32.mrb[0].mxu0
      %v982 = vpop.f32.mrb[0].mxu0
      %v983 = vadd.f32 0.0, %v982
      %v984 = vpop.f32.mrb[0].mxu0
      %985 = vmatprep.mubr.bf16.mxu0 0
      %986 = vmatmul.mubr.bf16.gmra.mrb[0].mxu0 %v929
      %v987 = vpop.f32.mrb[0].mxu0
      %v988 = vadd.f32 0.0, %v987
      %v989 = vpop.f32.mrb[0].mxu0
      %v990 = vpop.f32.mrb[0].mxu0
      %v991 = vadd.f32 0.0, %v990
      %v992 = vpop.f32.mrb[0].mxu0
      %993 = vmatprep.mubr.bf16.mxu0 0
      %994 = vmatmul.mubr.bf16.gmra.mrb[0].mxu0 %v932
      %v995 = vpop.f32.mrb[0].mxu0
      %v996 = vadd.f32 0.0, %v995
      %v997 = vpop.f32.mrb[0].mxu0
      %v998 = vpop.f32.mrb[0].mxu0
      %v999 = vadd.f32 0.0, %v998
      %v1000 = vpop.f32.mrb[0].mxu0
      %1001 = vdwg.mxu0
      %v1002 = vadd.f32 %v772, %v972
      %v1003 = vadd.f32 %v773, %v975
      %v1004 = vadd.f32 %v774, %v980
      %v1005 = vadd.f32 %v775, %v983
      %v1006 = vadd.f32 %v776, %v988
      %v1007 = vadd.f32 %v777, %v991
      %v1008 = vadd.f32 %v778, %v996
      %v1009 = vadd.f32 %v779, %v999
      %v1010 = vld [vmem:[%s661] sm:$0xe]
      %v1011 = vld [vmem:[%s661 + $0x8] sm:$0xe]
      %v1012 = vld [vmem:[%s661 + $0x10] sm:$0xe]
      %v1013 = vld [vmem:[%s661 + $0x18] sm:$0xe]
      %v1014 = vld [vmem:[%s661 + $0x20] sm:$0xe]
      %v1015 = vld [vmem:[%s661 + $0x28] sm:$0xe]
      %v1016 = vld [vmem:[%s661 + $0x30] sm:$0xe]
      %v1017 = vld [vmem:[%s661 + $0x38] sm:$0xe]
      %v1034 = vrot.slane %v1010, 5
      %v1035 = vrot.slane %v1034, 4
      %v1036 = vrot.slane %v781, 5
      %v1037 = vsel %vm526, %v1035, %v1036
      %v1038 = vrot.slane %v1011, 5
      %v1039 = vrot.slane %v1038, 4
      %v1040 = vrot.slane %v783, 5
      %v1041 = vsel %vm526, %v1039, %v1040
      %v1042 = vrot.slane %v1012, 5
      %v1043 = vrot.slane %v1042, 4
      %v1044 = vrot.slane %v785, 5
      %v1045 = vsel %vm526, %v1043, %v1044
      %v1046 = vrot.slane %v1013, 5
      %v1047 = vrot.slane %v1046, 4
      %v1048 = vrot.slane %v787, 5
      %v1049 = vsel %vm526, %v1047, %v1048
      %v1050 = vrot.slane %v1014, 5
      %v1051 = vrot.slane %v1050, 4
      %v1052 = vrot.slane %v789, 5
      %v1053 = vsel %vm526, %v1051, %v1052
      %v1054 = vrot.slane %v1015, 5
      %v1055 = vrot.slane %v1054, 4
      %v1056 = vrot.slane %v791, 5
      %v1057 = vsel %vm526, %v1055, %v1056
      %v1058 = vrot.slane %v1016, 5
      %v1059 = vrot.slane %v1058, 4
      %v1060 = vrot.slane %v793, 5
      %v1061 = vsel %vm526, %v1059, %v1060
      %v1062 = vrot.slane %v1017, 5
      %v1063 = vrot.slane %v1062, 4
      %v1064 = vrot.slane %v795, 5
      %v1065 = vsel %vm526, %v1063, %v1064
      %s1066 = scalar_lea.vmem %s1, 20
      %v1067 = vld [vmem:[%s1066] sm:$0xf]
      %v1068 = vunpack.c.l.b16 %v1037
      %v1069 = vunpack.c.l.b16 %v1041
      %v1070 = vunpack.c.l.b16 %v1045
      %v1071 = vunpack.c.l.b16 %v1049
      %v1072 = vunpack.c.l.b16 %v1053
      %v1073 = vunpack.c.l.b16 %v1057
      %v1074 = vunpack.c.l.b16 %v1061
      %v1075 = vunpack.c.l.b16 %v1065
      %v1076 = vpack.c.b16 %v1069, %v1068
      %v1077 = vpack.c.b16 %v1071, %v1070
      %v1078 = vpack.c.b16 %v1073, %v1072
      %v1079 = vpack.c.b16 %v1075, %v1074
      %v1081 = vsel %vm318, %v1076, 0
      %v1084 = vsel %vm318, %v1077, 0
      %v1087 = vsel %vm318, %v1078, 0
      %v1090 = vsel %vm318, %v1079, 0
      %v1093 = vsel %vm331, %v1067, 0
      %1095 = vmatprep.subr.bf16.mxu0 0
      %1096 = vmatpush1.bf16.msra.mxu0 %v1093
      %1097 = vmatprep.subr.bf16.mxu0 0
      %1098 = vmatpush1.bf16.msra.mxu0 0
      %1099 = vmatprep.subr.bf16.mxu0 0
      %1100 = vmatpush1.bf16.msra.mxu0 0
      %1101 = vmatprep.subr.bf16.mxu0 0
      %1102 = vmatpush1.bf16.msra.mxu0 0
      %1103 = vmatprep.subr.bf16.mxu0 0
      %1104 = vmatpush1.bf16.msra.mxu0 0
      %1105 = vmatprep.subr.bf16.mxu0 0
      %1106 = vmatpush1.bf16.msra.mxu0 0
      %1107 = vmatprep.subr.bf16.mxu0 0
      %1108 = vmatpush1.bf16.msra.mxu0 0
      %1109 = vmatprep.subr.bf16.mxu0 0
      %1110 = vmatpush1.bf16.msra.mxu0 0
      %1111 = vmatprep.subr.bf16.mxu0 0
      %1112 = vmatpush1.bf16.msra.mxu0 0
      %1113 = vmatprep.subr.bf16.mxu0 0
      %1114 = vmatpush1.bf16.msra.mxu0 0
      %1115 = vmatprep.subr.bf16.mxu0 0
      %1116 = vmatpush1.bf16.msra.mxu0 0
      %1117 = vmatprep.subr.bf16.mxu0 0
      %1118 = vmatpush1.bf16.msra.mxu0 0
      %1119 = vmatprep.subr.bf16.mxu0 0
      %1120 = vmatpush1.bf16.msra.mxu0 0
      %1121 = vmatprep.subr.bf16.mxu0 0
      %1122 = vmatpush1.bf16.msra.mxu0 0
      %1123 = vmatprep.subr.bf16.mxu0 0
      %1124 = vmatpush1.bf16.msra.mxu0 0
      %1125 = vmatprep.subr.bf16.mxu0 0
      %1126 = vmatpush1.bf16.msra.mxu0 0
      %1127 = vmatprep.mubr.bf16.mxu0 0
      %1128 = vmatmul.mubr.bf16.gmra.mrb[0].mxu0 %v1081
      %v1129 = vpop.f32.mrb[0].mxu0
      %v1130 = vadd.f32 0.0, %v1129
      %v1131 = vpop.f32.mrb[0].mxu0
      %v1132 = vpop.f32.mrb[0].mxu0
      %v1133 = vadd.f32 0.0, %v1132
      %v1134 = vpop.f32.mrb[0].mxu0
      %1135 = vmatprep.mubr.bf16.mxu0 0
      %1136 = vmatmul.mubr.bf16.gmra.mrb[0].mxu0 %v1084
      %v1137 = vpop.f32.mrb[0].mxu0
      %v1138 = vadd.f32 0.0, %v1137
      %v1139 = vpop.f32.mrb[0].mxu0
      %v1140 = vpop.f32.mrb[0].mxu0
      %v1141 = vadd.f32 0.0, %v1140
      %v1142 = vpop.f32.mrb[0].mxu0
      %1143 = vmatprep.mubr.bf16.mxu0 0
      %1144 = vmatmul.mubr.bf16.gmra.mrb[0].mxu0 %v1087
      %v1145 = vpop.f32.mrb[0].mxu0
      %v1146 = vadd.f32 0.0, %v1145
      %v1147 = vpop.f32.mrb[0].mxu0
      %v1148 = vpop.f32.mrb[0].mxu0
      %v1149 = vadd.f32 0.0, %v1148
      %v1150 = vpop.f32.mrb[0].mxu0
      %1151 = vmatprep.mubr.bf16.mxu0 0
      %1152 = vmatmul.mubr.bf16.gmra.mrb[0].mxu0 %v1090
      %v1153 = vpop.f32.mrb[0].mxu0
      %v1154 = vadd.f32 0.0, %v1153
      %v1155 = vpop.f32.mrb[0].mxu0
      %v1156 = vpop.f32.mrb[0].mxu0
      %v1157 = vadd.f32 0.0, %v1156
      %v1158 = vpop.f32.mrb[0].mxu0
      %1159 = vdwg.mxu0
      %v1160 = vadd.f32 %v1002, %v1130
      %v1161 = vadd.f32 %v1003, %v1133
      %v1162 = vadd.f32 %v1004, %v1138
      %v1163 = vadd.f32 %v1005, %v1141
      %v1164 = vadd.f32 %v1006, %v1146
      %v1165 = vadd.f32 %v1007, %v1149
      %v1166 = vadd.f32 %v1008, %v1154
      %v1167 = vadd.f32 %v1009, %v1157
      %s1168 = scalar_lea.vmem %s165, 16
      %v1169 = vld [vmem:[%s1168] sm:$0xf]
      %v1170 = vld [vmem:[%s1168 + $0x8] sm:$0xf]
      %v1171 = vld [vmem:[%s1168 + $0x10] sm:$0xf]
      %v1172 = vld [vmem:[%s1168 + $0x18] sm:$0xf]
      %v1173 = vld [vmem:[%s1168 + $0x20] sm:$0xf]
      %v1174 = vld [vmem:[%s1168 + $0x28] sm:$0xf]
      %v1175 = vld [vmem:[%s1168 + $0x30] sm:$0xf]
      %v1176 = vld [vmem:[%s1168 + $0x38] sm:$0xf]
      %s1177 = scalar_lea.vmem %s1, 24
      %v1178 = vld [vmem:[%s1177] sm:$0xf]
      %v1187 = vunpack.c.l.b16 %v1169
      %v1188 = vunpack.c.l.b16 %v1170
      %v1189 = vunpack.c.l.b16 %v1171
      %v1190 = vunpack.c.l.b16 %v1172
      %v1191 = vunpack.c.l.b16 %v1173
      %v1192 = vunpack.c.l.b16 %v1174
      %v1193 = vunpack.c.l.b16 %v1175
      %v1194 = vunpack.c.l.b16 %v1176
      %v1195 = vpack.c.b16 %v1188, %v1187
      %v1196 = vpack.c.b16 %v1190, %v1189
      %v1197 = vpack.c.b16 %v1192, %v1191
      %v1198 = vpack.c.b16 %v1194, %v1193
      %v1200 = vsel %vm318, %v1195, 0
      %v1203 = vsel %vm318, %v1196, 0
      %v1206 = vsel %vm318, %v1197, 0
      %v1209 = vsel %vm318, %v1198, 0
      %v1212 = vsel %vm331, %v1178, 0
      %1214 = vmatprep.subr.bf16.mxu0 0
      %1215 = vmatpush1.bf16.msra.mxu0 %v1212
      %1216 = vmatprep.subr.bf16.mxu0 0
      %1217 = vmatpush1.bf16.msra.mxu0 0
      %1218 = vmatprep.subr.bf16.mxu0 0
      %1219 = vmatpush1.bf16.msra.mxu0 0
      %1220 = vmatprep.subr.bf16.mxu0 0
      %1221 = vmatpush1.bf16.msra.mxu0 0
      %1222 = vmatprep.subr.bf16.mxu0 0
      %1223 = vmatpush1.bf16.msra.mxu0 0
      %1224 = vmatprep.subr.bf16.mxu0 0
      %1225 = vmatpush1.bf16.msra.mxu0 0
      %1226 = vmatprep.subr.bf16.mxu0 0
      %1227 = vmatpush1.bf16.msra.mxu0 0
      %1228 = vmatprep.subr.bf16.mxu0 0
      %1229 = vmatpush1.bf16.msra.mxu0 0
      %1230 = vmatprep.subr.bf16.mxu0 0
      %1231 = vmatpush1.bf16.msra.mxu0 0
      %1232 = vmatprep.subr.bf16.mxu0 0
      %1233 = vmatpush1.bf16.msra.mxu0 0
      %1234 = vmatprep.subr.bf16.mxu0 0
      %1235 = vmatpush1.bf16.msra.mxu0 0
      %1236 = vmatprep.subr.bf16.mxu0 0
      %1237 = vmatpush1.bf16.msra.mxu0 0
      %1238 = vmatprep.subr.bf16.mxu0 0
      %1239 = vmatpush1.bf16.msra.mxu0 0
      %1240 = vmatprep.subr.bf16.mxu0 0
      %1241 = vmatpush1.bf16.msra.mxu0 0
      %1242 = vmatprep.subr.bf16.mxu0 0
      %1243 = vmatpush1.bf16.msra.mxu0 0
      %1244 = vmatprep.subr.bf16.mxu0 0
      %1245 = vmatpush1.bf16.msra.mxu0 0
      %1246 = vmatprep.mubr.bf16.mxu0 0
      %1247 = vmatmul.mubr.bf16.gmra.mrb[0].mxu0 %v1200
      %v1248 = vpop.f32.mrb[0].mxu0
      %v1249 = vadd.f32 0.0, %v1248
      %v1250 = vpop.f32.mrb[0].mxu0
      %v1251 = vpop.f32.mrb[0].mxu0
      %v1252 = vadd.f32 0.0, %v1251
      %v1253 = vpop.f32.mrb[0].mxu0
      %1254 = vmatprep.mubr.bf16.mxu0 0
      %1255 = vmatmul.mubr.bf16.gmra.mrb[0].mxu0 %v1203
      %v1256 = vpop.f32.mrb[0].mxu0
      %v1257 = vadd.f32 0.0, %v1256
      %v1258 = vpop.f32.mrb[0].mxu0
      %v1259 = vpop.f32.mrb[0].mxu0
      %v1260 = vadd.f32 0.0, %v1259
      %v1261 = vpop.f32.mrb[0].mxu0
      %1262 = vmatprep.mubr.bf16.mxu0 0
      %1263 = vmatmul.mubr.bf16.gmra.mrb[0].mxu0 %v1206
      %v1264 = vpop.f32.mrb[0].mxu0
      %v1265 = vadd.f32 0.0, %v1264
      %v1266 = vpop.f32.mrb[0].mxu0
      %v1267 = vpop.f32.mrb[0].mxu0
      %v1268 = vadd.f32 0.0, %v1267
      %v1269 = vpop.f32.mrb[0].mxu0
      %1270 = vmatprep.mubr.bf16.mxu0 0
      %1271 = vmatmul.mubr.bf16.gmra.mrb[0].mxu0 %v1209
      %v1272 = vpop.f32.mrb[0].mxu0
      %v1273 = vadd.f32 0.0, %v1272
      %v1274 = vpop.f32.mrb[0].mxu0
      %v1275 = vpop.f32.mrb[0].mxu0
      %v1276 = vadd.f32 0.0, %v1275
      %v1277 = vpop.f32.mrb[0].mxu0
      %1278 = vdwg.mxu0
      %v1279 = vadd.f32 %v1160, %v1249
      %v1280 = vadd.f32 %v1161, %v1252
      %v1281 = vadd.f32 %v1162, %v1257
      %v1282 = vadd.f32 %v1163, %v1260
      %v1283 = vadd.f32 %v1164, %v1265
      %v1284 = vadd.f32 %v1165, %v1268
      %v1285 = vadd.f32 %v1166, %v1273
      %v1286 = vadd.f32 %v1167, %v1276
      %v1287 = vld [vmem:[%s1168] sm:$0xf]
      %v1288 = vld [vmem:[%s1168 + $0x4] sm:$0x1]
      %v1289 = vld [vmem:[%s1168 + $0x8] sm:$0xf]
      %v1290 = vld [vmem:[%s1168 + $0xc] sm:$0x1]
      %v1291 = vld [vmem:[%s1168 + $0x10] sm:$0xf]
      %v1292 = vld [vmem:[%s1168 + $0x14] sm:$0x1]
      %v1293 = vld [vmem:[%s1168 + $0x18] sm:$0xf]
      %v1294 = vld [vmem:[%s1168 + $0x1c] sm:$0x1]
      %v1295 = vld [vmem:[%s1168 + $0x20] sm:$0xf]
      %v1296 = vld [vmem:[%s1168 + $0x24] sm:$0x1]
      %v1297 = vld [vmem:[%s1168 + $0x28] sm:$0xf]
      %v1298 = vld [vmem:[%s1168 + $0x2c] sm:$0x1]
      %v1299 = vld [vmem:[%s1168 + $0x30] sm:$0xf]
      %v1300 = vld [vmem:[%s1168 + $0x34] sm:$0x1]
      %v1301 = vld [vmem:[%s1168 + $0x38] sm:$0xf]
      %v1302 = vld [vmem:[%s1168 + $0x3c] sm:$0x1]
      %v1304 = vshrl.u32 %v1287, 16
      %v1306 = vrot.slane %v1304, 4
      %v1307 = vshll.u32 %v1287, 16
      %v1309 = vrot.slane %v1307, 5
      %v1310 = vor.u32 %v1306, %v1309
      %v1311 = vrot.slane %v1310, 4
      %v1313 = vshll.u32 %v1288, 16
      %v1315 = vrot.slane %v1313, 5
      %v1316 = vsel %vm191, %v1311, %v1315
      %v1318 = vshrl.u32 %v1289, 16
      %v1320 = vrot.slane %v1318, 4
      %v1321 = vshll.u32 %v1289, 16
      %v1323 = vrot.slane %v1321, 5
      %v1324 = vor.u32 %v1320, %v1323
      %v1325 = vrot.slane %v1324, 4
      %v1327 = vshll.u32 %v1290, 16
      %v1329 = vrot.slane %v1327, 5
      %v1330 = vsel %vm191, %v1325, %v1329
      %v1332 = vshrl.u32 %v1291, 16
      %v1334 = vrot.slane %v1332, 4
      %v1335 = vshll.u32 %v1291, 16
      %v1337 = vrot.slane %v1335, 5
      %v1338 = vor.u32 %v1334, %v1337
      %v1339 = vrot.slane %v1338, 4
      %v1341 = vshll.u32 %v1292, 16
      %v1343 = vrot.slane %v1341, 5
      %v1344 = vsel %vm191, %v1339, %v1343
      %v1346 = vshrl.u32 %v1293, 16
      %v1348 = vrot.slane %v1346, 4
      %v1349 = vshll.u32 %v1293, 16
      %v1351 = vrot.slane %v1349, 5
      %v1352 = vor.u32 %v1348, %v1351
      %v1353 = vrot.slane %v1352, 4
      %v1355 = vshll.u32 %v1294, 16
      %v1357 = vrot.slane %v1355, 5
      %v1358 = vsel %vm191, %v1353, %v1357
      %v1360 = vshrl.u32 %v1295, 16
      %v1362 = vrot.slane %v1360, 4
      %v1363 = vshll.u32 %v1295, 16
      %v1365 = vrot.slane %v1363, 5
      %v1366 = vor.u32 %v1362, %v1365
      %v1367 = vrot.slane %v1366, 4
      %v1369 = vshll.u32 %v1296, 16
      %v1371 = vrot.slane %v1369, 5
      %v1372 = vsel %vm191, %v1367, %v1371
      %v1374 = vshrl.u32 %v1297, 16
      %v1376 = vrot.slane %v1374, 4
      %v1377 = vshll.u32 %v1297, 16
      %v1379 = vrot.slane %v1377, 5
      %v1380 = vor.u32 %v1376, %v1379
      %v1381 = vrot.slane %v1380, 4
      %v1383 = vshll.u32 %v1298, 16
      %v1385 = vrot.slane %v1383, 5
      %v1386 = vsel %vm191, %v1381, %v1385
      %v1388 = vshrl.u32 %v1299, 16
      %v1390 = vrot.slane %v1388, 4
      %v1391 = vshll.u32 %v1299, 16
      %v1393 = vrot.slane %v1391, 5
      %v1394 = vor.u32 %v1390, %v1393
      %v1395 = vrot.slane %v1394, 4
      %v1397 = vshll.u32 %v1300, 16
      %v1399 = vrot.slane %v1397, 5
      %v1400 = vsel %vm191, %v1395, %v1399
      %v1402 = vshrl.u32 %v1301, 16
      %v1404 = vrot.slane %v1402, 4
      %v1405 = vshll.u32 %v1301, 16
      %v1407 = vrot.slane %v1405, 5
      %v1408 = vor.u32 %v1404, %v1407
      %v1409 = vrot.slane %v1408, 4
      %v1411 = vshll.u32 %v1302, 16
      %v1413 = vrot.slane %v1411, 5
      %v1414 = vsel %vm191, %v1409, %v1413
      %s1415 = scalar_lea.vmem %s1, 28
      %v1416 = vld [vmem:[%s1415] sm:$0xf]
      %v1417 = vunpack.c.l.b16 %v1316
      %v1418 = vunpack.c.l.b16 %v1330
      %v1419 = vunpack.c.l.b16 %v1344
      %v1420 = vunpack.c.l.b16 %v1358
      %v1421 = vunpack.c.l.b16 %v1372
      %v1422 = vunpack.c.l.b16 %v1386
      %v1423 = vunpack.c.l.b16 %v1400
      %v1424 = vunpack.c.l.b16 %v1414
      %v1425 = vpack.c.b16 %v1418, %v1417
      %v1426 = vpack.c.b16 %v1420, %v1419
      %v1427 = vpack.c.b16 %v1422, %v1421
      %v1428 = vpack.c.b16 %v1424, %v1423
      %v1430 = vsel %vm318, %v1425, 0
      %v1433 = vsel %vm318, %v1426, 0
      %v1436 = vsel %vm318, %v1427, 0
      %v1439 = vsel %vm318, %v1428, 0
      %v1442 = vsel %vm331, %v1416, 0
      %1444 = vmatprep.subr.bf16.mxu0 0
      %1445 = vmatpush1.bf16.msra.mxu0 %v1442
      %1446 = vmatprep.subr.bf16.mxu0 0
      %1447 = vmatpush1.bf16.msra.mxu0 0
      %1448 = vmatprep.subr.bf16.mxu0 0
      %1449 = vmatpush1.bf16.msra.mxu0 0
      %1450 = vmatprep.subr.bf16.mxu0 0
      %1451 = vmatpush1.bf16.msra.mxu0 0
      %1452 = vmatprep.subr.bf16.mxu0 0
      %1453 = vmatpush1.bf16.msra.mxu0 0
      %1454 = vmatprep.subr.bf16.mxu0 0
      %1455 = vmatpush1.bf16.msra.mxu0 0
      %1456 = vmatprep.subr.bf16.mxu0 0
      %1457 = vmatpush1.bf16.msra.mxu0 0
      %1458 = vmatprep.subr.bf16.mxu0 0
      %1459 = vmatpush1.bf16.msra.mxu0 0
      %1460 = vmatprep.subr.bf16.mxu0 0
      %1461 = vmatpush1.bf16.msra.mxu0 0
      %1462 = vmatprep.subr.bf16.mxu0 0
      %1463 = vmatpush1.bf16.msra.mxu0 0
      %1464 = vmatprep.subr.bf16.mxu0 0
      %1465 = vmatpush1.bf16.msra.mxu0 0
      %1466 = vmatprep.subr.bf16.mxu0 0
      %1467 = vmatpush1.bf16.msra.mxu0 0
      %1468 = vmatprep.subr.bf16.mxu0 0
      %1469 = vmatpush1.bf16.msra.mxu0 0
      %1470 = vmatprep.subr.bf16.mxu0 0
      %1471 = vmatpush1.bf16.msra.mxu0 0
      %1472 = vmatprep.subr.bf16.mxu0 0
      %1473 = vmatpush1.bf16.msra.mxu0 0
      %1474 = vmatprep.subr.bf16.mxu0 0
      %1475 = vmatpush1.bf16.msra.mxu0 0
      %1476 = vmatprep.mubr.bf16.mxu0 0
      %1477 = vmatmul.mubr.bf16.gmra.mrb[0].mxu0 %v1430
      %v1478 = vpop.f32.mrb[0].mxu0
      %v1479 = vadd.f32 0.0, %v1478
      %v1480 = vpop.f32.mrb[0].mxu0
      %v1481 = vpop.f32.mrb[0].mxu0
      %v1482 = vadd.f32 0.0, %v1481
      %v1483 = vpop.f32.mrb[0].mxu0
      %1484 = vmatprep.mubr.bf16.mxu0 0
      %1485 = vmatmul.mubr.bf16.gmra.mrb[0].mxu0 %v1433
      %v1486 = vpop.f32.mrb[0].mxu0
      %v1487 = vadd.f32 0.0, %v1486
      %v1488 = vpop.f32.mrb[0].mxu0
      %v1489 = vpop.f32.mrb[0].mxu0
      %v1490 = vadd.f32 0.0, %v1489
      %v1491 = vpop.f32.mrb[0].mxu0
      %1492 = vmatprep.mubr.bf16.mxu0 0
      %1493 = vmatmul.mubr.bf16.gmra.mrb[0].mxu0 %v1436
      %v1494 = vpop.f32.mrb[0].mxu0
      %v1495 = vadd.f32 0.0, %v1494
      %v1496 = vpop.f32.mrb[0].mxu0
      %v1497 = vpop.f32.mrb[0].mxu0
      %v1498 = vadd.f32 0.0, %v1497
      %v1499 = vpop.f32.mrb[0].mxu0
      %1500 = vmatprep.mubr.bf16.mxu0 0
      %1501 = vmatmul.mubr.bf16.gmra.mrb[0].mxu0 %v1439
      %v1502 = vpop.f32.mrb[0].mxu0
      %v1503 = vadd.f32 0.0, %v1502
      %v1504 = vpop.f32.mrb[0].mxu0
      %v1505 = vpop.f32.mrb[0].mxu0
      %v1506 = vadd.f32 0.0, %v1505
      %v1507 = vpop.f32.mrb[0].mxu0
      %1508 = vdwg.mxu0
      %v1509 = vadd.f32 %v1279, %v1479
      %v1510 = vadd.f32 %v1280, %v1482
      %v1511 = vadd.f32 %v1281, %v1487
      %v1512 = vadd.f32 %v1282, %v1490
      %v1513 = vadd.f32 %v1283, %v1495
      %v1514 = vadd.f32 %v1284, %v1498
      %v1515 = vadd.f32 %v1285, %v1503
      %v1516 = vadd.f32 %v1286, %v1506
      %v1517 = vld [vmem:[%s1168] sm:$0xe]
      %v1518 = vld [vmem:[%s1168 + $0x8] sm:$0xe]
      %v1519 = vld [vmem:[%s1168 + $0x10] sm:$0xe]
      %v1520 = vld [vmem:[%s1168 + $0x18] sm:$0xe]
      %v1521 = vld [vmem:[%s1168 + $0x20] sm:$0xe]
      %v1522 = vld [vmem:[%s1168 + $0x28] sm:$0xe]
      %v1523 = vld [vmem:[%s1168 + $0x30] sm:$0xe]
      %v1524 = vld [vmem:[%s1168 + $0x38] sm:$0xe]
      %v1541 = vrot.slane %v1517, 5
      %v1542 = vrot.slane %v1541, 4
      %v1543 = vrot.slane %v1288, 5
      %v1544 = vsel %vm526, %v1542, %v1543
      %v1545 = vrot.slane %v1518, 5
      %v1546 = vrot.slane %v1545, 4
      %v1547 = vrot.slane %v1290, 5
      %v1548 = vsel %vm526, %v1546, %v1547
      %v1549 = vrot.slane %v1519, 5
      %v1550 = vrot.slane %v1549, 4
      %v1551 = vrot.slane %v1292, 5
      %v1552 = vsel %vm526, %v1550, %v1551
      %v1553 = vrot.slane %v1520, 5
      %v1554 = vrot.slane %v1553, 4
      %v1555 = vrot.slane %v1294, 5
      %v1556 = vsel %vm526, %v1554, %v1555
      %v1557 = vrot.slane %v1521, 5
      %v1558 = vrot.slane %v1557, 4
      %v1559 = vrot.slane %v1296, 5
      %v1560 = vsel %vm526, %v1558, %v1559
      %v1561 = vrot.slane %v1522, 5
      %v1562 = vrot.slane %v1561, 4
      %v1563 = vrot.slane %v1298, 5
      %v1564 = vsel %vm526, %v1562, %v1563
      %v1565 = vrot.slane %v1523, 5
      %v1566 = vrot.slane %v1565, 4
      %v1567 = vrot.slane %v1300, 5
      %v1568 = vsel %vm526, %v1566, %v1567
      %v1569 = vrot.slane %v1524, 5
      %v1570 = vrot.slane %v1569, 4
      %v1571 = vrot.slane %v1302, 5
      %v1572 = vsel %vm526, %v1570, %v1571
      %s1573 = scalar_lea.vmem %s1, 32
      %v1574 = vld [vmem:[%s1573] sm:$0xf]
      %v1575 = vunpack.c.l.b16 %v1544
      %v1576 = vunpack.c.l.b16 %v1548
      %v1577 = vunpack.c.l.b16 %v1552
      %v1578 = vunpack.c.l.b16 %v1556
      %v1579 = vunpack.c.l.b16 %v1560
      %v1580 = vunpack.c.l.b16 %v1564
      %v1581 = vunpack.c.l.b16 %v1568
      %v1582 = vunpack.c.l.b16 %v1572
      %v1583 = vpack.c.b16 %v1576, %v1575
      %v1584 = vpack.c.b16 %v1578, %v1577
      %v1585 = vpack.c.b16 %v1580, %v1579
      %v1586 = vpack.c.b16 %v1582, %v1581
      %v1588 = vsel %vm318, %v1583, 0
      %v1591 = vsel %vm318, %v1584, 0
      %v1594 = vsel %vm318, %v1585, 0
      %v1597 = vsel %vm318, %v1586, 0
      %v1600 = vsel %vm331, %v1574, 0
      %1602 = vmatprep.subr.bf16.mxu0 0
      %1603 = vmatpush1.bf16.msra.mxu0 %v1600
      %1604 = vmatprep.subr.bf16.mxu0 0
      %1605 = vmatpush1.bf16.msra.mxu0 0
      %1606 = vmatprep.subr.bf16.mxu0 0
      %1607 = vmatpush1.bf16.msra.mxu0 0
      %1608 = vmatprep.subr.bf16.mxu0 0
      %1609 = vmatpush1.bf16.msra.mxu0 0
      %1610 = vmatprep.subr.bf16.mxu0 0
      %1611 = vmatpush1.bf16.msra.mxu0 0
      %1612 = vmatprep.subr.bf16.mxu0 0
      %1613 = vmatpush1.bf16.msra.mxu0 0
      %1614 = vmatprep.subr.bf16.mxu0 0
      %1615 = vmatpush1.bf16.msra.mxu0 0
      %1616 = vmatprep.subr.bf16.mxu0 0
      %1617 = vmatpush1.bf16.msra.mxu0 0
      %1618 = vmatprep.subr.bf16.mxu0 0
      %1619 = vmatpush1.bf16.msra.mxu0 0
      %1620 = vmatprep.subr.bf16.mxu0 0
      %1621 = vmatpush1.bf16.msra.mxu0 0
      %1622 = vmatprep.subr.bf16.mxu0 0
      %1623 = vmatpush1.bf16.msra.mxu0 0
      %1624 = vmatprep.subr.bf16.mxu0 0
      %1625 = vmatpush1.bf16.msra.mxu0 0
      %1626 = vmatprep.subr.bf16.mxu0 0
      %1627 = vmatpush1.bf16.msra.mxu0 0
      %1628 = vmatprep.subr.bf16.mxu0 0
      %1629 = vmatpush1.bf16.msra.mxu0 0
      %1630 = vmatprep.subr.bf16.mxu0 0
      %1631 = vmatpush1.bf16.msra.mxu0 0
      %1632 = vmatprep.subr.bf16.mxu0 0
      %1633 = vmatpush1.bf16.msra.mxu0 0
      %1634 = vmatprep.mubr.bf16.mxu0 0
      %1635 = vmatmul.mubr.bf16.gmra.mrb[0].mxu0 %v1588
      %v1636 = vpop.f32.mrb[0].mxu0
      %v1637 = vadd.f32 0.0, %v1636
      %v1638 = vpop.f32.mrb[0].mxu0
      %v1639 = vpop.f32.mrb[0].mxu0
      %v1640 = vadd.f32 0.0, %v1639
      %v1641 = vpop.f32.mrb[0].mxu0
      %1642 = vmatprep.mubr.bf16.mxu0 0
      %1643 = vmatmul.mubr.bf16.gmra.mrb[0].mxu0 %v1591
      %v1644 = vpop.f32.mrb[0].mxu0
      %v1645 = vadd.f32 0.0, %v1644
      %v1646 = vpop.f32.mrb[0].mxu0
      %v1647 = vpop.f32.mrb[0].mxu0
      %v1648 = vadd.f32 0.0, %v1647
      %v1649 = vpop.f32.mrb[0].mxu0
      %1650 = vmatprep.mubr.bf16.mxu0 0
      %1651 = vmatmul.mubr.bf16.gmra.mrb[0].mxu0 %v1594
      %v1652 = vpop.f32.mrb[0].mxu0
      %v1653 = vadd.f32 0.0, %v1652
      %v1654 = vpop.f32.mrb[0].mxu0
      %v1655 = vpop.f32.mrb[0].mxu0
      %v1656 = vadd.f32 0.0, %v1655
      %v1657 = vpop.f32.mrb[0].mxu0
      %1658 = vmatprep.mubr.bf16.mxu0 0
      %1659 = vmatmul.mubr.bf16.gmra.mrb[0].mxu0 %v1597
      %v1660 = vpop.f32.mrb[0].mxu0
      %v1661 = vadd.f32 0.0, %v1660
      %v1662 = vpop.f32.mrb[0].mxu0
      %v1663 = vpop.f32.mrb[0].mxu0
      %v1664 = vadd.f32 0.0, %v1663
      %v1665 = vpop.f32.mrb[0].mxu0
      %1666 = vdwg.mxu0
      %v1667 = vadd.f32 %v1509, %v1637
      %v1668 = vadd.f32 %v1510, %v1640
      %v1669 = vadd.f32 %v1511, %v1645
      %v1670 = vadd.f32 %v1512, %v1648
      %v1671 = vadd.f32 %v1513, %v1653
      %v1672 = vadd.f32 %v1514, %v1656
      %v1673 = vadd.f32 %v1515, %v1661
      %v1674 = vadd.f32 %v1516, %v1664
      %v1675 = vld [vmem:[%s2] sm:$0x1]
      %v1677 = vlaneseq
      %v1678 = vshrl.u32 %v1677, 7
      %v1679 = vsub.s32 0, %v1678
      %v1680 = vrot.slane %v1675, %v1679
      %v1682 = vadd.f32 %v1667, %v1680
      %v1683 = vadd.f32 %v1668, %v1680
      %v1684 = vadd.f32 %v1669, %v1680
      %v1685 = vadd.f32 %v1670, %v1680
      %v1686 = vadd.f32 %v1671, %v1680
      %v1687 = vadd.f32 %v1672, %v1680
      %v1688 = vadd.f32 %v1673, %v1680
      %v1689 = vadd.f32 %v1674, %v1680
      %v1690 = vmax.f32 %v1682, 0.0
      %v1691 = vmax.f32 %v1683, 0.0
      %v1692 = vmax.f32 %v1684, 0.0
      %v1693 = vmax.f32 %v1685, 0.0
      %v1694 = vmax.f32 %v1686, 0.0
      %v1695 = vmax.f32 %v1687, 0.0
      %v1696 = vmax.f32 %v1688, 0.0
      %v1697 = vmax.f32 %v1689, 0.0
      %v1698 = vpack.c.bf16 %v1690, %v1690
      %v1699 = vpack.c.bf16 %v1691, %v1691
      %v1700 = vpack.c.bf16 %v1692, %v1692
      %v1701 = vpack.c.bf16 %v1693, %v1693
      %v1702 = vpack.c.bf16 %v1694, %v1694
      %v1703 = vpack.c.bf16 %v1695, %v1695
      %v1704 = vpack.c.bf16 %v1696, %v1696
      %v1705 = vpack.c.bf16 %v1697, %v1697
      %vm1706 = vcmask 60416
      %1707 = vst.msk [vmem:[%s170] sm:$0xf] %vm1706, %v1698
      %1708 = vst.msk [vmem:[%s170 + $0x4] sm:$0xf] %vm1706, %v1699
      %1709 = vst.msk [vmem:[%s170 + $0x8] sm:$0xf] %vm1706, %v1700
      %1710 = vst.msk [vmem:[%s170 + $0xc] sm:$0xf] %vm1706, %v1701
      %1711 = vst.msk [vmem:[%s170 + $0x10] sm:$0xf] %vm1706, %v1702
      %1712 = vst.msk [vmem:[%s170 + $0x14] sm:$0xf] %vm1706, %v1703
      %1713 = vst.msk [vmem:[%s170 + $0x18] sm:$0xf] %vm1706, %v1704
      %1714 = vst.msk [vmem:[%s170 + $0x1c] sm:$0xf] %vm1706, %v1705
      %p1715 = scmp.lt.s32.totalorder %s14, 1
      %s1716 = scalar_select %p1715, %s14, 1
      %s1717 = smul.addr %s1716, 8
      %s1718 = smul.addr %s1717, 4
      %s1719 = scalar_lea.vmem %s3, %s1718
      // Predicated region
      $region33: #{model_apply.10} parent=31 // pred_check
        %p1720 = pneg %p100
      $region34: #{model_apply.10} parent=31 // pred_check_branch
        %1722 = sbr.rel (%p1720) target = $region36
      $region35: #{model_apply.10} parent=31 // pred_region
        _
      $region36: #{model_apply.10} parent=31 // pred_fallthru
        _
    $region32: #{model_apply.10} parent=5 // pred_fallthru
      _
    %p1723 = scmp.le.s32.totalorder 2, %s9
    // Predicated region
    $region37: #{model_apply.10} parent=5 // pred_check
      %p1724 = pneg %p1723
    $region38: #{model_apply.10} parent=5 // pred_check_branch
      %1726 = sbr.rel (%p1724) target = $region40
    $region39: #{model_apply.10} parent=5 // pred_region
      %s1727 = ssub.s32 %s9, 2
      // Predicated region
      $region41: #{model_apply.10} parent=39 // pred_check
        %p1728 = pneg %p106
      $region42: #{model_apply.10} parent=39 // pred_check_branch
        %1730 = sbr.rel (%p1728) target = $region44
      $region43: #{model_apply.10} parent=39 // pred_region
        %p1731 = scmp.lt.s32.totalorder %s15, 1
        %s1732 = scalar_select %p1731, %s15, 1
        %s1733 = smul.addr %s1732, 8
        %s1734 = smul.addr %s1733, 4
        %s1735 = scalar_lea.vmem %s3, %s1734
      $region44: #{model_apply.10} parent=39 // pred_fallthru
        _
    $region40: #{model_apply.10} parent=5 // pred_fallthru
      _
  $region6: #{model_apply.10} parent=0 // loop_footer
    %s13 = sadd.s32 1, %s9
  $region7: #{model_apply.10} parent=0 // loop_footer_branch
    %8 = sbr.rel target = $region3
  $region8: #{model_apply.10} parent=0 // loop_exit
    _

// kernel: model_apply.7
$region0: #{model_apply.7}
  #allocation0 [shape = 'u32[]', space=smem, size = 0x4, offset = 0x4, fixed_abs, tag = 'smem constant byte address 0x4 - core index']
  #allocation1 [shape = 'u32[144,128]{1,0:T(1,128)}', space=vmem, size = 0x12000, scoped, tag = 'internal scratch']
  %s0 = inlined_call_operand.vmem [shape: bf16[2,18,18,4], index: 0, kind: input, shape index: {}]
  %s1 = inlined_call_operand.vmem [shape: bf16[9,4,4], index: 1, kind: input, shape index: {}]
  %s2 = inlined_call_operand.vmem [shape: f32[1,4], index: 2, kind: input, shape index: {}]
  %s3 = inlined_call_operand.vmem [shape: bf16[2,16,16,4], index: 3, kind: output, shape index: {}]
  %s4 = sld [smem:[#allocation0]]
  $region45: #{model_apply.7} parent=0
    _
  %s6 = ssub.s32 1, %s4
  %s7 = scalar_select 0, %s6, %s4
  loop: start=0, step=1, limit=4
  $region2: #{model_apply.7} parent=0 // loop_pre_header
    _
  $region3: #{model_apply.7} parent=0 // loop_header
    %s9 = sphi 0, %s13
    %p10 = scmp.ge.s32.totalorder %s9, 4
    %s19 = sphi 0, %s21
    %s22 = sphi 0, %s19
    %s23 = sphi 0, %s22
    %s39 = sphi 0, %s23
    %s43 = sphi 0, %s43
    %s45 = sphi 0, %s43
    %s46 = sphi 0, %s45
    %s60 = sphi 0, %s46
    %s64 = sphi 0, %s64
    %s66 = sphi 0, %s64
    %s67 = sphi 0, %s66
    %s81 = sphi 0, %s67
    %s87 = sphi 0, %s89
    %s90 = sphi 0, %s87
    %s91 = sphi 0, %s90
    %s107 = sphi 0, %s91
  $region4: #{model_apply.7} parent=0 // loop_header_branch
    %12 = sbr.rel (%p10) target = $region8
  $region5: #{model_apply.7} parent=0 // loop_body
    %s14 = ssub.s32 %s9, 1
    %s15 = ssub.s32 %s9, 2
    %s16 = sadd.s32 %s9, 1
    %s17 = ssub.s32 %s9, %s16
    %p18 = scmp.eq.s32.totalorder %s17, 0
    %s20 = sadd.s32 %s19, 1
    %s21 = scalar_select %p18, %s19, %s20
    %p24 = pneg %p18
    %p25 = scmp.eq.s32.totalorder %s9, 1
    %p26 = por %p24, %p25
    %p27 = scmp.ne.s32.totalorder %s19, %s22
    %p28 = scmp.eq.s32.totalorder %s9, 0
    %p29 = por %p27, %p28
    %p30 = scmp.ne.s32.totalorder %s19, %s22
    %p31 = scmp.eq.s32.totalorder %s14, 1
    %p32 = por %p30, %p31
    %p33 = scmp.ne.s32.totalorder %s22, %s23
    %p34 = scmp.eq.s32.totalorder %s14, 0
    %p35 = por %p33, %p34
    %p36 = scmp.ne.s32.totalorder %s22, %s23
    %p37 = scmp.eq.s32.totalorder %s15, 1
    %p38 = por %p36, %p37
    %p40 = scmp.ne.s32.totalorder %s23, %s39
    %p41 = scmp.eq.s32.totalorder %s15, 0
    %p42 = por %p40, %p41
    %s44 = sadd.s32 %s43, 1
    %p47 = scmp.eq.s32.totalorder %s9, 1
    %p48 = scmp.ne.s32.totalorder %s43, %s45
    %p49 = scmp.eq.s32.totalorder %s9, 0
    %p50 = por %p48, %p49
    %p51 = scmp.ne.s32.totalorder %s43, %s45
    %p52 = scmp.eq.s32.totalorder %s14, 1
    %p53 = por %p51, %p52
    %p54 = scmp.ne.s32.totalorder %s45, %s46
    %p55 = scmp.eq.s32.totalorder %s14, 0
    %p56 = por %p54, %p55
    %p57 = scmp.ne.s32.totalorder %s45, %s46
    %p58 = scmp.eq.s32.totalorder %s15, 1
    %p59 = por %p57, %p58
    %p61 = scmp.ne.s32.totalorder %s46, %s60
    %p62 = scmp.eq.s32.totalorder %s15, 0
    %p63 = por %p61, %p62
    %s65 = sadd.s32 %s64, 1
    %p68 = scmp.eq.s32.totalorder %s9, 1
    %p69 = scmp.ne.s32.totalorder %s64, %s66
    %p70 = scmp.eq.s32.totalorder %s9, 0
    %p71 = por %p69, %p70
    %p72 = scmp.ne.s32.totalorder %s64, %s66
    %p73 = scmp.eq.s32.totalorder %s14, 1
    %p74 = por %p72, %p73
    %p75 = scmp.ne.s32.totalorder %s66, %s67
    %p76 = scmp.eq.s32.totalorder %s14, 0
    %p77 = por %p75, %p76
    %p78 = scmp.ne.s32.totalorder %s66, %s67
    %p79 = scmp.eq.s32.totalorder %s15, 1
    %p80 = por %p78, %p79
    %p82 = scmp.ne.s32.totalorder %s67, %s81
    %p83 = scmp.eq.s32.totalorder %s15, 0
    %p84 = por %p82, %p83
    %s85 = ssub.s32 %s9, %s16
    %p86 = scmp.eq.s32.totalorder %s85, 0
    %s88 = sadd.s32 %s87, 1
    %s89 = scalar_select %p86, %s87, %s88
    %p92 = pneg %p86
    %p93 = scmp.eq.s32.totalorder %s9, 1
    %p94 = por %p92, %p93
    %p95 = scmp.ne.s32.totalorder %s87, %s90
    %p96 = scmp.eq.s32.totalorder %s9, 0
    %p97 = por %p95, %p96
    %p98 = scmp.ne.s32.totalorder %s87, %s90
    %p99 = scmp.eq.s32.totalorder %s14, 1
    %p100 = por %p98, %p99
    %p101 = scmp.ne.s32.totalorder %s90, %s91
    %p102 = scmp.eq.s32.totalorder %s14, 0
    %p103 = por %p101, %p102
    %p104 = scmp.ne.s32.totalorder %s90, %s91
    %p105 = scmp.eq.s32.totalorder %s15, 1
    %p106 = por %p104, %p105
    %p108 = scmp.ne.s32.totalorder %s91, %s107
    %p109 = scmp.eq.s32.totalorder %s15, 0
    %p110 = por %p108, %p109
    %p111 = scmp.le.s32.totalorder 1, %s9
    %p112 = scmp.lt.s32.totalorder %s9, 3
    %p113 = pnand %p111, %p112
    %p114 = pneg %p113
    // Predicated region
    $region9: #{model_apply.7} parent=5 // pred_check
      _
    $region10: #{model_apply.7} parent=5 // pred_check_branch
      %116 = sbr.rel (%p113) target = $region12
    $region11: #{model_apply.7} parent=5 // pred_region
      %s117 = ssub.s32 %s9, 1
      // Predicated region
      $region13: #{model_apply.7} parent=11 // pred_check
        %p118 = pneg %p56
      $region14: #{model_apply.7} parent=11 // pred_check_branch
        %120 = sbr.rel (%p118) target = $region16
      $region15: #{model_apply.7} parent=11 // pred_region
        _
      $region16: #{model_apply.7} parent=11 // pred_fallthru
        _
      // Predicated region
      $region17: #{model_apply.7} parent=11 // pred_check
        %p121 = pneg %p77
      $region18: #{model_apply.7} parent=11 // pred_check_branch
        %123 = sbr.rel (%p121) target = $region20
      $region19: #{model_apply.7} parent=11 // pred_region
        _
      $region20: #{model_apply.7} parent=11 // pred_fallthru
        _
    $region12: #{model_apply.7} parent=5 // pred_fallthru
      _
    %p124 = scmp.lt.s32.totalorder %s9, 2
    // Predicated region
    $region21: #{model_apply.7} parent=5 // pred_check
      %p125 = pneg %p124
    $region22: #{model_apply.7} parent=5 // pred_check_branch
      %127 = sbr.rel (%p125) target = $region24
    $region23: #{model_apply.7} parent=5 // pred_region
      // Predicated region
      $region25: #{model_apply.7} parent=23 // pred_check
        %p128 = pneg %p29
      $region26: #{model_apply.7} parent=23 // pred_check_branch
        %130 = sbr.rel (%p128) target = $region28
      $region27: #{model_apply.7} parent=23 // pred_region
        %p131 = scmp.lt.s32.totalorder %s9, 1
        %s132 = scalar_select %p131, %s9, 1
        %s133 = smul.addr %s132, 54
        %s134 = smul.addr %s133, 4
        %s135 = scalar_lea.vmem %s0, %s134
      $region28: #{model_apply.7} parent=23 // pred_fallthru
        _
    $region24: #{model_apply.7} parent=5 // pred_fallthru
      _
    %p136 = scmp.le.s32.totalorder 1, %s9
    %p137 = scmp.lt.s32.totalorder %s9, 3
    %p138 = pnand %p136, %p137
    %p139 = pneg %p138
    // Predicated region
    $region29: #{model_apply.7} parent=5 // pred_check
      _
    $region30: #{model_apply.7} parent=5 // pred_check_branch
      %141 = sbr.rel (%p138) target = $region32
    $region31: #{model_apply.7} parent=5 // pred_region
      %s142 = ssub.s32 %s9, 1
      %p143 = scmp.lt.s32.totalorder %s14, 1
      %s144 = scalar_select %p143, %s14, 1
      %s145 = smul.addr %s144, 54
      %s146 = smul.addr %s145, 4
      %s147 = scalar_lea.vmem %s0, %s146
      %p148 = pneg %p35
      %p149 = pneg %p32
      %p150 = pneg %p56
      %p151 = pneg %p53
      %p152 = pneg %p77
      %p153 = pneg %p74
      %p154 = pneg %p103
      %p155 = pneg %p100
      %p156 = scmp.lt.s32.totalorder %s14, 1
      %s157 = scalar_select %p156, %s14, 1
      %s158 = smul.addr %s157, 32
      %s159 = smul.addr %s158, 4
      %s160 = scalar_lea.vmem %s3, %s159
      %p161 = scmp.lt.s32.totalorder %s14, 1
      %s162 = scalar_select %p161, %s14, 1
      %s163 = smul.addr %s162, 54
      %s164 = smul.addr %s163, 4
      %s165 = scalar_lea.vmem %s0, %s164
      %p166 = scmp.lt.s32.totalorder %s14, 1
      %s167 = scalar_select %p166, %s14, 1
      %s168 = smul.addr %s167, 32
      %s169 = smul.addr %s168, 4
      %s170 = scalar_lea.vmem %s3, %s169
      %v172 = vld [vmem:[%s165] sm:$0xf]
      %v173 = vld [vmem:[%s165 + $0x4] sm:$0xf]
      %v174 = vld [vmem:[%s165 + $0xc] sm:$0xf]
      %v175 = vld [vmem:[%s165 + $0x10] sm:$0xf]
      %v176 = vld [vmem:[%s165 + $0x18] sm:$0xf]
      %v177 = vld [vmem:[%s165 + $0x1c] sm:$0xf]
      %v178 = vld [vmem:[%s165 + $0x24] sm:$0xf]
      %v179 = vld [vmem:[%s165 + $0x28] sm:$0xf]
      %v180 = vld [vmem:[%s165 + $0x30] sm:$0xf]
      %v181 = vld [vmem:[%s165 + $0x34] sm:$0xf]
      %v182 = vld [vmem:[%s165 + $0x3c] sm:$0xf]
      %v183 = vld [vmem:[%s165 + $0x40] sm:$0xf]
      %v184 = vld [vmem:[%s165 + $0x48] sm:$0xf]
      %v185 = vld [vmem:[%s165 + $0x4c] sm:$0xf]
      %v186 = vld [vmem:[%s165 + $0x54] sm:$0xf]
      %v187 = vld [vmem:[%s165 + $0x58] sm:$0xf]
      %v188 = vld [vmem:[%s165 + $0x60] sm:$0xf]
      %v189 = vld [vmem:[%s165 + $0x64] sm:$0xf]
      %v190 = vld [vmem:[%s165 + $0x6c] sm:$0xf]
      %v191 = vld [vmem:[%s165 + $0x70] sm:$0xf]
      %v192 = vld [vmem:[%s165 + $0x78] sm:$0xf]
      %v193 = vld [vmem:[%s165 + $0x7c] sm:$0xf]
      %v194 = vld [vmem:[%s165 + $0x84] sm:$0xf]
      %v195 = vld [vmem:[%s165 + $0x88] sm:$0xf]
      %v196 = vld [vmem:[%s165 + $0x90] sm:$0xf]
      %v197 = vld [vmem:[%s165 + $0x94] sm:$0xf]
      %v198 = vld [vmem:[%s165 + $0x9c] sm:$0xf]
      %v199 = vld [vmem:[%s165 + $0xa0] sm:$0xf]
      %v200 = vld [vmem:[%s165 + $0xa8] sm:$0xf]
      %v201 = vld [vmem:[%s165 + $0xac] sm:$0xf]
      %v202 = vld [vmem:[%s165 + $0xb4] sm:$0xf]
      %v203 = vld [vmem:[%s165 + $0xb8] sm:$0xf]
      %v204 = vld [vmem:[%s1] sm:$0x3]
      %v205 = vld [vmem:[%s165 + $0x8] sm:$0x1]
      %v206 = vld [vmem:[%s165 + $0x14] sm:$0x1]
      %v207 = vld [vmem:[%s165 + $0x20] sm:$0x1]
      %v208 = vld [vmem:[%s165 + $0x2c] sm:$0x1]
      %v209 = vld [vmem:[%s165 + $0x38] sm:$0x1]
      %v210 = vld [vmem:[%s165 + $0x44] sm:$0x1]
      %v211 = vld [vmem:[%s165 + $0x50] sm:$0x1]
      %v212 = vld [vmem:[%s165 + $0x5c] sm:$0x1]
      %v213 = vld [vmem:[%s165 + $0x68] sm:$0x1]
      %v214 = vld [vmem:[%s165 + $0x74] sm:$0x1]
      %v215 = vld [vmem:[%s165 + $0x80] sm:$0x1]
      %v216 = vld [vmem:[%s165 + $0x8c] sm:$0x1]
      %v217 = vld [vmem:[%s165 + $0x98] sm:$0x1]
      %v218 = vld [vmem:[%s165 + $0xa4] sm:$0x1]
      %v219 = vld [vmem:[%s165 + $0xb0] sm:$0x1]
      %v220 = vld [vmem:[%s165 + $0xbc] sm:$0x1]
      %vm221 = vsmask.f32 3328
      %vm222 = vsmask.f32 7440
      %vm223 = vmor %vm221, %vm222
      %v225 = vshrl.u32 %v172, 16
      %v227 = vrot.slane %v225, 4
      %v228 = vshll.u32 %v172, 16
      %v230 = vrot.slane %v228, 5
      %v231 = vor.u32 %v227, %v230
      %v232 = vrot.slane %v231, 4
      %v234 = vshll.u32 %v173, 16
      %v236 = vrot.slane %v234, 5
      %v237 = vsel %vm223, %v232, %v236
      %v238 = vshrl.u32 %v173, 16
      %v240 = vrot.slane %v238, 4
      %v241 = vor.u32 %v240, %v236
      %v242 = vrot.slane %v241, 4
      %v244 = vshll.u32 %v205, 16
      %v246 = vrot.slane %v244, 5
      %v247 = vsel %vm223, %v242, %v246
      %v249 = vshrl.u32 %v174, 16
      %v251 = vrot.slane %v249, 4
      %v252 = vshll.u32 %v174, 16
      %v254 = vrot.slane %v252, 5
      %v255 = vor.u32 %v251, %v254
      %v256 = vrot.slane %v255, 4
      %v258 = vshll.u32 %v175, 16
      %v260 = vrot.slane %v258, 5
      %v261 = vsel %vm223, %v256, %v260
      %v262 = vshrl.u32 %v175, 16
      %v264 = vrot.slane %v262, 4
      %v265 = vor.u32 %v264, %v260
      %v266 = vrot.slane %v265, 4
      %v268 = vshll.u32 %v206, 16
      %v270 = vrot.slane %v268, 5
      %v271 = vsel %vm223, %v266, %v270
      %v273 = vshrl.u32 %v176, 16
      %v275 = vrot.slane %v273, 4
      %v276 = vshll.u32 %v176, 16
      %v278 = vrot.slane %v276, 5
      %v279 = vor.u32 %v275, %v278
      %v280 = vrot.slane %v279, 4
      %v282 = vshll.u32 %v177, 16
      %v284 = vrot.slane %v282, 5
      %v285 = vsel %vm223, %v280, %v284
      %v286 = vshrl.u32 %v177, 16
      %v288 = vrot.slane %v286, 4
      %v289 = vor.u32 %v288, %v284
      %v290 = vrot.slane %v289, 4
      %v292 = vshll.u32 %v207, 16
      %v294 = vrot.slane %v292, 5
      %v295 = vsel %vm223, %v290, %v294
      %v297 = vshrl.u32 %v178, 16
      %v299 = vrot.slane %v297, 4
      %v300 = vshll.u32 %v178, 16
      %v302 = vrot.slane %v300, 5
      %v303 = vor.u32 %v299, %v302
      %v304 = vrot.slane %v303, 4
      %v306 = vshll.u32 %v179, 16
      %v308 = vrot.slane %v306, 5
      %v309 = vsel %vm223, %v304, %v308
      %v310 = vshrl.u32 %v179, 16
      %v312 = vrot.slane %v310, 4
      %v313 = vor.u32 %v312, %v308
      %v314 = vrot.slane %v313, 4
      %v316 = vshll.u32 %v208, 16
      %v318 = vrot.slane %v316, 5
      %v319 = vsel %vm223, %v314, %v318
      %v321 = vshrl.u32 %v180, 16
      %v323 = vrot.slane %v321, 4
      %v324 = vshll.u32 %v180, 16
      %v326 = vrot.slane %v324, 5
      %v327 = vor.u32 %v323, %v326
      %v328 = vrot.slane %v327, 4
      %v330 = vshll.u32 %v181, 16
      %v332 = vrot.slane %v330, 5
      %v333 = vsel %vm223, %v328, %v332
      %v334 = vshrl.u32 %v181, 16
      %v336 = vrot.slane %v334, 4
      %v337 = vor.u32 %v336, %v332
      %v338 = vrot.slane %v337, 4
      %v340 = vshll.u32 %v209, 16
      %v342 = vrot.slane %v340, 5
      %v343 = vsel %vm223, %v338, %v342
      %v345 = vshrl.u32 %v182, 16
      %v347 = vrot.slane %v345, 4
      %v348 = vshll.u32 %v182, 16
      %v350 = vrot.slane %v348, 5
      %v351 = vor.u32 %v347, %v350
      %v352 = vrot.slane %v351, 4
      %v354 = vshll.u32 %v183, 16
      %v356 = vrot.slane %v354, 5
      %v357 = vsel %vm223, %v352, %v356
      %v358 = vshrl.u32 %v183, 16
      %v360 = vrot.slane %v358, 4
      %v361 = vor.u32 %v360, %v356
      %v362 = vrot.slane %v361, 4
      %v364 = vshll.u32 %v210, 16
      %v366 = vrot.slane %v364, 5
      %v367 = vsel %vm223, %v362, %v366
      %v369 = vshrl.u32 %v184, 16
      %v371 = vrot.slane %v369, 4
      %v372 = vshll.u32 %v184, 16
      %v374 = vrot.slane %v372, 5
      %v375 = vor.u32 %v371, %v374
      %v376 = vrot.slane %v375, 4
      %v378 = vshll.u32 %v185, 16
      %v380 = vrot.slane %v378, 5
      %v381 = vsel %vm223, %v376, %v380
      %v382 = vshrl.u32 %v185, 16
      %v384 = vrot.slane %v382, 4
      %v385 = vor.u32 %v384, %v380
      %v386 = vrot.slane %v385, 4
      %v388 = vshll.u32 %v211, 16
      %v390 = vrot.slane %v388, 5
      %v391 = vsel %vm223, %v386, %v390
      %v393 = vshrl.u32 %v186, 16
      %v395 = vrot.slane %v393, 4
      %v396 = vshll.u32 %v186, 16
      %v398 = vrot.slane %v396, 5
      %v399 = vor.u32 %v395, %v398
      %v400 = vrot.slane %v399, 4
      %v402 = vshll.u32 %v187, 16
      %v404 = vrot.slane %v402, 5
      %v405 = vsel %vm223, %v400, %v404
      %v406 = vshrl.u32 %v187, 16
      %v408 = vrot.slane %v406, 4
      %v409 = vor.u32 %v408, %v404
      %v410 = vrot.slane %v409, 4
      %v412 = vshll.u32 %v212, 16
      %v414 = vrot.slane %v412, 5
      %v415 = vsel %vm223, %v410, %v414
      %v417 = vshrl.u32 %v188, 16
      %v419 = vrot.slane %v417, 4
      %v420 = vshll.u32 %v188, 16
      %v422 = vrot.slane %v420, 5
      %v423 = vor.u32 %v419, %v422
      %v424 = vrot.slane %v423, 4
      %v426 = vshll.u32 %v189, 16
      %v428 = vrot.slane %v426, 5
      %v429 = vsel %vm223, %v424, %v428
      %v430 = vshrl.u32 %v189, 16
      %v432 = vrot.slane %v430, 4
      %v433 = vor.u32 %v432, %v428
      %v434 = vrot.slane %v433, 4
      %v436 = vshll.u32 %v213, 16
      %v438 = vrot.slane %v436, 5
      %v439 = vsel %vm223, %v434, %v438
      %v441 = vshrl.u32 %v190, 16
      %v443 = vrot.slane %v441, 4
      %v444 = vshll.u32 %v190, 16
      %v446 = vrot.slane %v444, 5
      %v447 = vor.u32 %v443, %v446
      %v448 = vrot.slane %v447, 4
      %v450 = vshll.u32 %v191, 16
      %v452 = vrot.slane %v450, 5
      %v453 = vsel %vm223, %v448, %v452
      %v454 = vshrl.u32 %v191, 16
      %v456 = vrot.slane %v454, 4
      %v457 = vor.u32 %v456, %v452
      %v458 = vrot.slane %v457, 4
      %v460 = vshll.u32 %v214, 16
      %v462 = vrot.slane %v460, 5
      %v463 = vsel %vm223, %v458, %v462
      %v465 = vshrl.u32 %v192, 16
      %v467 = vrot.slane %v465, 4
      %v468 = vshll.u32 %v192, 16
      %v470 = vrot.slane %v468, 5
      %v471 = vor.u32 %v467, %v470
      %v472 = vrot.slane %v471, 4
      %v474 = vshll.u32 %v193, 16
      %v476 = vrot.slane %v474, 5
      %v477 = vsel %vm223, %v472, %v476
      %v478 = vshrl.u32 %v193, 16
      %v480 = vrot.slane %v478, 4
      %v481 = vor.u32 %v480, %v476
      %v482 = vrot.slane %v481, 4
      %v484 = vshll.u32 %v215, 16
      %v486 = vrot.slane %v484, 5
      %v487 = vsel %vm223, %v482, %v486
      %v489 = vshrl.u32 %v194, 16
      %v491 = vrot.slane %v489, 4
      %v492 = vshll.u32 %v194, 16
      %v494 = vrot.slane %v492, 5
      %v495 = vor.u32 %v491, %v494
      %v496 = vrot.slane %v495, 4
      %v498 = vshll.u32 %v195, 16
      %v500 = vrot.slane %v498, 5
      %v501 = vsel %vm223, %v496, %v500
      %v502 = vshrl.u32 %v195, 16
      %v504 = vrot.slane %v502, 4
      %v505 = vor.u32 %v504, %v500
      %v506 = vrot.slane %v505, 4
      %v508 = vshll.u32 %v216, 16
      %v510 = vrot.slane %v508, 5
      %v511 = vsel %vm223, %v506, %v510
      %v513 = vshrl.u32 %v196, 16
      %v515 = vrot.slane %v513, 4
      %v516 = vshll.u32 %v196, 16
      %v518 = vrot.slane %v516, 5
      %v519 = vor.u32 %v515, %v518
      %v520 = vrot.slane %v519, 4
      %v522 = vshll.u32 %v197, 16
      %v524 = vrot.slane %v522, 5
      %v525 = vsel %vm223, %v520, %v524
      %v526 = vshrl.u32 %v197, 16
      %v528 = vrot.slane %v526, 4
      %v529 = vor.u32 %v528, %v524
      %v530 = vrot.slane %v529, 4
      %v532 = vshll.u32 %v217, 16
      %v534 = vrot.slane %v532, 5
      %v535 = vsel %vm223, %v530, %v534
      %v537 = vshrl.u32 %v198, 16
      %v539 = vrot.slane %v537, 4
      %v540 = vshll.u32 %v198, 16
      %v542 = vrot.slane %v540, 5
      %v543 = vor.u32 %v539, %v542
      %v544 = vrot.slane %v543, 4
      %v546 = vshll.u32 %v199, 16
      %v548 = vrot.slane %v546, 5
      %v549 = vsel %vm223, %v544, %v548
      %v550 = vshrl.u32 %v199, 16
      %v552 = vrot.slane %v550, 4
      %v553 = vor.u32 %v552, %v548
      %v554 = vrot.slane %v553, 4
      %v556 = vshll.u32 %v218, 16
      %v558 = vrot.slane %v556, 5
      %v559 = vsel %vm223, %v554, %v558
      %v561 = vshrl.u32 %v200, 16
      %v563 = vrot.slane %v561, 4
      %v564 = vshll.u32 %v200, 16
      %v566 = vrot.slane %v564, 5
      %v567 = vor.u32 %v563, %v566
      %v568 = vrot.slane %v567, 4
      %v570 = vshll.u32 %v201, 16
      %v572 = vrot.slane %v570, 5
      %v573 = vsel %vm223, %v568, %v572
      %v574 = vshrl.u32 %v201, 16
      %v576 = vrot.slane %v574, 4
      %v577 = vor.u32 %v576, %v572
      %v578 = vrot.slane %v577, 4
      %v580 = vshll.u32 %v219, 16
      %v582 = vrot.slane %v580, 5
      %v583 = vsel %vm223, %v578, %v582
      %v585 = vshrl.u32 %v202, 16
      %v587 = vrot.slane %v585, 4
      %v588 = vshll.u32 %v202, 16
      %v590 = vrot.slane %v588, 5
      %v591 = vor.u32 %v587, %v590
      %v592 = vrot.slane %v591, 4
      %v594 = vshll.u32 %v203, 16
      %v596 = vrot.slane %v594, 5
      %v597 = vsel %vm223, %v592, %v596
      %v598 = vshrl.u32 %v203, 16
      %v600 = vrot.slane %v598, 4
      %v601 = vor.u32 %v600, %v596
      %v602 = vrot.slane %v601, 4
      %v604 = vshll.u32 %v220, 16
      %v606 = vrot.slane %v604, 5
      %v607 = vsel %vm223, %v602, %v606
      %s608 = scalar_lea.vmem %s1, 2
      %v609 = vld [vmem:[%s608] sm:$0x3]
      %v610 = vunpack.c.l.b16 %v237
      %v611 = vunpack.c.l.b16 %v247
      %v612 = vunpack.c.l.b16 %v261
      %v613 = vunpack.c.l.b16 %v271
      %v614 = vunpack.c.l.b16 %v285
      %v615 = vunpack.c.l.b16 %v295
      %v616 = vunpack.c.l.b16 %v309
      %v617 = vunpack.c.l.b16 %v319
      %v618 = vunpack.c.l.b16 %v333
      %v619 = vunpack.c.l.b16 %v343
      %v620 = vunpack.c.l.b16 %v357
      %v621 = vunpack.c.l.b16 %v367
      %v622 = vunpack.c.l.b16 %v381
      %v623 = vunpack.c.l.b16 %v391
      %v624 = vunpack.c.l.b16 %v405
      %v625 = vunpack.c.l.b16 %v415
      %v626 = vunpack.c.l.b16 %v429
      %v627 = vunpack.c.l.b16 %v439
      %v628 = vunpack.c.l.b16 %v453
      %v629 = vunpack.c.l.b16 %v463
      %v630 = vunpack.c.l.b16 %v477
      %v631 = vunpack.c.l.b16 %v487
      %v632 = vunpack.c.l.b16 %v501
      %v633 = vunpack.c.l.b16 %v511
      %v634 = vunpack.c.l.b16 %v525
      %v635 = vunpack.c.l.b16 %v535
      %v636 = vunpack.c.l.b16 %v549
      %v637 = vunpack.c.l.b16 %v559
      %v638 = vunpack.c.l.b16 %v573
      %v639 = vunpack.c.l.b16 %v583
      %v640 = vunpack.c.l.b16 %v597
      %v641 = vunpack.c.l.b16 %v607
      %v642 = vpack.c.b16 %v611, %v610
      %v643 = vpack.c.b16 %v613, %v612
      %v644 = vpack.c.b16 %v615, %v614
      %v645 = vpack.c.b16 %v617, %v616
      %v646 = vpack.c.b16 %v619, %v618
      %v647 = vpack.c.b16 %v621, %v620
      %v648 = vpack.c.b16 %v623, %v622
      %v649 = vpack.c.b16 %v625, %v624
      %v650 = vpack.c.b16 %v627, %v626
      %v651 = vpack.c.b16 %v629, %v628
      %v652 = vpack.c.b16 %v631, %v630
      %v653 = vpack.c.b16 %v633, %v632
      %v654 = vpack.c.b16 %v635, %v634
      %v655 = vpack.c.b16 %v637, %v636
      %v656 = vpack.c.b16 %v639, %v638
      %v657 = vpack.c.b16 %v641, %v640
      %vm658 = vcmask 31744
      %v660 = vsel %vm658, %v642, 0
      %v663 = vsel %vm658, %v643, 0
      %v666 = vsel %vm658, %v644, 0
      %v669 = vsel %vm658, %v645, 0
      %v672 = vsel %vm658, %v646, 0
      %v675 = vsel %vm658, %v647, 0
      %v678 = vsel %vm658, %v648, 0
      %v681 = vsel %vm658, %v649, 0
      %v684 = vsel %vm658, %v650, 0
      %v687 = vsel %vm658, %v651, 0
      %v690 = vsel %vm658, %v652, 0
      %v693 = vsel %vm658, %v653, 0
      %v696 = vsel %vm658, %v654, 0
      %v699 = vsel %vm658, %v655, 0
      %v702 = vsel %vm658, %v656, 0
      %v705 = vsel %vm658, %v657, 0
      %vm707 = vcmask 1041408
      %v709 = vsel %vm707, %v609, 0
      %711 = vmatprep.subr.bf16.mxu0 0
      %712 = vmatpush1.bf16.msra.mxu0 %v709
      %713 = vmatprep.subr.bf16.mxu0 0
      %714 = vmatpush1.bf16.msra.mxu0 0
      %715 = vmatprep.subr.bf16.mxu0 0
      %716 = vmatpush1.bf16.msra.mxu0 0
      %717 = vmatprep.subr.bf16.mxu0 0
      %718 = vmatpush1.bf16.msra.mxu0 0
      %719 = vmatprep.subr.bf16.mxu0 0
      %720 = vmatpush1.bf16.msra.mxu0 0
      %721 = vmatprep.subr.bf16.mxu0 0
      %722 = vmatpush1.bf16.msra.mxu0 0
      %723 = vmatprep.subr.bf16.mxu0 0
      %724 = vmatpush1.bf16.msra.mxu0 0
      %725 = vmatprep.subr.bf16.mxu0 0
      %726 = vmatpush1.bf16.msra.mxu0 0
      %727 = vmatprep.subr.bf16.mxu0 0
      %728 = vmatpush1.bf16.msra.mxu0 0
      %729 = vmatprep.subr.bf16.mxu0 0
      %730 = vmatpush1.bf16.msra.mxu0 0
      %731 = vmatprep.subr.bf16.mxu0 0
      %732 = vmatpush1.bf16.msra.mxu0 0
      %733 = vmatprep.subr.bf16.mxu0 0
      %734 = vmatpush1.bf16.msra.mxu0 0
      %735 = vmatprep.subr.bf16.mxu0 0
      %736 = vmatpush1.bf16.msra.mxu0 0
      %737 = vmatprep.subr.bf16.mxu0 0
      %738 = vmatpush1.bf16.msra.mxu0 0
      %739 = vmatprep.subr.bf16.mxu0 0
      %740 = vmatpush1.bf16.msra.mxu0 0
      %741 = vmatprep.subr.bf16.mxu0 0
      %742 = vmatpush1.bf16.msra.mxu0 0
      %743 = vmatprep.mubr.bf16.mxu0 0
      %744 = vmatmul.mubr.bf16.gmra.mrb[0].mxu0 %v660
      %v745 = vpop.f32.mrb[0].mxu0
      %v746 = vadd.f32 0.0, %v745
      %v747 = vpop.f32.mrb[0].mxu0
      %v748 = vpop.f32.mrb[0].mxu0
      %v749 = vadd.f32 0.0, %v748
      %v750 = vpop.f32.mrb[0].mxu0
      %751 = vmatprep.mubr.bf16.mxu0 0
      %752 = vmatmul.mubr.bf16.gmra.mrb[0].mxu0 %v663
      %v753 = vpop.f32.mrb[0].mxu0
      %v754 = vadd.f32 0.0, %v753
      %v755 = vpop.f32.mrb[0].mxu0
      %v756 = vpop.f32.mrb[0].mxu0
      %v757 = vadd.f32 0.0, %v756
      %v758 = vpop.f32.mrb[0].mxu0
      %759 = vmatprep.mubr.bf16.mxu0 0
      %760 = vmatmul.mubr.bf16.gmra.mrb[0].mxu0 %v666
      %v761 = vpop.f32.mrb[0].mxu0
      %v762 = vadd.f32 0.0, %v761
      %v763 = vpop.f32.mrb[0].mxu0
      %v764 = vpop.f32.mrb[0].mxu0
      %v765 = vadd.f32 0.0, %v764
      %v766 = vpop.f32.mrb[0].mxu0
      %767 = vmatprep.mubr.bf16.mxu0 0
      %768 = vmatmul.mubr.bf16.gmra.mrb[0].mxu0 %v669
      %v769 = vpop.f32.mrb[0].mxu0
      %v770 = vadd.f32 0.0, %v769
      %v771 = vpop.f32.mrb[0].mxu0
      %v772 = vpop.f32.mrb[0].mxu0
      %v773 = vadd.f32 0.0, %v772
      %v774 = vpop.f32.mrb[0].mxu0
      %775 = vmatprep.mubr.bf16.mxu0 0
      %776 = vmatmul.mubr.bf16.gmra.mrb[0].mxu0 %v672
      %v777 = vpop.f32.mrb[0].mxu0
      %v778 = vadd.f32 0.0, %v777
      %v779 = vpop.f32.mrb[0].mxu0
      %v780 = vpop.f32.mrb[0].mxu0
      %v781 = vadd.f32 0.0, %v780
      %v782 = vpop.f32.mrb[0].mxu0
      %783 = vmatprep.mubr.bf16.mxu0 0
      %784 = vmatmul.mubr.bf16.gmra.mrb[0].mxu0 %v675
      %v785 = vpop.f32.mrb[0].mxu0
      %v786 = vadd.f32 0.0, %v785
      %v787 = vpop.f32.mrb[0].mxu0
      %v788 = vpop.f32.mrb[0].mxu0
      %v789 = vadd.f32 0.0, %v788
      %v790 = vpop.f32.mrb[0].mxu0
      %791 = vmatprep.mubr.bf16.mxu0 0
      %792 = vmatmul.mubr.bf16.gmra.mrb[0].mxu0 %v678
      %v793 = vpop.f32.mrb[0].mxu0
      %v794 = vadd.f32 0.0, %v793
      %v795 = vpop.f32.mrb[0].mxu0
      %v796 = vpop.f32.mrb[0].mxu0
      %v797 = vadd.f32 0.0, %v796
      %v798 = vpop.f32.mrb[0].mxu0
      %799 = vmatprep.mubr.bf16.mxu0 0
      %800 = vmatmul.mubr.bf16.gmra.mrb[0].mxu0 %v681
      %v801 = vpop.f32.mrb[0].mxu0
      %v802 = vadd.f32 0.0, %v801
      %v803 = vpop.f32.mrb[0].mxu0
      %v804 = vpop.f32.mrb[0].mxu0
      %v805 = vadd.f32 0.0, %v804
      %v806 = vpop.f32.mrb[0].mxu0
      %807 = vmatprep.mubr.bf16.mxu0 0
      %808 = vmatmul.mubr.bf16.gmra.mrb[0].mxu0 %v684
      %v809 = vpop.f32.mrb[0].mxu0
      %v810 = vadd.f32 0.0, %v809
      %v811 = vpop.f32.mrb[0].mxu0
      %v812 = vpop.f32.mrb[0].mxu0
      %v813 = vadd.f32 0.0, %v812
      %v814 = vpop.f32.mrb[0].mxu0
      %815 = vmatprep.mubr.bf16.mxu0 0
      %816 = vmatmul.mubr.bf16.gmra.mrb[0].mxu0 %v687
      %v817 = vpop.f32.mrb[0].mxu0
      %v818 = vadd.f32 0.0, %v817
      %v819 = vpop.f32.mrb[0].mxu0
      %v820 = vpop.f32.mrb[0].mxu0
      %v821 = vadd.f32 0.0, %v820
      %v822 = vpop.f32.mrb[0].mxu0
      %823 = vmatprep.mubr.bf16.mxu0 0
      %824 = vmatmul.mubr.bf16.gmra.mrb[0].mxu0 %v690
      %v825 = vpop.f32.mrb[0].mxu0
      %v826 = vadd.f32 0.0, %v825
      %v827 = vpop.f32.mrb[0].mxu0
      %v828 = vpop.f32.mrb[0].mxu0
      %v829 = vadd.f32 0.0, %v828
      %v830 = vpop.f32.mrb[0].mxu0
      %831 = vmatprep.mubr.bf16.mxu0 0
      %832 = vmatmul.mubr.bf16.gmra.mrb[0].mxu0 %v693
      %v833 = vpop.f32.mrb[0].mxu0
      %v834 = vadd.f32 0.0, %v833
      %v835 = vpop.f32.mrb[0].mxu0
      %v836 = vpop.f32.mrb[0].mxu0
      %v837 = vadd.f32 0.0, %v836
      %v838 = vpop.f32.mrb[0].mxu0
      %839 = vmatprep.mubr.bf16.mxu0 0
      %840 = vmatmul.mubr.bf16.gmra.mrb[0].mxu0 %v696
      %v841 = vpop.f32.mrb[0].mxu0
      %v842 = vadd.f32 0.0, %v841
      %v843 = vpop.f32.mrb[0].mxu0
      %v844 = vpop.f32.mrb[0].mxu0
      %v845 = vadd.f32 0.0, %v844
      %v846 = vpop.f32.mrb[0].mxu0
      %847 = vmatprep.mubr.bf16.mxu0 0
      %848 = vmatmul.mubr.bf16.gmra.mrb[0].mxu0 %v699
      %v849 = vpop.f32.mrb[0].mxu0
      %v850 = vadd.f32 0.0, %v849
      %v851 = vpop.f32.mrb[0].mxu0
      %v852 = vpop.f32.mrb[0].mxu0
      %v853 = vadd.f32 0.0, %v852
      %v854 = vpop.f32.mrb[0].mxu0
      %855 = vmatprep.mubr.bf16.mxu0 0
      %856 = vmatmul.mubr.bf16.gmra.mrb[0].mxu0 %v702
      %v857 = vpop.f32.mrb[0].mxu0
      %v858 = vadd.f32 0.0, %v857
      %v859 = vpop.f32.mrb[0].mxu0
      %v860 = vpop.f32.mrb[0].mxu0
      %v861 = vadd.f32 0.0, %v860
      %v862 = vpop.f32.mrb[0].mxu0
      %863 = vmatprep.mubr.bf16.mxu0 0
      %864 = vmatmul.mubr.bf16.gmra.mrb[0].mxu0 %v705
      %v865 = vpop.f32.mrb[0].mxu0
      %v866 = vadd.f32 0.0, %v865
      %v867 = vpop.f32.mrb[0].mxu0
      %v868 = vpop.f32.mrb[0].mxu0
      %v869 = vadd.f32 0.0, %v868
      %v870 = vpop.f32.mrb[0].mxu0
      %871 = vdwg.mxu0
      %v904 = vunpack.c.l.b16 %v172
      %v905 = vunpack.c.l.b16 %v173
      %v906 = vunpack.c.l.b16 %v174
      %v907 = vunpack.c.l.b16 %v175
      %v908 = vunpack.c.l.b16 %v176
      %v909 = vunpack.c.l.b16 %v177
      %v910 = vunpack.c.l.b16 %v178
      %v911 = vunpack.c.l.b16 %v179
      %v912 = vunpack.c.l.b16 %v180
      %v913 = vunpack.c.l.b16 %v181
      %v914 = vunpack.c.l.b16 %v182
      %v915 = vunpack.c.l.b16 %v183
      %v916 = vunpack.c.l.b16 %v184
      %v917 = vunpack.c.l.b16 %v185
      %v918 = vunpack.c.l.b16 %v186
      %v919 = vunpack.c.l.b16 %v187
      %v920 = vunpack.c.l.b16 %v188
      %v921 = vunpack.c.l.b16 %v189
      %v922 = vunpack.c.l.b16 %v190
      %v923 = vunpack.c.l.b16 %v191
      %v924 = vunpack.c.l.b16 %v192
      %v925 = vunpack.c.l.b16 %v193
      %v926 = vunpack.c.l.b16 %v194
      %v927 = vunpack.c.l.b16 %v195
      %v928 = vunpack.c.l.b16 %v196
      %v929 = vunpack.c.l.b16 %v197
      %v930 = vunpack.c.l.b16 %v198
      %v931 = vunpack.c.l.b16 %v199
      %v932 = vunpack.c.l.b16 %v200
      %v933 = vunpack.c.l.b16 %v201
      %v934 = vunpack.c.l.b16 %v202
      %v935 = vunpack.c.l.b16 %v203
      %v936 = vpack.c.b16 %v905, %v904
      %v937 = vpack.c.b16 %v907, %v906
      %v938 = vpack.c.b16 %v909, %v908
      %v939 = vpack.c.b16 %v911, %v910
      %v940 = vpack.c.b16 %v913, %v912
      %v941 = vpack.c.b16 %v915, %v914
      %v942 = vpack.c.b16 %v917, %v916
      %v943 = vpack.c.b16 %v919, %v918
      %v944 = vpack.c.b16 %v921, %v920
      %v945 = vpack.c.b16 %v923, %v922
      %v946 = vpack.c.b16 %v925, %v924
      %v947 = vpack.c.b16 %v927, %v926
      %v948 = vpack.c.b16 %v929, %v928
      %v949 = vpack.c.b16 %v931, %v930
      %v950 = vpack.c.b16 %v933, %v932
      %v951 = vpack.c.b16 %v935, %v934
      %v953 = vsel %vm658, %v936, 0
      %v956 = vsel %vm658, %v937, 0
      %v959 = vsel %vm658, %v938, 0
      %v962 = vsel %vm658, %v939, 0
      %v965 = vsel %vm658, %v940, 0
      %v968 = vsel %vm658, %v941, 0
      %v971 = vsel %vm658, %v942, 0
      %v974 = vsel %vm658, %v943, 0
      %v977 = vsel %vm658, %v944, 0
      %v980 = vsel %vm658, %v945, 0
      %v983 = vsel %vm658, %v946, 0
      %v986 = vsel %vm658, %v947, 0
      %v989 = vsel %vm658, %v948, 0
      %v992 = vsel %vm658, %v949, 0
      %v995 = vsel %vm658, %v950, 0
      %v998 = vsel %vm658, %v951, 0
      %v1001 = vsel %vm707, %v204, 0
      %1003 = vmatprep.subr.bf16.mxu0 0
      %1004 = vmatpush1.bf16.msra.mxu0 %v1001
      %1005 = vmatprep.subr.bf16.mxu0 0
      %1006 = vmatpush1.bf16.msra.mxu0 0
      %1007 = vmatprep.subr.bf16.mxu0 0
      %1008 = vmatpush1.bf16.msra.mxu0 0
      %1009 = vmatprep.subr.bf16.mxu0 0
      %1010 = vmatpush1.bf16.msra.mxu0 0
      %1011 = vmatprep.subr.bf16.mxu0 0
      %1012 = vmatpush1.bf16.msra.mxu0 0
      %1013 = vmatprep.subr.bf16.mxu0 0
      %1014 = vmatpush1.bf16.msra.mxu0 0
      %1015 = vmatprep.subr.bf16.mxu0 0
      %1016 = vmatpush1.bf16.msra.mxu0 0
      %1017 = vmatprep.subr.bf16.mxu0 0
      %1018 = vmatpush1.bf16.msra.mxu0 0
      %1019 = vmatprep.subr.bf16.mxu0 0
      %1020 = vmatpush1.bf16.msra.mxu0 0
      %1021 = vmatprep.subr.bf16.mxu0 0
      %1022 = vmatpush1.bf16.msra.mxu0 0
      %1023 = vmatprep.subr.bf16.mxu0 0
      %1024 = vmatpush1.bf16.msra.mxu0 0
      %1025 = vmatprep.subr.bf16.mxu0 0
      %1026 = vmatpush1.bf16.msra.mxu0 0
      %1027 = vmatprep.subr.bf16.mxu0 0
      %1028 = vmatpush1.bf16.msra.mxu0 0
      %1029 = vmatprep.subr.bf16.mxu0 0
      %1030 = vmatpush1.bf16.msra.mxu0 0
      %1031 = vmatprep.subr.bf16.mxu0 0
      %1032 = vmatpush1.bf16.msra.mxu0 0
      %1033 = vmatprep.subr.bf16.mxu0 0
      %1034 = vmatpush1.bf16.msra.mxu0 0
      %1035 = vmatprep.mubr.bf16.mxu0 0
      %1036 = vmatmul.mubr.bf16.gmra.mrb[0].mxu0 %v953
      %v1037 = vpop.f32.mrb[0].mxu0
      %v1038 = vadd.f32 %v746, %v1037
      %v1039 = vpop.f32.mrb[0].mxu0
      %v1040 = vpop.f32.mrb[0].mxu0
      %v1041 = vadd.f32 %v749, %v1040
      %v1042 = vpop.f32.mrb[0].mxu0
      %1043 = vmatprep.mubr.bf16.mxu0 0
      %1044 = vmatmul.mubr.bf16.gmra.mrb[0].mxu0 %v956
      %v1045 = vpop.f32.mrb[0].mxu0
      %v1046 = vadd.f32 %v754, %v1045
      %v1047 = vpop.f32.mrb[0].mxu0
      %v1048 = vpop.f32.mrb[0].mxu0
      %v1049 = vadd.f32 %v757, %v1048
      %v1050 = vpop.f32.mrb[0].mxu0
      %1051 = vmatprep.mubr.bf16.mxu0 0
      %1052 = vmatmul.mubr.bf16.gmra.mrb[0].mxu0 %v959
      %v1053 = vpop.f32.mrb[0].mxu0
      %v1054 = vadd.f32 %v762, %v1053
      %v1055 = vpop.f32.mrb[0].mxu0
      %v1056 = vpop.f32.mrb[0].mxu0
      %v1057 = vadd.f32 %v765, %v1056
      %v1058 = vpop.f32.mrb[0].mxu0
      %1059 = vmatprep.mubr.bf16.mxu0 0
      %1060 = vmatmul.mubr.bf16.gmra.mrb[0].mxu0 %v962
      %v1061 = vpop.f32.mrb[0].mxu0
      %v1062 = vadd.f32 %v770, %v1061
      %v1063 = vpop.f32.mrb[0].mxu0
      %v1064 = vpop.f32.mrb[0].mxu0
      %v1065 = vadd.f32 %v773, %v1064
      %v1066 = vpop.f32.mrb[0].mxu0
      %1067 = vmatprep.mubr.bf16.mxu0 0
      %1068 = vmatmul.mubr.bf16.gmra.mrb[0].mxu0 %v965
      %v1069 = vpop.f32.mrb[0].mxu0
      %v1070 = vadd.f32 %v778, %v1069
      %v1071 = vpop.f32.mrb[0].mxu0
      %v1072 = vpop.f32.mrb[0].mxu0
      %v1073 = vadd.f32 %v781, %v1072
      %v1074 = vpop.f32.mrb[0].mxu0
      %1075 = vmatprep.mubr.bf16.mxu0 0
      %1076 = vmatmul.mubr.bf16.gmra.mrb[0].mxu0 %v968
      %v1077 = vpop.f32.mrb[0].mxu0
      %v1078 = vadd.f32 %v786, %v1077
      %v1079 = vpop.f32.mrb[0].mxu0
      %v1080 = vpop.f32.mrb[0].mxu0
      %v1081 = vadd.f32 %v789, %v1080
      %v1082 = vpop.f32.mrb[0].mxu0
      %1083 = vmatprep.mubr.bf16.mxu0 0
      %1084 = vmatmul.mubr.bf16.gmra.mrb[0].mxu0 %v971
      %v1085 = vpop.f32.mrb[0].mxu0
      %v1086 = vadd.f32 %v794, %v1085
      %v1087 = vpop.f32.mrb[0].mxu0
      %v1088 = vpop.f32.mrb[0].mxu0
      %v1089 = vadd.f32 %v797, %v1088
      %v1090 = vpop.f32.mrb[0].mxu0
      %1091 = vmatprep.mubr.bf16.mxu0 0
      %1092 = vmatmul.mubr.bf16.gmra.mrb[0].mxu0 %v974
      %v1093 = vpop.f32.mrb[0].mxu0
      %v1094 = vadd.f32 %v802, %v1093
      %v1095 = vpop.f32.mrb[0].mxu0
      %v1096 = vpop.f32.mrb[0].mxu0
      %v1097 = vadd.f32 %v805, %v1096
      %v1098 = vpop.f32.mrb[0].mxu0
      %1099 = vmatprep.mubr.bf16.mxu0 0
      %1100 = vmatmul.mubr.bf16.gmra.mrb[0].mxu0 %v977
      %v1101 = vpop.f32.mrb[0].mxu0
      %v1102 = vadd.f32 %v810, %v1101
      %v1103 = vpop.f32.mrb[0].mxu0
      %v1104 = vpop.f32.mrb[0].mxu0
      %v1105 = vadd.f32 %v813, %v1104
      %v1106 = vpop.f32.mrb[0].mxu0
      %1107 = vmatprep.mubr.bf16.mxu0 0
      %1108 = vmatmul.mubr.bf16.gmra.mrb[0].mxu0 %v980
      %v1109 = vpop.f32.mrb[0].mxu0
      %v1110 = vadd.f32 %v818, %v1109
      %v1111 = vpop.f32.mrb[0].mxu0
      %v1112 = vpop.f32.mrb[0].mxu0
      %v1113 = vadd.f32 %v821, %v1112
      %v1114 = vpop.f32.mrb[0].mxu0
      %1115 = vmatprep.mubr.bf16.mxu0 0
      %1116 = vmatmul.mubr.bf16.gmra.mrb[0].mxu0 %v983
      %v1117 = vpop.f32.mrb[0].mxu0
      %v1118 = vadd.f32 %v826, %v1117
      %v1119 = vpop.f32.mrb[0].mxu0
      %v1120 = vpop.f32.mrb[0].mxu0
      %v1121 = vadd.f32 %v829, %v1120
      %v1122 = vpop.f32.mrb[0].mxu0
      %1123 = vmatprep.mubr.bf16.mxu0 0
      %1124 = vmatmul.mubr.bf16.gmra.mrb[0].mxu0 %v986
      %v1125 = vpop.f32.mrb[0].mxu0
      %v1126 = vadd.f32 %v834, %v1125
      %v1127 = vpop.f32.mrb[0].mxu0
      %v1128 = vpop.f32.mrb[0].mxu0
      %v1129 = vadd.f32 %v837, %v1128
      %v1130 = vpop.f32.mrb[0].mxu0
      %1131 = vmatprep.mubr.bf16.mxu0 0
      %1132 = vmatmul.mubr.bf16.gmra.mrb[0].mxu0 %v989
      %v1133 = vpop.f32.mrb[0].mxu0
      %v1134 = vadd.f32 %v842, %v1133
      %v1135 = vpop.f32.mrb[0].mxu0
      %v1136 = vpop.f32.mrb[0].mxu0
      %v1137 = vadd.f32 %v845, %v1136
      %v1138 = vpop.f32.mrb[0].mxu0
      %1139 = vmatprep.mubr.bf16.mxu0 0
      %1140 = vmatmul.mubr.bf16.gmra.mrb[0].mxu0 %v992
      %v1141 = vpop.f32.mrb[0].mxu0
      %v1142 = vadd.f32 %v850, %v1141
      %v1143 = vpop.f32.mrb[0].mxu0
      %v1144 = vpop.f32.mrb[0].mxu0
      %v1145 = vadd.f32 %v853, %v1144
      %v1146 = vpop.f32.mrb[0].mxu0
      %1147 = vmatprep.mubr.bf16.mxu0 0
      %1148 = vmatmul.mubr.bf16.gmra.mrb[0].mxu0 %v995
      %v1149 = vpop.f32.mrb[0].mxu0
      %v1150 = vadd.f32 %v858, %v1149
      %v1151 = vpop.f32.mrb[0].mxu0
      %v1152 = vpop.f32.mrb[0].mxu0
      %v1153 = vadd.f32 %v861, %v1152
      %v1154 = vpop.f32.mrb[0].mxu0
      %1155 = vmatprep.mubr.bf16.mxu0 0
      %1156 = vmatmul.mubr.bf16.gmra.mrb[0].mxu0 %v998
      %v1157 = vpop.f32.mrb[0].mxu0
      %v1158 = vadd.f32 %v866, %v1157
      %v1159 = vpop.f32.mrb[0].mxu0
      %v1160 = vpop.f32.mrb[0].mxu0
      %v1161 = vadd.f32 %v869, %v1160
      %v1162 = vpop.f32.mrb[0].mxu0
      %1163 = vdwg.mxu0
      %v1164 = vld [vmem:[%s165] sm:$0xe]
      %v1165 = vld [vmem:[%s165 + $0xc] sm:$0xe]
      %v1166 = vld [vmem:[%s165 + $0x18] sm:$0xe]
      %v1167 = vld [vmem:[%s165 + $0x24] sm:$0xe]
      %v1168 = vld [vmem:[%s165 + $0x30] sm:$0xe]
      %v1169 = vld [vmem:[%s165 + $0x3c] sm:$0xe]
      %v1170 = vld [vmem:[%s165 + $0x48] sm:$0xe]
      %v1171 = vld [vmem:[%s165 + $0x54] sm:$0xe]
      %v1172 = vld [vmem:[%s165 + $0x60] sm:$0xe]
      %v1173 = vld [vmem:[%s165 + $0x6c] sm:$0xe]
      %v1174 = vld [vmem:[%s165 + $0x78] sm:$0xe]
      %v1175 = vld [vmem:[%s165 + $0x84] sm:$0xe]
      %v1176 = vld [vmem:[%s165 + $0x90] sm:$0xe]
      %v1177 = vld [vmem:[%s165 + $0x9c] sm:$0xe]
      %v1178 = vld [vmem:[%s165 + $0xa8] sm:$0xe]
      %v1179 = vld [vmem:[%s165 + $0xb4] sm:$0xe]
      %vm1212 = vcmask 1042432
      %vm1213 = vcmask 1046532
      %vm1214 = vmor %vm1212, %vm1213
      %v1215 = vrot.slane %v1164, 5
      %v1216 = vrot.slane %v1215, 4
      %v1217 = vrot.slane %v173, 5
      %v1218 = vsel %vm1214, %v1216, %v1217
      %v1219 = vrot.slane %v1217, 4
      %v1220 = vrot.slane %v205, 5
      %v1221 = vsel %vm1214, %v1219, %v1220
      %v1222 = vrot.slane %v1165, 5
      %v1223 = vrot.slane %v1222, 4
      %v1224 = vrot.slane %v175, 5
      %v1225 = vsel %vm1214, %v1223, %v1224
      %v1226 = vrot.slane %v1224, 4
      %v1227 = vrot.slane %v206, 5
      %v1228 = vsel %vm1214, %v1226, %v1227
      %v1229 = vrot.slane %v1166, 5
      %v1230 = vrot.slane %v1229, 4
      %v1231 = vrot.slane %v177, 5
      %v1232 = vsel %vm1214, %v1230, %v1231
      %v1233 = vrot.slane %v1231, 4
      %v1234 = vrot.slane %v207, 5
      %v1235 = vsel %vm1214, %v1233, %v1234
      %v1236 = vrot.slane %v1167, 5
      %v1237 = vrot.slane %v1236, 4
      %v1238 = vrot.slane %v179, 5
      %v1239 = vsel %vm1214, %v1237, %v1238
      %v1240 = vrot.slane %v1238, 4
      %v1241 = vrot.slane %v208, 5
      %v1242 = vsel %vm1214, %v1240, %v1241
      %v1243 = vrot.slane %v1168, 5
      %v1244 = vrot.slane %v1243, 4
      %v1245 = vrot.slane %v181, 5
      %v1246 = vsel %vm1214, %v1244, %v1245
      %v1247 = vrot.slane %v1245, 4
      %v1248 = vrot.slane %v209, 5
      %v1249 = vsel %vm1214, %v1247, %v1248
      %v1250 = vrot.slane %v1169, 5
      %v1251 = vrot.slane %v1250, 4
      %v1252 = vrot.slane %v183, 5
      %v1253 = vsel %vm1214, %v1251, %v1252
      %v1254 = vrot.slane %v1252, 4
      %v1255 = vrot.slane %v210, 5
      %v1256 = vsel %vm1214, %v1254, %v1255
      %v1257 = vrot.slane %v1170, 5
      %v1258 = vrot.slane %v1257, 4
      %v1259 = vrot.slane %v185, 5
      %v1260 = vsel %vm1214, %v1258, %v1259
      %v1261 = vrot.slane %v1259, 4
      %v1262 = vrot.slane %v211, 5
      %v1263 = vsel %vm1214, %v1261, %v1262
      %v1264 = vrot.slane %v1171, 5
      %v1265 = vrot.slane %v1264, 4
      %v1266 = vrot.slane %v187, 5
      %v1267 = vsel %vm1214, %v1265, %v1266
      %v1268 = vrot.slane %v1266, 4
      %v1269 = vrot.slane %v212, 5
      %v1270 = vsel %vm1214, %v1268, %v1269
      %v1271 = vrot.slane %v1172, 5
      %v1272 = vrot.slane %v1271, 4
      %v1273 = vrot.slane %v189, 5
      %v1274 = vsel %vm1214, %v1272, %v1273
      %v1275 = vrot.slane %v1273, 4
      %v1276 = vrot.slane %v213, 5
      %v1277 = vsel %vm1214, %v1275, %v1276
      %v1278 = vrot.slane %v1173, 5
      %v1279 = vrot.slane %v1278, 4
      %v1280 = vrot.slane %v191, 5
      %v1281 = vsel %vm1214, %v1279, %v1280
      %v1282 = vrot.slane %v1280, 4
      %v1283 = vrot.slane %v214, 5
      %v1284 = vsel %vm1214, %v1282, %v1283
      %v1285 = vrot.slane %v1174, 5
      %v1286 = vrot.slane %v1285, 4
      %v1287 = vrot.slane %v193, 5
      %v1288 = vsel %vm1214, %v1286, %v1287
      %v1289 = vrot.slane %v1287, 4
      %v1290 = vrot.slane %v215, 5
      %v1291 = vsel %vm1214, %v1289, %v1290
      %v1292 = vrot.slane %v1175, 5
      %v1293 = vrot.slane %v1292, 4
      %v1294 = vrot.slane %v195, 5
      %v1295 = vsel %vm1214, %v1293, %v1294
      %v1296 = vrot.slane %v1294, 4
      %v1297 = vrot.slane %v216, 5
      %v1298 = vsel %vm1214, %v1296, %v1297
      %v1299 = vrot.slane %v1176, 5
      %v1300 = vrot.slane %v1299, 4
      %v1301 = vrot.slane %v197, 5
      %v1302 = vsel %vm1214, %v1300, %v1301
      %v1303 = vrot.slane %v1301, 4
      %v1304 = vrot.slane %v217, 5
      %v1305 = vsel %vm1214, %v1303, %v1304
      %v1306 = vrot.slane %v1177, 5
      %v1307 = vrot.slane %v1306, 4
      %v1308 = vrot.slane %v199, 5
      %v1309 = vsel %vm1214, %v1307, %v1308
      %v1310 = vrot.slane %v1308, 4
      %v1311 = vrot.slane %v218, 5
      %v1312 = vsel %vm1214, %v1310, %v1311
      %v1313 = vrot.slane %v1178, 5
      %v1314 = vrot.slane %v1313, 4
      %v1315 = vrot.slane %v201, 5
      %v1316 = vsel %vm1214, %v1314, %v1315
      %v1317 = vrot.slane %v1315, 4
      %v1318 = vrot.slane %v219, 5
      %v1319 = vsel %vm1214, %v1317, %v1318
      %v1320 = vrot.slane %v1179, 5
      %v1321 = vrot.slane %v1320, 4
      %v1322 = vrot.slane %v203, 5
      %v1323 = vsel %vm1214, %v1321, %v1322
      %v1324 = vrot.slane %v1322, 4
      %v1325 = vrot.slane %v220, 5
      %v1326 = vsel %vm1214, %v1324, %v1325
      %s1327 = scalar_lea.vmem %s1, 4
      %v1328 = vld [vmem:[%s1327] sm:$0x3]
      %v1329 = vunpack.c.l.b16 %v1218
      %v1330 = vunpack.c.l.b16 %v1221
      %v1331 = vunpack.c.l.b16 %v1225
      %v1332 = vunpack.c.l.b16 %v1228
      %v1333 = vunpack.c.l.b16 %v1232
      %v1334 = vunpack.c.l.b16 %v1235
      %v1335 = vunpack.c.l.b16 %v1239
      %v1336 = vunpack.c.l.b16 %v1242
      %v1337 = vunpack.c.l.b16 %v1246
      %v1338 = vunpack.c.l.b16 %v1249
      %v1339 = vunpack.c.l.b16 %v1253
      %v1340 = vunpack.c.l.b16 %v1256
      %v1341 = vunpack.c.l.b16 %v1260
      %v1342 = vunpack.c.l.b16 %v1263
      %v1343 = vunpack.c.l.b16 %v1267
      %v1344 = vunpack.c.l.b16 %v1270
      %v1345 = vunpack.c.l.b16 %v1274
      %v1346 = vunpack.c.l.b16 %v1277
      %v1347 = vunpack.c.l.b16 %v1281
      %v1348 = vunpack.c.l.b16 %v1284
      %v1349 = vunpack.c.l.b16 %v1288
      %v1350 = vunpack.c.l.b16 %v1291
      %v1351 = vunpack.c.l.b16 %v1295
      %v1352 = vunpack.c.l.b16 %v1298
      %v1353 = vunpack.c.l.b16 %v1302
      %v1354 = vunpack.c.l.b16 %v1305
      %v1355 = vunpack.c.l.b16 %v1309
      %v1356 = vunpack.c.l.b16 %v1312
      %v1357 = vunpack.c.l.b16 %v1316
      %v1358 = vunpack.c.l.b16 %v1319
      %v1359 = vunpack.c.l.b16 %v1323
      %v1360 = vunpack.c.l.b16 %v1326
      %v1361 = vpack.c.b16 %v1330, %v1329
      %v1362 = vpack.c.b16 %v1332, %v1331
      %v1363 = vpack.c.b16 %v1334, %v1333
      %v1364 = vpack.c.b16 %v1336, %v1335
      %v1365 = vpack.c.b16 %v1338, %v1337
      %v1366 = vpack.c.b16 %v1340, %v1339
      %v1367 = vpack.c.b16 %v1342, %v1341
      %v1368 = vpack.c.b16 %v1344, %v1343
      %v1369 = vpack.c.b16 %v1346, %v1345
      %v1370 = vpack.c.b16 %v1348, %v1347
      %v1371 = vpack.c.b16 %v1350, %v1349
      %v1372 = vpack.c.b16 %v1352, %v1351
      %v1373 = vpack.c.b16 %v1354, %v1353
      %v1374 = vpack.c.b16 %v1356, %v1355
      %v1375 = vpack.c.b16 %v1358, %v1357
      %v1376 = vpack.c.b16 %v1360, %v1359
      %v1378 = vsel %vm658, %v1361, 0
      %v1381 = vsel %vm658, %v1362, 0
      %v1384 = vsel %vm658, %v1363, 0
      %v1387 = vsel %vm658, %v1364, 0
      %v1390 = vsel %vm658, %v1365, 0
      %v1393 = vsel %vm658, %v1366, 0
      %v1396 = vsel %vm658, %v1367, 0
      %v1399 = vsel %vm658, %v1368, 0
      %v1402 = vsel %vm658, %v1369, 0
      %v1405 = vsel %vm658, %v1370, 0
      %v1408 = vsel %vm658, %v1371, 0
      %v1411 = vsel %vm658, %v1372, 0
      %v1414 = vsel %vm658, %v1373, 0
      %v1417 = vsel %vm658, %v1374, 0
      %v1420 = vsel %vm658, %v1375, 0
      %v1423 = vsel %vm658, %v1376, 0
      %v1426 = vsel %vm707, %v1328, 0
      %1428 = vmatprep.subr.bf16.mxu0 0
      %1429 = vmatpush1.bf16.msra.mxu0 %v1426
      %1430 = vmatprep.subr.bf16.mxu0 0
      %1431 = vmatpush1.bf16.msra.mxu0 0
      %1432 = vmatprep.subr.bf16.mxu0 0
      %1433 = vmatpush1.bf16.msra.mxu0 0
      %1434 = vmatprep.subr.bf16.mxu0 0
      %1435 = vmatpush1.bf16.msra.mxu0 0
      %1436 = vmatprep.subr.bf16.mxu0 0
      %1437 = vmatpush1.bf16.msra.mxu0 0
      %1438 = vmatprep.subr.bf16.mxu0 0
      %1439 = vmatpush1.bf16.msra.mxu0 0
      %1440 = vmatprep.subr.bf16.mxu0 0
      %1441 = vmatpush1.bf16.msra.mxu0 0
      %1442 = vmatprep.subr.bf16.mxu0 0
      %1443 = vmatpush1.bf16.msra.mxu0 0
      %1444 = vmatprep.subr.bf16.mxu0 0
      %1445 = vmatpush1.bf16.msra.mxu0 0
      %1446 = vmatprep.subr.bf16.mxu0 0
      %1447 = vmatpush1.bf16.msra.mxu0 0
      %1448 = vmatprep.subr.bf16.mxu0 0
      %1449 = vmatpush1.bf16.msra.mxu0 0
      %1450 = vmatprep.subr.bf16.mxu0 0
      %1451 = vmatpush1.bf16.msra.mxu0 0
      %1452 = vmatprep.subr.bf16.mxu0 0
      %1453 = vmatpush1.bf16.msra.mxu0 0
      %1454 = vmatprep.subr.bf16.mxu0 0
      %1455 = vmatpush1.bf16.msra.mxu0 0
      %1456 = vmatprep.subr.bf16.mxu0 0
      %1457 = vmatpush1.bf16.msra.mxu0 0
      %1458 = vmatprep.subr.bf16.mxu0 0
      %1459 = vmatpush1.bf16.msra.mxu0 0
      %1460 = vmatprep.mubr.bf16.mxu0 0
      %1461 = vmatmul.mubr.bf16.gmra.mrb[0].mxu0 %v1378
      %v1462 = vpop.f32.mrb[0].mxu0
      %v1463 = vadd.f32 0.0, %v1462
      %v1464 = vpop.f32.mrb[0].mxu0
      %v1465 = vpop.f32.mrb[0].mxu0
      %v1466 = vadd.f32 0.0, %v1465
      %v1467 = vpop.f32.mrb[0].mxu0
      %1468 = vmatprep.mubr.bf16.mxu0 0
      %1469 = vmatmul.mubr.bf16.gmra.mrb[0].mxu0 %v1381
      %v1470 = vpop.f32.mrb[0].mxu0
      %v1471 = vadd.f32 0.0, %v1470
      %v1472 = vpop.f32.mrb[0].mxu0
      %v1473 = vpop.f32.mrb[0].mxu0
      %v1474 = vadd.f32 0.0, %v1473
      %v1475 = vpop.f32.mrb[0].mxu0
      %1476 = vmatprep.mubr.bf16.mxu0 0
      %1477 = vmatmul.mubr.bf16.gmra.mrb[0].mxu0 %v1384
      %v1478 = vpop.f32.mrb[0].mxu0
      %v1479 = vadd.f32 0.0, %v1478
      %v1480 = vpop.f32.mrb[0].mxu0
      %v1481 = vpop.f32.mrb[0].mxu0
      %v1482 = vadd.f32 0.0, %v1481
      %v1483 = vpop.f32.mrb[0].mxu0
      %1484 = vmatprep.mubr.bf16.mxu0 0
      %1485 = vmatmul.mubr.bf16.gmra.mrb[0].mxu0 %v1387
      %v1486 = vpop.f32.mrb[0].mxu0
      %v1487 = vadd.f32 0.0, %v1486
      %v1488 = vpop.f32.mrb[0].mxu0
      %v1489 = vpop.f32.mrb[0].mxu0
      %v1490 = vadd.f32 0.0, %v1489
      %v1491 = vpop.f32.mrb[0].mxu0
      %1492 = vmatprep.mubr.bf16.mxu0 0
      %1493 = vmatmul.mubr.bf16.gmra.mrb[0].mxu0 %v1390
      %v1494 = vpop.f32.mrb[0].mxu0
      %v1495 = vadd.f32 0.0, %v1494
      %v1496 = vpop.f32.mrb[0].mxu0
      %v1497 = vpop.f32.mrb[0].mxu0
      %v1498 = vadd.f32 0.0, %v1497
      %v1499 = vpop.f32.mrb[0].mxu0
      %1500 = vmatprep.mubr.bf16.mxu0 0
      %1501 = vmatmul.mubr.bf16.gmra.mrb[0].mxu0 %v1393
      %v1502 = vpop.f32.mrb[0].mxu0
      %v1503 = vadd.f32 0.0, %v1502
      %v1504 = vpop.f32.mrb[0].mxu0
      %v1505 = vpop.f32.mrb[0].mxu0
      %v1506 = vadd.f32 0.0, %v1505
      %v1507 = vpop.f32.mrb[0].mxu0
      %1508 = vmatprep.mubr.bf16.mxu0 0
      %1509 = vmatmul.mubr.bf16.gmra.mrb[0].mxu0 %v1396
      %v1510 = vpop.f32.mrb[0].mxu0
      %v1511 = vadd.f32 0.0, %v1510
      %v1512 = vpop.f32.mrb[0].mxu0
      %v1513 = vpop.f32.mrb[0].mxu0
      %v1514 = vadd.f32 0.0, %v1513
      %v1515 = vpop.f32.mrb[0].mxu0
      %1516 = vmatprep.mubr.bf16.mxu0 0
      %1517 = vmatmul.mubr.bf16.gmra.mrb[0].mxu0 %v1399
      %v1518 = vpop.f32.mrb[0].mxu0
      %v1519 = vadd.f32 0.0, %v1518
      %v1520 = vpop.f32.mrb[0].mxu0
      %v1521 = vpop.f32.mrb[0].mxu0
      %v1522 = vadd.f32 0.0, %v1521
      %v1523 = vpop.f32.mrb[0].mxu0
      %1524 = vmatprep.mubr.bf16.mxu0 0
      %1525 = vmatmul.mubr.bf16.gmra.mrb[0].mxu0 %v1402
      %v1526 = vpop.f32.mrb[0].mxu0
      %v1527 = vadd.f32 0.0, %v1526
      %v1528 = vpop.f32.mrb[0].mxu0
      %v1529 = vpop.f32.mrb[0].mxu0
      %v1530 = vadd.f32 0.0, %v1529
      %v1531 = vpop.f32.mrb[0].mxu0
      %1532 = vmatprep.mubr.bf16.mxu0 0
      %1533 = vmatmul.mubr.bf16.gmra.mrb[0].mxu0 %v1405
      %v1534 = vpop.f32.mrb[0].mxu0
      %v1535 = vadd.f32 0.0, %v1534
      %v1536 = vpop.f32.mrb[0].mxu0
      %v1537 = vpop.f32.mrb[0].mxu0
      %v1538 = vadd.f32 0.0, %v1537
      %v1539 = vpop.f32.mrb[0].mxu0
      %1540 = vmatprep.mubr.bf16.mxu0 0
      %1541 = vmatmul.mubr.bf16.gmra.mrb[0].mxu0 %v1408
      %v1542 = vpop.f32.mrb[0].mxu0
      %v1543 = vadd.f32 0.0, %v1542
      %v1544 = vpop.f32.mrb[0].mxu0
      %v1545 = vpop.f32.mrb[0].mxu0
      %v1546 = vadd.f32 0.0, %v1545
      %v1547 = vpop.f32.mrb[0].mxu0
      %1548 = vmatprep.mubr.bf16.mxu0 0
      %1549 = vmatmul.mubr.bf16.gmra.mrb[0].mxu0 %v1411
      %v1550 = vpop.f32.mrb[0].mxu0
      %v1551 = vadd.f32 0.0, %v1550
      %v1552 = vpop.f32.mrb[0].mxu0
      %v1553 = vpop.f32.mrb[0].mxu0
      %v1554 = vadd.f32 0.0, %v1553
      %v1555 = vpop.f32.mrb[0].mxu0
      %1556 = vmatprep.mubr.bf16.mxu0 0
      %1557 = vmatmul.mubr.bf16.gmra.mrb[0].mxu0 %v1414
      %v1558 = vpop.f32.mrb[0].mxu0
      %v1559 = vadd.f32 0.0, %v1558
      %v1560 = vpop.f32.mrb[0].mxu0
      %v1561 = vpop.f32.mrb[0].mxu0
      %v1562 = vadd.f32 0.0, %v1561
      %v1563 = vpop.f32.mrb[0].mxu0
      %1564 = vmatprep.mubr.bf16.mxu0 0
      %1565 = vmatmul.mubr.bf16.gmra.mrb[0].mxu0 %v1417
      %v1566 = vpop.f32.mrb[0].mxu0
      %v1567 = vadd.f32 0.0, %v1566
      %v1568 = vpop.f32.mrb[0].mxu0
      %v1569 = vpop.f32.mrb[0].mxu0
      %v1570 = vadd.f32 0.0, %v1569
      %v1571 = vpop.f32.mrb[0].mxu0
      %1572 = vmatprep.mubr.bf16.mxu0 0
      %1573 = vmatmul.mubr.bf16.gmra.mrb[0].mxu0 %v1420
      %v1574 = vpop.f32.mrb[0].mxu0
      %v1575 = vadd.f32 0.0, %v1574
      %v1576 = vpop.f32.mrb[0].mxu0
      %v1577 = vpop.f32.mrb[0].mxu0
      %v1578 = vadd.f32 0.0, %v1577
      %v1579 = vpop.f32.mrb[0].mxu0
      %1580 = vmatprep.mubr.bf16.mxu0 0
      %1581 = vmatmul.mubr.bf16.gmra.mrb[0].mxu0 %v1423
      %v1582 = vpop.f32.mrb[0].mxu0
      %v1583 = vadd.f32 0.0, %v1582
      %v1584 = vpop.f32.mrb[0].mxu0
      %v1585 = vpop.f32.mrb[0].mxu0
      %v1586 = vadd.f32 0.0, %v1585
      %v1587 = vpop.f32.mrb[0].mxu0
      %1588 = vdwg.mxu0
      %v1589 = vadd.f32 %v1038, %v1463
      %v1590 = vadd.f32 %v1041, %v1466
      %v1591 = vadd.f32 %v1046, %v1471
      %v1592 = vadd.f32 %v1049, %v1474
      %v1593 = vadd.f32 %v1054, %v1479
      %v1594 = vadd.f32 %v1057, %v1482
      %v1595 = vadd.f32 %v1062, %v1487
      %v1596 = vadd.f32 %v1065, %v1490
      %v1597 = vadd.f32 %v1070, %v1495
      %v1598 = vadd.f32 %v1073, %v1498
      %v1599 = vadd.f32 %v1078, %v1503
      %v1600 = vadd.f32 %v1081, %v1506
      %v1601 = vadd.f32 %v1086, %v1511
      %v1602 = vadd.f32 %v1089, %v1514
      %v1603 = vadd.f32 %v1094, %v1519
      %v1604 = vadd.f32 %v1097, %v1522
      %v1605 = vadd.f32 %v1102, %v1527
      %v1606 = vadd.f32 %v1105, %v1530
      %v1607 = vadd.f32 %v1110, %v1535
      %v1608 = vadd.f32 %v1113, %v1538
      %v1609 = vadd.f32 %v1118, %v1543
      %v1610 = vadd.f32 %v1121, %v1546
      %v1611 = vadd.f32 %v1126, %v1551
      %v1612 = vadd.f32 %v1129, %v1554
      %v1613 = vadd.f32 %v1134, %v1559
      %v1614 = vadd.f32 %v1137, %v1562
      %v1615 = vadd.f32 %v1142, %v1567
      %v1616 = vadd.f32 %v1145, %v1570
      %v1617 = vadd.f32 %v1150, %v1575
      %v1618 = vadd.f32 %v1153, %v1578
      %v1619 = vadd.f32 %v1158, %v1583
      %v1620 = vadd.f32 %v1161, %v1586
      %s1621 = scalar_lea.vmem %s165, 12
      %v1622 = vld [vmem:[%s1621] sm:$0xf]
      %v1623 = vld [vmem:[%s1621 + $0x4] sm:$0xf]
      %v1624 = vld [vmem:[%s1621 + $0xc] sm:$0xf]
      %v1625 = vld [vmem:[%s1621 + $0x10] sm:$0xf]
      %v1626 = vld [vmem:[%s1621 + $0x18] sm:$0xf]
      %v1627 = vld [vmem:[%s1621 + $0x1c] sm:$0xf]
      %v1628 = vld [vmem:[%s1621 + $0x24] sm:$0xf]
      %v1629 = vld [vmem:[%s1621 + $0x28] sm:$0xf]
      %v1630 = vld [vmem:[%s1621 + $0x30] sm:$0xf]
      %v1631 = vld [vmem:[%s1621 + $0x34] sm:$0xf]
      %v1632 = vld [vmem:[%s1621 + $0x3c] sm:$0xf]
      %v1633 = vld [vmem:[%s1621 + $0x40] sm:$0xf]
      %v1634 = vld [vmem:[%s1621 + $0x48] sm:$0xf]
      %v1635 = vld [vmem:[%s1621 + $0x4c] sm:$0xf]
      %v1636 = vld [vmem:[%s1621 + $0x54] sm:$0xf]
      %v1637 = vld [vmem:[%s1621 + $0x58] sm:$0xf]
      %v1638 = vld [vmem:[%s1621 + $0x60] sm:$0xf]
      %v1639 = vld [vmem:[%s1621 + $0x64] sm:$0xf]
      %v1640 = vld [vmem:[%s1621 + $0x6c] sm:$0xf]
      %v1641 = vld [vmem:[%s1621 + $0x70] sm:$0xf]
      %v1642 = vld [vmem:[%s1621 + $0x78] sm:$0xf]
      %v1643 = vld [vmem:[%s1621 + $0x7c] sm:$0xf]
      %v1644 = vld [vmem:[%s1621 + $0x84] sm:$0xf]
      %v1645 = vld [vmem:[%s1621 + $0x88] sm:$0xf]
      %v1646 = vld [vmem:[%s1621 + $0x90] sm:$0xf]
      %v1647 = vld [vmem:[%s1621 + $0x94] sm:$0xf]
      %v1648 = vld [vmem:[%s1621 + $0x9c] sm:$0xf]
      %v1649 = vld [vmem:[%s1621 + $0xa0] sm:$0xf]
      %v1650 = vld [vmem:[%s1621 + $0xa8] sm:$0xf]
      %v1651 = vld [vmem:[%s1621 + $0xac] sm:$0xf]
      %v1652 = vld [vmem:[%s1621 + $0xb4] sm:$0xf]
      %v1653 = vld [vmem:[%s1621 + $0xb8] sm:$0xf]
      %s1654 = scalar_lea.vmem %s1, 6
      %v1655 = vld [vmem:[%s1654] sm:$0x3]
      %v1688 = vunpack.c.l.b16 %v1622
      %v1689 = vunpack.c.l.b16 %v1623
      %v1690 = vunpack.c.l.b16 %v1624
      %v1691 = vunpack.c.l.b16 %v1625
      %v1692 = vunpack.c.l.b16 %v1626
      %v1693 = vunpack.c.l.b16 %v1627
      %v1694 = vunpack.c.l.b16 %v1628
      %v1695 = vunpack.c.l.b16 %v1629
      %v1696 = vunpack.c.l.b16 %v1630
      %v1697 = vunpack.c.l.b16 %v1631
      %v1698 = vunpack.c.l.b16 %v1632
      %v1699 = vunpack.c.l.b16 %v1633
      %v1700 = vunpack.c.l.b16 %v1634
      %v1701 = vunpack.c.l.b16 %v1635
      %v1702 = vunpack.c.l.b16 %v1636
      %v1703 = vunpack.c.l.b16 %v1637
      %v1704 = vunpack.c.l.b16 %v1638
      %v1705 = vunpack.c.l.b16 %v1639
      %v1706 = vunpack.c.l.b16 %v1640
      %v1707 = vunpack.c.l.b16 %v1641
      %v1708 = vunpack.c.l.b16 %v1642
      %v1709 = vunpack.c.l.b16 %v1643
      %v1710 = vunpack.c.l.b16 %v1644
      %v1711 = vunpack.c.l.b16 %v1645
      %v1712 = vunpack.c.l.b16 %v1646
      %v1713 = vunpack.c.l.b16 %v1647
      %v1714 = vunpack.c.l.b16 %v1648
      %v1715 = vunpack.c.l.b16 %v1649
      %v1716 = vunpack.c.l.b16 %v1650
      %v1717 = vunpack.c.l.b16 %v1651
      %v1718 = vunpack.c.l.b16 %v1652
      %v1719 = vunpack.c.l.b16 %v1653
      %v1720 = vpack.c.b16 %v1689, %v1688
      %v1721 = vpack.c.b16 %v1691, %v1690
      %v1722 = vpack.c.b16 %v1693, %v1692
      %v1723 = vpack.c.b16 %v1695, %v1694
      %v1724 = vpack.c.b16 %v1697, %v1696
      %v1725 = vpack.c.b16 %v1699, %v1698
      %v1726 = vpack.c.b16 %v1701, %v1700
      %v1727 = vpack.c.b16 %v1703, %v1702
      %v1728 = vpack.c.b16 %v1705, %v1704
      %v1729 = vpack.c.b16 %v1707, %v1706
      %v1730 = vpack.c.b16 %v1709, %v1708
      %v1731 = vpack.c.b16 %v1711, %v1710
      %v1732 = vpack.c.b16 %v1713, %v1712
      %v1733 = vpack.c.b16 %v1715, %v1714
      %v1734 = vpack.c.b16 %v1717, %v1716
      %v1735 = vpack.c.b16 %v1719, %v1718
      %v1737 = vsel %vm658, %v1720, 0
      %v1740 = vsel %vm658, %v1721, 0
      %v1743 = vsel %vm658, %v1722, 0
      %v1746 = vsel %vm658, %v1723, 0
      %v1749 = vsel %vm658, %v1724, 0
      %v1752 = vsel %vm658, %v1725, 0
      %v1755 = vsel %vm658, %v1726, 0
      %v1758 = vsel %vm658, %v1727, 0
      %v1761 = vsel %vm658, %v1728, 0
      %v1764 = vsel %vm658, %v1729, 0
      %v1767 = vsel %vm658, %v1730, 0
      %v1770 = vsel %vm658, %v1731, 0
      %v1773 = vsel %vm658, %v1732, 0
      %v1776 = vsel %vm658, %v1733, 0
      %v1779 = vsel %vm658, %v1734, 0
      %v1782 = vsel %vm658, %v1735, 0
      %v1785 = vsel %vm707, %v1655, 0
      %1787 = vmatprep.subr.bf16.mxu0 0
      %1788 = vmatpush1.bf16.msra.mxu0 %v1785
      %1789 = vmatprep.subr.bf16.mxu0 0
      %1790 = vmatpush1.bf16.msra.mxu0 0
      %1791 = vmatprep.subr.bf16.mxu0 0
      %1792 = vmatpush1.bf16.msra.mxu0 0
      %1793 = vmatprep.subr.bf16.mxu0 0
      %1794 = vmatpush1.bf16.msra.mxu0 0
      %1795 = vmatprep.subr.bf16.mxu0 0
      %1796 = vmatpush1.bf16.msra.mxu0 0
      %1797 = vmatprep.subr.bf16.mxu0 0
      %1798 = vmatpush1.bf16.msra.mxu0 0
      %1799 = vmatprep.subr.bf16.mxu0 0
      %1800 = vmatpush1.bf16.msra.mxu0 0
      %1801 = vmatprep.subr.bf16.mxu0 0
      %1802 = vmatpush1.bf16.msra.mxu0 0
      %1803 = vmatprep.subr.bf16.mxu0 0
      %1804 = vmatpush1.bf16.msra.mxu0 0
      %1805 = vmatprep.subr.bf16.mxu0 0
      %1806 = vmatpush1.bf16.msra.mxu0 0
      %1807 = vmatprep.subr.bf16.mxu0 0
      %1808 = vmatpush1.bf16.msra.mxu0 0
      %1809 = vmatprep.subr.bf16.mxu0 0
      %1810 = vmatpush1.bf16.msra.mxu0 0
      %1811 = vmatprep.subr.bf16.mxu0 0
      %1812 = vmatpush1.bf16.msra.mxu0 0
      %1813 = vmatprep.subr.bf16.mxu0 0
      %1814 = vmatpush1.bf16.msra.mxu0 0
      %1815 = vmatprep.subr.bf16.mxu0 0
      %1816 = vmatpush1.bf16.msra.mxu0 0
      %1817 = vmatprep.subr.bf16.mxu0 0
      %1818 = vmatpush1.bf16.msra.mxu0 0
      %1819 = vmatprep.mubr.bf16.mxu0 0
      %1820 = vmatmul.mubr.bf16.gmra.mrb[0].mxu0 %v1737
      %v1821 = vpop.f32.mrb[0].mxu0
      %v1822 = vadd.f32 0.0, %v1821
      %v1823 = vpop.f32.mrb[0].mxu0
      %v1824 = vpop.f32.mrb[0].mxu0
      %v1825 = vadd.f32 0.0, %v1824
      %v1826 = vpop.f32.mrb[0].mxu0
      %1827 = vmatprep.mubr.bf16.mxu0 0
      %1828 = vmatmul.mubr.bf16.gmra.mrb[0].mxu0 %v1740
      %v1829 = vpop.f32.mrb[0].mxu0
      %v1830 = vadd.f32 0.0, %v1829
      %v1831 = vpop.f32.mrb[0].mxu0
      %v1832 = vpop.f32.mrb[0].mxu0
      %v1833 = vadd.f32 0.0, %v1832
      %v1834 = vpop.f32.mrb[0].mxu0
      %1835 = vmatprep.mubr.bf16.mxu0 0
      %1836 = vmatmul.mubr.bf16.gmra.mrb[0].mxu0 %v1743
      %v1837 = vpop.f32.mrb[0].mxu0
      %v1838 = vadd.f32 0.0, %v1837
      %v1839 = vpop.f32.mrb[0].mxu0
      %v1840 = vpop.f32.mrb[0].mxu0
      %v1841 = vadd.f32 0.0, %v1840
      %v1842 = vpop.f32.mrb[0].mxu0
      %1843 = vmatprep.mubr.bf16.mxu0 0
      %1844 = vmatmul.mubr.bf16.gmra.mrb[0].mxu0 %v1746
      %v1845 = vpop.f32.mrb[0].mxu0
      %v1846 = vadd.f32 0.0, %v1845
      %v1847 = vpop.f32.mrb[0].mxu0
      %v1848 = vpop.f32.mrb[0].mxu0
      %v1849 = vadd.f32 0.0, %v1848
      %v1850 = vpop.f32.mrb[0].mxu0
      %1851 = vmatprep.mubr.bf16.mxu0 0
      %1852 = vmatmul.mubr.bf16.gmra.mrb[0].mxu0 %v1749
      %v1853 = vpop.f32.mrb[0].mxu0
      %v1854 = vadd.f32 0.0, %v1853
      %v1855 = vpop.f32.mrb[0].mxu0
      %v1856 = vpop.f32.mrb[0].mxu0
      %v1857 = vadd.f32 0.0, %v1856
      %v1858 = vpop.f32.mrb[0].mxu0
      %1859 = vmatprep.mubr.bf16.mxu0 0
      %1860 = vmatmul.mubr.bf16.gmra.mrb[0].mxu0 %v1752
      %v1861 = vpop.f32.mrb[0].mxu0
      %v1862 = vadd.f32 0.0, %v1861
      %v1863 = vpop.f32.mrb[0].mxu0
      %v1864 = vpop.f32.mrb[0].mxu0
      %v1865 = vadd.f32 0.0, %v1864
      %v1866 = vpop.f32.mrb[0].mxu0
      %1867 = vmatprep.mubr.bf16.mxu0 0
      %1868 = vmatmul.mubr.bf16.gmra.mrb[0].mxu0 %v1755
      %v1869 = vpop.f32.mrb[0].mxu0
      %v1870 = vadd.f32 0.0, %v1869
      %v1871 = vpop.f32.mrb[0].mxu0
      %v1872 = vpop.f32.mrb[0].mxu0
      %v1873 = vadd.f32 0.0, %v1872
      %v1874 = vpop.f32.mrb[0].mxu0
      %1875 = vmatprep.mubr.bf16.mxu0 0
      %1876 = vmatmul.mubr.bf16.gmra.mrb[0].mxu0 %v1758
      %v1877 = vpop.f32.mrb[0].mxu0
      %v1878 = vadd.f32 0.0, %v1877
      %v1879 = vpop.f32.mrb[0].mxu0
      %v1880 = vpop.f32.mrb[0].mxu0
      %v1881 = vadd.f32 0.0, %v1880
      %v1882 = vpop.f32.mrb[0].mxu0
      %1883 = vmatprep.mubr.bf16.mxu0 0
      %1884 = vmatmul.mubr.bf16.gmra.mrb[0].mxu0 %v1761
      %v1885 = vpop.f32.mrb[0].mxu0
      %v1886 = vadd.f32 0.0, %v1885
      %v1887 = vpop.f32.mrb[0].mxu0
      %v1888 = vpop.f32.mrb[0].mxu0
      %v1889 = vadd.f32 0.0, %v1888
      %v1890 = vpop.f32.mrb[0].mxu0
      %1891 = vmatprep.mubr.bf16.mxu0 0
      %1892 = vmatmul.mubr.bf16.gmra.mrb[0].mxu0 %v1764
      %v1893 = vpop.f32.mrb[0].mxu0
      %v1894 = vadd.f32 0.0, %v1893
      %v1895 = vpop.f32.mrb[0].mxu0
      %v1896 = vpop.f32.mrb[0].mxu0
      %v1897 = vadd.f32 0.0, %v1896
      %v1898 = vpop.f32.mrb[0].mxu0
      %1899 = vmatprep.mubr.bf16.mxu0 0
      %1900 = vmatmul.mubr.bf16.gmra.mrb[0].mxu0 %v1767
      %v1901 = vpop.f32.mrb[0].mxu0
      %v1902 = vadd.f32 0.0, %v1901
      %v1903 = vpop.f32.mrb[0].mxu0
      %v1904 = vpop.f32.mrb[0].mxu0
      %v1905 = vadd.f32 0.0, %v1904
      %v1906 = vpop.f32.mrb[0].mxu0
      %1907 = vmatprep.mubr.bf16.mxu0 0
      %1908 = vmatmul.mubr.bf16.gmra.mrb[0].mxu0 %v1770
      %v1909 = vpop.f32.mrb[0].mxu0
      %v1910 = vadd.f32 0.0, %v1909
      %v1911 = vpop.f32.mrb[0].mxu0
      %v1912 = vpop.f32.mrb[0].mxu0
      %v1913 = vadd.f32 0.0, %v1912
      %v1914 = vpop.f32.mrb[0].mxu0
      %1915 = vmatprep.mubr.bf16.mxu0 0
      %1916 = vmatmul.mubr.bf16.gmra.mrb[0].mxu0 %v1773
      %v1917 = vpop.f32.mrb[0].mxu0
      %v1918 = vadd.f32 0.0, %v1917
      %v1919 = vpop.f32.mrb[0].mxu0
      %v1920 = vpop.f32.mrb[0].mxu0
      %v1921 = vadd.f32 0.0, %v1920
      %v1922 = vpop.f32.mrb[0].mxu0
      %1923 = vmatprep.mubr.bf16.mxu0 0
      %1924 = vmatmul.mubr.bf16.gmra.mrb[0].mxu0 %v1776
      %v1925 = vpop.f32.mrb[0].mxu0
      %v1926 = vadd.f32 0.0, %v1925
      %v1927 = vpop.f32.mrb[0].mxu0
      %v1928 = vpop.f32.mrb[0].mxu0
      %v1929 = vadd.f32 0.0, %v1928
      %v1930 = vpop.f32.mrb[0].mxu0
      %1931 = vmatprep.mubr.bf16.mxu0 0
      %1932 = vmatmul.mubr.bf16.gmra.mrb[0].mxu0 %v1779
      %v1933 = vpop.f32.mrb[0].mxu0
      %v1934 = vadd.f32 0.0, %v1933
      %v1935 = vpop.f32.mrb[0].mxu0
      %v1936 = vpop.f32.mrb[0].mxu0
      %v1937 = vadd.f32 0.0, %v1936
      %v1938 = vpop.f32.mrb[0].mxu0
      %1939 = vmatprep.mubr.bf16.mxu0 0
      %1940 = vmatmul.mubr.bf16.gmra.mrb[0].mxu0 %v1782
      %v1941 = vpop.f32.mrb[0].mxu0
      %v1942 = vadd.f32 0.0, %v1941
      %v1943 = vpop.f32.mrb[0].mxu0
      %v1944 = vpop.f32.mrb[0].mxu0
      %v1945 = vadd.f32 0.0, %v1944
      %v1946 = vpop.f32.mrb[0].mxu0
      %1947 = vdwg.mxu0
      %v1948 = vadd.f32 %v1589, %v1822
      %v1949 = vadd.f32 %v1590, %v1825
      %v1950 = vadd.f32 %v1591, %v1830
      %v1951 = vadd.f32 %v1592, %v1833
      %v1952 = vadd.f32 %v1593, %v1838
      %v1953 = vadd.f32 %v1594, %v1841
      %v1954 = vadd.f32 %v1595, %v1846
      %v1955 = vadd.f32 %v1596, %v1849
      %v1956 = vadd.f32 %v1597, %v1854
      %v1957 = vadd.f32 %v1598, %v1857
      %v1958 = vadd.f32 %v1599, %v1862
      %v1959 = vadd.f32 %v1600, %v1865
      %v1960 = vadd.f32 %v1601, %v1870
      %v1961 = vadd.f32 %v1602, %v1873
      %v1962 = vadd.f32 %v1603, %v1878
      %v1963 = vadd.f32 %v1604, %v1881
      %v1964 = vadd.f32 %v1605, %v1886
      %v1965 = vadd.f32 %v1606, %v1889
      %v1966 = vadd.f32 %v1607, %v1894
      %v1967 = vadd.f32 %v1608, %v1897
      %v1968 = vadd.f32 %v1609, %v1902
      %v1969 = vadd.f32 %v1610, %v1905
      %v1970 = vadd.f32 %v1611, %v1910
      %v1971 = vadd.f32 %v1612, %v1913
      %v1972 = vadd.f32 %v1613, %v1918
      %v1973 = vadd.f32 %v1614, %v1921
      %v1974 = vadd.f32 %v1615, %v1926
      %v1975 = vadd.f32 %v1616, %v1929
      %v1976 = vadd.f32 %v1617, %v1934
      %v1977 = vadd.f32 %v1618, %v1937
      %v1978 = vadd.f32 %v1619, %v1942
      %v1979 = vadd.f32 %v1620, %v1945
      %v1980 = vld [vmem:[%s1621] sm:$0xf]
      %v1981 = vld [vmem:[%s1621 + $0x4] sm:$0xf]
      %v1982 = vld [vmem:[%s1621 + $0x8] sm:$0x1]
      %v1983 = vld [vmem:[%s1621 + $0xc] sm:$0xf]
      %v1984 = vld [vmem:[%s1621 + $0x10] sm:$0xf]
      %v1985 = vld [vmem:[%s1621 + $0x14] sm:$0x1]
      %v1986 = vld [vmem:[%s1621 + $0x18] sm:$0xf]
      %v1987 = vld [vmem:[%s1621 + $0x1c] sm:$0xf]
      %v1988 = vld [vmem:[%s1621 + $0x20] sm:$0x1]
      %v1989 = vld [vmem:[%s1621 + $0x24] sm:$0xf]
      %v1990 = vld [vmem:[%s1621 + $0x28] sm:$0xf]
      %v1991 = vld [vmem:[%s1621 + $0x2c] sm:$0x1]
      %v1992 = vld [vmem:[%s1621 + $0x30] sm:$0xf]
      %v1993 = vld [vmem:[%s1621 + $0x34] sm:$0xf]
      %v1994 = vld [vmem:[%s1621 + $0x38] sm:$0x1]
      %v1995 = vld [vmem:[%s1621 + $0x3c] sm:$0xf]
      %v1996 = vld [vmem:[%s1621 + $0x40] sm:$0xf]
      %v1997 = vld [vmem:[%s1621 + $0x44] sm:$0x1]
      %v1998 = vld [vmem:[%s1621 + $0x48] sm:$0xf]
      %v1999 = vld [vmem:[%s1621 + $0x4c] sm:$0xf]
      %v2000 = vld [vmem:[%s1621 + $0x50] sm:$0x1]
      %v2001 = vld [vmem:[%s1621 + $0x54] sm:$0xf]
      %v2002 = vld [vmem:[%s1621 + $0x58] sm:$0xf]
      %v2003 = vld [vmem:[%s1621 + $0x5c] sm:$0x1]
      %v2004 = vld [vmem:[%s1621 + $0x60] sm:$0xf]
      %v2005 = vld [vmem:[%s1621 + $0x64] sm:$0xf]
      %v2006 = vld [vmem:[%s1621 + $0x68] sm:$0x1]
      %v2007 = vld [vmem:[%s1621 + $0x6c] sm:$0xf]
      %v2008 = vld [vmem:[%s1621 + $0x70] sm:$0xf]
      %v2009 = vld [vmem:[%s1621 + $0x74] sm:$0x1]
      %v2010 = vld [vmem:[%s1621 + $0x78] sm:$0xf]
      %v2011 = vld [vmem:[%s1621 + $0x7c] sm:$0xf]
      %v2012 = vld [vmem:[%s1621 + $0x80] sm:$0x1]
      %v2013 = vld [vmem:[%s1621 + $0x84] sm:$0xf]
      %v2014 = vld [vmem:[%s1621 + $0x88] sm:$0xf]
      %v2015 = vld [vmem:[%s1621 + $0x8c] sm:$0x1]
      %v2016 = vld [vmem:[%s1621 + $0x90] sm:$0xf]
      %v2017 = vld [vmem:[%s1621 + $0x94] sm:$0xf]
      %v2018 = vld [vmem:[%s1621 + $0x98] sm:$0x1]
      %v2019 = vld [vmem:[%s1621 + $0x9c] sm:$0xf]
      %v2020 = vld [vmem:[%s1621 + $0xa0] sm:$0xf]
      %v2021 = vld [vmem:[%s1621 + $0xa4] sm:$0x1]
      %v2022 = vld [vmem:[%s1621 + $0xa8] sm:$0xf]
      %v2023 = vld [vmem:[%s1621 + $0xac] sm:$0xf]
      %v2024 = vld [vmem:[%s1621 + $0xb0] sm:$0x1]
      %v2025 = vld [vmem:[%s1621 + $0xb4] sm:$0xf]
      %v2026 = vld [vmem:[%s1621 + $0xb8] sm:$0xf]
      %v2027 = vld [vmem:[%s1621 + $0xbc] sm:$0x1]
      %v2029 = vshrl.u32 %v1980, 16
      %v2031 = vrot.slane %v2029, 4
      %v2032 = vshll.u32 %v1980, 16
      %v2034 = vrot.slane %v2032, 5
      %v2035 = vor.u32 %v2031, %v2034
      %v2036 = vrot.slane %v2035, 4
      %v2038 = vshll.u32 %v1981, 16
      %v2040 = vrot.slane %v2038, 5
      %v2041 = vsel %vm223, %v2036, %v2040
      %v2042 = vshrl.u32 %v1981, 16
      %v2044 = vrot.slane %v2042, 4
      %v2045 = vor.u32 %v2044, %v2040
      %v2046 = vrot.slane %v2045, 4
      %v2048 = vshll.u32 %v1982, 16
      %v2050 = vrot.slane %v2048, 5
      %v2051 = vsel %vm223, %v2046, %v2050
      %v2053 = vshrl.u32 %v1983, 16
      %v2055 = vrot.slane %v2053, 4
      %v2056 = vshll.u32 %v1983, 16
      %v2058 = vrot.slane %v2056, 5
      %v2059 = vor.u32 %v2055, %v2058
      %v2060 = vrot.slane %v2059, 4
      %v2062 = vshll.u32 %v1984, 16
      %v2064 = vrot.slane %v2062, 5
      %v2065 = vsel %vm223, %v2060, %v2064
      %v2066 = vshrl.u32 %v1984, 16
      %v2068 = vrot.slane %v2066, 4
      %v2069 = vor.u32 %v2068, %v2064
      %v2070 = vrot.slane %v2069, 4
      %v2072 = vshll.u32 %v1985, 16
      %v2074 = vrot.slane %v2072, 5
      %v2075 = vsel %vm223, %v2070, %v2074
      %v2077 = vshrl.u32 %v1986, 16
      %v2079 = vrot.slane %v2077, 4
      %v2080 = vshll.u32 %v1986, 16
      %v2082 = vrot.slane %v2080, 5
      %v2083 = vor.u32 %v2079, %v2082
      %v2084 = vrot.slane %v2083, 4
      %v2086 = vshll.u32 %v1987, 16
      %v2088 = vrot.slane %v2086, 5
      %v2089 = vsel %vm223, %v2084, %v2088
      %v2090 = vshrl.u32 %v1987, 16
      %v2092 = vrot.slane %v2090, 4
      %v2093 = vor.u32 %v2092, %v2088
      %v2094 = vrot.slane %v2093, 4
      %v2096 = vshll.u32 %v1988, 16
      %v2098 = vrot.slane %v2096, 5
      %v2099 = vsel %vm223, %v2094, %v2098
      %v2101 = vshrl.u32 %v1989, 16
      %v2103 = vrot.slane %v2101, 4
      %v2104 = vshll.u32 %v1989, 16
      %v2106 = vrot.slane %v2104, 5
      %v2107 = vor.u32 %v2103, %v2106
      %v2108 = vrot.slane %v2107, 4
      %v2110 = vshll.u32 %v1990, 16
      %v2112 = vrot.slane %v2110, 5
      %v2113 = vsel %vm223, %v2108, %v2112
      %v2114 = vshrl.u32 %v1990, 16
      %v2116 = vrot.slane %v2114, 4
      %v2117 = vor.u32 %v2116, %v2112
      %v2118 = vrot.slane %v2117, 4
      %v2120 = vshll.u32 %v1991, 16
      %v2122 = vrot.slane %v2120, 5
      %v2123 = vsel %vm223, %v2118, %v2122
      %v2125 = vshrl.u32 %v1992, 16
      %v2127 = vrot.slane %v2125, 4
      %v2128 = vshll.u32 %v1992, 16
      %v2130 = vrot.slane %v2128, 5
      %v2131 = vor.u32 %v2127, %v2130
      %v2132 = vrot.slane %v2131, 4
      %v2134 = vshll.u32 %v1993, 16
      %v2136 = vrot.slane %v2134, 5
      %v2137 = vsel %vm223, %v2132, %v2136
      %v2138 = vshrl.u32 %v1993, 16
      %v2140 = vrot.slane %v2138, 4
      %v2141 = vor.u32 %v2140, %v2136
      %v2142 = vrot.slane %v2141, 4
      %v2144 = vshll.u32 %v1994, 16
      %v2146 = vrot.slane %v2144, 5
      %v2147 = vsel %vm223, %v2142, %v2146
      %v2149 = vshrl.u32 %v1995, 16
      %v2151 = vrot.slane %v2149, 4
      %v2152 = vshll.u32 %v1995, 16
      %v2154 = vrot.slane %v2152, 5
      %v2155 = vor.u32 %v2151, %v2154
      %v2156 = vrot.slane %v2155, 4
      %v2158 = vshll.u32 %v1996, 16
      %v2160 = vrot.slane %v2158, 5
      %v2161 = vsel %vm223, %v2156, %v2160
      %v2162 = vshrl.u32 %v1996, 16
      %v2164 = vrot.slane %v2162, 4
      %v2165 = vor.u32 %v2164, %v2160
      %v2166 = vrot.slane %v2165, 4
      %v2168 = vshll.u32 %v1997, 16
      %v2170 = vrot.slane %v2168, 5
      %v2171 = vsel %vm223, %v2166, %v2170
      %v2173 = vshrl.u32 %v1998, 16
      %v2175 = vrot.slane %v2173, 4
      %v2176 = vshll.u32 %v1998, 16
      %v2178 = vrot.slane %v2176, 5
      %v2179 = vor.u32 %v2175, %v2178
      %v2180 = vrot.slane %v2179, 4
      %v2182 = vshll.u32 %v1999, 16
      %v2184 = vrot.slane %v2182, 5
      %v2185 = vsel %vm223, %v2180, %v2184
      %v2186 = vshrl.u32 %v1999, 16
      %v2188 = vrot.slane %v2186, 4
      %v2189 = vor.u32 %v2188, %v2184
      %v2190 = vrot.slane %v2189, 4
      %v2192 = vshll.u32 %v2000, 16
      %v2194 = vrot.slane %v2192, 5
      %v2195 = vsel %vm223, %v2190, %v2194
      %v2197 = vshrl.u32 %v2001, 16
      %v2199 = vrot.slane %v2197, 4
      %v2200 = vshll.u32 %v2001, 16
      %v2202 = vrot.slane %v2200, 5
      %v2203 = vor.u32 %v2199, %v2202
      %v2204 = vrot.slane %v2203, 4
      %v2206 = vshll.u32 %v2002, 16
      %v2208 = vrot.slane %v2206, 5
      %v2209 = vsel %vm223, %v2204, %v2208
      %v2210 = vshrl.u32 %v2002, 16
      %v2212 = vrot.slane %v2210, 4
      %v2213 = vor.u32 %v2212, %v2208
      %v2214 = vrot.slane %v2213, 4
      %v2216 = vshll.u32 %v2003, 16
      %v2218 = vrot.slane %v2216, 5
      %v2219 = vsel %vm223, %v2214, %v2218
      %v2221 = vshrl.u32 %v2004, 16
      %v2223 = vrot.slane %v2221, 4
      %v2224 = vshll.u32 %v2004, 16
      %v2226 = vrot.slane %v2224, 5
      %v2227 = vor.u32 %v2223, %v2226
      %v2228 = vrot.slane %v2227, 4
      %v2230 = vshll.u32 %v2005, 16
      %v2232 = vrot.slane %v2230, 5
      %v2233 = vsel %vm223, %v2228, %v2232
      %v2234 = vshrl.u32 %v2005, 16
      %v2236 = vrot.slane %v2234, 4
      %v2237 = vor.u32 %v2236, %v2232
      %v2238 = vrot.slane %v2237, 4
      %v2240 = vshll.u32 %v2006, 16
      %v2242 = vrot.slane %v2240, 5
      %v2243 = vsel %vm223, %v2238, %v2242
      %v2245 = vshrl.u32 %v2007, 16
      %v2247 = vrot.slane %v2245, 4
      %v2248 = vshll.u32 %v2007, 16
      %v2250 = vrot.slane %v2248, 5
      %v2251 = vor.u32 %v2247, %v2250
      %v2252 = vrot.slane %v2251, 4
      %v2254 = vshll.u32 %v2008, 16
      %v2256 = vrot.slane %v2254, 5
      %v2257 = vsel %vm223, %v2252, %v2256
      %v2258 = vshrl.u32 %v2008, 16
      %v2260 = vrot.slane %v2258, 4
      %v2261 = vor.u32 %v2260, %v2256
      %v2262 = vrot.slane %v2261, 4
      %v2264 = vshll.u32 %v2009, 16
      %v2266 = vrot.slane %v2264, 5
      %v2267 = vsel %vm223, %v2262, %v2266
      %v2269 = vshrl.u32 %v2010, 16
      %v2271 = vrot.slane %v2269, 4
      %v2272 = vshll.u32 %v2010, 16
      %v2274 = vrot.slane %v2272, 5
      %v2275 = vor.u32 %v2271, %v2274
      %v2276 = vrot.slane %v2275, 4
      %v2278 = vshll.u32 %v2011, 16
      %v2280 = vrot.slane %v2278, 5
      %v2281 = vsel %vm223, %v2276, %v2280
      %v2282 = vshrl.u32 %v2011, 16
      %v2284 = vrot.slane %v2282, 4
      %v2285 = vor.u32 %v2284, %v2280
      %v2286 = vrot.slane %v2285, 4
      %v2288 = vshll.u32 %v2012, 16
      %v2290 = vrot.slane %v2288, 5
      %v2291 = vsel %vm223, %v2286, %v2290
      %v2293 = vshrl.u32 %v2013, 16
      %v2295 = vrot.slane %v2293, 4
      %v2296 = vshll.u32 %v2013, 16
      %v2298 = vrot.slane %v2296, 5
      %v2299 = vor.u32 %v2295, %v2298
      %v2300 = vrot.slane %v2299, 4
      %v2302 = vshll.u32 %v2014, 16
      %v2304 = vrot.slane %v2302, 5
      %v2305 = vsel %vm223, %v2300, %v2304
      %v2306 = vshrl.u32 %v2014, 16
      %v2308 = vrot.slane %v2306, 4
      %v2309 = vor.u32 %v2308, %v2304
      %v2310 = vrot.slane %v2309, 4
      %v2312 = vshll.u32 %v2015, 16
      %v2314 = vrot.slane %v2312, 5
      %v2315 = vsel %vm223, %v2310, %v2314
      %v2317 = vshrl.u32 %v2016, 16
      %v2319 = vrot.slane %v2317, 4
      %v2320 = vshll.u32 %v2016, 16
      %v2322 = vrot.slane %v2320, 5
      %v2323 = vor.u32 %v2319, %v2322
      %v2324 = vrot.slane %v2323, 4
      %v2326 = vshll.u32 %v2017, 16
      %v2328 = vrot.slane %v2326, 5
      %v2329 = vsel %vm223, %v2324, %v2328
      %v2330 = vshrl.u32 %v2017, 16
      %v2332 = vrot.slane %v2330, 4
      %v2333 = vor.u32 %v2332, %v2328
      %v2334 = vrot.slane %v2333, 4
      %v2336 = vshll.u32 %v2018, 16
      %v2338 = vrot.slane %v2336, 5
      %v2339 = vsel %vm223, %v2334, %v2338
      %v2341 = vshrl.u32 %v2019, 16
      %v2343 = vrot.slane %v2341, 4
      %v2344 = vshll.u32 %v2019, 16
      %v2346 = vrot.slane %v2344, 5
      %v2347 = vor.u32 %v2343, %v2346
      %v2348 = vrot.slane %v2347, 4
      %v2350 = vshll.u32 %v2020, 16
      %v2352 = vrot.slane %v2350, 5
      %v2353 = vsel %vm223, %v2348, %v2352
      %v2354 = vshrl.u32 %v2020, 16
      %v2356 = vrot.slane %v2354, 4
      %v2357 = vor.u32 %v2356, %v2352
      %v2358 = vrot.slane %v2357, 4
      %v2360 = vshll.u32 %v2021, 16
      %v2362 = vrot.slane %v2360, 5
      %v2363 = vsel %vm223, %v2358, %v2362
      %v2365 = vshrl.u32 %v2022, 16
      %v2367 = vrot.slane %v2365, 4
      %v2368 = vshll.u32 %v2022, 16
      %v2370 = vrot.slane %v2368, 5
      %v2371 = vor.u32 %v2367, %v2370
      %v2372 = vrot.slane %v2371, 4
      %v2374 = vshll.u32 %v2023, 16
      %v2376 = vrot.slane %v2374, 5
      %v2377 = vsel %vm223, %v2372, %v2376
      %v2378 = vshrl.u32 %v2023, 16
      %v2380 = vrot.slane %v2378, 4
      %v2381 = vor.u32 %v2380, %v2376
      %v2382 = vrot.slane %v2381, 4
      %v2384 = vshll.u32 %v2024, 16
      %v2386 = vrot.slane %v2384, 5
      %v2387 = vsel %vm223, %v2382, %v2386
      %v2389 = vshrl.u32 %v2025, 16
      %v2391 = vrot.slane %v2389, 4
      %v2392 = vshll.u32 %v2025, 16
      %v2394 = vrot.slane %v2392, 5
      %v2395 = vor.u32 %v2391, %v2394
      %v2396 = vrot.slane %v2395, 4
      %v2398 = vshll.u32 %v2026, 16
      %v2400 = vrot.slane %v2398, 5
      %v2401 = vsel %vm223, %v2396, %v2400
      %v2402 = vshrl.u32 %v2026, 16
      %v2404 = vrot.slane %v2402, 4
      %v2405 = vor.u32 %v2404, %v2400
      %v2406 = vrot.slane %v2405, 4
      %v2408 = vshll.u32 %v2027, 16
      %v2410 = vrot.slane %v2408, 5
      %v2411 = vsel %vm223, %v2406, %v2410
      %s2412 = scalar_lea.vmem %s1, 8
      %v2413 = vld [vmem:[%s2412] sm:$0x3]
      %v2414 = vunpack.c.l.b16 %v2041
      %v2415 = vunpack.c.l.b16 %v2051
      %v2416 = vunpack.c.l.b16 %v2065
      %v2417 = vunpack.c.l.b16 %v2075
      %v2418 = vunpack.c.l.b16 %v2089
      %v2419 = vunpack.c.l.b16 %v2099
      %v2420 = vunpack.c.l.b16 %v2113
      %v2421 = vunpack.c.l.b16 %v2123
      %v2422 = vunpack.c.l.b16 %v2137
      %v2423 = vunpack.c.l.b16 %v2147
      %v2424 = vunpack.c.l.b16 %v2161
      %v2425 = vunpack.c.l.b16 %v2171
      %v2426 = vunpack.c.l.b16 %v2185
      %v2427 = vunpack.c.l.b16 %v2195
      %v2428 = vunpack.c.l.b16 %v2209
      %v2429 = vunpack.c.l.b16 %v2219
      %v2430 = vunpack.c.l.b16 %v2233
      %v2431 = vunpack.c.l.b16 %v2243
      %v2432 = vunpack.c.l.b16 %v2257
      %v2433 = vunpack.c.l.b16 %v2267
      %v2434 = vunpack.c.l.b16 %v2281
      %v2435 = vunpack.c.l.b16 %v2291
      %v2436 = vunpack.c.l.b16 %v2305
      %v2437 = vunpack.c.l.b16 %v2315
      %v2438 = vunpack.c.l.b16 %v2329
      %v2439 = vunpack.c.l.b16 %v2339
      %v2440 = vunpack.c.l.b16 %v2353
      %v2441 = vunpack.c.l.b16 %v2363
      %v2442 = vunpack.c.l.b16 %v2377
      %v2443 = vunpack.c.l.b16 %v2387
      %v2444 = vunpack.c.l.b16 %v2401
      %v2445 = vunpack.c.l.b16 %v2411
      %v2446 = vpack.c.b16 %v2415, %v2414
      %v2447 = vpack.c.b16 %v2417, %v2416
      %v2448 = vpack.c.b16 %v2419, %v2418
      %v2449 = vpack.c.b16 %v2421, %v2420
      %v2450 = vpack.c.b16 %v2423, %v2422
      %v2451 = vpack.c.b16 %v2425, %v2424
      %v2452 = vpack.c.b16 %v2427, %v2426
      %v2453 = vpack.c.b16 %v2429, %v2428
      %v2454 = vpack.c.b16 %v2431, %v2430
      %v2455 = vpack.c.b16 %v2433, %v2432
      %v2456 = vpack.c.b16 %v2435, %v2434
      %v2457 = vpack.c.b16 %v2437, %v2436
      %v2458 = vpack.c.b16 %v2439, %v2438
      %v2459 = vpack.c.b16 %v2441, %v2440
      %v2460 = vpack.c.b16 %v2443, %v2442
      %v2461 = vpack.c.b16 %v2445, %v2444
      %v2463 = vsel %vm658, %v2446, 0
      %v2466 = vsel %vm658, %v2447, 0
      %v2469 = vsel %vm658, %v2448, 0
      %v2472 = vsel %vm658, %v2449, 0
      %v2475 = vsel %vm658, %v2450, 0
      %v2478 = vsel %vm658, %v2451, 0
      %v2481 = vsel %vm658, %v2452, 0
      %v2484 = vsel %vm658, %v2453, 0
      %v2487 = vsel %vm658, %v2454, 0
      %v2490 = vsel %vm658, %v2455, 0
      %v2493 = vsel %vm658, %v2456, 0
      %v2496 = vsel %vm658, %v2457, 0
      %v2499 = vsel %vm658, %v2458, 0
      %v2502 = vsel %vm658, %v2459, 0
      %v2505 = vsel %vm658, %v2460, 0
      %v2508 = vsel %vm658, %v2461, 0
      %v2511 = vsel %vm707, %v2413, 0
      %2513 = vmatprep.subr.bf16.mxu0 0
      %2514 = vmatpush1.bf16.msra.mxu0 %v2511
      %2515 = vmatprep.subr.bf16.mxu0 0
      %2516 = vmatpush1.bf16.msra.mxu0 0
      %2517 = vmatprep.subr.bf16.mxu0 0
      %2518 = vmatpush1.bf16.msra.mxu0 0
      %2519 = vmatprep.subr.bf16.mxu0 0
      %2520 = vmatpush1.bf16.msra.mxu0 0
      %2521 = vmatprep.subr.bf16.mxu0 0
      %2522 = vmatpush1.bf16.msra.mxu0 0
      %2523 = vmatprep.subr.bf16.mxu0 0
      %2524 = vmatpush1.bf16.msra.mxu0 0
      %2525 = vmatprep.subr.bf16.mxu0 0
      %2526 = vmatpush1.bf16.msra.mxu0 0
      %2527 = vmatprep.subr.bf16.mxu0 0
      %2528 = vmatpush1.bf16.msra.mxu0 0
      %2529 = vmatprep.subr.bf16.mxu0 0
      %2530 = vmatpush1.bf16.msra.mxu0 0
      %2531 = vmatprep.subr.bf16.mxu0 0
      %2532 = vmatpush1.bf16.msra.mxu0 0
      %2533 = vmatprep.subr.bf16.mxu0 0
      %2534 = vmatpush1.bf16.msra.mxu0 0
      %2535 = vmatprep.subr.bf16.mxu0 0
      %2536 = vmatpush1.bf16.msra.mxu0 0
      %2537 = vmatprep.subr.bf16.mxu0 0
      %2538 = vmatpush1.bf16.msra.mxu0 0
      %2539 = vmatprep.subr.bf16.mxu0 0
      %2540 = vmatpush1.bf16.msra.mxu0 0
      %2541 = vmatprep.subr.bf16.mxu0 0
      %2542 = vmatpush1.bf16.msra.mxu0 0
      %2543 = vmatprep.subr.bf16.mxu0 0
      %2544 = vmatpush1.bf16.msra.mxu0 0
      %2545 = vmatprep.mubr.bf16.mxu0 0
      %2546 = vmatmul.mubr.bf16.gmra.mrb[0].mxu0 %v2463
      %v2547 = vpop.f32.mrb[0].mxu0
      %v2548 = vadd.f32 0.0, %v2547
      %v2549 = vpop.f32.mrb[0].mxu0
      %v2550 = vpop.f32.mrb[0].mxu0
      %v2551 = vadd.f32 0.0, %v2550
      %v2552 = vpop.f32.mrb[0].mxu0
      %2553 = vmatprep.mubr.bf16.mxu0 0
      %2554 = vmatmul.mubr.bf16.gmra.mrb[0].mxu0 %v2466
      %v2555 = vpop.f32.mrb[0].mxu0
      %v2556 = vadd.f32 0.0, %v2555
      %v2557 = vpop.f32.mrb[0].mxu0
      %v2558 = vpop.f32.mrb[0].mxu0
      %v2559 = vadd.f32 0.0, %v2558
      %v2560 = vpop.f32.mrb[0].mxu0
      %2561 = vmatprep.mubr.bf16.mxu0 0
      %2562 = vmatmul.mubr.bf16.gmra.mrb[0].mxu0 %v2469
      %v2563 = vpop.f32.mrb[0].mxu0
      %v2564 = vadd.f32 0.0, %v2563
      %v2565 = vpop.f32.mrb[0].mxu0
      %v2566 = vpop.f32.mrb[0].mxu0
      %v2567 = vadd.f32 0.0, %v2566
      %v2568 = vpop.f32.mrb[0].mxu0
      %2569 = vmatprep.mubr.bf16.mxu0 0
      %2570 = vmatmul.mubr.bf16.gmra.mrb[0].mxu0 %v2472
      %v2571 = vpop.f32.mrb[0].mxu0
      %v2572 = vadd.f32 0.0, %v2571
      %v2573 = vpop.f32.mrb[0].mxu0
      %v2574 = vpop.f32.mrb[0].mxu0
      %v2575 = vadd.f32 0.0, %v2574
      %v2576 = vpop.f32.mrb[0].mxu0
      %2577 = vmatprep.mubr.bf16.mxu0 0
      %2578 = vmatmul.mubr.bf16.gmra.mrb[0].mxu0 %v2475
      %v2579 = vpop.f32.mrb[0].mxu0
      %v2580 = vadd.f32 0.0, %v2579
      %v2581 = vpop.f32.mrb[0].mxu0
      %v2582 = vpop.f32.mrb[0].mxu0
      %v2583 = vadd.f32 0.0, %v2582
      %v2584 = vpop.f32.mrb[0].mxu0
      %2585 = vmatprep.mubr.bf16.mxu0 0
      %2586 = vmatmul.mubr.bf16.gmra.mrb[0].mxu0 %v2478
      %v2587 = vpop.f32.mrb[0].mxu0
      %v2588 = vadd.f32 0.0, %v2587
      %v2589 = vpop.f32.mrb[0].mxu0
      %v2590 = vpop.f32.mrb[0].mxu0
      %v2591 = vadd.f32 0.0, %v2590
      %v2592 = vpop.f32.mrb[0].mxu0
      %2593 = vmatprep.mubr.bf16.mxu0 0
      %2594 = vmatmul.mubr.bf16.gmra.mrb[0].mxu0 %v2481
      %v2595 = vpop.f32.mrb[0].mxu0
      %v2596 = vadd.f32 0.0, %v2595
      %v2597 = vpop.f32.mrb[0].mxu0
      %v2598 = vpop.f32.mrb[0].mxu0
      %v2599 = vadd.f32 0.0, %v2598
      %v2600 = vpop.f32.mrb[0].mxu0
      %2601 = vmatprep.mubr.bf16.mxu0 0
      %2602 = vmatmul.mubr.bf16.gmra.mrb[0].mxu0 %v2484
      %v2603 = vpop.f32.mrb[0].mxu0
      %v2604 = vadd.f32 0.0, %v2603
      %v2605 = vpop.f32.mrb[0].mxu0
      %v2606 = vpop.f32.mrb[0].mxu0
      %v2607 = vadd.f32 0.0, %v2606
      %v2608 = vpop.f32.mrb[0].mxu0
      %2609 = vmatprep.mubr.bf16.mxu0 0
      %2610 = vmatmul.mubr.bf16.gmra.mrb[0].mxu0 %v2487
      %v2611 = vpop.f32.mrb[0].mxu0
      %v2612 = vadd.f32 0.0, %v2611
      %v2613 = vpop.f32.mrb[0].mxu0
      %v2614 = vpop.f32.mrb[0].mxu0
      %v2615 = vadd.f32 0.0, %v2614
      %v2616 = vpop.f32.mrb[0].mxu0
      %2617 = vmatprep.mubr.bf16.mxu0 0
      %2618 = vmatmul.mubr.bf16.gmra.mrb[0].mxu0 %v2490
      %v2619 = vpop.f32.mrb[0].mxu0
      %v2620 = vadd.f32 0.0, %v2619
      %v2621 = vpop.f32.mrb[0].mxu0
      %v2622 = vpop.f32.mrb[0].mxu0
      %v2623 = vadd.f32 0.0, %v2622
      %v2624 = vpop.f32.mrb[0].mxu0
      %2625 = vmatprep.mubr.bf16.mxu0 0
      %2626 = vmatmul.mubr.bf16.gmra.mrb[0].mxu0 %v2493
      %v2627 = vpop.f32.mrb[0].mxu0
      %v2628 = vadd.f32 0.0, %v2627
      %v2629 = vpop.f32.mrb[0].mxu0
      %v2630 = vpop.f32.mrb[0].mxu0
      %v2631 = vadd.f32 0.0, %v2630
      %v2632 = vpop.f32.mrb[0].mxu0
      %2633 = vmatprep.mubr.bf16.mxu0 0
      %2634 = vmatmul.mubr.bf16.gmra.mrb[0].mxu0 %v2496
      %v2635 = vpop.f32.mrb[0].mxu0
      %v2636 = vadd.f32 0.0, %v2635
      %v2637 = vpop.f32.mrb[0].mxu0
      %v2638 = vpop.f32.mrb[0].mxu0
      %v2639 = vadd.f32 0.0, %v2638
      %v2640 = vpop.f32.mrb[0].mxu0
      %2641 = vmatprep.mubr.bf16.mxu0 0
      %2642 = vmatmul.mubr.bf16.gmra.mrb[0].mxu0 %v2499
      %v2643 = vpop.f32.mrb[0].mxu0
      %v2644 = vadd.f32 0.0, %v2643
      %v2645 = vpop.f32.mrb[0].mxu0
      %v2646 = vpop.f32.mrb[0].mxu0
      %v2647 = vadd.f32 0.0, %v2646
      %v2648 = vpop.f32.mrb[0].mxu0
      %2649 = vmatprep.mubr.bf16.mxu0 0
      %2650 = vmatmul.mubr.bf16.gmra.mrb[0].mxu0 %v2502
      %v2651 = vpop.f32.mrb[0].mxu0
      %v2652 = vadd.f32 0.0, %v2651
      %v2653 = vpop.f32.mrb[0].mxu0
      %v2654 = vpop.f32.mrb[0].mxu0
      %v2655 = vadd.f32 0.0, %v2654
      %v2656 = vpop.f32.mrb[0].mxu0
      %2657 = vmatprep.mubr.bf16.mxu0 0
      %2658 = vmatmul.mubr.bf16.gmra.mrb[0].mxu0 %v2505
      %v2659 = vpop.f32.mrb[0].mxu0
      %v2660 = vadd.f32 0.0, %v2659
      %v2661 = vpop.f32.mrb[0].mxu0
      %v2662 = vpop.f32.mrb[0].mxu0
      %v2663 = vadd.f32 0.0, %v2662
      %v2664 = vpop.f32.mrb[0].mxu0
      %2665 = vmatprep.mubr.bf16.mxu0 0
      %2666 = vmatmul.mubr.bf16.gmra.mrb[0].mxu0 %v2508
      %v2667 = vpop.f32.mrb[0].mxu0
      %v2668 = vadd.f32 0.0, %v2667
      %v2669 = vpop.f32.mrb[0].mxu0
      %v2670 = vpop.f32.mrb[0].mxu0
      %v2671 = vadd.f32 0.0, %v2670
      %v2672 = vpop.f32.mrb[0].mxu0
      %2673 = vdwg.mxu0
      %v2674 = vadd.f32 %v1948, %v2548
      %v2675 = vadd.f32 %v1949, %v2551
      %v2676 = vadd.f32 %v1950, %v2556
      %v2677 = vadd.f32 %v1951, %v2559
      %v2678 = vadd.f32 %v1952, %v2564
      %v2679 = vadd.f32 %v1953, %v2567
      %v2680 = vadd.f32 %v1954, %v2572
      %v2681 = vadd.f32 %v1955, %v2575
      %v2682 = vadd.f32 %v1956, %v2580
      %v2683 = vadd.f32 %v1957, %v2583
      %v2684 = vadd.f32 %v1958, %v2588
      %v2685 = vadd.f32 %v1959, %v2591
      %v2686 = vadd.f32 %v1960, %v2596
      %v2687 = vadd.f32 %v1961, %v2599
      %v2688 = vadd.f32 %v1962, %v2604
      %v2689 = vadd.f32 %v1963, %v2607
      %v2690 = vadd.f32 %v1964, %v2612
      %v2691 = vadd.f32 %v1965, %v2615
      %v2692 = vadd.f32 %v1966, %v2620
      %v2693 = vadd.f32 %v1967, %v2623
      %v2694 = vadd.f32 %v1968, %v2628
      %v2695 = vadd.f32 %v1969, %v2631
      %v2696 = vadd.f32 %v1970, %v2636
      %v2697 = vadd.f32 %v1971, %v2639
      %v2698 = vadd.f32 %v1972, %v2644
      %v2699 = vadd.f32 %v1973, %v2647
      %v2700 = vadd.f32 %v1974, %v2652
      %v2701 = vadd.f32 %v1975, %v2655
      %v2702 = vadd.f32 %v1976, %v2660
      %v2703 = vadd.f32 %v1977, %v2663
      %v2704 = vadd.f32 %v1978, %v2668
      %v2705 = vadd.f32 %v1979, %v2671
      %v2706 = vld [vmem:[%s1621] sm:$0xe]
      %v2707 = vld [vmem:[%s1621 + $0xc] sm:$0xe]
      %v2708 = vld [vmem:[%s1621 + $0x18] sm:$0xe]
      %v2709 = vld [vmem:[%s1621 + $0x24] sm:$0xe]
      %v2710 = vld [vmem:[%s1621 + $0x30] sm:$0xe]
      %v2711 = vld [vmem:[%s1621 + $0x3c] sm:$0xe]
      %v2712 = vld [vmem:[%s1621 + $0x48] sm:$0xe]
      %v2713 = vld [vmem:[%s1621 + $0x54] sm:$0xe]
      %v2714 = vld [vmem:[%s1621 + $0x60] sm:$0xe]
      %v2715 = vld [vmem:[%s1621 + $0x6c] sm:$0xe]
      %v2716 = vld [vmem:[%s1621 + $0x78] sm:$0xe]
      %v2717 = vld [vmem:[%s1621 + $0x84] sm:$0xe]
      %v2718 = vld [vmem:[%s1621 + $0x90] sm:$0xe]
      %v2719 = vld [vmem:[%s1621 + $0x9c] sm:$0xe]
      %v2720 = vld [vmem:[%s1621 + $0xa8] sm:$0xe]
      %v2721 = vld [vmem:[%s1621 + $0xb4] sm:$0xe]
      %v2770 = vrot.slane %v2706, 5
      %v2771 = vrot.slane %v2770, 4
      %v2772 = vrot.slane %v1981, 5
      %v2773 = vsel %vm1214, %v2771, %v2772
      %v2774 = vrot.slane %v2772, 4
      %v2775 = vrot.slane %v1982, 5
      %v2776 = vsel %vm1214, %v2774, %v2775
      %v2777 = vrot.slane %v2707, 5
      %v2778 = vrot.slane %v2777, 4
      %v2779 = vrot.slane %v1984, 5
      %v2780 = vsel %vm1214, %v2778, %v2779
      %v2781 = vrot.slane %v2779, 4
      %v2782 = vrot.slane %v1985, 5
      %v2783 = vsel %vm1214, %v2781, %v2782
      %v2784 = vrot.slane %v2708, 5
      %v2785 = vrot.slane %v2784, 4
      %v2786 = vrot.slane %v1987, 5
      %v2787 = vsel %vm1214, %v2785, %v2786
      %v2788 = vrot.slane %v2786, 4
      %v2789 = vrot.slane %v1988, 5
      %v2790 = vsel %vm1214, %v2788, %v2789
      %v2791 = vrot.slane %v2709, 5
      %v2792 = vrot.slane %v2791, 4
      %v2793 = vrot.slane %v1990, 5
      %v2794 = vsel %vm1214, %v2792, %v2793
      %v2795 = vrot.slane %v2793, 4
      %v2796 = vrot.slane %v1991, 5
      %v2797 = vsel %vm1214, %v2795, %v2796
      %v2798 = vrot.slane %v2710, 5
      %v2799 = vrot.slane %v2798, 4
      %v2800 = vrot.slane %v1993, 5
      %v2801 = vsel %vm1214, %v2799, %v2800
      %v2802 = vrot.slane %v2800, 4
      %v2803 = vrot.slane %v1994, 5
      %v2804 = vsel %vm1214, %v2802, %v2803
      %v2805 = vrot.slane %v2711, 5
      %v2806 = vrot.slane %v2805, 4
      %v2807 = vrot.slane %v1996, 5
      %v2808 = vsel %vm1214, %v2806, %v2807
      %v2809 = vrot.slane %v2807, 4
      %v2810 = vrot.slane %v1997, 5
      %v2811 = vsel %vm1214, %v2809, %v2810
      %v2812 = vrot.slane %v2712, 5
      %v2813 = vrot.slane %v2812, 4
      %v2814 = vrot.slane %v1999, 5
      %v2815 = vsel %vm1214, %v2813, %v2814
      %v2816 = vrot.slane %v2814, 4
      %v2817 = vrot.slane %v2000, 5
      %v2818 = vsel %vm1214, %v2816, %v2817
      %v2819 = vrot.slane %v2713, 5
      %v2820 = vrot.slane %v2819, 4
      %v2821 = vrot.slane %v2002, 5
      %v2822 = vsel %vm1214, %v2820, %v2821
      %v2823 = vrot.slane %v2821, 4
      %v2824 = vrot.slane %v2003, 5
      %v2825 = vsel %vm1214, %v2823, %v2824
      %v2826 = vrot.slane %v2714, 5
      %v2827 = vrot.slane %v2826, 4
      %v2828 = vrot.slane %v2005, 5
      %v2829 = vsel %vm1214, %v2827, %v2828
      %v2830 = vrot.slane %v2828, 4
      %v2831 = vrot.slane %v2006, 5
      %v2832 = vsel %vm1214, %v2830, %v2831
      %v2833 = vrot.slane %v2715, 5
      %v2834 = vrot.slane %v2833, 4
      %v2835 = vrot.slane %v2008, 5
      %v2836 = vsel %vm1214, %v2834, %v2835
      %v2837 = vrot.slane %v2835, 4
      %v2838 = vrot.slane %v2009, 5
      %v2839 = vsel %vm1214, %v2837, %v2838
      %v2840 = vrot.slane %v2716, 5
      %v2841 = vrot.slane %v2840, 4
      %v2842 = vrot.slane %v2011, 5
      %v2843 = vsel %vm1214, %v2841, %v2842
      %v2844 = vrot.slane %v2842, 4
      %v2845 = vrot.slane %v2012, 5
      %v2846 = vsel %vm1214, %v2844, %v2845
      %v2847 = vrot.slane %v2717, 5
      %v2848 = vrot.slane %v2847, 4
      %v2849 = vrot.slane %v2014, 5
      %v2850 = vsel %vm1214, %v2848, %v2849
      %v2851 = vrot.slane %v2849, 4
      %v2852 = vrot.slane %v2015, 5
      %v2853 = vsel %vm1214, %v2851, %v2852
      %v2854 = vrot.slane %v2718, 5
      %v2855 = vrot.slane %v2854, 4
      %v2856 = vrot.slane %v2017, 5
      %v2857 = vsel %vm1214, %v2855, %v2856
      %v2858 = vrot.slane %v2856, 4
      %v2859 = vrot.slane %v2018, 5
      %v2860 = vsel %vm1214, %v2858, %v2859
      %v2861 = vrot.slane %v2719, 5
      %v2862 = vrot.slane %v2861, 4
      %v2863 = vrot.slane %v2020, 5
      %v2864 = vsel %vm1214, %v2862, %v2863
      %v2865 = vrot.slane %v2863, 4
      %v2866 = vrot.slane %v2021, 5
      %v2867 = vsel %vm1214, %v2865, %v2866
      %v2868 = vrot.slane %v2720, 5
      %v2869 = vrot.slane %v2868, 4
      %v2870 = vrot.slane %v2023, 5
      %v2871 = vsel %vm1214, %v2869, %v2870
      %v2872 = vrot.slane %v2870, 4
      %v2873 = vrot.slane %v2024, 5
      %v2874 = vsel %vm1214, %v2872, %v2873
      %v2875 = vrot.slane %v2721, 5
      %v2876 = vrot.slane %v2875, 4
      %v2877 = vrot.slane %v2026, 5
      %v2878 = vsel %vm1214, %v2876, %v2877
      %v2879 = vrot.slane %v2877, 4
      %v2880 = vrot.slane %v2027, 5
      %v2881 = vsel %vm1214, %v2879, %v2880
      %s2882 = scalar_lea.vmem %s1, 10
      %v2883 = vld [vmem:[%s2882] sm:$0x3]
      %v2884 = vunpack.c.l.b16 %v2773
      %v2885 = vunpack.c.l.b16 %v2776
      %v2886 = vunpack.c.l.b16 %v2780
      %v2887 = vunpack.c.l.b16 %v2783
      %v2888 = vunpack.c.l.b16 %v2787
      %v2889 = vunpack.c.l.b16 %v2790
      %v2890 = vunpack.c.l.b16 %v2794
      %v2891 = vunpack.c.l.b16 %v2797
      %v2892 = vunpack.c.l.b16 %v2801
      %v2893 = vunpack.c.l.b16 %v2804
      %v2894 = vunpack.c.l.b16 %v2808
      %v2895 = vunpack.c.l.b16 %v2811
      %v2896 = vunpack.c.l.b16 %v2815
      %v2897 = vunpack.c.l.b16 %v2818
      %v2898 = vunpack.c.l.b16 %v2822
      %v2899 = vunpack.c.l.b16 %v2825
      %v2900 = vunpack.c.l.b16 %v2829
      %v2901 = vunpack.c.l.b16 %v2832
      %v2902 = vunpack.c.l.b16 %v2836
      %v2903 = vunpack.c.l.b16 %v2839
      %v2904 = vunpack.c.l.b16 %v2843
      %v2905 = vunpack.c.l.b16 %v2846
      %v2906 = vunpack.c.l.b16 %v2850
      %v2907 = vunpack.c.l.b16 %v2853
      %v2908 = vunpack.c.l.b16 %v2857
      %v2909 = vunpack.c.l.b16 %v2860
      %v2910 = vunpack.c.l.b16 %v2864
      %v2911 = vunpack.c.l.b16 %v2867
      %v2912 = vunpack.c.l.b16 %v2871
      %v2913 = vunpack.c.l.b16 %v2874
      %v2914 = vunpack.c.l.b16 %v2878
      %v2915 = vunpack.c.l.b16 %v2881
      %v2916 = vpack.c.b16 %v2885, %v2884
      %v2917 = vpack.c.b16 %v2887, %v2886
      %v2918 = vpack.c.b16 %v2889, %v2888
      %v2919 = vpack.c.b16 %v2891, %v2890
      %v2920 = vpack.c.b16 %v2893, %v2892
      %v2921 = vpack.c.b16 %v2895, %v2894
      %v2922 = vpack.c.b16 %v2897, %v2896
      %v2923 = vpack.c.b16 %v2899, %v2898
      %v2924 = vpack.c.b16 %v2901, %v2900
      %v2925 = vpack.c.b16 %v2903, %v2902
      %v2926 = vpack.c.b16 %v2905, %v2904
      %v2927 = vpack.c.b16 %v2907, %v2906
      %v2928 = vpack.c.b16 %v2909, %v2908
      %v2929 = vpack.c.b16 %v2911, %v2910
      %v2930 = vpack.c.b16 %v2913, %v2912
      %v2931 = vpack.c.b16 %v2915, %v2914
      %v2933 = vsel %vm658, %v2916, 0
      %v2936 = vsel %vm658, %v2917, 0
      %v2939 = vsel %vm658, %v2918, 0
      %v2942 = vsel %vm658, %v2919, 0
      %v2945 = vsel %vm658, %v2920, 0
      %v2948 = vsel %vm658, %v2921, 0
      %v2951 = vsel %vm658, %v2922, 0
      %v2954 = vsel %vm658, %v2923, 0
      %v2957 = vsel %vm658, %v2924, 0
      %v2960 = vsel %vm658, %v2925, 0
      %v2963 = vsel %vm658, %v2926, 0
      %v2966 = vsel %vm658, %v2927, 0
      %v2969 = vsel %vm658, %v2928, 0
      %v2972 = vsel %vm658, %v2929, 0
      %v2975 = vsel %vm658, %v2930, 0
      %v2978 = vsel %vm658, %v2931, 0
      %v2981 = vsel %vm707, %v2883, 0
      %2983 = vmatprep.subr.bf16.mxu0 0
      %2984 = vmatpush1.bf16.msra.mxu0 %v2981
      %2985 = vmatprep.subr.bf16.mxu0 0
      %2986 = vmatpush1.bf16.msra.mxu0 0
      %2987 = vmatprep.subr.bf16.mxu0 0
      %2988 = vmatpush1.bf16.msra.mxu0 0
      %2989 = vmatprep.subr.bf16.mxu0 0
      %2990 = vmatpush1.bf16.msra.mxu0 0
      %2991 = vmatprep.subr.bf16.mxu0 0
      %2992 = vmatpush1.bf16.msra.mxu0 0
      %2993 = vmatprep.subr.bf16.mxu0 0
      %2994 = vmatpush1.bf16.msra.mxu0 0
      %2995 = vmatprep.subr.bf16.mxu0 0
      %2996 = vmatpush1.bf16.msra.mxu0 0
      %2997 = vmatprep.subr.bf16.mxu0 0
      %2998 = vmatpush1.bf16.msra.mxu0 0
      %2999 = vmatprep.subr.bf16.mxu0 0
      %3000 = vmatpush1.bf16.msra.mxu0 0
      %3001 = vmatprep.subr.bf16.mxu0 0
      %3002 = vmatpush1.bf16.msra.mxu0 0
      %3003 = vmatprep.subr.bf16.mxu0 0
      %3004 = vmatpush1.bf16.msra.mxu0 0
      %3005 = vmatprep.subr.bf16.mxu0 0
      %3006 = vmatpush1.bf16.msra.mxu0 0
      %3007 = vmatprep.subr.bf16.mxu0 0
      %3008 = vmatpush1.bf16.msra.mxu0 0
      %3009 = vmatprep.subr.bf16.mxu0 0
      %3010 = vmatpush1.bf16.msra.mxu0 0
      %3011 = vmatprep.subr.bf16.mxu0 0
      %3012 = vmatpush1.bf16.msra.mxu0 0
      %3013 = vmatprep.subr.bf16.mxu0 0
      %3014 = vmatpush1.bf16.msra.mxu0 0
      %3015 = vmatprep.mubr.bf16.mxu0 0
      %3016 = vmatmul.mubr.bf16.gmra.mrb[0].mxu0 %v2933
      %v3017 = vpop.f32.mrb[0].mxu0
      %v3018 = vadd.f32 0.0, %v3017
      %v3019 = vpop.f32.mrb[0].mxu0
      %v3020 = vpop.f32.mrb[0].mxu0
      %v3021 = vadd.f32 0.0, %v3020
      %v3022 = vpop.f32.mrb[0].mxu0
      %3023 = vmatprep.mubr.bf16.mxu0 0
      %3024 = vmatmul.mubr.bf16.gmra.mrb[0].mxu0 %v2936
      %v3025 = vpop.f32.mrb[0].mxu0
      %v3026 = vadd.f32 0.0, %v3025
      %v3027 = vpop.f32.mrb[0].mxu0
      %v3028 = vpop.f32.mrb[0].mxu0
      %v3029 = vadd.f32 0.0, %v3028
      %v3030 = vpop.f32.mrb[0].mxu0
      %3031 = vmatprep.mubr.bf16.mxu0 0
      %3032 = vmatmul.mubr.bf16.gmra.mrb[0].mxu0 %v2939
      %v3033 = vpop.f32.mrb[0].mxu0
      %v3034 = vadd.f32 0.0, %v3033
      %v3035 = vpop.f32.mrb[0].mxu0
      %v3036 = vpop.f32.mrb[0].mxu0
      %v3037 = vadd.f32 0.0, %v3036
      %v3038 = vpop.f32.mrb[0].mxu0
      %3039 = vmatprep.mubr.bf16.mxu0 0
      %3040 = vmatmul.mubr.bf16.gmra.mrb[0].mxu0 %v2942
      %v3041 = vpop.f32.mrb[0].mxu0
      %v3042 = vadd.f32 0.0, %v3041
      %v3043 = vpop.f32.mrb[0].mxu0
      %v3044 = vpop.f32.mrb[0].mxu0
      %v3045 = vadd.f32 0.0, %v3044
      %v3046 = vpop.f32.mrb[0].mxu0
      %3047 = vmatprep.mubr.bf16.mxu0 0
      %3048 = vmatmul.mubr.bf16.gmra.mrb[0].mxu0 %v2945
      %v3049 = vpop.f32.mrb[0].mxu0
      %v3050 = vadd.f32 0.0, %v3049
      %v3051 = vpop.f32.mrb[0].mxu0
      %v3052 = vpop.f32.mrb[0].mxu0
      %v3053 = vadd.f32 0.0, %v3052
      %v3054 = vpop.f32.mrb[0].mxu0
      %3055 = vmatprep.mubr.bf16.mxu0 0
      %3056 = vmatmul.mubr.bf16.gmra.mrb[0].mxu0 %v2948
      %v3057 = vpop.f32.mrb[0].mxu0
      %v3058 = vadd.f32 0.0, %v3057
      %v3059 = vpop.f32.mrb[0].mxu0
      %v3060 = vpop.f32.mrb[0].mxu0
      %v3061 = vadd.f32 0.0, %v3060
      %v3062 = vpop.f32.mrb[0].mxu0
      %3063 = vmatprep.mubr.bf16.mxu0 0
      %3064 = vmatmul.mubr.bf16.gmra.mrb[0].mxu0 %v2951
      %v3065 = vpop.f32.mrb[0].mxu0
      %v3066 = vadd.f32 0.0, %v3065
      %v3067 = vpop.f32.mrb[0].mxu0
      %v3068 = vpop.f32.mrb[0].mxu0
      %v3069 = vadd.f32 0.0, %v3068
      %v3070 = vpop.f32.mrb[0].mxu0
      %3071 = vmatprep.mubr.bf16.mxu0 0
      %3072 = vmatmul.mubr.bf16.gmra.mrb[0].mxu0 %v2954
      %v3073 = vpop.f32.mrb[0].mxu0
      %v3074 = vadd.f32 0.0, %v3073
      %v3075 = vpop.f32.mrb[0].mxu0
      %v3076 = vpop.f32.mrb[0].mxu0
      %v3077 = vadd.f32 0.0, %v3076
      %v3078 = vpop.f32.mrb[0].mxu0
      %3079 = vmatprep.mubr.bf16.mxu0 0
      %3080 = vmatmul.mubr.bf16.gmra.mrb[0].mxu0 %v2957
      %v3081 = vpop.f32.mrb[0].mxu0
      %v3082 = vadd.f32 0.0, %v3081
      %v3083 = vpop.f32.mrb[0].mxu0
      %v3084 = vpop.f32.mrb[0].mxu0
      %v3085 = vadd.f32 0.0, %v3084
      %v3086 = vpop.f32.mrb[0].mxu0
      %3087 = vmatprep.mubr.bf16.mxu0 0
      %3088 = vmatmul.mubr.bf16.gmra.mrb[0].mxu0 %v2960
      %v3089 = vpop.f32.mrb[0].mxu0
      %v3090 = vadd.f32 0.0, %v3089
      %v3091 = vpop.f32.mrb[0].mxu0
      %v3092 = vpop.f32.mrb[0].mxu0
      %v3093 = vadd.f32 0.0, %v3092
      %v3094 = vpop.f32.mrb[0].mxu0
      %3095 = vmatprep.mubr.bf16.mxu0 0
      %3096 = vmatmul.mubr.bf16.gmra.mrb[0].mxu0 %v2963
      %v3097 = vpop.f32.mrb[0].mxu0
      %v3098 = vadd.f32 0.0, %v3097
      %v3099 = vpop.f32.mrb[0].mxu0
      %v3100 = vpop.f32.mrb[0].mxu0
      %v3101 = vadd.f32 0.0, %v3100
      %v3102 = vpop.f32.mrb[0].mxu0
      %3103 = vmatprep.mubr.bf16.mxu0 0
      %3104 = vmatmul.mubr.bf16.gmra.mrb[0].mxu0 %v2966
      %v3105 = vpop.f32.mrb[0].mxu0
      %v3106 = vadd.f32 0.0, %v3105
      %v3107 = vpop.f32.mrb[0].mxu0
      %v3108 = vpop.f32.mrb[0].mxu0
      %v3109 = vadd.f32 0.0, %v3108
      %v3110 = vpop.f32.mrb[0].mxu0
      %3111 = vmatprep.mubr.bf16.mxu0 0
      %3112 = vmatmul.mubr.bf16.gmra.mrb[0].mxu0 %v2969
      %v3113 = vpop.f32.mrb[0].mxu0
      %v3114 = vadd.f32 0.0, %v3113
      %v3115 = vpop.f32.mrb[0].mxu0
      %v3116 = vpop.f32.mrb[0].mxu0
      %v3117 = vadd.f32 0.0, %v3116
      %v3118 = vpop.f32.mrb[0].mxu0
      %3119 = vmatprep.mubr.bf16.mxu0 0
      %3120 = vmatmul.mubr.bf16.gmra.mrb[0].mxu0 %v2972
      %v3121 = vpop.f32.mrb[0].mxu0
      %v3122 = vadd.f32 0.0, %v3121
      %v3123 = vpop.f32.mrb[0].mxu0
      %v3124 = vpop.f32.mrb[0].mxu0
      %v3125 = vadd.f32 0.0, %v3124
      %v3126 = vpop.f32.mrb[0].mxu0
      %3127 = vmatprep.mubr.bf16.mxu0 0
      %3128 = vmatmul.mubr.bf16.gmra.mrb[0].mxu0 %v2975
      %v3129 = vpop.f32.mrb[0].mxu0
      %v3130 = vadd.f32 0.0, %v3129
      %v3131 = vpop.f32.mrb[0].mxu0
      %v3132 = vpop.f32.mrb[0].mxu0
      %v3133 = vadd.f32 0.0, %v3132
      %v3134 = vpop.f32.mrb[0].mxu0
      %3135 = vmatprep.mubr.bf16.mxu0 0
      %3136 = vmatmul.mubr.bf16.gmra.mrb[0].mxu0 %v2978
      %v3137 = vpop.f32.mrb[0].mxu0
      %v3138 = vadd.f32 0.0, %v3137
      %v3139 = vpop.f32.mrb[0].mxu0
      %v3140 = vpop.f32.mrb[0].mxu0
      %v3141 = vadd.f32 0.0, %v3140
      %v3142 = vpop.f32.mrb[0].mxu0
      %3143 = vdwg.mxu0
      %v3144 = vadd.f32 %v2674, %v3018
      %v3145 = vadd.f32 %v2675, %v3021
      %v3146 = vadd.f32 %v2676, %v3026
      %v3147 = vadd.f32 %v2677, %v3029
      %v3148 = vadd.f32 %v2678, %v3034
      %v3149 = vadd.f32 %v2679, %v3037
      %v3150 = vadd.f32 %v2680, %v3042
      %v3151 = vadd.f32 %v2681, %v3045
      %v3152 = vadd.f32 %v2682, %v3050
      %v3153 = vadd.f32 %v2683, %v3053
      %v3154 = vadd.f32 %v2684, %v3058
      %v3155 = vadd.f32 %v2685, %v3061
      %v3156 = vadd.f32 %v2686, %v3066
      %v3157 = vadd.f32 %v2687, %v3069
      %v3158 = vadd.f32 %v2688, %v3074
      %v3159 = vadd.f32 %v2689, %v3077
      %v3160 = vadd.f32 %v2690, %v3082
      %v3161 = vadd.f32 %v2691, %v3085
      %v3162 = vadd.f32 %v2692, %v3090
      %v3163 = vadd.f32 %v2693, %v3093
      %v3164 = vadd.f32 %v2694, %v3098
      %v3165 = vadd.f32 %v2695, %v3101
      %v3166 = vadd.f32 %v2696, %v3106
      %v3167 = vadd.f32 %v2697, %v3109
      %v3168 = vadd.f32 %v2698, %v3114
      %v3169 = vadd.f32 %v2699, %v3117
      %v3170 = vadd.f32 %v2700, %v3122
      %v3171 = vadd.f32 %v2701, %v3125
      %v3172 = vadd.f32 %v2702, %v3130
      %v3173 = vadd.f32 %v2703, %v3133
      %v3174 = vadd.f32 %v2704, %v3138
      %v3175 = vadd.f32 %v2705, %v3141
      %s3176 = scalar_lea.vmem %s165, 24
      %v3177 = vld [vmem:[%s3176] sm:$0xf]
      %v3178 = vld [vmem:[%s3176 + $0x4] sm:$0xf]
      %v3179 = vld [vmem:[%s3176 + $0xc] sm:$0xf]
      %v3180 = vld [vmem:[%s3176 + $0x10] sm:$0xf]
      %v3181 = vld [vmem:[%s3176 + $0x18] sm:$0xf]
      %v3182 = vld [vmem:[%s3176 + $0x1c] sm:$0xf]
      %v3183 = vld [vmem:[%s3176 + $0x24] sm:$0xf]
      %v3184 = vld [vmem:[%s3176 + $0x28] sm:$0xf]
      %v3185 = vld [vmem:[%s3176 + $0x30] sm:$0xf]
      %v3186 = vld [vmem:[%s3176 + $0x34] sm:$0xf]
      %v3187 = vld [vmem:[%s3176 + $0x3c] sm:$0xf]
      %v3188 = vld [vmem:[%s3176 + $0x40] sm:$0xf]
      %v3189 = vld [vmem:[%s3176 + $0x48] sm:$0xf]
      %v3190 = vld [vmem:[%s3176 + $0x4c] sm:$0xf]
      %v3191 = vld [vmem:[%s3176 + $0x54] sm:$0xf]
      %v3192 = vld [vmem:[%s3176 + $0x58] sm:$0xf]
      %v3193 = vld [vmem:[%s3176 + $0x60] sm:$0xf]
      %v3194 = vld [vmem:[%s3176 + $0x64] sm:$0xf]
      %v3195 = vld [vmem:[%s3176 + $0x6c] sm:$0xf]
      %v3196 = vld [vmem:[%s3176 + $0x70] sm:$0xf]
      %v3197 = vld [vmem:[%s3176 + $0x78] sm:$0xf]
      %v3198 = vld [vmem:[%s3176 + $0x7c] sm:$0xf]
      %v3199 = vld [vmem:[%s3176 + $0x84] sm:$0xf]
      %v3200 = vld [vmem:[%s3176 + $0x88] sm:$0xf]
      %v3201 = vld [vmem:[%s3176 + $0x90] sm:$0xf]
      %v3202 = vld [vmem:[%s3176 + $0x94] sm:$0xf]
      %v3203 = vld [vmem:[%s3176 + $0x9c] sm:$0xf]
      %v3204 = vld [vmem:[%s3176 + $0xa0] sm:$0xf]
      %v3205 = vld [vmem:[%s3176 + $0xa8] sm:$0xf]
      %v3206 = vld [vmem:[%s3176 + $0xac] sm:$0xf]
      %v3207 = vld [vmem:[%s3176 + $0xb4] sm:$0xf]
      %v3208 = vld [vmem:[%s3176 + $0xb8] sm:$0xf]
      %s3209 = scalar_lea.vmem %s1, 12
      %v3210 = vld [vmem:[%s3209] sm:$0x3]
      %v3243 = vunpack.c.l.b16 %v3177
      %v3244 = vunpack.c.l.b16 %v3178
      %v3245 = vunpack.c.l.b16 %v3179
      %v3246 = vunpack.c.l.b16 %v3180
      %v3247 = vunpack.c.l.b16 %v3181
      %v3248 = vunpack.c.l.b16 %v3182
      %v3249 = vunpack.c.l.b16 %v3183
      %v3250 = vunpack.c.l.b16 %v3184
      %v3251 = vunpack.c.l.b16 %v3185
      %v3252 = vunpack.c.l.b16 %v3186
      %v3253 = vunpack.c.l.b16 %v3187
      %v3254 = vunpack.c.l.b16 %v3188
      %v3255 = vunpack.c.l.b16 %v3189
      %v3256 = vunpack.c.l.b16 %v3190
      %v3257 = vunpack.c.l.b16 %v3191
      %v3258 = vunpack.c.l.b16 %v3192
      %v3259 = vunpack.c.l.b16 %v3193
      %v3260 = vunpack.c.l.b16 %v3194
      %v3261 = vunpack.c.l.b16 %v3195
      %v3262 = vunpack.c.l.b16 %v3196
      %v3263 = vunpack.c.l.b16 %v3197
      %v3264 = vunpack.c.l.b16 %v3198
      %v3265 = vunpack.c.l.b16 %v3199
      %v3266 = vunpack.c.l.b16 %v3200
      %v3267 = vunpack.c.l.b16 %v3201
      %v3268 = vunpack.c.l.b16 %v3202
      %v3269 = vunpack.c.l.b16 %v3203
      %v3270 = vunpack.c.l.b16 %v3204
      %v3271 = vunpack.c.l.b16 %v3205
      %v3272 = vunpack.c.l.b16 %v3206
      %v3273 = vunpack.c.l.b16 %v3207
      %v3274 = vunpack.c.l.b16 %v3208
      %v3275 = vpack.c.b16 %v3244, %v3243
      %v3276 = vpack.c.b16 %v3246, %v3245
      %v3277 = vpack.c.b16 %v3248, %v3247
      %v3278 = vpack.c.b16 %v3250, %v3249
      %v3279 = vpack.c.b16 %v3252, %v3251
      %v3280 = vpack.c.b16 %v3254, %v3253
      %v3281 = vpack.c.b16 %v3256, %v3255
      %v3282 = vpack.c.b16 %v3258, %v3257
      %v3283 = vpack.c.b16 %v3260, %v3259
      %v3284 = vpack.c.b16 %v3262, %v3261
      %v3285 = vpack.c.b16 %v3264, %v3263
      %v3286 = vpack.c.b16 %v3266, %v3265
      %v3287 = vpack.c.b16 %v3268, %v3267
      %v3288 = vpack.c.b16 %v3270, %v3269
      %v3289 = vpack.c.b16 %v3272, %v3271
      %v3290 = vpack.c.b16 %v3274, %v3273
      %v3292 = vsel %vm658, %v3275, 0
      %v3295 = vsel %vm658, %v3276, 0
      %v3298 = vsel %vm658, %v3277, 0
      %v3301 = vsel %vm658, %v3278, 0
      %v3304 = vsel %vm658, %v3279, 0
      %v3307 = vsel %vm658, %v3280, 0
      %v3310 = vsel %vm658, %v3281, 0
      %v3313 = vsel %vm658, %v3282, 0
      %v3316 = vsel %vm658, %v3283, 0
      %v3319 = vsel %vm658, %v3284, 0
      %v3322 = vsel %vm658, %v3285, 0
      %v3325 = vsel %vm658, %v3286, 0
      %v3328 = vsel %vm658, %v3287, 0
      %v3331 = vsel %vm658, %v3288, 0
      %v3334 = vsel %vm658, %v3289, 0
      %v3337 = vsel %vm658, %v3290, 0
      %v3340 = vsel %vm707, %v3210, 0
      %3342 = vmatprep.subr.bf16.mxu0 0
      %3343 = vmatpush1.bf16.msra.mxu0 %v3340
      %3344 = vmatprep.subr.bf16.mxu0 0
      %3345 = vmatpush1.bf16.msra.mxu0 0
      %3346 = vmatprep.subr.bf16.mxu0 0
      %3347 = vmatpush1.bf16.msra.mxu0 0
      %3348 = vmatprep.subr.bf16.mxu0 0
      %3349 = vmatpush1.bf16.msra.mxu0 0
      %3350 = vmatprep.subr.bf16.mxu0 0
      %3351 = vmatpush1.bf16.msra.mxu0 0
      %3352 = vmatprep.subr.bf16.mxu0 0
      %3353 = vmatpush1.bf16.msra.mxu0 0
      %3354 = vmatprep.subr.bf16.mxu0 0
      %3355 = vmatpush1.bf16.msra.mxu0 0
      %3356 = vmatprep.subr.bf16.mxu0 0
      %3357 = vmatpush1.bf16.msra.mxu0 0
      %3358 = vmatprep.subr.bf16.mxu0 0
      %3359 = vmatpush1.bf16.msra.mxu0 0
      %3360 = vmatprep.subr.bf16.mxu0 0
      %3361 = vmatpush1.bf16.msra.mxu0 0
      %3362 = vmatprep.subr.bf16.mxu0 0
      %3363 = vmatpush1.bf16.msra.mxu0 0
      %3364 = vmatprep.subr.bf16.mxu0 0
      %3365 = vmatpush1.bf16.msra.mxu0 0
      %3366 = vmatprep.subr.bf16.mxu0 0
      %3367 = vmatpush1.bf16.msra.mxu0 0
      %3368 = vmatprep.subr.bf16.mxu0 0
      %3369 = vmatpush1.bf16.msra.mxu0 0
      %3370 = vmatprep.subr.bf16.mxu0 0
      %3371 = vmatpush1.bf16.msra.mxu0 0
      %3372 = vmatprep.subr.bf16.mxu0 0
      %3373 = vmatpush1.bf16.msra.mxu0 0
      %3374 = vmatprep.mubr.bf16.mxu0 0
      %3375 = vmatmul.mubr.bf16.gmra.mrb[0].mxu0 %v3292
      %v3376 = vpop.f32.mrb[0].mxu0
      %v3377 = vadd.f32 0.0, %v3376
      %v3378 = vpop.f32.mrb[0].mxu0
      %v3379 = vpop.f32.mrb[0].mxu0
      %v3380 = vadd.f32 0.0, %v3379
      %v3381 = vpop.f32.mrb[0].mxu0
      %3382 = vmatprep.mubr.bf16.mxu0 0
      %3383 = vmatmul.mubr.bf16.gmra.mrb[0].mxu0 %v3295
      %v3384 = vpop.f32.mrb[0].mxu0
      %v3385 = vadd.f32 0.0, %v3384
      %v3386 = vpop.f32.mrb[0].mxu0
      %v3387 = vpop.f32.mrb[0].mxu0
      %v3388 = vadd.f32 0.0, %v3387
      %v3389 = vpop.f32.mrb[0].mxu0
      %3390 = vmatprep.mubr.bf16.mxu0 0
      %3391 = vmatmul.mubr.bf16.gmra.mrb[0].mxu0 %v3298
      %v3392 = vpop.f32.mrb[0].mxu0
      %v3393 = vadd.f32 0.0, %v3392
      %v3394 = vpop.f32.mrb[0].mxu0
      %v3395 = vpop.f32.mrb[0].mxu0
      %v3396 = vadd.f32 0.0, %v3395
      %v3397 = vpop.f32.mrb[0].mxu0
      %3398 = vmatprep.mubr.bf16.mxu0 0
      %3399 = vmatmul.mubr.bf16.gmra.mrb[0].mxu0 %v3301
      %v3400 = vpop.f32.mrb[0].mxu0
      %v3401 = vadd.f32 0.0, %v3400
      %v3402 = vpop.f32.mrb[0].mxu0
      %v3403 = vpop.f32.mrb[0].mxu0
      %v3404 = vadd.f32 0.0, %v3403
      %v3405 = vpop.f32.mrb[0].mxu0
      %3406 = vmatprep.mubr.bf16.mxu0 0
      %3407 = vmatmul.mubr.bf16.gmra.mrb[0].mxu0 %v3304
      %v3408 = vpop.f32.mrb[0].mxu0
      %v3409 = vadd.f32 0.0, %v3408
      %v3410 = vpop.f32.mrb[0].mxu0
      %v3411 = vpop.f32.mrb[0].mxu0
      %v3412 = vadd.f32 0.0, %v3411
      %v3413 = vpop.f32.mrb[0].mxu0
      %3414 = vmatprep.mubr.bf16.mxu0 0
      %3415 = vmatmul.mubr.bf16.gmra.mrb[0].mxu0 %v3307
      %v3416 = vpop.f32.mrb[0].mxu0
      %v3417 = vadd.f32 0.0, %v3416
      %v3418 = vpop.f32.mrb[0].mxu0
      %v3419 = vpop.f32.mrb[0].mxu0
      %v3420 = vadd.f32 0.0, %v3419
      %v3421 = vpop.f32.mrb[0].mxu0
      %3422 = vmatprep.mubr.bf16.mxu0 0
      %3423 = vmatmul.mubr.bf16.gmra.mrb[0].mxu0 %v3310
      %v3424 = vpop.f32.mrb[0].mxu0
      %v3425 = vadd.f32 0.0, %v3424
      %v3426 = vpop.f32.mrb[0].mxu0
      %v3427 = vpop.f32.mrb[0].mxu0
      %v3428 = vadd.f32 0.0, %v3427
      %v3429 = vpop.f32.mrb[0].mxu0
      %3430 = vmatprep.mubr.bf16.mxu0 0
      %3431 = vmatmul.mubr.bf16.gmra.mrb[0].mxu0 %v3313
      %v3432 = vpop.f32.mrb[0].mxu0
      %v3433 = vadd.f32 0.0, %v3432
      %v3434 = vpop.f32.mrb[0].mxu0
      %v3435 = vpop.f32.mrb[0].mxu0
      %v3436 = vadd.f32 0.0, %v3435
      %v3437 = vpop.f32.mrb[0].mxu0
      %3438 = vmatprep.mubr.bf16.mxu0 0
      %3439 = vmatmul.mubr.bf16.gmra.mrb[0].mxu0 %v3316
      %v3440 = vpop.f32.mrb[0].mxu0
      %v3441 = vadd.f32 0.0, %v3440
      %v3442 = vpop.f32.mrb[0].mxu0
      %v3443 = vpop.f32.mrb[0].mxu0
      %v3444 = vadd.f32 0.0, %v3443
      %v3445 = vpop.f32.mrb[0].mxu0
      %3446 = vmatprep.mubr.bf16.mxu0 0
      %3447 = vmatmul.mubr.bf16.gmra.mrb[0].mxu0 %v3319
      %v3448 = vpop.f32.mrb[0].mxu0
      %v3449 = vadd.f32 0.0, %v3448
      %v3450 = vpop.f32.mrb[0].mxu0
      %v3451 = vpop.f32.mrb[0].mxu0
      %v3452 = vadd.f32 0.0, %v3451
      %v3453 = vpop.f32.mrb[0].mxu0
      %3454 = vmatprep.mubr.bf16.mxu0 0
      %3455 = vmatmul.mubr.bf16.gmra.mrb[0].mxu0 %v3322
      %v3456 = vpop.f32.mrb[0].mxu0
      %v3457 = vadd.f32 0.0, %v3456
      %v3458 = vpop.f32.mrb[0].mxu0
      %v3459 = vpop.f32.mrb[0].mxu0
      %v3460 = vadd.f32 0.0, %v3459
      %v3461 = vpop.f32.mrb[0].mxu0
      %3462 = vmatprep.mubr.bf16.mxu0 0
      %3463 = vmatmul.mubr.bf16.gmra.mrb[0].mxu0 %v3325
      %v3464 = vpop.f32.mrb[0].mxu0
      %v3465 = vadd.f32 0.0, %v3464
      %v3466 = vpop.f32.mrb[0].mxu0
      %v3467 = vpop.f32.mrb[0].mxu0
      %v3468 = vadd.f32 0.0, %v3467
      %v3469 = vpop.f32.mrb[0].mxu0
      %3470 = vmatprep.mubr.bf16.mxu0 0
      %3471 = vmatmul.mubr.bf16.gmra.mrb[0].mxu0 %v3328
      %v3472 = vpop.f32.mrb[0].mxu0
      %v3473 = vadd.f32 0.0, %v3472
      %v3474 = vpop.f32.mrb[0].mxu0
      %v3475 = vpop.f32.mrb[0].mxu0
      %v3476 = vadd.f32 0.0, %v3475
      %v3477 = vpop.f32.mrb[0].mxu0
      %3478 = vmatprep.mubr.bf16.mxu0 0
      %3479 = vmatmul.mubr.bf16.gmra.mrb[0].mxu0 %v3331
      %v3480 = vpop.f32.mrb[0].mxu0
      %v3481 = vadd.f32 0.0, %v3480
      %v3482 = vpop.f32.mrb[0].mxu0
      %v3483 = vpop.f32.mrb[0].mxu0
      %v3484 = vadd.f32 0.0, %v3483
      %v3485 = vpop.f32.mrb[0].mxu0
      %3486 = vmatprep.mubr.bf16.mxu0 0
      %3487 = vmatmul.mubr.bf16.gmra.mrb[0].mxu0 %v3334
      %v3488 = vpop.f32.mrb[0].mxu0
      %v3489 = vadd.f32 0.0, %v3488
      %v3490 = vpop.f32.mrb[0].mxu0
      %v3491 = vpop.f32.mrb[0].mxu0
      %v3492 = vadd.f32 0.0, %v3491
      %v3493 = vpop.f32.mrb[0].mxu0
      %3494 = vmatprep.mubr.bf16.mxu0 0
      %3495 = vmatmul.mubr.bf16.gmra.mrb[0].mxu0 %v3337
      %v3496 = vpop.f32.mrb[0].mxu0
      %v3497 = vadd.f32 0.0, %v3496
      %v3498 = vpop.f32.mrb[0].mxu0
      %v3499 = vpop.f32.mrb[0].mxu0
      %v3500 = vadd.f32 0.0, %v3499
      %v3501 = vpop.f32.mrb[0].mxu0
      %3502 = vdwg.mxu0
      %v3503 = vadd.f32 %v3144, %v3377
      %v3504 = vadd.f32 %v3145, %v3380
      %v3505 = vadd.f32 %v3146, %v3385
      %v3506 = vadd.f32 %v3147, %v3388
      %v3507 = vadd.f32 %v3148, %v3393
      %v3508 = vadd.f32 %v3149, %v3396
      %v3509 = vadd.f32 %v3150, %v3401
      %v3510 = vadd.f32 %v3151, %v3404
      %v3511 = vadd.f32 %v3152, %v3409
      %v3512 = vadd.f32 %v3153, %v3412
      %v3513 = vadd.f32 %v3154, %v3417
      %v3514 = vadd.f32 %v3155, %v3420
      %v3515 = vadd.f32 %v3156, %v3425
      %v3516 = vadd.f32 %v3157, %v3428
      %v3517 = vadd.f32 %v3158, %v3433
      %v3518 = vadd.f32 %v3159, %v3436
      %v3519 = vadd.f32 %v3160, %v3441
      %v3520 = vadd.f32 %v3161, %v3444
      %v3521 = vadd.f32 %v3162, %v3449
      %v3522 = vadd.f32 %v3163, %v3452
      %v3523 = vadd.f32 %v3164, %v3457
      %v3524 = vadd.f32 %v3165, %v3460
      %v3525 = vadd.f32 %v3166, %v3465
      %v3526 = vadd.f32 %v3167, %v3468
      %v3527 = vadd.f32 %v3168, %v3473
      %v3528 = vadd.f32 %v3169, %v3476
      %v3529 = vadd.f32 %v3170, %v3481
      %v3530 = vadd.f32 %v3171, %v3484
      %v3531 = vadd.f32 %v3172, %v3489
      %v3532 = vadd.f32 %v3173, %v3492
      %v3533 = vadd.f32 %v3174, %v3497
      %v3534 = vadd.f32 %v3175, %v3500
      %v3535 = vld [vmem:[%s3176] sm:$0xf]
      %v3536 = vld [vmem:[%s3176 + $0x4] sm:$0xf]
      %v3537 = vld [vmem:[%s3176 + $0x8] sm:$0x1]
      %v3538 = vld [vmem:[%s3176 + $0xc] sm:$0xf]
      %v3539 = vld [vmem:[%s3176 + $0x10] sm:$0xf]
      %v3540 = vld [vmem:[%s3176 + $0x14] sm:$0x1]
      %v3541 = vld [vmem:[%s3176 + $0x18] sm:$0xf]
      %v3542 = vld [vmem:[%s3176 + $0x1c] sm:$0xf]
      %v3543 = vld [vmem:[%s3176 + $0x20] sm:$0x1]
      %v3544 = vld [vmem:[%s3176 + $0x24] sm:$0xf]
      %v3545 = vld [vmem:[%s3176 + $0x28] sm:$0xf]
      %v3546 = vld [vmem:[%s3176 + $0x2c] sm:$0x1]
      %v3547 = vld [vmem:[%s3176 + $0x30] sm:$0xf]
      %v3548 = vld [vmem:[%s3176 + $0x34] sm:$0xf]
      %v3549 = vld [vmem:[%s3176 + $0x38] sm:$0x1]
      %v3550 = vld [vmem:[%s3176 + $0x3c] sm:$0xf]
      %v3551 = vld [vmem:[%s3176 + $0x40] sm:$0xf]
      %v3552 = vld [vmem:[%s3176 + $0x44] sm:$0x1]
      %v3553 = vld [vmem:[%s3176 + $0x48] sm:$0xf]
      %v3554 = vld [vmem:[%s3176 + $0x4c] sm:$0xf]
      %v3555 = vld [vmem:[%s3176 + $0x50] sm:$0x1]
      %v3556 = vld [vmem:[%s3176 + $0x54] sm:$0xf]
      %v3557 = vld [vmem:[%s3176 + $0x58] sm:$0xf]
      %v3558 = vld [vmem:[%s3176 + $0x5c] sm:$0x1]
      %v3559 = vld [vmem:[%s3176 + $0x60] sm:$0xf]
      %v3560 = vld [vmem:[%s3176 + $0x64] sm:$0xf]
      %v3561 = vld [vmem:[%s3176 + $0x68] sm:$0x1]
      %v3562 = vld [vmem:[%s3176 + $0x6c] sm:$0xf]
      %v3563 = vld [vmem:[%s3176 + $0x70] sm:$0xf]
      %v3564 = vld [vmem:[%s3176 + $0x74] sm:$0x1]
      %v3565 = vld [vmem:[%s3176 + $0x78] sm:$0xf]
      %v3566 = vld [vmem:[%s3176 + $0x7c] sm:$0xf]
      %v3567 = vld [vmem:[%s3176 + $0x80] sm:$0x1]
      %v3568 = vld [vmem:[%s3176 + $0x84] sm:$0xf]
      %v3569 = vld [vmem:[%s3176 + $0x88] sm:$0xf]
      %v3570 = vld [vmem:[%s3176 + $0x8c] sm:$0x1]
      %v3571 = vld [vmem:[%s3176 + $0x90] sm:$0xf]
      %v3572 = vld [vmem:[%s3176 + $0x94] sm:$0xf]
      %v3573 = vld [vmem:[%s3176 + $0x98] sm:$0x1]
      %v3574 = vld [vmem:[%s3176 + $0x9c] sm:$0xf]
      %v3575 = vld [vmem:[%s3176 + $0xa0] sm:$0xf]
      %v3576 = vld [vmem:[%s3176 + $0xa4] sm:$0x1]
      %v3577 = vld [vmem:[%s3176 + $0xa8] sm:$0xf]
      %v3578 = vld [vmem:[%s3176 + $0xac] sm:$0xf]
      %v3579 = vld [vmem:[%s3176 + $0xb0] sm:$0x1]
      %v3580 = vld [vmem:[%s3176 + $0xb4] sm:$0xf]
      %v3581 = vld [vmem:[%s3176 + $0xb8] sm:$0xf]
      %v3582 = vld [vmem:[%s3176 + $0xbc] sm:$0x1]
      %v3584 = vshrl.u32 %v3535, 16
      %v3586 = vrot.slane %v3584, 4
      %v3587 = vshll.u32 %v3535, 16
      %v3589 = vrot.slane %v3587, 5
      %v3590 = vor.u32 %v3586, %v3589
      %v3591 = vrot.slane %v3590, 4
      %v3593 = vshll.u32 %v3536, 16
      %v3595 = vrot.slane %v3593, 5
      %v3596 = vsel %vm223, %v3591, %v3595
      %v3597 = vshrl.u32 %v3536, 16
      %v3599 = vrot.slane %v3597, 4
      %v3600 = vor.u32 %v3599, %v3595
      %v3601 = vrot.slane %v3600, 4
      %v3603 = vshll.u32 %v3537, 16
      %v3605 = vrot.slane %v3603, 5
      %v3606 = vsel %vm223, %v3601, %v3605
      %v3608 = vshrl.u32 %v3538, 16
      %v3610 = vrot.slane %v3608, 4
      %v3611 = vshll.u32 %v3538, 16
      %v3613 = vrot.slane %v3611, 5
      %v3614 = vor.u32 %v3610, %v3613
      %v3615 = vrot.slane %v3614, 4
      %v3617 = vshll.u32 %v3539, 16
      %v3619 = vrot.slane %v3617, 5
      %v3620 = vsel %vm223, %v3615, %v3619
      %v3621 = vshrl.u32 %v3539, 16
      %v3623 = vrot.slane %v3621, 4
      %v3624 = vor.u32 %v3623, %v3619
      %v3625 = vrot.slane %v3624, 4
      %v3627 = vshll.u32 %v3540, 16
      %v3629 = vrot.slane %v3627, 5
      %v3630 = vsel %vm223, %v3625, %v3629
      %v3632 = vshrl.u32 %v3541, 16
      %v3634 = vrot.slane %v3632, 4
      %v3635 = vshll.u32 %v3541, 16
      %v3637 = vrot.slane %v3635, 5
      %v3638 = vor.u32 %v3634, %v3637
      %v3639 = vrot.slane %v3638, 4
      %v3641 = vshll.u32 %v3542, 16
      %v3643 = vrot.slane %v3641, 5
      %v3644 = vsel %vm223, %v3639, %v3643
      %v3645 = vshrl.u32 %v3542, 16
      %v3647 = vrot.slane %v3645, 4
      %v3648 = vor.u32 %v3647, %v3643
      %v3649 = vrot.slane %v3648, 4
      %v3651 = vshll.u32 %v3543, 16
      %v3653 = vrot.slane %v3651, 5
      %v3654 = vsel %vm223, %v3649, %v3653
      %v3656 = vshrl.u32 %v3544, 16
      %v3658 = vrot.slane %v3656, 4
      %v3659 = vshll.u32 %v3544, 16
      %v3661 = vrot.slane %v3659, 5
      %v3662 = vor.u32 %v3658, %v3661
      %v3663 = vrot.slane %v3662, 4
      %v3665 = vshll.u32 %v3545, 16
      %v3667 = vrot.slane %v3665, 5
      %v3668 = vsel %vm223, %v3663, %v3667
      %v3669 = vshrl.u32 %v3545, 16
      %v3671 = vrot.slane %v3669, 4
      %v3672 = vor.u32 %v3671, %v3667
      %v3673 = vrot.slane %v3672, 4
      %v3675 = vshll.u32 %v3546, 16
      %v3677 = vrot.slane %v3675, 5
      %v3678 = vsel %vm223, %v3673, %v3677
      %v3680 = vshrl.u32 %v3547, 16
      %v3682 = vrot.slane %v3680, 4
      %v3683 = vshll.u32 %v3547, 16
      %v3685 = vrot.slane %v3683, 5
      %v3686 = vor.u32 %v3682, %v3685
      %v3687 = vrot.slane %v3686, 4
      %v3689 = vshll.u32 %v3548, 16
      %v3691 = vrot.slane %v3689, 5
      %v3692 = vsel %vm223, %v3687, %v3691
      %v3693 = vshrl.u32 %v3548, 16
      %v3695 = vrot.slane %v3693, 4
      %v3696 = vor.u32 %v3695, %v3691
      %v3697 = vrot.slane %v3696, 4
      %v3699 = vshll.u32 %v3549, 16
      %v3701 = vrot.slane %v3699, 5
      %v3702 = vsel %vm223, %v3697, %v3701
      %v3704 = vshrl.u32 %v3550, 16
      %v3706 = vrot.slane %v3704, 4
      %v3707 = vshll.u32 %v3550, 16
      %v3709 = vrot.slane %v3707, 5
      %v3710 = vor.u32 %v3706, %v3709
      %v3711 = vrot.slane %v3710, 4
      %v3713 = vshll.u32 %v3551, 16
      %v3715 = vrot.slane %v3713, 5
      %v3716 = vsel %vm223, %v3711, %v3715
      %v3717 = vshrl.u32 %v3551, 16
      %v3719 = vrot.slane %v3717, 4
      %v3720 = vor.u32 %v3719, %v3715
      %v3721 = vrot.slane %v3720, 4
      %v3723 = vshll.u32 %v3552, 16
      %v3725 = vrot.slane %v3723, 5
      %v3726 = vsel %vm223, %v3721, %v3725
      %v3728 = vshrl.u32 %v3553, 16
      %v3730 = vrot.slane %v3728, 4
      %v3731 = vshll.u32 %v3553, 16
      %v3733 = vrot.slane %v3731, 5
      %v3734 = vor.u32 %v3730, %v3733
      %v3735 = vrot.slane %v3734, 4
      %v3737 = vshll.u32 %v3554, 16
      %v3739 = vrot.slane %v3737, 5
      %v3740 = vsel %vm223, %v3735, %v3739
      %v3741 = vshrl.u32 %v3554, 16
      %v3743 = vrot.slane %v3741, 4
      %v3744 = vor.u32 %v3743, %v3739
      %v3745 = vrot.slane %v3744, 4
      %v3747 = vshll.u32 %v3555, 16
      %v3749 = vrot.slane %v3747, 5
      %v3750 = vsel %vm223, %v3745, %v3749
      %v3752 = vshrl.u32 %v3556, 16
      %v3754 = vrot.slane %v3752, 4
      %v3755 = vshll.u32 %v3556, 16
      %v3757 = vrot.slane %v3755, 5
      %v3758 = vor.u32 %v3754, %v3757
      %v3759 = vrot.slane %v3758, 4
      %v3761 = vshll.u32 %v3557, 16
      %v3763 = vrot.slane %v3761, 5
      %v3764 = vsel %vm223, %v3759, %v3763
      %v3765 = vshrl.u32 %v3557, 16
      %v3767 = vrot.slane %v3765, 4
      %v3768 = vor.u32 %v3767, %v3763
      %v3769 = vrot.slane %v3768, 4
      %v3771 = vshll.u32 %v3558, 16
      %v3773 = vrot.slane %v3771, 5
      %v3774 = vsel %vm223, %v3769, %v3773
      %v3776 = vshrl.u32 %v3559, 16
      %v3778 = vrot.slane %v3776, 4
      %v3779 = vshll.u32 %v3559, 16
      %v3781 = vrot.slane %v3779, 5
      %v3782 = vor.u32 %v3778, %v3781
      %v3783 = vrot.slane %v3782, 4
      %v3785 = vshll.u32 %v3560, 16
      %v3787 = vrot.slane %v3785, 5
      %v3788 = vsel %vm223, %v3783, %v3787
      %v3789 = vshrl.u32 %v3560, 16
      %v3791 = vrot.slane %v3789, 4
      %v3792 = vor.u32 %v3791, %v3787
      %v3793 = vrot.slane %v3792, 4
      %v3795 = vshll.u32 %v3561, 16
      %v3797 = vrot.slane %v3795, 5
      %v3798 = vsel %vm223, %v3793, %v3797
      %v3800 = vshrl.u32 %v3562, 16
      %v3802 = vrot.slane %v3800, 4
      %v3803 = vshll.u32 %v3562, 16
      %v3805 = vrot.slane %v3803, 5
      %v3806 = vor.u32 %v3802, %v3805
      %v3807 = vrot.slane %v3806, 4
      %v3809 = vshll.u32 %v3563, 16
      %v3811 = vrot.slane %v3809, 5
      %v3812 = vsel %vm223, %v3807, %v3811
      %v3813 = vshrl.u32 %v3563, 16
      %v3815 = vrot.slane %v3813, 4
      %v3816 = vor.u32 %v3815, %v3811
      %v3817 = vrot.slane %v3816, 4
      %v3819 = vshll.u32 %v3564, 16
      %v3821 = vrot.slane %v3819, 5
      %v3822 = vsel %vm223, %v3817, %v3821
      %v3824 = vshrl.u32 %v3565, 16
      %v3826 = vrot.slane %v3824, 4
      %v3827 = vshll.u32 %v3565, 16
      %v3829 = vrot.slane %v3827, 5
      %v3830 = vor.u32 %v3826, %v3829
      %v3831 = vrot.slane %v3830, 4
      %v3833 = vshll.u32 %v3566, 16
      %v3835 = vrot.slane %v3833, 5
      %v3836 = vsel %vm223, %v3831, %v3835
      %v3837 = vshrl.u32 %v3566, 16
      %v3839 = vrot.slane %v3837, 4
      %v3840 = vor.u32 %v3839, %v3835
      %v3841 = vrot.slane %v3840, 4
      %v3843 = vshll.u32 %v3567, 16
      %v3845 = vrot.slane %v3843, 5
      %v3846 = vsel %vm223, %v3841, %v3845
      %v3848 = vshrl.u32 %v3568, 16
      %v3850 = vrot.slane %v3848, 4
      %v3851 = vshll.u32 %v3568, 16
      %v3853 = vrot.slane %v3851, 5
      %v3854 = vor.u32 %v3850, %v3853
      %v3855 = vrot.slane %v3854, 4
      %v3857 = vshll.u32 %v3569, 16
      %v3859 = vrot.slane %v3857, 5
      %v3860 = vsel %vm223, %v3855, %v3859
      %v3861 = vshrl.u32 %v3569, 16
      %v3863 = vrot.slane %v3861, 4
      %v3864 = vor.u32 %v3863, %v3859
      %v3865 = vrot.slane %v3864, 4
      %v3867 = vshll.u32 %v3570, 16
      %v3869 = vrot.slane %v3867, 5
      %v3870 = vsel %vm223, %v3865, %v3869
      %v3872 = vshrl.u32 %v3571, 16
      %v3874 = vrot.slane %v3872, 4
      %v3875 = vshll.u32 %v3571, 16
      %v3877 = vrot.slane %v3875, 5
      %v3878 = vor.u32 %v3874, %v3877
      %v3879 = vrot.slane %v3878, 4
      %v3881 = vshll.u32 %v3572, 16
      %v3883 = vrot.slane %v3881, 5
      %v3884 = vsel %vm223, %v3879, %v3883
      %v3885 = vshrl.u32 %v3572, 16
      %v3887 = vrot.slane %v3885, 4
      %v3888 = vor.u32 %v3887, %v3883
      %v3889 = vrot.slane %v3888, 4
      %v3891 = vshll.u32 %v3573, 16
      %v3893 = vrot.slane %v3891, 5
      %v3894 = vsel %vm223, %v3889, %v3893
      %v3896 = vshrl.u32 %v3574, 16
      %v3898 = vrot.slane %v3896, 4
      %v3899 = vshll.u32 %v3574, 16
      %v3901 = vrot.slane %v3899, 5
      %v3902 = vor.u32 %v3898, %v3901
      %v3903 = vrot.slane %v3902, 4
      %v3905 = vshll.u32 %v3575, 16
      %v3907 = vrot.slane %v3905, 5
      %v3908 = vsel %vm223, %v3903, %v3907
      %v3909 = vshrl.u32 %v3575, 16
      %v3911 = vrot.slane %v3909, 4
      %v3912 = vor.u32 %v3911, %v3907
      %v3913 = vrot.slane %v3912, 4
      %v3915 = vshll.u32 %v3576, 16
      %v3917 = vrot.slane %v3915, 5
      %v3918 = vsel %vm223, %v3913, %v3917
      %v3920 = vshrl.u32 %v3577, 16
      %v3922 = vrot.slane %v3920, 4
      %v3923 = vshll.u32 %v3577, 16
      %v3925 = vrot.slane %v3923, 5
      %v3926 = vor.u32 %v3922, %v3925
      %v3927 = vrot.slane %v3926, 4
      %v3929 = vshll.u32 %v3578, 16
      %v3931 = vrot.slane %v3929, 5
      %v3932 = vsel %vm223, %v3927, %v3931
      %v3933 = vshrl.u32 %v3578, 16
      %v3935 = vrot.slane %v3933, 4
      %v3936 = vor.u32 %v3935, %v3931
      %v3937 = vrot.slane %v3936, 4
      %v3939 = vshll.u32 %v3579, 16
      %v3941 = vrot.slane %v3939, 5
      %v3942 = vsel %vm223, %v3937, %v3941
      %v3944 = vshrl.u32 %v3580, 16
      %v3946 = vrot.slane %v3944, 4
      %v3947 = vshll.u32 %v3580, 16
      %v3949 = vrot.slane %v3947, 5
      %v3950 = vor.u32 %v3946, %v3949
      %v3951 = vrot.slane %v3950, 4
      %v3953 = vshll.u32 %v3581, 16
      %v3955 = vrot.slane %v3953, 5
      %v3956 = vsel %vm223, %v3951, %v3955
      %v3957 = vshrl.u32 %v3581, 16
      %v3959 = vrot.slane %v3957, 4
      %v3960 = vor.u32 %v3959, %v3955
      %v3961 = vrot.slane %v3960, 4
      %v3963 = vshll.u32 %v3582, 16
      %v3965 = vrot.slane %v3963, 5
      %v3966 = vsel %vm223, %v3961, %v3965
      %s3967 = scalar_lea.vmem %s1, 14
      %v3968 = vld [vmem:[%s3967] sm:$0x3]
      %v3969 = vunpack.c.l.b16 %v3596
      %v3970 = vunpack.c.l.b16 %v3606
      %v3971 = vunpack.c.l.b16 %v3620
      %v3972 = vunpack.c.l.b16 %v3630
      %v3973 = vunpack.c.l.b16 %v3644
      %v3974 = vunpack.c.l.b16 %v3654
      %v3975 = vunpack.c.l.b16 %v3668
      %v3976 = vunpack.c.l.b16 %v3678
      %v3977 = vunpack.c.l.b16 %v3692
      %v3978 = vunpack.c.l.b16 %v3702
      %v3979 = vunpack.c.l.b16 %v3716
      %v3980 = vunpack.c.l.b16 %v3726
      %v3981 = vunpack.c.l.b16 %v3740
      %v3982 = vunpack.c.l.b16 %v3750
      %v3983 = vunpack.c.l.b16 %v3764
      %v3984 = vunpack.c.l.b16 %v3774
      %v3985 = vunpack.c.l.b16 %v3788
      %v3986 = vunpack.c.l.b16 %v3798
      %v3987 = vunpack.c.l.b16 %v3812
      %v3988 = vunpack.c.l.b16 %v3822
      %v3989 = vunpack.c.l.b16 %v3836
      %v3990 = vunpack.c.l.b16 %v3846
      %v3991 = vunpack.c.l.b16 %v3860
      %v3992 = vunpack.c.l.b16 %v3870
      %v3993 = vunpack.c.l.b16 %v3884
      %v3994 = vunpack.c.l.b16 %v3894
      %v3995 = vunpack.c.l.b16 %v3908
      %v3996 = vunpack.c.l.b16 %v3918
      %v3997 = vunpack.c.l.b16 %v3932
      %v3998 = vunpack.c.l.b16 %v3942
      %v3999 = vunpack.c.l.b16 %v3956
      %v4000 = vunpack.c.l.b16 %v3966
      %v4001 = vpack.c.b16 %v3970, %v3969
      %v4002 = vpack.c.b16 %v3972, %v3971
      %v4003 = vpack.c.b16 %v3974, %v3973
      %v4004 = vpack.c.b16 %v3976, %v3975
      %v4005 = vpack.c.b16 %v3978, %v3977
      %v4006 = vpack.c.b16 %v3980, %v3979
      %v4007 = vpack.c.b16 %v3982, %v3981
      %v4008 = vpack.c.b16 %v3984, %v3983
      %v4009 = vpack.c.b16 %v3986, %v3985
      %v4010 = vpack.c.b16 %v3988, %v3987
      %v4011 = vpack.c.b16 %v3990, %v3989
      %v4012 = vpack.c.b16 %v3992, %v3991
      %v4013 = vpack.c.b16 %v3994, %v3993
      %v4014 = vpack.c.b16 %v3996, %v3995
      %v4015 = vpack.c.b16 %v3998, %v3997
      %v4016 = vpack.c.b16 %v4000, %v3999
      %v4018 = vsel %vm658, %v4001, 0
      %v4021 = vsel %vm658, %v4002, 0
      %v4024 = vsel %vm658, %v4003, 0
      %v4027 = vsel %vm658, %v4004, 0
      %v4030 = vsel %vm658, %v4005, 0
      %v4033 = vsel %vm658, %v4006, 0
      %v4036 = vsel %vm658, %v4007, 0
      %v4039 = vsel %vm658, %v4008, 0
      %v4042 = vsel %vm658, %v4009, 0
      %v4045 = vsel %vm658, %v4010, 0
      %v4048 = vsel %vm658, %v4011, 0
      %v4051 = vsel %vm658, %v4012, 0
      %v4054 = vsel %vm658, %v4013, 0
      %v4057 = vsel %vm658, %v4014, 0
      %v4060 = vsel %vm658, %v4015, 0
      %v4063 = vsel %vm658, %v4016, 0
      %v4066 = vsel %vm707, %v3968, 0
      %4068 = vmatprep.subr.bf16.mxu0 0
      %4069 = vmatpush1.bf16.msra.mxu0 %v4066
      %4070 = vmatprep.subr.bf16.mxu0 0
      %4071 = vmatpush1.bf16.msra.mxu0 0
      %4072 = vmatprep.subr.bf16.mxu0 0
      %4073 = vmatpush1.bf16.msra.mxu0 0
      %4074 = vmatprep.subr.bf16.mxu0 0
      %4075 = vmatpush1.bf16.msra.mxu0 0
      %4076 = vmatprep.subr.bf16.mxu0 0
      %4077 = vmatpush1.bf16.msra.mxu0 0
      %4078 = vmatprep.subr.bf16.mxu0 0
      %4079 = vmatpush1.bf16.msra.mxu0 0
      %4080 = vmatprep.subr.bf16.mxu0 0
      %4081 = vmatpush1.bf16.msra.mxu0 0
      %4082 = vmatprep.subr.bf16.mxu0 0
      %4083 = vmatpush1.bf16.msra.mxu0 0
      %4084 = vmatprep.subr.bf16.mxu0 0
      %4085 = vmatpush1.bf16.msra.mxu0 0
      %4086 = vmatprep.subr.bf16.mxu0 0
      %4087 = vmatpush1.bf16.msra.mxu0 0
      %4088 = vmatprep.subr.bf16.mxu0 0
      %4089 = vmatpush1.bf16.msra.mxu0 0
      %4090 = vmatprep.subr.bf16.mxu0 0
      %4091 = vmatpush1.bf16.msra.mxu0 0
      %4092 = vmatprep.subr.bf16.mxu0 0
      %4093 = vmatpush1.bf16.msra.mxu0 0
      %4094 = vmatprep.subr.bf16.mxu0 0
      %4095 = vmatpush1.bf16.msra.mxu0 0
      %4096 = vmatprep.subr.bf16.mxu0 0
      %4097 = vmatpush1.bf16.msra.mxu0 0
      %4098 = vmatprep.subr.bf16.mxu0 0
      %4099 = vmatpush1.bf16.msra.mxu0 0
      %4100 = vmatprep.mubr.bf16.mxu0 0
      %4101 = vmatmul.mubr.bf16.gmra.mrb[0].mxu0 %v4018
      %v4102 = vpop.f32.mrb[0].mxu0
      %v4103 = vadd.f32 0.0, %v4102
      %v4104 = vpop.f32.mrb[0].mxu0
      %v4105 = vpop.f32.mrb[0].mxu0
      %v4106 = vadd.f32 0.0, %v4105
      %v4107 = vpop.f32.mrb[0].mxu0
      %4108 = vmatprep.mubr.bf16.mxu0 0
      %4109 = vmatmul.mubr.bf16.gmra.mrb[0].mxu0 %v4021
      %v4110 = vpop.f32.mrb[0].mxu0
      %v4111 = vadd.f32 0.0, %v4110
      %v4112 = vpop.f32.mrb[0].mxu0
      %v4113 = vpop.f32.mrb[0].mxu0
      %v4114 = vadd.f32 0.0, %v4113
      %v4115 = vpop.f32.mrb[0].mxu0
      %4116 = vmatprep.mubr.bf16.mxu0 0
      %4117 = vmatmul.mubr.bf16.gmra.mrb[0].mxu0 %v4024
      %v4118 = vpop.f32.mrb[0].mxu0
      %v4119 = vadd.f32 0.0, %v4118
      %v4120 = vpop.f32.mrb[0].mxu0
      %v4121 = vpop.f32.mrb[0].mxu0
      %v4122 = vadd.f32 0.0, %v4121
      %v4123 = vpop.f32.mrb[0].mxu0
      %4124 = vmatprep.mubr.bf16.mxu0 0
      %4125 = vmatmul.mubr.bf16.gmra.mrb[0].mxu0 %v4027
      %v4126 = vpop.f32.mrb[0].mxu0
      %v4127 = vadd.f32 0.0, %v4126
      %v4128 = vpop.f32.mrb[0].mxu0
      %v4129 = vpop.f32.mrb[0].mxu0
      %v4130 = vadd.f32 0.0, %v4129
      %v4131 = vpop.f32.mrb[0].mxu0
      %4132 = vmatprep.mubr.bf16.mxu0 0
      %4133 = vmatmul.mubr.bf16.gmra.mrb[0].mxu0 %v4030
      %v4134 = vpop.f32.mrb[0].mxu0
      %v4135 = vadd.f32 0.0, %v4134
      %v4136 = vpop.f32.mrb[0].mxu0
      %v4137 = vpop.f32.mrb[0].mxu0
      %v4138 = vadd.f32 0.0, %v4137
      %v4139 = vpop.f32.mrb[0].mxu0
      %4140 = vmatprep.mubr.bf16.mxu0 0
      %4141 = vmatmul.mubr.bf16.gmra.mrb[0].mxu0 %v4033
      %v4142 = vpop.f32.mrb[0].mxu0
      %v4143 = vadd.f32 0.0, %v4142
      %v4144 = vpop.f32.mrb[0].mxu0
      %v4145 = vpop.f32.mrb[0].mxu0
      %v4146 = vadd.f32 0.0, %v4145
      %v4147 = vpop.f32.mrb[0].mxu0
      %4148 = vmatprep.mubr.bf16.mxu0 0
      %4149 = vmatmul.mubr.bf16.gmra.mrb[0].mxu0 %v4036
      %v4150 = vpop.f32.mrb[0].mxu0
      %v4151 = vadd.f32 0.0, %v4150
      %v4152 = vpop.f32.mrb[0].mxu0
      %v4153 = vpop.f32.mrb[0].mxu0
      %v4154 = vadd.f32 0.0, %v4153
      %v4155 = vpop.f32.mrb[0].mxu0
      %4156 = vmatprep.mubr.bf16.mxu0 0
      %4157 = vmatmul.mubr.bf16.gmra.mrb[0].mxu0 %v4039
      %v4158 = vpop.f32.mrb[0].mxu0
      %v4159 = vadd.f32 0.0, %v4158
      %v4160 = vpop.f32.mrb[0].mxu0
      %v4161 = vpop.f32.mrb[0].mxu0
      %v4162 = vadd.f32 0.0, %v4161
      %v4163 = vpop.f32.mrb[0].mxu0
      %4164 = vmatprep.mubr.bf16.mxu0 0
      %4165 = vmatmul.mubr.bf16.gmra.mrb[0].mxu0 %v4042
      %v4166 = vpop.f32.mrb[0].mxu0
      %v4167 = vadd.f32 0.0, %v4166
      %v4168 = vpop.f32.mrb[0].mxu0
      %v4169 = vpop.f32.mrb[0].mxu0
      %v4170 = vadd.f32 0.0, %v4169
      %v4171 = vpop.f32.mrb[0].mxu0
      %4172 = vmatprep.mubr.bf16.mxu0 0
      %4173 = vmatmul.mubr.bf16.gmra.mrb[0].mxu0 %v4045
      %v4174 = vpop.f32.mrb[0].mxu0
      %v4175 = vadd.f32 0.0, %v4174
      %v4176 = vpop.f32.mrb[0].mxu0
      %v4177 = vpop.f32.mrb[0].mxu0
      %v4178 = vadd.f32 0.0, %v4177
      %v4179 = vpop.f32.mrb[0].mxu0
      %4180 = vmatprep.mubr.bf16.mxu0 0
      %4181 = vmatmul.mubr.bf16.gmra.mrb[0].mxu0 %v4048
      %v4182 = vpop.f32.mrb[0].mxu0
      %v4183 = vadd.f32 0.0, %v4182
      %v4184 = vpop.f32.mrb[0].mxu0
      %v4185 = vpop.f32.mrb[0].mxu0
      %v4186 = vadd.f32 0.0, %v4185
      %v4187 = vpop.f32.mrb[0].mxu0
      %4188 = vmatprep.mubr.bf16.mxu0 0
      %4189 = vmatmul.mubr.bf16.gmra.mrb[0].mxu0 %v4051
      %v4190 = vpop.f32.mrb[0].mxu0
      %v4191 = vadd.f32 0.0, %v4190
      %v4192 = vpop.f32.mrb[0].mxu0
      %v4193 = vpop.f32.mrb[0].mxu0
      %v4194 = vadd.f32 0.0, %v4193
      %v4195 = vpop.f32.mrb[0].mxu0
      %4196 = vmatprep.mubr.bf16.mxu0 0
      %4197 = vmatmul.mubr.bf16.gmra.mrb[0].mxu0 %v4054
      %v4198 = vpop.f32.mrb[0].mxu0
      %v4199 = vadd.f32 0.0, %v4198
      %v4200 = vpop.f32.mrb[0].mxu0
      %v4201 = vpop.f32.mrb[0].mxu0
      %v4202 = vadd.f32 0.0, %v4201
      %v4203 = vpop.f32.mrb[0].mxu0
      %4204 = vmatprep.mubr.bf16.mxu0 0
      %4205 = vmatmul.mubr.bf16.gmra.mrb[0].mxu0 %v4057
      %v4206 = vpop.f32.mrb[0].mxu0
      %v4207 = vadd.f32 0.0, %v4206
      %v4208 = vpop.f32.mrb[0].mxu0
      %v4209 = vpop.f32.mrb[0].mxu0
      %v4210 = vadd.f32 0.0, %v4209
      %v4211 = vpop.f32.mrb[0].mxu0
      %4212 = vmatprep.mubr.bf16.mxu0 0
      %4213 = vmatmul.mubr.bf16.gmra.mrb[0].mxu0 %v4060
      %v4214 = vpop.f32.mrb[0].mxu0
      %v4215 = vadd.f32 0.0, %v4214
      %v4216 = vpop.f32.mrb[0].mxu0
      %v4217 = vpop.f32.mrb[0].mxu0
      %v4218 = vadd.f32 0.0, %v4217
      %v4219 = vpop.f32.mrb[0].mxu0
      %4220 = vmatprep.mubr.bf16.mxu0 0
      %4221 = vmatmul.mubr.bf16.gmra.mrb[0].mxu0 %v4063
      %v4222 = vpop.f32.mrb[0].mxu0
      %v4223 = vadd.f32 0.0, %v4222
      %v4224 = vpop.f32.mrb[0].mxu0
      %v4225 = vpop.f32.mrb[0].mxu0
      %v4226 = vadd.f32 0.0, %v4225
      %v4227 = vpop.f32.mrb[0].mxu0
      %4228 = vdwg.mxu0
      %v4229 = vadd.f32 %v3503, %v4103
      %v4230 = vadd.f32 %v3504, %v4106
      %v4231 = vadd.f32 %v3505, %v4111
      %v4232 = vadd.f32 %v3506, %v4114
      %v4233 = vadd.f32 %v3507, %v4119
      %v4234 = vadd.f32 %v3508, %v4122
      %v4235 = vadd.f32 %v3509, %v4127
      %v4236 = vadd.f32 %v3510, %v4130
      %v4237 = vadd.f32 %v3511, %v4135
      %v4238 = vadd.f32 %v3512, %v4138
      %v4239 = vadd.f32 %v3513, %v4143
      %v4240 = vadd.f32 %v3514, %v4146
      %v4241 = vadd.f32 %v3515, %v4151
      %v4242 = vadd.f32 %v3516, %v4154
      %v4243 = vadd.f32 %v3517, %v4159
      %v4244 = vadd.f32 %v3518, %v4162
      %v4245 = vadd.f32 %v3519, %v4167
      %v4246 = vadd.f32 %v3520, %v4170
      %v4247 = vadd.f32 %v3521, %v4175
      %v4248 = vadd.f32 %v3522, %v4178
      %v4249 = vadd.f32 %v3523, %v4183
      %v4250 = vadd.f32 %v3524, %v4186
      %v4251 = vadd.f32 %v3525, %v4191
      %v4252 = vadd.f32 %v3526, %v4194
      %v4253 = vadd.f32 %v3527, %v4199
      %v4254 = vadd.f32 %v3528, %v4202
      %v4255 = vadd.f32 %v3529, %v4207
      %v4256 = vadd.f32 %v3530, %v4210
      %v4257 = vadd.f32 %v3531, %v4215
      %v4258 = vadd.f32 %v3532, %v4218
      %v4259 = vadd.f32 %v3533, %v4223
      %v4260 = vadd.f32 %v3534, %v4226
      %v4261 = vld [vmem:[%s3176] sm:$0xe]
      %v4262 = vld [vmem:[%s3176 + $0xc] sm:$0xe]
      %v4263 = vld [vmem:[%s3176 + $0x18] sm:$0xe]
      %v4264 = vld [vmem:[%s3176 + $0x24] sm:$0xe]
      %v4265 = vld [vmem:[%s3176 + $0x30] sm:$0xe]
      %v4266 = vld [vmem:[%s3176 + $0x3c] sm:$0xe]
      %v4267 = vld [vmem:[%s3176 + $0x48] sm:$0xe]
      %v4268 = vld [vmem:[%s3176 + $0x54] sm:$0xe]
      %v4269 = vld [vmem:[%s3176 + $0x60] sm:$0xe]
      %v4270 = vld [vmem:[%s3176 + $0x6c] sm:$0xe]
      %v4271 = vld [vmem:[%s3176 + $0x78] sm:$0xe]
      %v4272 = vld [vmem:[%s3176 + $0x84] sm:$0xe]
      %v4273 = vld [vmem:[%s3176 + $0x90] sm:$0xe]
      %v4274 = vld [vmem:[%s3176 + $0x9c] sm:$0xe]
      %v4275 = vld [vmem:[%s3176 + $0xa8] sm:$0xe]
      %v4276 = vld [vmem:[%s3176 + $0xb4] sm:$0xe]
      %v4325 = vrot.slane %v4261, 5
      %v4326 = vrot.slane %v4325, 4
      %v4327 = vrot.slane %v3536, 5
      %v4328 = vsel %vm1214, %v4326, %v4327
      %v4329 = vrot.slane %v4327, 4
      %v4330 = vrot.slane %v3537, 5
      %v4331 = vsel %vm1214, %v4329, %v4330
      %v4332 = vrot.slane %v4262, 5
      %v4333 = vrot.slane %v4332, 4
      %v4334 = vrot.slane %v3539, 5
      %v4335 = vsel %vm1214, %v4333, %v4334
      %v4336 = vrot.slane %v4334, 4
      %v4337 = vrot.slane %v3540, 5
      %v4338 = vsel %vm1214, %v4336, %v4337
      %v4339 = vrot.slane %v4263, 5
      %v4340 = vrot.slane %v4339, 4
      %v4341 = vrot.slane %v3542, 5
      %v4342 = vsel %vm1214, %v4340, %v4341
      %v4343 = vrot.slane %v4341, 4
      %v4344 = vrot.slane %v3543, 5
      %v4345 = vsel %vm1214, %v4343, %v4344
      %v4346 = vrot.slane %v4264, 5
      %v4347 = vrot.slane %v4346, 4
      %v4348 = vrot.slane %v3545, 5
      %v4349 = vsel %vm1214, %v4347, %v4348
      %v4350 = vrot.slane %v4348, 4
      %v4351 = vrot.slane %v3546, 5
      %v4352 = vsel %vm1214, %v4350, %v4351
      %v4353 = vrot.slane %v4265, 5
      %v4354 = vrot.slane %v4353, 4
      %v4355 = vrot.slane %v3548, 5
      %v4356 = vsel %vm1214, %v4354, %v4355
      %v4357 = vrot.slane %v4355, 4
      %v4358 = vrot.slane %v3549, 5
      %v4359 = vsel %vm1214, %v4357, %v4358
      %v4360 = vrot.slane %v4266, 5
      %v4361 = vrot.slane %v4360, 4
      %v4362 = vrot.slane %v3551, 5
      %v4363 = vsel %vm1214, %v4361, %v4362
      %v4364 = vrot.slane %v4362, 4
      %v4365 = vrot.slane %v3552, 5
      %v4366 = vsel %vm1214, %v4364, %v4365
      %v4367 = vrot.slane %v4267, 5
      %v4368 = vrot.slane %v4367, 4
      %v4369 = vrot.slane %v3554, 5
      %v4370 = vsel %vm1214, %v4368, %v4369
      %v4371 = vrot.slane %v4369, 4
      %v4372 = vrot.slane %v3555, 5
      %v4373 = vsel %vm1214, %v4371, %v4372
      %v4374 = vrot.slane %v4268, 5
      %v4375 = vrot.slane %v4374, 4
      %v4376 = vrot.slane %v3557, 5
      %v4377 = vsel %vm1214, %v4375, %v4376
      %v4378 = vrot.slane %v4376, 4
      %v4379 = vrot.slane %v3558, 5
      %v4380 = vsel %vm1214, %v4378, %v4379
      %v4381 = vrot.slane %v4269, 5
      %v4382 = vrot.slane %v4381, 4
      %v4383 = vrot.slane %v3560, 5
      %v4384 = vsel %vm1214, %v4382, %v4383
      %v4385 = vrot.slane %v4383, 4
      %v4386 = vrot.slane %v3561, 5
      %v4387 = vsel %vm1214, %v4385, %v4386
      %v4388 = vrot.slane %v4270, 5
      %v4389 = vrot.slane %v4388, 4
      %v4390 = vrot.slane %v3563, 5
      %v4391 = vsel %vm1214, %v4389, %v4390
      %v4392 = vrot.slane %v4390, 4
      %v4393 = vrot.slane %v3564, 5
      %v4394 = vsel %vm1214, %v4392, %v4393
      %v4395 = vrot.slane %v4271, 5
      %v4396 = vrot.slane %v4395, 4
      %v4397 = vrot.slane %v3566, 5
      %v4398 = vsel %vm1214, %v4396, %v4397
      %v4399 = vrot.slane %v4397, 4
      %v4400 = vrot.slane %v3567, 5
      %v4401 = vsel %vm1214, %v4399, %v4400
      %v4402 = vrot.slane %v4272, 5
      %v4403 = vrot.slane %v4402, 4
      %v4404 = vrot.slane %v3569, 5
      %v4405 = vsel %vm1214, %v4403, %v4404
      %v4406 = vrot.slane %v4404, 4
      %v4407 = vrot.slane %v3570, 5
      %v4408 = vsel %vm1214, %v4406, %v4407
      %v4409 = vrot.slane %v4273, 5
      %v4410 = vrot.slane %v4409, 4
      %v4411 = vrot.slane %v3572, 5
      %v4412 = vsel %vm1214, %v4410, %v4411
      %v4413 = vrot.slane %v4411, 4
      %v4414 = vrot.slane %v3573, 5
      %v4415 = vsel %vm1214, %v4413, %v4414
      %v4416 = vrot.slane %v4274, 5
      %v4417 = vrot.slane %v4416, 4
      %v4418 = vrot.slane %v3575, 5
      %v4419 = vsel %vm1214, %v4417, %v4418
      %v4420 = vrot.slane %v4418, 4
      %v4421 = vrot.slane %v3576, 5
      %v4422 = vsel %vm1214, %v4420, %v4421
      %v4423 = vrot.slane %v4275, 5
      %v4424 = vrot.slane %v4423, 4
      %v4425 = vrot.slane %v3578, 5
      %v4426 = vsel %vm1214, %v4424, %v4425
      %v4427 = vrot.slane %v4425, 4
      %v4428 = vrot.slane %v3579, 5
      %v4429 = vsel %vm1214, %v4427, %v4428
      %v4430 = vrot.slane %v4276, 5
      %v4431 = vrot.slane %v4430, 4
      %v4432 = vrot.slane %v3581, 5
      %v4433 = vsel %vm1214, %v4431, %v4432
      %v4434 = vrot.slane %v4432, 4
      %v4435 = vrot.slane %v3582, 5
      %v4436 = vsel %vm1214, %v4434, %v4435
      %s4437 = scalar_lea.vmem %s1, 16
      %v4438 = vld [vmem:[%s4437] sm:$0x3]
      %v4439 = vunpack.c.l.b16 %v4328
      %v4440 = vunpack.c.l.b16 %v4331
      %v4441 = vunpack.c.l.b16 %v4335
      %v4442 = vunpack.c.l.b16 %v4338
      %v4443 = vunpack.c.l.b16 %v4342
      %v4444 = vunpack.c.l.b16 %v4345
      %v4445 = vunpack.c.l.b16 %v4349
      %v4446 = vunpack.c.l.b16 %v4352
      %v4447 = vunpack.c.l.b16 %v4356
      %v4448 = vunpack.c.l.b16 %v4359
      %v4449 = vunpack.c.l.b16 %v4363
      %v4450 = vunpack.c.l.b16 %v4366
      %v4451 = vunpack.c.l.b16 %v4370
      %v4452 = vunpack.c.l.b16 %v4373
      %v4453 = vunpack.c.l.b16 %v4377
      %v4454 = vunpack.c.l.b16 %v4380
      %v4455 = vunpack.c.l.b16 %v4384
      %v4456 = vunpack.c.l.b16 %v4387
      %v4457 = vunpack.c.l.b16 %v4391
      %v4458 = vunpack.c.l.b16 %v4394
      %v4459 = vunpack.c.l.b16 %v4398
      %v4460 = vunpack.c.l.b16 %v4401
      %v4461 = vunpack.c.l.b16 %v4405
      %v4462 = vunpack.c.l.b16 %v4408
      %v4463 = vunpack.c.l.b16 %v4412
      %v4464 = vunpack.c.l.b16 %v4415
      %v4465 = vunpack.c.l.b16 %v4419
      %v4466 = vunpack.c.l.b16 %v4422
      %v4467 = vunpack.c.l.b16 %v4426
      %v4468 = vunpack.c.l.b16 %v4429
      %v4469 = vunpack.c.l.b16 %v4433
      %v4470 = vunpack.c.l.b16 %v4436
      %v4471 = vpack.c.b16 %v4440, %v4439
      %v4472 = vpack.c.b16 %v4442, %v4441
      %v4473 = vpack.c.b16 %v4444, %v4443
      %v4474 = vpack.c.b16 %v4446, %v4445
      %v4475 = vpack.c.b16 %v4448, %v4447
      %v4476 = vpack.c.b16 %v4450, %v4449
      %v4477 = vpack.c.b16 %v4452, %v4451
      %v4478 = vpack.c.b16 %v4454, %v4453
      %v4479 = vpack.c.b16 %v4456, %v4455
      %v4480 = vpack.c.b16 %v4458, %v4457
      %v4481 = vpack.c.b16 %v4460, %v4459
      %v4482 = vpack.c.b16 %v4462, %v4461
      %v4483 = vpack.c.b16 %v4464, %v4463
      %v4484 = vpack.c.b16 %v4466, %v4465
      %v4485 = vpack.c.b16 %v4468, %v4467
      %v4486 = vpack.c.b16 %v4470, %v4469
      %v4488 = vsel %vm658, %v4471, 0
      %v4491 = vsel %vm658, %v4472, 0
      %v4494 = vsel %vm658, %v4473, 0
      %v4497 = vsel %vm658, %v4474, 0
      %v4500 = vsel %vm658, %v4475, 0
      %v4503 = vsel %vm658, %v4476, 0
      %v4506 = vsel %vm658, %v4477, 0
      %v4509 = vsel %vm658, %v4478, 0
      %v4512 = vsel %vm658, %v4479, 0
      %v4515 = vsel %vm658, %v4480, 0
      %v4518 = vsel %vm658, %v4481, 0
      %v4521 = vsel %vm658, %v4482, 0
      %v4524 = vsel %vm658, %v4483, 0
      %v4527 = vsel %vm658, %v4484, 0
      %v4530 = vsel %vm658, %v4485, 0
      %v4533 = vsel %vm658, %v4486, 0
      %v4536 = vsel %vm707, %v4438, 0
      %4538 = vmatprep.subr.bf16.mxu0 0
      %4539 = vmatpush1.bf16.msra.mxu0 %v4536
      %4540 = vmatprep.subr.bf16.mxu0 0
      %4541 = vmatpush1.bf16.msra.mxu0 0
      %4542 = vmatprep.subr.bf16.mxu0 0
      %4543 = vmatpush1.bf16.msra.mxu0 0
      %4544 = vmatprep.subr.bf16.mxu0 0
      %4545 = vmatpush1.bf16.msra.mxu0 0
      %4546 = vmatprep.subr.bf16.mxu0 0
      %4547 = vmatpush1.bf16.msra.mxu0 0
      %4548 = vmatprep.subr.bf16.mxu0 0
      %4549 = vmatpush1.bf16.msra.mxu0 0
      %4550 = vmatprep.subr.bf16.mxu0 0
      %4551 = vmatpush1.bf16.msra.mxu0 0
      %4552 = vmatprep.subr.bf16.mxu0 0
      %4553 = vmatpush1.bf16.msra.mxu0 0
      %4554 = vmatprep.subr.bf16.mxu0 0
      %4555 = vmatpush1.bf16.msra.mxu0 0
      %4556 = vmatprep.subr.bf16.mxu0 0
      %4557 = vmatpush1.bf16.msra.mxu0 0
      %4558 = vmatprep.subr.bf16.mxu0 0
      %4559 = vmatpush1.bf16.msra.mxu0 0
      %4560 = vmatprep.subr.bf16.mxu0 0
      %4561 = vmatpush1.bf16.msra.mxu0 0
      %4562 = vmatprep.subr.bf16.mxu0 0
      %4563 = vmatpush1.bf16.msra.mxu0 0
      %4564 = vmatprep.subr.bf16.mxu0 0
      %4565 = vmatpush1.bf16.msra.mxu0 0
      %4566 = vmatprep.subr.bf16.mxu0 0
      %4567 = vmatpush1.bf16.msra.mxu0 0
      %4568 = vmatprep.subr.bf16.mxu0 0
      %4569 = vmatpush1.bf16.msra.mxu0 0
      %4570 = vmatprep.mubr.bf16.mxu0 0
      %4571 = vmatmul.mubr.bf16.gmra.mrb[0].mxu0 %v4488
      %v4572 = vpop.f32.mrb[0].mxu0
      %v4573 = vadd.f32 0.0, %v4572
      %v4574 = vpop.f32.mrb[0].mxu0
      %v4575 = vpop.f32.mrb[0].mxu0
      %v4576 = vadd.f32 0.0, %v4575
      %v4577 = vpop.f32.mrb[0].mxu0
      %4578 = vmatprep.mubr.bf16.mxu0 0
      %4579 = vmatmul.mubr.bf16.gmra.mrb[0].mxu0 %v4491
      %v4580 = vpop.f32.mrb[0].mxu0
      %v4581 = vadd.f32 0.0, %v4580
      %v4582 = vpop.f32.mrb[0].mxu0
      %v4583 = vpop.f32.mrb[0].mxu0
      %v4584 = vadd.f32 0.0, %v4583
      %v4585 = vpop.f32.mrb[0].mxu0
      %4586 = vmatprep.mubr.bf16.mxu0 0
      %4587 = vmatmul.mubr.bf16.gmra.mrb[0].mxu0 %v4494
      %v4588 = vpop.f32.mrb[0].mxu0
      %v4589 = vadd.f32 0.0, %v4588
      %v4590 = vpop.f32.mrb[0].mxu0
      %v4591 = vpop.f32.mrb[0].mxu0
      %v4592 = vadd.f32 0.0, %v4591
      %v4593 = vpop.f32.mrb[0].mxu0
      %4594 = vmatprep.mubr.bf16.mxu0 0
      %4595 = vmatmul.mubr.bf16.gmra.mrb[0].mxu0 %v4497
      %v4596 = vpop.f32.mrb[0].mxu0
      %v4597 = vadd.f32 0.0, %v4596
      %v4598 = vpop.f32.mrb[0].mxu0
      %v4599 = vpop.f32.mrb[0].mxu0
      %v4600 = vadd.f32 0.0, %v4599
      %v4601 = vpop.f32.mrb[0].mxu0
      %4602 = vmatprep.mubr.bf16.mxu0 0
      %4603 = vmatmul.mubr.bf16.gmra.mrb[0].mxu0 %v4500
      %v4604 = vpop.f32.mrb[0].mxu0
      %v4605 = vadd.f32 0.0, %v4604
      %v4606 = vpop.f32.mrb[0].mxu0
      %v4607 = vpop.f32.mrb[0].mxu0
      %v4608 = vadd.f32 0.0, %v4607
      %v4609 = vpop.f32.mrb[0].mxu0
      %4610 = vmatprep.mubr.bf16.mxu0 0
      %4611 = vmatmul.mubr.bf16.gmra.mrb[0].mxu0 %v4503
      %v4612 = vpop.f32.mrb[0].mxu0
      %v4613 = vadd.f32 0.0, %v4612
      %v4614 = vpop.f32.mrb[0].mxu0
      %v4615 = vpop.f32.mrb[0].mxu0
      %v4616 = vadd.f32 0.0, %v4615
      %v4617 = vpop.f32.mrb[0].mxu0
      %4618 = vmatprep.mubr.bf16.mxu0 0
      %4619 = vmatmul.mubr.bf16.gmra.mrb[0].mxu0 %v4506
      %v4620 = vpop.f32.mrb[0].mxu0
      %v4621 = vadd.f32 0.0, %v4620
      %v4622 = vpop.f32.mrb[0].mxu0
      %v4623 = vpop.f32.mrb[0].mxu0
      %v4624 = vadd.f32 0.0, %v4623
      %v4625 = vpop.f32.mrb[0].mxu0
      %4626 = vmatprep.mubr.bf16.mxu0 0
      %4627 = vmatmul.mubr.bf16.gmra.mrb[0].mxu0 %v4509
      %v4628 = vpop.f32.mrb[0].mxu0
      %v4629 = vadd.f32 0.0, %v4628
      %v4630 = vpop.f32.mrb[0].mxu0
      %v4631 = vpop.f32.mrb[0].mxu0
      %v4632 = vadd.f32 0.0, %v4631
      %v4633 = vpop.f32.mrb[0].mxu0
      %4634 = vmatprep.mubr.bf16.mxu0 0
      %4635 = vmatmul.mubr.bf16.gmra.mrb[0].mxu0 %v4512
      %v4636 = vpop.f32.mrb[0].mxu0
      %v4637 = vadd.f32 0.0, %v4636
      %v4638 = vpop.f32.mrb[0].mxu0
      %v4639 = vpop.f32.mrb[0].mxu0
      %v4640 = vadd.f32 0.0, %v4639
      %v4641 = vpop.f32.mrb[0].mxu0
      %4642 = vmatprep.mubr.bf16.mxu0 0
      %4643 = vmatmul.mubr.bf16.gmra.mrb[0].mxu0 %v4515
      %v4644 = vpop.f32.mrb[0].mxu0
      %v4645 = vadd.f32 0.0, %v4644
      %v4646 = vpop.f32.mrb[0].mxu0
      %v4647 = vpop.f32.mrb[0].mxu0
      %v4648 = vadd.f32 0.0, %v4647
      %v4649 = vpop.f32.mrb[0].mxu0
      %4650 = vmatprep.mubr.bf16.mxu0 0
      %4651 = vmatmul.mubr.bf16.gmra.mrb[0].mxu0 %v4518
      %v4652 = vpop.f32.mrb[0].mxu0
      %v4653 = vadd.f32 0.0, %v4652
      %v4654 = vpop.f32.mrb[0].mxu0
      %v4655 = vpop.f32.mrb[0].mxu0
      %v4656 = vadd.f32 0.0, %v4655
      %v4657 = vpop.f32.mrb[0].mxu0
      %4658 = vmatprep.mubr.bf16.mxu0 0
      %4659 = vmatmul.mubr.bf16.gmra.mrb[0].mxu0 %v4521
      %v4660 = vpop.f32.mrb[0].mxu0
      %v4661 = vadd.f32 0.0, %v4660
      %v4662 = vpop.f32.mrb[0].mxu0
      %v4663 = vpop.f32.mrb[0].mxu0
      %v4664 = vadd.f32 0.0, %v4663
      %v4665 = vpop.f32.mrb[0].mxu0
      %4666 = vmatprep.mubr.bf16.mxu0 0
      %4667 = vmatmul.mubr.bf16.gmra.mrb[0].mxu0 %v4524
      %v4668 = vpop.f32.mrb[0].mxu0
      %v4669 = vadd.f32 0.0, %v4668
      %v4670 = vpop.f32.mrb[0].mxu0
      %v4671 = vpop.f32.mrb[0].mxu0
      %v4672 = vadd.f32 0.0, %v4671
      %v4673 = vpop.f32.mrb[0].mxu0
      %4674 = vmatprep.mubr.bf16.mxu0 0
      %4675 = vmatmul.mubr.bf16.gmra.mrb[0].mxu0 %v4527
      %v4676 = vpop.f32.mrb[0].mxu0
      %v4677 = vadd.f32 0.0, %v4676
      %v4678 = vpop.f32.mrb[0].mxu0
      %v4679 = vpop.f32.mrb[0].mxu0
      %v4680 = vadd.f32 0.0, %v4679
      %v4681 = vpop.f32.mrb[0].mxu0
      %4682 = vmatprep.mubr.bf16.mxu0 0
      %4683 = vmatmul.mubr.bf16.gmra.mrb[0].mxu0 %v4530
      %v4684 = vpop.f32.mrb[0].mxu0
      %v4685 = vadd.f32 0.0, %v4684
      %v4686 = vpop.f32.mrb[0].mxu0
      %v4687 = vpop.f32.mrb[0].mxu0
      %v4688 = vadd.f32 0.0, %v4687
      %v4689 = vpop.f32.mrb[0].mxu0
      %4690 = vmatprep.mubr.bf16.mxu0 0
      %4691 = vmatmul.mubr.bf16.gmra.mrb[0].mxu0 %v4533
      %v4692 = vpop.f32.mrb[0].mxu0
      %v4693 = vadd.f32 0.0, %v4692
      %v4694 = vpop.f32.mrb[0].mxu0
      %v4695 = vpop.f32.mrb[0].mxu0
      %v4696 = vadd.f32 0.0, %v4695
      %v4697 = vpop.f32.mrb[0].mxu0
      %4698 = vdwg.mxu0
      %v4699 = vadd.f32 %v4229, %v4573
      %v4700 = vadd.f32 %v4230, %v4576
      %v4701 = vadd.f32 %v4231, %v4581
      %v4702 = vadd.f32 %v4232, %v4584
      %v4703 = vadd.f32 %v4233, %v4589
      %v4704 = vadd.f32 %v4234, %v4592
      %v4705 = vadd.f32 %v4235, %v4597
      %v4706 = vadd.f32 %v4236, %v4600
      %v4707 = vadd.f32 %v4237, %v4605
      %v4708 = vadd.f32 %v4238, %v4608
      %v4709 = vadd.f32 %v4239, %v4613
      %v4710 = vadd.f32 %v4240, %v4616
      %v4711 = vadd.f32 %v4241, %v4621
      %v4712 = vadd.f32 %v4242, %v4624
      %v4713 = vadd.f32 %v4243, %v4629
      %v4714 = vadd.f32 %v4244, %v4632
      %v4715 = vadd.f32 %v4245, %v4637
      %v4716 = vadd.f32 %v4246, %v4640
      %v4717 = vadd.f32 %v4247, %v4645
      %v4718 = vadd.f32 %v4248, %v4648
      %v4719 = vadd.f32 %v4249, %v4653
      %v4720 = vadd.f32 %v4250, %v4656
      %v4721 = vadd.f32 %v4251, %v4661
      %v4722 = vadd.f32 %v4252, %v4664
      %v4723 = vadd.f32 %v4253, %v4669
      %v4724 = vadd.f32 %v4254, %v4672
      %v4725 = vadd.f32 %v4255, %v4677
      %v4726 = vadd.f32 %v4256, %v4680
      %v4727 = vadd.f32 %v4257, %v4685
      %v4728 = vadd.f32 %v4258, %v4688
      %v4729 = vadd.f32 %v4259, %v4693
      %v4730 = vadd.f32 %v4260, %v4696
      %v4731 = vld [vmem:[%s2] sm:$0x1]
      %v4733 = vlaneseq
      %v4734 = vshrl.u32 %v4733, 7
      %v4735 = vsub.s32 0, %v4734
      %v4736 = vrot.slane %v4731, %v4735
      %v4738 = vadd.f32 %v4699, %v4736
      %v4739 = vadd.f32 %v4700, %v4736
      %v4740 = vadd.f32 %v4701, %v4736
      %v4741 = vadd.f32 %v4702, %v4736
      %v4742 = vadd.f32 %v4703, %v4736
      %v4743 = vadd.f32 %v4704, %v4736
      %v4744 = vadd.f32 %v4705, %v4736
      %v4745 = vadd.f32 %v4706, %v4736
      %v4746 = vadd.f32 %v4707, %v4736
      %v4747 = vadd.f32 %v4708, %v4736
      %v4748 = vadd.f32 %v4709, %v4736
      %v4749 = vadd.f32 %v4710, %v4736
      %v4750 = vadd.f32 %v4711, %v4736
      %v4751 = vadd.f32 %v4712, %v4736
      %v4752 = vadd.f32 %v4713, %v4736
      %v4753 = vadd.f32 %v4714, %v4736
      %v4754 = vadd.f32 %v4715, %v4736
      %v4755 = vadd.f32 %v4716, %v4736
      %v4756 = vadd.f32 %v4717, %v4736
      %v4757 = vadd.f32 %v4718, %v4736
      %v4758 = vadd.f32 %v4719, %v4736
      %v4759 = vadd.f32 %v4720, %v4736
      %v4760 = vadd.f32 %v4721, %v4736
      %v4761 = vadd.f32 %v4722, %v4736
      %v4762 = vadd.f32 %v4723, %v4736
      %v4763 = vadd.f32 %v4724, %v4736
      %v4764 = vadd.f32 %v4725, %v4736
      %v4765 = vadd.f32 %v4726, %v4736
      %v4766 = vadd.f32 %v4727, %v4736
      %v4767 = vadd.f32 %v4728, %v4736
      %v4768 = vadd.f32 %v4729, %v4736
      %v4769 = vadd.f32 %v4730, %v4736
      %v4770 = vmax.f32 %v4738, 0.0
      %v4771 = vmax.f32 %v4739, 0.0
      %v4772 = vmax.f32 %v4740, 0.0
      %v4773 = vmax.f32 %v4741, 0.0
      %v4774 = vmax.f32 %v4742, 0.0
      %v4775 = vmax.f32 %v4743, 0.0
      %v4776 = vmax.f32 %v4744, 0.0
      %v4777 = vmax.f32 %v4745, 0.0
      %v4778 = vmax.f32 %v4746, 0.0
      %v4779 = vmax.f32 %v4747, 0.0
      %v4780 = vmax.f32 %v4748, 0.0
      %v4781 = vmax.f32 %v4749, 0.0
      %v4782 = vmax.f32 %v4750, 0.0
      %v4783 = vmax.f32 %v4751, 0.0
      %v4784 = vmax.f32 %v4752, 0.0
      %v4785 = vmax.f32 %v4753, 0.0
      %v4786 = vmax.f32 %v4754, 0.0
      %v4787 = vmax.f32 %v4755, 0.0
      %v4788 = vmax.f32 %v4756, 0.0
      %v4789 = vmax.f32 %v4757, 0.0
      %v4790 = vmax.f32 %v4758, 0.0
      %v4791 = vmax.f32 %v4759, 0.0
      %v4792 = vmax.f32 %v4760, 0.0
      %v4793 = vmax.f32 %v4761, 0.0
      %v4794 = vmax.f32 %v4762, 0.0
      %v4795 = vmax.f32 %v4763, 0.0
      %v4796 = vmax.f32 %v4764, 0.0
      %v4797 = vmax.f32 %v4765, 0.0
      %v4798 = vmax.f32 %v4766, 0.0
      %v4799 = vmax.f32 %v4767, 0.0
      %v4800 = vmax.f32 %v4768, 0.0
      %v4801 = vmax.f32 %v4769, 0.0
      %v4802 = vpack.c.bf16 %v4771, %v4770
      %v4803 = vpack.c.bf16 %v4773, %v4772
      %v4804 = vpack.c.bf16 %v4775, %v4774
      %v4805 = vpack.c.bf16 %v4777, %v4776
      %v4806 = vpack.c.bf16 %v4779, %v4778
      %v4807 = vpack.c.bf16 %v4781, %v4780
      %v4808 = vpack.c.bf16 %v4783, %v4782
      %v4809 = vpack.c.bf16 %v4785, %v4784
      %v4810 = vpack.c.bf16 %v4787, %v4786
      %v4811 = vpack.c.bf16 %v4789, %v4788
      %v4812 = vpack.c.bf16 %v4791, %v4790
      %v4813 = vpack.c.bf16 %v4793, %v4792
      %v4814 = vpack.c.bf16 %v4795, %v4794
      %v4815 = vpack.c.bf16 %v4797, %v4796
      %v4816 = vpack.c.bf16 %v4799, %v4798
      %v4817 = vpack.c.bf16 %v4801, %v4800
      %v4834 = vunpack.c.l.b16 %v4802
      %v4835 = vunpack.c.h.b16 %v4802
      %v4836 = vunpack.c.l.b16 %v4803
      %v4837 = vunpack.c.h.b16 %v4803
      %v4838 = vunpack.c.l.b16 %v4804
      %v4839 = vunpack.c.h.b16 %v4804
      %v4840 = vunpack.c.l.b16 %v4805
      %v4841 = vunpack.c.h.b16 %v4805
      %v4842 = vunpack.c.l.b16 %v4806
      %v4843 = vunpack.c.h.b16 %v4806
      %v4844 = vunpack.c.l.b16 %v4807
      %v4845 = vunpack.c.h.b16 %v4807
      %v4846 = vunpack.c.l.b16 %v4808
      %v4847 = vunpack.c.h.b16 %v4808
      %v4848 = vunpack.c.l.b16 %v4809
      %v4849 = vunpack.c.h.b16 %v4809
      %v4850 = vunpack.c.l.b16 %v4810
      %v4851 = vunpack.c.h.b16 %v4810
      %v4852 = vunpack.c.l.b16 %v4811
      %v4853 = vunpack.c.h.b16 %v4811
      %v4854 = vunpack.c.l.b16 %v4812
      %v4855 = vunpack.c.h.b16 %v4812
      %v4856 = vunpack.c.l.b16 %v4813
      %v4857 = vunpack.c.h.b16 %v4813
      %v4858 = vunpack.c.l.b16 %v4814
      %v4859 = vunpack.c.h.b16 %v4814
      %v4860 = vunpack.c.l.b16 %v4815
      %v4861 = vunpack.c.h.b16 %v4815
      %v4862 = vunpack.c.l.b16 %v4816
      %v4863 = vunpack.c.h.b16 %v4816
      %v4864 = vunpack.c.l.b16 %v4817
      %v4865 = vunpack.c.h.b16 %v4817
      %v4866 = vpack.c.b16 %v4834, %v4834
      %v4867 = vpack.c.b16 %v4835, %v4835
      %v4868 = vpack.c.b16 %v4836, %v4836
      %v4869 = vpack.c.b16 %v4837, %v4837
      %v4870 = vpack.c.b16 %v4838, %v4838
      %v4871 = vpack.c.b16 %v4839, %v4839
      %v4872 = vpack.c.b16 %v4840, %v4840
      %v4873 = vpack.c.b16 %v4841, %v4841
      %v4874 = vpack.c.b16 %v4842, %v4842
      %v4875 = vpack.c.b16 %v4843, %v4843
      %v4876 = vpack.c.b16 %v4844, %v4844
      %v4877 = vpack.c.b16 %v4845, %v4845
      %v4878 = vpack.c.b16 %v4846, %v4846
      %v4879 = vpack.c.b16 %v4847, %v4847
      %v4880 = vpack.c.b16 %v4848, %v4848
      %v4881 = vpack.c.b16 %v4849, %v4849
      %v4882 = vpack.c.b16 %v4850, %v4850
      %v4883 = vpack.c.b16 %v4851, %v4851
      %v4884 = vpack.c.b16 %v4852, %v4852
      %v4885 = vpack.c.b16 %v4853, %v4853
      %v4886 = vpack.c.b16 %v4854, %v4854
      %v4887 = vpack.c.b16 %v4855, %v4855
      %v4888 = vpack.c.b16 %v4856, %v4856
      %v4889 = vpack.c.b16 %v4857, %v4857
      %v4890 = vpack.c.b16 %v4858, %v4858
      %v4891 = vpack.c.b16 %v4859, %v4859
      %v4892 = vpack.c.b16 %v4860, %v4860
      %v4893 = vpack.c.b16 %v4861, %v4861
      %v4894 = vpack.c.b16 %v4862, %v4862
      %v4895 = vpack.c.b16 %v4863, %v4863
      %v4896 = vpack.c.b16 %v4864, %v4864
      %v4897 = vpack.c.b16 %v4865, %v4865
      %vm4930 = vcmask 27648
      %4931 = vst.msk [vmem:[%s170] sm:$0xf] %vm4930, %v4866
      %4932 = vst.msk [vmem:[%s170 + $0x4] sm:$0xf] %vm4930, %v4867
      %4933 = vst.msk [vmem:[%s170 + $0x8] sm:$0xf] %vm4930, %v4868
      %4934 = vst.msk [vmem:[%s170 + $0xc] sm:$0xf] %vm4930, %v4869
      %4935 = vst.msk [vmem:[%s170 + $0x10] sm:$0xf] %vm4930, %v4870
      %4936 = vst.msk [vmem:[%s170 + $0x14] sm:$0xf] %vm4930, %v4871
      %4937 = vst.msk [vmem:[%s170 + $0x18] sm:$0xf] %vm4930, %v4872
      %4938 = vst.msk [vmem:[%s170 + $0x1c] sm:$0xf] %vm4930, %v4873
      %4939 = vst.msk [vmem:[%s170 + $0x20] sm:$0xf] %vm4930, %v4874
      %4940 = vst.msk [vmem:[%s170 + $0x24] sm:$0xf] %vm4930, %v4875
      %4941 = vst.msk [vmem:[%s170 + $0x28] sm:$0xf] %vm4930, %v4876
      %4942 = vst.msk [vmem:[%s170 + $0x2c] sm:$0xf] %vm4930, %v4877
      %4943 = vst.msk [vmem:[%s170 + $0x30] sm:$0xf] %vm4930, %v4878
      %4944 = vst.msk [vmem:[%s170 + $0x34] sm:$0xf] %vm4930, %v4879
      %4945 = vst.msk [vmem:[%s170 + $0x38] sm:$0xf] %vm4930, %v4880
      %4946 = vst.msk [vmem:[%s170 + $0x3c] sm:$0xf] %vm4930, %v4881
      %4947 = vst.msk [vmem:[%s170 + $0x40] sm:$0xf] %vm4930, %v4882
      %4948 = vst.msk [vmem:[%s170 + $0x44] sm:$0xf] %vm4930, %v4883
      %4949 = vst.msk [vmem:[%s170 + $0x48] sm:$0xf] %vm4930, %v4884
      %4950 = vst.msk [vmem:[%s170 + $0x4c] sm:$0xf] %vm4930, %v4885
      %4951 = vst.msk [vmem:[%s170 + $0x50] sm:$0xf] %vm4930, %v4886
      %4952 = vst.msk [vmem:[%s170 + $0x54] sm:$0xf] %vm4930, %v4887
      %4953 = vst.msk [vmem:[%s170 + $0x58] sm:$0xf] %vm4930, %v4888
      %4954 = vst.msk [vmem:[%s170 + $0x5c] sm:$0xf] %vm4930, %v4889
      %4955 = vst.msk [vmem:[%s170 + $0x60] sm:$0xf] %vm4930, %v4890
      %4956 = vst.msk [vmem:[%s170 + $0x64] sm:$0xf] %vm4930, %v4891
      %4957 = vst.msk [vmem:[%s170 + $0x68] sm:$0xf] %vm4930, %v4892
      %4958 = vst.msk [vmem:[%s170 + $0x6c] sm:$0xf] %vm4930, %v4893
      %4959 = vst.msk [vmem:[%s170 + $0x70] sm:$0xf] %vm4930, %v4894
      %4960 = vst.msk [vmem:[%s170 + $0x74] sm:$0xf] %vm4930, %v4895
      %4961 = vst.msk [vmem:[%s170 + $0x78] sm:$0xf] %vm4930, %v4896
      %4962 = vst.msk [vmem:[%s170 + $0x7c] sm:$0xf] %vm4930, %v4897
      %p4963 = scmp.lt.s32.totalorder %s14, 1
      %s4964 = scalar_select %p4963, %s14, 1
      %s4965 = smul.addr %s4964, 32
      %s4966 = smul.addr %s4965, 4
      %s4967 = scalar_lea.vmem %s3, %s4966
      // Predicated region
      $region33: #{model_apply.7} parent=31 // pred_check
        %p4968 = pneg %p100
      $region34: #{model_apply.7} parent=31 // pred_check_branch
        %4970 = sbr.rel (%p4968) target = $region36
      $region35: #{model_apply.7} parent=31 // pred_region
        _
      $region36: #{model_apply.7} parent=31 // pred_fallthru
        _
    $region32: #{model_apply.7} parent=5 // pred_fallthru
      _
    %p4971 = scmp.le.s32.totalorder 2, %s9
    // Predicated region
    $region37: #{model_apply.7} parent=5 // pred_check
      %p4972 = pneg %p4971
    $region38: #{model_apply.7} parent=5 // pred_check_branch
      %4974 = sbr.rel (%p4972) target = $region40
    $region39: #{model_apply.7} parent=5 // pred_region
      %s4975 = ssub.s32 %s9, 2
      // Predicated region
      $region41: #{model_apply.7} parent=39 // pred_check
        %p4976 = pneg %p106
      $region42: #{model_apply.7} parent=39 // pred_check_branch
        %4978 = sbr.rel (%p4976) target = $region44
      $region43: #{model_apply.7} parent=39 // pred_region
        %p4979 = scmp.lt.s32.totalorder %s15, 1
        %s4980 = scalar_select %p4979, %s15, 1
        %s4981 = smul.addr %s4980, 32
        %s4982 = smul.addr %s4981, 4
        %s4983 = scalar_lea.vmem %s3, %s4982
      $region44: #{model_apply.7} parent=39 // pred_fallthru
        _
    $region40: #{model_apply.7} parent=5 // pred_fallthru
      _
  $region6: #{model_apply.7} parent=0 // loop_footer
    %s13 = sadd.s32 1, %s9
  $region7: #{model_apply.7} parent=0 // loop_footer_branch
    %8 = sbr.rel target = $region3
  $region8: #{model_apply.7} parent=0 // loop_exit
    _

</llo_original>
